<compile_context>
chip_gen: v7x
topology: tpu7x:2x2x1
jax: 0.10.0
libtpu: 0.0.40
codegen_flags: <defaults>
</compile_context>

<pallas_src>
import functools

import jax
import jax.numpy as jnp
from jax import lax
from jax.experimental import pallas as pl
from jax.experimental.pallas import tpu as pltpu

BN_EPS = 1e-5


# ----------------------------- kernel helpers -------------------------------
def _bn_relu(z, gb, inv_p):
    """Training-mode BatchNorm2d (biased batch var) + ReLU on a (P, C) tile.

    Two-pass statistics; the row-sums are MXU ones-row dots so the reduction
    does not go through the cross-sublane XLU path.
    """
    f32 = jnp.float32
    ones = jnp.ones((1, z.shape[0]), f32)
    mean = jnp.dot(ones, z, preferred_element_type=f32) * inv_p
    d = z - mean
    var = jnp.dot(ones, d * d, preferred_element_type=f32) * inv_p
    scale = gb[0:1, :] * lax.rsqrt(var + BN_EPS)
    return jnp.maximum(d * scale + gb[1:2, :], 0.0)


def _conv3x3(read_slab, w_ref, n_img, h, w, cout):
    """3x3 stride-1 'same' conv via 9 accumulating MXU dots (no im2col buffer).

    read_slab(n, off) returns rows [off, off+h*w) of image n's H-padded,
    flattened (+1 guard element each end) buffer, so tap (kh, kw) of output
    pixel p is flat row p + kh*w + kw.  The two W-wrap-around columns are
    masked per kw group to reproduce the conv's zero padding in W.
    Returns z of shape (n_img*h*w, cout), f32.
    """
    f32 = jnp.float32
    p = h * w
    xpos = lax.broadcasted_iota(jnp.int32, (p, 1), 0) % w
    mask_l = (xpos != 0).astype(f32)
    mask_r = (xpos != (w - 1)).astype(f32)
    outs = []
    for n in range(n_img):
        z = jnp.zeros((p, cout), f32)
        for kw in range(3):
            part = jnp.zeros((p, cout), f32)
            for kh in range(3):
                part = part + jnp.dot(read_slab(n, kh * w + kw),
                                      w_ref[kh * 3 + kw],
                                      preferred_element_type=f32)
            if kw == 0:
                part = part * mask_l
            elif kw == 2:
                part = part * mask_r
            z = z + part
        outs.append(z)
    return jnp.concatenate(outs, axis=0) if len(outs) > 1 else outs[0]


def _downsample_rows(src_ref, dst_ref, n_img, h_src, w_src):
    """Stride-2 spatial subsample of a (n*h*w, C) activation scratch.

    Per output row (n, ho): one strided sublane read of w_src//2 rows
    (stride 2) written contiguously into dst_ref in (n, ho, wo) order.
    """
    h_dst, w_dst = h_src // 2, w_src // 2
    for n in range(n_img):
        for ho in range(h_dst):
            dst_ref[pl.ds((n * h_dst + ho) * w_dst, w_dst), :] = \
                src_ref[pl.ds(n * h_src * w_src + 2 * ho * w_src, w_dst, 2), :]


# ------------------------------ fused kernel --------------------------------
def _fused_fpn_kernel(xflat_ref, w0_ref, w1_ref, w2_ref, w3_ref,
                      gb0_ref, gb1_ref, gb2_ref, gb3_ref,
                      o0_ref, o1_ref, o2_ref, o3_ref,
                      y0_ref, y1_ref, sub_ref, pad3_ref,
                      *, n_img, h_in, w_in, cout):
    f32 = jnp.float32
    h_half, w_half = h_in // 2, w_in // 2
    h_q, w_q = h_in // 4, w_in // 4
    p0i, p1i, p2i = h_in * w_in, h_half * w_half, h_q * w_q
    p0, p1, p2 = n_img * p0i, n_img * p1i, n_img * p2i

    ii = lax.broadcasted_iota(jnp.int32, (cout, cout), 0)
    jj = lax.broadcasted_iota(jnp.int32, (cout, cout), 1)
    eye = (ii == jj).astype(f32)

    def store_nchw(o_ref, y, pimg):
        # (pixels, C) -> per-image (C, pixels) lane-dense store; the orientation
        # swap rides the MXU (NT dot with the 8x8 identity; exact in f32)
        # rather than relying on XLU transposes of lane-narrow (P, 8) tiles.
        for img in range(n_img):
            y_img = y[img * pimg:(img + 1) * pimg, :]
            o_ref[img, :, :] = lax.dot_general(
                eye, y_img, (((1,), (1,)), ((), ())),
                preferred_element_type=f32)

    # ---- stage 0: Conv3x3 s1 (cin -> cout) + BN + ReLU ---------------------
    z0 = _conv3x3(lambda n, off: xflat_ref[n, pl.ds(off, p0i), :],
                  w0_ref, n_img, h_in, w_in, cout)
    y0 = _bn_relu(z0, gb0_ref[...], 1.0 / p0)
    y0_ref[...] = y0                       # kept in (P, C) for the subsample
    store_nchw(o0_ref, y0, p0i)

    # ---- stage 1: Conv1x1 s2 + BN + ReLU (strided-row subsample) -----------
    _downsample_rows(y0_ref, sub_ref, n_img, h_in, w_in)
    z1 = jnp.dot(sub_ref[pl.ds(0, p1), :], w1_ref[...],
                 preferred_element_type=f32)
    y1 = _bn_relu(z1, gb1_ref[...], 1.0 / p1)
    y1_ref[...] = y1
    store_nchw(o1_ref, y1, p1i)

    # ---- stage 2: Conv1x1 s2 + BN + ReLU -----------------------------------
    _downsample_rows(y1_ref, sub_ref, n_img, h_half, w_half)
    z2 = jnp.dot(sub_ref[pl.ds(0, p2), :], w2_ref[...],
                 preferred_element_type=f32)
    y2 = _bn_relu(z2, gb2_ref[...], 1.0 / p2)
    store_nchw(o2_ref, y2, p2i)

    # ---- stage 3: Conv3x3 s1 (cout -> cout) on the (h_q, w_q) grid ---------
    # One zero fill + one store per image into the H-padded flat layout
    # (pixel (hp, x) of padded image n lives at flat index hp*w_q + x + 1).
    pad3_ref[...] = jnp.zeros(pad3_ref.shape, f32)
    for n in range(n_img):
        pad3_ref[n, pl.ds(w_q + 1, p2i), :] = y2[n * p2i:(n + 1) * p2i, :]
    z3 = _conv3x3(lambda n, off: pad3_ref[n, pl.ds(off, p2i), :],
                  w3_ref, n_img, h_q, w_q, cout)
    y3 = _bn_relu(z3, gb3_ref[...], 1.0 / p2)
    store_nchw(o3_ref, y3, p2i)


# ------------------------- parameter construction ---------------------------
def build_wrapper_fpn_params(key, num_stages, c_in, c_out, stride, affine):
    """Mirrors WrapperFPN._build_arch_fpn; conv bias = not affine = False."""
    layers = []
    n = len(num_stages)
    for i, stage in enumerate(num_stages):
        name = f"{stage[0]}->{stage[1]}"
        if i == 0:
            kind, cin, ksize = "conv3x3_s1", c_in, 3
        elif i == n - 1 and len(stage) > 2:
            kind, cin, ksize = "conv3x3_s1", c_out, 3
        else:
            if stride == 2:
                kind, cin, ksize = "conv1x1_s2", c_out, 1
            else:
                # TODO(synk): stride==1 AvgPool2d(3,2,1,count_include_pad=False)
                # downsampling branch is not instantiated in this config.
                raise NotImplementedError("stride==1 avgpool branch not built")
        key, kw_, kg, kb = jax.random.split(key, 4)
        w = 0.3 * jax.random.normal(kw_, (c_out, cin, ksize, ksize), jnp.float32)
        gamma = 1.0 + 0.1 * jax.random.normal(kg, (c_out,), jnp.float32)
        beta = 0.1 * jax.random.normal(kb, (c_out,), jnp.float32)
        layers.append((name, kind, dict(w=w, gamma=gamma, beta=beta)))
    return layers


# ------------------------------ forward pass --------------------------------
def wrapper_fpn_forward(x_nchw, layers):
    """Forward pass matching WrapperFPN.forward (train-mode BN), fully fused."""
    kinds = [k for _, k, _ in layers]
    assert kinds == ["conv3x3_s1", "conv1x1_s2", "conv1x1_s2", "conv3x3_s1"], kinds
    n, cin, h, w = x_nchw.shape
    assert h % 4 == 0 and w % 4 == 0
    cout = layers[0][2]["w"].shape[0]

    # NCHW -> NHWC, pad H by 1, flatten (H+2, W) and add a 1-element guard at
    # each end of the flat axis (layout consumed by the in-kernel flat-shift
    # im2col: tap (kh, kw) of output pixel p is flat row p + kh*W + kw).
    x = jnp.transpose(x_nchw, (0, 2, 3, 1)).astype(jnp.float32)
    xflat = jnp.pad(
        jnp.pad(x, ((0, 0), (1, 1), (0, 0), (0, 0))).reshape(n, (h + 2) * w, cin),
        ((0, 0), (1, 1), (0, 0)))

    def prep_w3x3(wt):   # OIHW -> (KH*KW, I, O); tap index t = kh*3 + kw
        o, i, kh, kw = wt.shape
        return jnp.transpose(wt, (2, 3, 1, 0)).reshape(kh * kw, i, o)

    def prep_w1x1(wt):   # OI11 -> (I, O)
        return jnp.transpose(wt[:, :, 0, 0], (1, 0))

    wt0 = prep_w3x3(layers[0][2]["w"])
    wt1 = prep_w1x1(layers[1][2]["w"])
    wt2 = prep_w1x1(layers[2][2]["w"])
    wt3 = prep_w3x3(layers[3][2]["w"])
    gbs = [jnp.stack([p["gamma"], p["beta"]]) for _, _, p in layers]

    p0i, p1i, p2i = h * w, (h // 2) * (w // 2), (h // 4) * (w // 4)
    vm = pl.BlockSpec(memory_space=pltpu.MemorySpace.VMEM)
    kernel = functools.partial(_fused_fpn_kernel, n_img=n, h_in=h, w_in=w,
                               cout=cout)
    outs = pl.pallas_call(
        kernel,
        out_shape=(jax.ShapeDtypeStruct((n, cout, p0i), jnp.float32),
                   jax.ShapeDtypeStruct((n, cout, p1i), jnp.float32),
                   jax.ShapeDtypeStruct((n, cout, p2i), jnp.float32),
                   jax.ShapeDtypeStruct((n, cout, p2i), jnp.float32)),
        in_specs=[vm] * 9,
        out_specs=(vm, vm, vm, vm),
        scratch_shapes=[
            pltpu.VMEM((n * p0i, cout), jnp.float32),    # y0 (stage-1 subsample src)
            pltpu.VMEM((n * p1i, cout), jnp.float32),    # y1 (stage-2 subsample src)
            pltpu.VMEM((n * p1i, cout), jnp.float32),    # subsample staging (stg 1&2)
            pltpu.VMEM((n, (h // 4 + 2) * (w // 4) + 2, cout), jnp.float32),  # stage-3 pad
        ],
    )(xflat, wt0, wt1, wt2, wt3, gbs[0], gbs[1], gbs[2], gbs[3])

    # Kernel already emits (N, C, H*W): NCHW is a pure reshape, no transposes.
    dims = [(h, w), (h // 2, w // 2), (h // 4, w // 4), (h // 4, w // 4)]
    out = {}
    for (name, _, _), y, (hh, ww) in zip(layers, outs, dims):
        out[name] = y.reshape(n, cout, hh, ww)
    return out


# ------------------------------ reference -----------------------------------
def _ref_layer(x_nhwc, kind, w, gamma, beta):
    wt = jnp.transpose(w, (2, 3, 1, 0))  # OIHW -> HWIO
    if kind == "conv3x3_s1":
        y = lax.conv_general_dilated(x_nhwc, wt, (1, 1), [(1, 1), (1, 1)],
                                     dimension_numbers=("NHWC", "HWIO", "NHWC"))
    else:
        y = lax.conv_general_dilated(x_nhwc, wt, (2, 2), [(0, 0), (0, 0)],
                                     dimension_numbers=("NHWC", "HWIO", "NHWC"))
    mean = jnp.mean(y, axis=(0, 1, 2))
    var = jnp.mean((y - mean) ** 2, axis=(0, 1, 2))
    yn = (y - mean) * lax.rsqrt(var + BN_EPS) * gamma + beta
    return jnp.maximum(yn, 0.0)


def wrapper_fpn_reference(x_nchw, layers):
    x = jnp.transpose(x_nchw, (0, 2, 3, 1))
    out = {}
    for name, kind, p in layers:
        x = _ref_layer(x, kind, p["w"], p["gamma"], p["beta"])
        out[name] = jnp.transpose(x, (0, 3, 1, 2))
    return out


# --------------------------------- main --------------------------------------
if __name__ == "__main__":
    num_stages = [[0, 1], [1, 2], [2, 3], [3, 4, "out"]]
    C_in, C_out, stride = 4, 8, 2
    affine, track_running_stats = True, True

    key = jax.random.PRNGKey(0)
    key, kx = jax.random.split(key)
    x = jax.random.normal(kx, (2, C_in, 16, 16), jnp.float32)  # NCHW, like PyTorch

    layers = build_wrapper_fpn_params(key, num_stages, C_in, C_out, stride, affine)

    fwd = jax.jit(lambda inp: wrapper_fpn_forward(inp, layers))
    out = jax.block_until_ready(fwd(x))

    ref = wrapper_fpn_reference(x, layers)
    for name in out:
        assert out[name].shape == ref[name].shape, (name, out[name].shape, ref[name].shape)
        err = jnp.max(jnp.abs(out[name] - ref[name]))
        assert err < 1e-3, f"stage {name} mismatch: {err}"

    print("KERNEL_OK")
</pallas_src>

<mosaic_0001>
module attributes {stable_mosaic.version = 11 : i64} {
  func.func @_fused_fpn_kernel(%arg0: memref<2x290x4xf32, #tpu.memory_space<vmem>>, %arg1: memref<9x4x8xf32, #tpu.memory_space<vmem>>, %arg2: memref<8x8xf32, #tpu.memory_space<vmem>>, %arg3: memref<8x8xf32, #tpu.memory_space<vmem>>, %arg4: memref<9x8x8xf32, #tpu.memory_space<vmem>>, %arg5: memref<2x8xf32, #tpu.memory_space<vmem>>, %arg6: memref<2x8xf32, #tpu.memory_space<vmem>>, %arg7: memref<2x8xf32, #tpu.memory_space<vmem>>, %arg8: memref<2x8xf32, #tpu.memory_space<vmem>>, %arg9: memref<2x8x256xf32, #tpu.memory_space<vmem>>, %arg10: memref<2x8x64xf32, #tpu.memory_space<vmem>>, %arg11: memref<2x8x16xf32, #tpu.memory_space<vmem>>, %arg12: memref<2x8x16xf32, #tpu.memory_space<vmem>>, %arg13: memref<512x8xf32, #tpu.memory_space<vmem>>, %arg14: memref<128x8xf32, #tpu.memory_space<vmem>>, %arg15: memref<128x8xf32, #tpu.memory_space<vmem>>, %arg16: memref<2x26x8xf32, #tpu.memory_space<vmem>>) attributes {dimension_semantics = [], scalar_prefetch = 0 : i64, scratch_operands = 4 : i64, tpu.core_type = #tpu.core_type<tc>} {
    %0 = tpu.iota {dimensions = array<i32: 0>} : vector<8x8xi32>
    %1 = tpu.iota {dimensions = array<i32: 1>} : vector<8x8xi32>
    %2 = arith.cmpi eq, %0, %1 : vector<8x8xi32>
    %3 = arith.extui %2 : vector<8x8xi1> to vector<8x8xi32>
    %4 = arith.sitofp %3 : vector<8x8xi32> to vector<8x8xf32>
    %5 = tpu.iota {dimensions = array<i32: 0>} : vector<256x1xi32>
    %c16_i32 = arith.constant 16 : i32
    %c0_i32 = arith.constant 0 : i32
    %6 = arith.cmpi eq, %c16_i32, %c0_i32 : i32
    %c1_i32 = arith.constant 1 : i32
    %7 = arith.select %6, %c1_i32, %c16_i32 : i32
    %8 = vector.broadcast %7 : i32 to vector<256x1xi32>
    %9 = arith.remsi %5, %8 : vector<256x1xi32>
    %c0_i32_0 = arith.constant 0 : i32
    %10 = vector.broadcast %c0_i32_0 : i32 to vector<256x1xi32>
    %11 = arith.cmpi ne, %9, %10 : vector<256x1xi32>
    %c0_i32_1 = arith.constant 0 : i32
    %12 = vector.broadcast %c0_i32_1 : i32 to vector<256x1xi32>
    %13 = arith.cmpi slt, %9, %12 : vector<256x1xi32>
    %c0_i32_2 = arith.constant 0 : i32
    %14 = arith.cmpi slt, %7, %c0_i32_2 : i32
    %15 = vector.broadcast %14 : i1 to vector<256x1xi1>
    %16 = vector.broadcast %15 : vector<256x1xi1> to vector<256x1xi1>
    %17 = arith.xori %13, %16 : vector<256x1xi1>
    %18 = arith.andi %17, %11 : vector<256x1xi1>
    %19 = vector.broadcast %7 : i32 to vector<256x1xi32>
    %20 = arith.addi %9, %19 : vector<256x1xi32>
    %21 = arith.select %18, %20, %9 : vector<256x1xi1>, vector<256x1xi32>
    %c0_i32_3 = arith.constant 0 : i32
    %22 = vector.broadcast %c0_i32_3 : i32 to vector<256x1xi32>
    %23 = arith.cmpi ne, %21, %22 : vector<256x1xi32>
    %24 = arith.extui %23 : vector<256x1xi1> to vector<256x1xi32>
    %25 = arith.sitofp %24 : vector<256x1xi32> to vector<256x1xf32>
    %c15_i32 = arith.constant 15 : i32
    %26 = vector.broadcast %c15_i32 : i32 to vector<256x1xi32>
    %27 = arith.cmpi ne, %21, %26 : vector<256x1xi32>
    %28 = arith.extui %27 : vector<256x1xi1> to vector<256x1xi32>
    %29 = arith.sitofp %28 : vector<256x1xi32> to vector<256x1xf32>
    %cst = arith.constant 0.000000e+00 : f32
    %30 = vector.broadcast %cst : f32 to vector<256x8xf32>
    %cst_4 = arith.constant 0.000000e+00 : f32
    %31 = vector.broadcast %cst_4 : f32 to vector<256x8xf32>
    %c0 = arith.constant 0 : index
    %c0_5 = arith.constant 0 : index
    %c0_6 = arith.constant 0 : index
    %32 = vector.load %arg0[%c0, %c0_5, %c0_6] : memref<2x290x4xf32, #tpu.memory_space<vmem>>, vector<1x256x4xf32>
    %33 = vector.shape_cast %32 : vector<1x256x4xf32> to vector<256x4xf32>
    %c0_7 = arith.constant 0 : index
    %c0_8 = arith.constant 0 : index
    %c0_9 = arith.constant 0 : index
    %34 = vector.load %arg1[%c0_7, %c0_8, %c0_9] : memref<9x4x8xf32, #tpu.memory_space<vmem>>, vector<1x4x8xf32>
    %35 = vector.shape_cast %34 : vector<1x4x8xf32> to vector<4x8xf32>
    %cst_10 = arith.constant dense<0.000000e+00> : vector<256x8xf32>
    %36 = tpu.matmul %33, %35, %cst_10 {dimension_numbers = #tpu.dot_dimension_numbers<[1], [0], [0], [1], [0, 0, 1, 1], [], []>} : vector<256x4xf32>, vector<4x8xf32>, vector<256x8xf32> -> vector<256x8xf32>
    %37 = arith.addf %31, %36 : vector<256x8xf32>
    %c0_11 = arith.constant 0 : index
    %c16 = arith.constant 16 : index
    %c0_12 = arith.constant 0 : index
    %38 = vector.load %arg0[%c0_11, %c16, %c0_12] : memref<2x290x4xf32, #tpu.memory_space<vmem>>, vector<1x256x4xf32>
    %39 = vector.shape_cast %38 : vector<1x256x4xf32> to vector<256x4xf32>
    %c3 = arith.constant 3 : index
    %c0_13 = arith.constant 0 : index
    %c0_14 = arith.constant 0 : index
    %40 = vector.load %arg1[%c3, %c0_13, %c0_14] : memref<9x4x8xf32, #tpu.memory_space<vmem>>, vector<1x4x8xf32>
    %41 = vector.shape_cast %40 : vector<1x4x8xf32> to vector<4x8xf32>
    %cst_15 = arith.constant dense<0.000000e+00> : vector<256x8xf32>
    %42 = tpu.matmul %39, %41, %cst_15 {dimension_numbers = #tpu.dot_dimension_numbers<[1], [0], [0], [1], [0, 0, 1, 1], [], []>} : vector<256x4xf32>, vector<4x8xf32>, vector<256x8xf32> -> vector<256x8xf32>
    %43 = arith.addf %37, %42 : vector<256x8xf32>
    %c0_16 = arith.constant 0 : index
    %c32 = arith.constant 32 : index
    %c0_17 = arith.constant 0 : index
    %44 = vector.load %arg0[%c0_16, %c32, %c0_17] : memref<2x290x4xf32, #tpu.memory_space<vmem>>, vector<1x256x4xf32>
    %45 = vector.shape_cast %44 : vector<1x256x4xf32> to vector<256x4xf32>
    %c6 = arith.constant 6 : index
    %c0_18 = arith.constant 0 : index
    %c0_19 = arith.constant 0 : index
    %46 = vector.load %arg1[%c6, %c0_18, %c0_19] : memref<9x4x8xf32, #tpu.memory_space<vmem>>, vector<1x4x8xf32>
    %47 = vector.shape_cast %46 : vector<1x4x8xf32> to vector<4x8xf32>
    %cst_20 = arith.constant dense<0.000000e+00> : vector<256x8xf32>
    %48 = tpu.matmul %45, %47, %cst_20 {dimension_numbers = #tpu.dot_dimension_numbers<[1], [0], [0], [1], [0, 0, 1, 1], [], []>} : vector<256x4xf32>, vector<4x8xf32>, vector<256x8xf32> -> vector<256x8xf32>
    %49 = arith.addf %43, %48 : vector<256x8xf32>
    %50 = vector.broadcast %25 : vector<256x1xf32> to vector<256x8xf32>
    %51 = arith.mulf %49, %50 : vector<256x8xf32>
    %52 = arith.addf %30, %51 : vector<256x8xf32>
    %cst_21 = arith.constant 0.000000e+00 : f32
    %53 = vector.broadcast %cst_21 : f32 to vector<256x8xf32>
    %c0_22 = arith.constant 0 : index
    %c1 = arith.constant 1 : index
    %c0_23 = arith.constant 0 : index
    %54 = vector.load %arg0[%c0_22, %c1, %c0_23] : memref<2x290x4xf32, #tpu.memory_space<vmem>>, vector<1x256x4xf32>
    %55 = vector.shape_cast %54 : vector<1x256x4xf32> to vector<256x4xf32>
    %c1_24 = arith.constant 1 : index
    %c0_25 = arith.constant 0 : index
    %c0_26 = arith.constant 0 : index
    %56 = vector.load %arg1[%c1_24, %c0_25, %c0_26] : memref<9x4x8xf32, #tpu.memory_space<vmem>>, vector<1x4x8xf32>
    %57 = vector.shape_cast %56 : vector<1x4x8xf32> to vector<4x8xf32>
    %cst_27 = arith.constant dense<0.000000e+00> : vector<256x8xf32>
    %58 = tpu.matmul %55, %57, %cst_27 {dimension_numbers = #tpu.dot_dimension_numbers<[1], [0], [0], [1], [0, 0, 1, 1], [], []>} : vector<256x4xf32>, vector<4x8xf32>, vector<256x8xf32> -> vector<256x8xf32>
    %59 = arith.addf %53, %58 : vector<256x8xf32>
    %c0_28 = arith.constant 0 : index
    %c17 = arith.constant 17 : index
    %c0_29 = arith.constant 0 : index
    %60 = vector.load %arg0[%c0_28, %c17, %c0_29] : memref<2x290x4xf32, #tpu.memory_space<vmem>>, vector<1x256x4xf32>
    %61 = vector.shape_cast %60 : vector<1x256x4xf32> to vector<256x4xf32>
    %c4 = arith.constant 4 : index
    %c0_30 = arith.constant 0 : index
    %c0_31 = arith.constant 0 : index
    %62 = vector.load %arg1[%c4, %c0_30, %c0_31] : memref<9x4x8xf32, #tpu.memory_space<vmem>>, vector<1x4x8xf32>
    %63 = vector.shape_cast %62 : vector<1x4x8xf32> to vector<4x8xf32>
    %cst_32 = arith.constant dense<0.000000e+00> : vector<256x8xf32>
    %64 = tpu.matmul %61, %63, %cst_32 {dimension_numbers = #tpu.dot_dimension_numbers<[1], [0], [0], [1], [0, 0, 1, 1], [], []>} : vector<256x4xf32>, vector<4x8xf32>, vector<256x8xf32> -> vector<256x8xf32>
    %65 = arith.addf %59, %64 : vector<256x8xf32>
    %c0_33 = arith.constant 0 : index
    %c33 = arith.constant 33 : index
    %c0_34 = arith.constant 0 : index
    %66 = vector.load %arg0[%c0_33, %c33, %c0_34] : memref<2x290x4xf32, #tpu.memory_space<vmem>>, vector<1x256x4xf32>
    %67 = vector.shape_cast %66 : vector<1x256x4xf32> to vector<256x4xf32>
    %c7 = arith.constant 7 : index
    %c0_35 = arith.constant 0 : index
    %c0_36 = arith.constant 0 : index
    %68 = vector.load %arg1[%c7, %c0_35, %c0_36] : memref<9x4x8xf32, #tpu.memory_space<vmem>>, vector<1x4x8xf32>
    %69 = vector.shape_cast %68 : vector<1x4x8xf32> to vector<4x8xf32>
    %cst_37 = arith.constant dense<0.000000e+00> : vector<256x8xf32>
    %70 = tpu.matmul %67, %69, %cst_37 {dimension_numbers = #tpu.dot_dimension_numbers<[1], [0], [0], [1], [0, 0, 1, 1], [], []>} : vector<256x4xf32>, vector<4x8xf32>, vector<256x8xf32> -> vector<256x8xf32>
    %71 = arith.addf %65, %70 : vector<256x8xf32>
    %72 = arith.addf %52, %71 : vector<256x8xf32>
    %cst_38 = arith.constant 0.000000e+00 : f32
    %73 = vector.broadcast %cst_38 : f32 to vector<256x8xf32>
    %c0_39 = arith.constant 0 : index
    %c2 = arith.constant 2 : index
    %c0_40 = arith.constant 0 : index
    %74 = vector.load %arg0[%c0_39, %c2, %c0_40] : memref<2x290x4xf32, #tpu.memory_space<vmem>>, vector<1x256x4xf32>
    %75 = vector.shape_cast %74 : vector<1x256x4xf32> to vector<256x4xf32>
    %c2_41 = arith.constant 2 : index
    %c0_42 = arith.constant 0 : index
    %c0_43 = arith.constant 0 : index
    %76 = vector.load %arg1[%c2_41, %c0_42, %c0_43] : memref<9x4x8xf32, #tpu.memory_space<vmem>>, vector<1x4x8xf32>
    %77 = vector.shape_cast %76 : vector<1x4x8xf32> to vector<4x8xf32>
    %cst_44 = arith.constant dense<0.000000e+00> : vector<256x8xf32>
    %78 = tpu.matmul %75, %77, %cst_44 {dimension_numbers = #tpu.dot_dimension_numbers<[1], [0], [0], [1], [0, 0, 1, 1], [], []>} : vector<256x4xf32>, vector<4x8xf32>, vector<256x8xf32> -> vector<256x8xf32>
    %79 = arith.addf %73, %78 : vector<256x8xf32>
    %c0_45 = arith.constant 0 : index
    %c18 = arith.constant 18 : index
    %c0_46 = arith.constant 0 : index
    %80 = vector.load %arg0[%c0_45, %c18, %c0_46] : memref<2x290x4xf32, #tpu.memory_space<vmem>>, vector<1x256x4xf32>
    %81 = vector.shape_cast %80 : vector<1x256x4xf32> to vector<256x4xf32>
    %c5 = arith.constant 5 : index
    %c0_47 = arith.constant 0 : index
    %c0_48 = arith.constant 0 : index
    %82 = vector.load %arg1[%c5, %c0_47, %c0_48] : memref<9x4x8xf32, #tpu.memory_space<vmem>>, vector<1x4x8xf32>
    %83 = vector.shape_cast %82 : vector<1x4x8xf32> to vector<4x8xf32>
    %cst_49 = arith.constant dense<0.000000e+00> : vector<256x8xf32>
    %84 = tpu.matmul %81, %83, %cst_49 {dimension_numbers = #tpu.dot_dimension_numbers<[1], [0], [0], [1], [0, 0, 1, 1], [], []>} : vector<256x4xf32>, vector<4x8xf32>, vector<256x8xf32> -> vector<256x8xf32>
    %85 = arith.addf %79, %84 : vector<256x8xf32>
    %c0_50 = arith.constant 0 : index
    %c34 = arith.constant 34 : index
    %c0_51 = arith.constant 0 : index
    %86 = vector.load %arg0[%c0_50, %c34, %c0_51] : memref<2x290x4xf32, #tpu.memory_space<vmem>>, vector<1x256x4xf32>
    %87 = vector.shape_cast %86 : vector<1x256x4xf32> to vector<256x4xf32>
    %c8 = arith.constant 8 : index
    %c0_52 = arith.constant 0 : index
    %c0_53 = arith.constant 0 : index
    %88 = vector.load %arg1[%c8, %c0_52, %c0_53] : memref<9x4x8xf32, #tpu.memory_space<vmem>>, vector<1x4x8xf32>
    %89 = vector.shape_cast %88 : vector<1x4x8xf32> to vector<4x8xf32>
    %cst_54 = arith.constant dense<0.000000e+00> : vector<256x8xf32>
    %90 = tpu.matmul %87, %89, %cst_54 {dimension_numbers = #tpu.dot_dimension_numbers<[1], [0], [0], [1], [0, 0, 1, 1], [], []>} : vector<256x4xf32>, vector<4x8xf32>, vector<256x8xf32> -> vector<256x8xf32>
    %91 = arith.addf %85, %90 : vector<256x8xf32>
    %92 = vector.broadcast %29 : vector<256x1xf32> to vector<256x8xf32>
    %93 = arith.mulf %91, %92 : vector<256x8xf32>
    %94 = arith.addf %72, %93 : vector<256x8xf32>
    %cst_55 = arith.constant 0.000000e+00 : f32
    %95 = vector.broadcast %cst_55 : f32 to vector<256x8xf32>
    %cst_56 = arith.constant 0.000000e+00 : f32
    %96 = vector.broadcast %cst_56 : f32 to vector<256x8xf32>
    %c1_57 = arith.constant 1 : index
    %c0_58 = arith.constant 0 : index
    %c0_59 = arith.constant 0 : index
    %97 = vector.load %arg0[%c1_57, %c0_58, %c0_59] : memref<2x290x4xf32, #tpu.memory_space<vmem>>, vector<1x256x4xf32>
    %98 = vector.shape_cast %97 : vector<1x256x4xf32> to vector<256x4xf32>
    %c0_60 = arith.constant 0 : index
    %c0_61 = arith.constant 0 : index
    %c0_62 = arith.constant 0 : index
    %99 = vector.load %arg1[%c0_60, %c0_61, %c0_62] : memref<9x4x8xf32, #tpu.memory_space<vmem>>, vector<1x4x8xf32>
    %100 = vector.shape_cast %99 : vector<1x4x8xf32> to vector<4x8xf32>
    %cst_63 = arith.constant dense<0.000000e+00> : vector<256x8xf32>
    %101 = tpu.matmul %98, %100, %cst_63 {dimension_numbers = #tpu.dot_dimension_numbers<[1], [0], [0], [1], [0, 0, 1, 1], [], []>} : vector<256x4xf32>, vector<4x8xf32>, vector<256x8xf32> -> vector<256x8xf32>
    %102 = arith.addf %96, %101 : vector<256x8xf32>
    %c1_64 = arith.constant 1 : index
    %c16_65 = arith.constant 16 : index
    %c0_66 = arith.constant 0 : index
    %103 = vector.load %arg0[%c1_64, %c16_65, %c0_66] : memref<2x290x4xf32, #tpu.memory_space<vmem>>, vector<1x256x4xf32>
    %104 = vector.shape_cast %103 : vector<1x256x4xf32> to vector<256x4xf32>
    %c3_67 = arith.constant 3 : index
    %c0_68 = arith.constant 0 : index
    %c0_69 = arith.constant 0 : index
    %105 = vector.load %arg1[%c3_67, %c0_68, %c0_69] : memref<9x4x8xf32, #tpu.memory_space<vmem>>, vector<1x4x8xf32>
    %106 = vector.shape_cast %105 : vector<1x4x8xf32> to vector<4x8xf32>
    %cst_70 = arith.constant dense<0.000000e+00> : vector<256x8xf32>
    %107 = tpu.matmul %104, %106, %cst_70 {dimension_numbers = #tpu.dot_dimension_numbers<[1], [0], [0], [1], [0, 0, 1, 1], [], []>} : vector<256x4xf32>, vector<4x8xf32>, vector<256x8xf32> -> vector<256x8xf32>
    %108 = arith.addf %102, %107 : vector<256x8xf32>
    %c1_71 = arith.constant 1 : index
    %c32_72 = arith.constant 32 : index
    %c0_73 = arith.constant 0 : index
    %109 = vector.load %arg0[%c1_71, %c32_72, %c0_73] : memref<2x290x4xf32, #tpu.memory_space<vmem>>, vector<1x256x4xf32>
    %110 = vector.shape_cast %109 : vector<1x256x4xf32> to vector<256x4xf32>
    %c6_74 = arith.constant 6 : index
    %c0_75 = arith.constant 0 : index
    %c0_76 = arith.constant 0 : index
    %111 = vector.load %arg1[%c6_74, %c0_75, %c0_76] : memref<9x4x8xf32, #tpu.memory_space<vmem>>, vector<1x4x8xf32>
    %112 = vector.shape_cast %111 : vector<1x4x8xf32> to vector<4x8xf32>
    %cst_77 = arith.constant dense<0.000000e+00> : vector<256x8xf32>
    %113 = tpu.matmul %110, %112, %cst_77 {dimension_numbers = #tpu.dot_dimension_numbers<[1], [0], [0], [1], [0, 0, 1, 1], [], []>} : vector<256x4xf32>, vector<4x8xf32>, vector<256x8xf32> -> vector<256x8xf32>
    %114 = arith.addf %108, %113 : vector<256x8xf32>
    %115 = vector.broadcast %25 : vector<256x1xf32> to vector<256x8xf32>
    %116 = arith.mulf %114, %115 : vector<256x8xf32>
    %117 = arith.addf %95, %116 : vector<256x8xf32>
    %cst_78 = arith.constant 0.000000e+00 : f32
    %118 = vector.broadcast %cst_78 : f32 to vector<256x8xf32>
    %c1_79 = arith.constant 1 : index
    %c1_80 = arith.constant 1 : index
    %c0_81 = arith.constant 0 : index
    %119 = vector.load %arg0[%c1_79, %c1_80, %c0_81] : memref<2x290x4xf32, #tpu.memory_space<vmem>>, vector<1x256x4xf32>
    %120 = vector.shape_cast %119 : vector<1x256x4xf32> to vector<256x4xf32>
    %c1_82 = arith.constant 1 : index
    %c0_83 = arith.constant 0 : index
    %c0_84 = arith.constant 0 : index
    %121 = vector.load %arg1[%c1_82, %c0_83, %c0_84] : memref<9x4x8xf32, #tpu.memory_space<vmem>>, vector<1x4x8xf32>
    %122 = vector.shape_cast %121 : vector<1x4x8xf32> to vector<4x8xf32>
    %cst_85 = arith.constant dense<0.000000e+00> : vector<256x8xf32>
    %123 = tpu.matmul %120, %122, %cst_85 {dimension_numbers = #tpu.dot_dimension_numbers<[1], [0], [0], [1], [0, 0, 1, 1], [], []>} : vector<256x4xf32>, vector<4x8xf32>, vector<256x8xf32> -> vector<256x8xf32>
    %124 = arith.addf %118, %123 : vector<256x8xf32>
    %c1_86 = arith.constant 1 : index
    %c17_87 = arith.constant 17 : index
    %c0_88 = arith.constant 0 : index
    %125 = vector.load %arg0[%c1_86, %c17_87, %c0_88] : memref<2x290x4xf32, #tpu.memory_space<vmem>>, vector<1x256x4xf32>
    %126 = vector.shape_cast %125 : vector<1x256x4xf32> to vector<256x4xf32>
    %c4_89 = arith.constant 4 : index
    %c0_90 = arith.constant 0 : index
    %c0_91 = arith.constant 0 : index
    %127 = vector.load %arg1[%c4_89, %c0_90, %c0_91] : memref<9x4x8xf32, #tpu.memory_space<vmem>>, vector<1x4x8xf32>
    %128 = vector.shape_cast %127 : vector<1x4x8xf32> to vector<4x8xf32>
    %cst_92 = arith.constant dense<0.000000e+00> : vector<256x8xf32>
    %129 = tpu.matmul %126, %128, %cst_92 {dimension_numbers = #tpu.dot_dimension_numbers<[1], [0], [0], [1], [0, 0, 1, 1], [], []>} : vector<256x4xf32>, vector<4x8xf32>, vector<256x8xf32> -> vector<256x8xf32>
    %130 = arith.addf %124, %129 : vector<256x8xf32>
    %c1_93 = arith.constant 1 : index
    %c33_94 = arith.constant 33 : index
    %c0_95 = arith.constant 0 : index
    %131 = vector.load %arg0[%c1_93, %c33_94, %c0_95] : memref<2x290x4xf32, #tpu.memory_space<vmem>>, vector<1x256x4xf32>
    %132 = vector.shape_cast %131 : vector<1x256x4xf32> to vector<256x4xf32>
    %c7_96 = arith.constant 7 : index
    %c0_97 = arith.constant 0 : index
    %c0_98 = arith.constant 0 : index
    %133 = vector.load %arg1[%c7_96, %c0_97, %c0_98] : memref<9x4x8xf32, #tpu.memory_space<vmem>>, vector<1x4x8xf32>
    %134 = vector.shape_cast %133 : vector<1x4x8xf32> to vector<4x8xf32>
    %cst_99 = arith.constant dense<0.000000e+00> : vector<256x8xf32>
    %135 = tpu.matmul %132, %134, %cst_99 {dimension_numbers = #tpu.dot_dimension_numbers<[1], [0], [0], [1], [0, 0, 1, 1], [], []>} : vector<256x4xf32>, vector<4x8xf32>, vector<256x8xf32> -> vector<256x8xf32>
    %136 = arith.addf %130, %135 : vector<256x8xf32>
    %137 = arith.addf %117, %136 : vector<256x8xf32>
    %cst_100 = arith.constant 0.000000e+00 : f32
    %138 = vector.broadcast %cst_100 : f32 to vector<256x8xf32>
    %c1_101 = arith.constant 1 : index
    %c2_102 = arith.constant 2 : index
    %c0_103 = arith.constant 0 : index
    %139 = vector.load %arg0[%c1_101, %c2_102, %c0_103] : memref<2x290x4xf32, #tpu.memory_space<vmem>>, vector<1x256x4xf32>
    %140 = vector.shape_cast %139 : vector<1x256x4xf32> to vector<256x4xf32>
    %c2_104 = arith.constant 2 : index
    %c0_105 = arith.constant 0 : index
    %c0_106 = arith.constant 0 : index
    %141 = vector.load %arg1[%c2_104, %c0_105, %c0_106] : memref<9x4x8xf32, #tpu.memory_space<vmem>>, vector<1x4x8xf32>
    %142 = vector.shape_cast %141 : vector<1x4x8xf32> to vector<4x8xf32>
    %cst_107 = arith.constant dense<0.000000e+00> : vector<256x8xf32>
    %143 = tpu.matmul %140, %142, %cst_107 {dimension_numbers = #tpu.dot_dimension_numbers<[1], [0], [0], [1], [0, 0, 1, 1], [], []>} : vector<256x4xf32>, vector<4x8xf32>, vector<256x8xf32> -> vector<256x8xf32>
    %144 = arith.addf %138, %143 : vector<256x8xf32>
    %c1_108 = arith.constant 1 : index
    %c18_109 = arith.constant 18 : index
    %c0_110 = arith.constant 0 : index
    %145 = vector.load %arg0[%c1_108, %c18_109, %c0_110] : memref<2x290x4xf32, #tpu.memory_space<vmem>>, vector<1x256x4xf32>
    %146 = vector.shape_cast %145 : vector<1x256x4xf32> to vector<256x4xf32>
    %c5_111 = arith.constant 5 : index
    %c0_112 = arith.constant 0 : index
    %c0_113 = arith.constant 0 : index
    %147 = vector.load %arg1[%c5_111, %c0_112, %c0_113] : memref<9x4x8xf32, #tpu.memory_space<vmem>>, vector<1x4x8xf32>
    %148 = vector.shape_cast %147 : vector<1x4x8xf32> to vector<4x8xf32>
    %cst_114 = arith.constant dense<0.000000e+00> : vector<256x8xf32>
    %149 = tpu.matmul %146, %148, %cst_114 {dimension_numbers = #tpu.dot_dimension_numbers<[1], [0], [0], [1], [0, 0, 1, 1], [], []>} : vector<256x4xf32>, vector<4x8xf32>, vector<256x8xf32> -> vector<256x8xf32>
    %150 = arith.addf %144, %149 : vector<256x8xf32>
    %c1_115 = arith.constant 1 : index
    %c34_116 = arith.constant 34 : index
    %c0_117 = arith.constant 0 : index
    %151 = vector.load %arg0[%c1_115, %c34_116, %c0_117] : memref<2x290x4xf32, #tpu.memory_space<vmem>>, vector<1x256x4xf32>
    %152 = vector.shape_cast %151 : vector<1x256x4xf32> to vector<256x4xf32>
    %c8_118 = arith.constant 8 : index
    %c0_119 = arith.constant 0 : index
    %c0_120 = arith.constant 0 : index
    %153 = vector.load %arg1[%c8_118, %c0_119, %c0_120] : memref<9x4x8xf32, #tpu.memory_space<vmem>>, vector<1x4x8xf32>
    %154 = vector.shape_cast %153 : vector<1x4x8xf32> to vector<4x8xf32>
    %cst_121 = arith.constant dense<0.000000e+00> : vector<256x8xf32>
    %155 = tpu.matmul %152, %154, %cst_121 {dimension_numbers = #tpu.dot_dimension_numbers<[1], [0], [0], [1], [0, 0, 1, 1], [], []>} : vector<256x4xf32>, vector<4x8xf32>, vector<256x8xf32> -> vector<256x8xf32>
    %156 = arith.addf %150, %155 : vector<256x8xf32>
    %157 = vector.broadcast %29 : vector<256x1xf32> to vector<256x8xf32>
    %158 = arith.mulf %156, %157 : vector<256x8xf32>
    %159 = arith.addf %137, %158 : vector<256x8xf32>
    %160 = tpu.concatenate %94, %159 in 0 : vector<256x8xf32>, vector<256x8xf32> -> vector<512x8xf32>
    %c0_122 = arith.constant 0 : index
    %c0_123 = arith.constant 0 : index
    %161 = vector.load %arg5[%c0_122, %c0_123] : memref<2x8xf32, #tpu.memory_space<vmem>>, vector<2x8xf32>
    %cst_124 = arith.constant 1.000000e+00 : f32
    %162 = vector.broadcast %cst_124 : f32 to vector<1x512xf32>
    %cst_125 = arith.constant dense<0.000000e+00> : vector<1x8xf32>
    %163 = tpu.matmul %162, %160, %cst_125 {dimension_numbers = #tpu.dot_dimension_numbers<[1], [0], [0], [1], [0, 0, 1, 1], [], []>} : vector<1x512xf32>, vector<512x8xf32>, vector<1x8xf32> -> vector<1x8xf32>
    %cst_126 = arith.constant 0.001953125 : f32
    %164 = vector.broadcast %cst_126 : f32 to vector<1x8xf32>
    %165 = arith.mulf %163, %164 : vector<1x8xf32>
    %166 = vector.broadcast %165 : vector<1x8xf32> to vector<512x8xf32>
    %167 = arith.subf %160, %166 : vector<512x8xf32>
    %168 = arith.mulf %167, %167 : vector<512x8xf32>
    %cst_127 = arith.constant dense<0.000000e+00> : vector<1x8xf32>
    %169 = tpu.matmul %162, %168, %cst_127 {dimension_numbers = #tpu.dot_dimension_numbers<[1], [0], [0], [1], [0, 0, 1, 1], [], []>} : vector<1x512xf32>, vector<512x8xf32>, vector<1x8xf32> -> vector<1x8xf32>
    %cst_128 = arith.constant 0.001953125 : f32
    %170 = vector.broadcast %cst_128 : f32 to vector<1x8xf32>
    %171 = arith.mulf %169, %170 : vector<1x8xf32>
    %172 = vector.extract_strided_slice %161 {offsets = [0, 0], sizes = [1, 8], strides = [1, 1]} : vector<2x8xf32> to vector<1x8xf32>
    %cst_129 = arith.constant 9.99999974E-6 : f32
    %173 = vector.broadcast %cst_129 : f32 to vector<1x8xf32>
    %174 = arith.addf %171, %173 : vector<1x8xf32>
    %175 = math.rsqrt %174 : vector<1x8xf32>
    %176 = arith.mulf %172, %175 : vector<1x8xf32>
    %177 = vector.broadcast %176 : vector<1x8xf32> to vector<512x8xf32>
    %178 = arith.mulf %167, %177 : vector<512x8xf32>
    %179 = vector.extract_strided_slice %161 {offsets = [1, 0], sizes = [1, 8], strides = [1, 1]} : vector<2x8xf32> to vector<1x8xf32>
    %180 = vector.broadcast %179 : vector<1x8xf32> to vector<512x8xf32>
    %181 = arith.addf %178, %180 : vector<512x8xf32>
    %cst_130 = arith.constant 0.000000e+00 : f32
    %182 = vector.broadcast %cst_130 : f32 to vector<512x8xf32>
    %183 = arith.maximumf %181, %182 : vector<512x8xf32>
    %c0_131 = arith.constant 0 : index
    %c0_132 = arith.constant 0 : index
    %184 = vector.load %arg13[%c0_131, %c0_132] : memref<512x8xf32, #tpu.memory_space<vmem>>, vector<512x8xf32>
    tpu.vector_store %arg13[%c0_131, %c0_132], %183 {strides = array<i32>} : memref<512x8xf32, #tpu.memory_space<vmem>>, vector<512x8xf32>,
    %185 = vector.extract_strided_slice %183 {offsets = [0, 0], sizes = [256, 8], strides = [1, 1]} : vector<512x8xf32> to vector<256x8xf32>
    %cst_133 = arith.constant dense<0.000000e+00> : vector<8x256xf32>
    %186 = tpu.matmul %4, %185, %cst_133 {dimension_numbers = #tpu.dot_dimension_numbers<[1], [1], [0], [0], [0, 0, 1, 0], [], []>} : vector<8x8xf32>, vector<256x8xf32>, vector<8x256xf32> -> vector<8x256xf32>
    %c0_134 = arith.constant 0 : index
    %c0_135 = arith.constant 0 : index
    %c0_136 = arith.constant 0 : index
    %187 = vector.load %arg9[%c0_134, %c0_135, %c0_136] : memref<2x8x256xf32, #tpu.memory_space<vmem>>, vector<1x8x256xf32>
    %188 = vector.shape_cast %187 : vector<1x8x256xf32> to vector<8x256xf32>
    %189 = vector.shape_cast %186 : vector<8x256xf32> to vector<1x8x256xf32>
    tpu.vector_store %arg9[%c0_134, %c0_135, %c0_136], %189 {strides = array<i32>} : memref<2x8x256xf32, #tpu.memory_space<vmem>>, vector<1x8x256xf32>,
    %190 = vector.extract_strided_slice %183 {offsets = [256, 0], sizes = [256, 8], strides = [1, 1]} : vector<512x8xf32> to vector<256x8xf32>
    %cst_137 = arith.constant dense<0.000000e+00> : vector<8x256xf32>
    %191 = tpu.matmul %4, %190, %cst_137 {dimension_numbers = #tpu.dot_dimension_numbers<[1], [1], [0], [0], [0, 0, 1, 0], [], []>} : vector<8x8xf32>, vector<256x8xf32>, vector<8x256xf32> -> vector<8x256xf32>
    %c1_138 = arith.constant 1 : index
    %c0_139 = arith.constant 0 : index
    %c0_140 = arith.constant 0 : index
    %192 = vector.load %arg9[%c1_138, %c0_139, %c0_140] : memref<2x8x256xf32, #tpu.memory_space<vmem>>, vector<1x8x256xf32>
    %193 = vector.shape_cast %192 : vector<1x8x256xf32> to vector<8x256xf32>
    %194 = vector.shape_cast %191 : vector<8x256xf32> to vector<1x8x256xf32>
    tpu.vector_store %arg9[%c1_138, %c0_139, %c0_140], %194 {strides = array<i32>} : memref<2x8x256xf32, #tpu.memory_space<vmem>>, vector<1x8x256xf32>,
    %c0_141 = arith.constant 0 : index
    %c0_142 = arith.constant 0 : index
    %195 = tpu.strided_load %arg13[%c0_141, %c0_142] {strides = array<i32: 2, 1>} : memref<512x8xf32, #tpu.memory_space<vmem>>, vector<8x8xf32>
    %c0_143 = arith.constant 0 : index
    %c0_144 = arith.constant 0 : index
    %196 = vector.load %arg15[%c0_143, %c0_144] : memref<128x8xf32, #tpu.memory_space<vmem>>, vector<8x8xf32>
    tpu.vector_store %arg15[%c0_143, %c0_144], %195 {strides = array<i32>} : memref<128x8xf32, #tpu.memory_space<vmem>>, vector<8x8xf32>,
    %c32_145 = arith.constant 32 : index
    %c0_146 = arith.constant 0 : index
    %197 = tpu.strided_load %arg13[%c32_145, %c0_146] {strides = array<i32: 2, 1>} : memref<512x8xf32, #tpu.memory_space<vmem>>, vector<8x8xf32>
    %c8_147 = arith.constant 8 : index
    %c0_148 = arith.constant 0 : index
    %198 = vector.load %arg15[%c8_147, %c0_148] : memref<128x8xf32, #tpu.memory_space<vmem>>, vector<8x8xf32>
    tpu.vector_store %arg15[%c8_147, %c0_148], %197 {strides = array<i32>} : memref<128x8xf32, #tpu.memory_space<vmem>>, vector<8x8xf32>,
    %c64 = arith.constant 64 : index
    %c0_149 = arith.constant 0 : index
    %199 = tpu.strided_load %arg13[%c64, %c0_149] {strides = array<i32: 2, 1>} : memref<512x8xf32, #tpu.memory_space<vmem>>, vector<8x8xf32>
    %c16_150 = arith.constant 16 : index
    %c0_151 = arith.constant 0 : index
    %200 = vector.load %arg15[%c16_150, %c0_151] : memref<128x8xf32, #tpu.memory_space<vmem>>, vector<8x8xf32>
    tpu.vector_store %arg15[%c16_150, %c0_151], %199 {strides = array<i32>} : memref<128x8xf32, #tpu.memory_space<vmem>>, vector<8x8xf32>,
    %c96 = arith.constant 96 : index
    %c0_152 = arith.constant 0 : index
    %201 = tpu.strided_load %arg13[%c96, %c0_152] {strides = array<i32: 2, 1>} : memref<512x8xf32, #tpu.memory_space<vmem>>, vector<8x8xf32>
    %c24 = arith.constant 24 : index
    %c0_153 = arith.constant 0 : index
    %202 = vector.load %arg15[%c24, %c0_153] : memref<128x8xf32, #tpu.memory_space<vmem>>, vector<8x8xf32>
    tpu.vector_store %arg15[%c24, %c0_153], %201 {strides = array<i32>} : memref<128x8xf32, #tpu.memory_space<vmem>>, vector<8x8xf32>,
    %c128 = arith.constant 128 : index
    %c0_154 = arith.constant 0 : index
    %203 = tpu.strided_load %arg13[%c128, %c0_154] {strides = array<i32: 2, 1>} : memref<512x8xf32, #tpu.memory_space<vmem>>, vector<8x8xf32>
    %c32_155 = arith.constant 32 : index
    %c0_156 = arith.constant 0 : index
    %204 = vector.load %arg15[%c32_155, %c0_156] : memref<128x8xf32, #tpu.memory_space<vmem>>, vector<8x8xf32>
    tpu.vector_store %arg15[%c32_155, %c0_156], %203 {strides = array<i32>} : memref<128x8xf32, #tpu.memory_space<vmem>>, vector<8x8xf32>,
    %c160 = arith.constant 160 : index
    %c0_157 = arith.constant 0 : index
    %205 = tpu.strided_load %arg13[%c160, %c0_157] {strides = array<i32: 2, 1>} : memref<512x8xf32, #tpu.memory_space<vmem>>, vector<8x8xf32>
    %c40 = arith.constant 40 : index
    %c0_158 = arith.constant 0 : index
    %206 = vector.load %arg15[%c40, %c0_158] : memref<128x8xf32, #tpu.memory_space<vmem>>, vector<8x8xf32>
    tpu.vector_store %arg15[%c40, %c0_158], %205 {strides = array<i32>} : memref<128x8xf32, #tpu.memory_space<vmem>>, vector<8x8xf32>,
    %c192 = arith.constant 192 : index
    %c0_159 = arith.constant 0 : index
    %207 = tpu.strided_load %arg13[%c192, %c0_159] {strides = array<i32: 2, 1>} : memref<512x8xf32, #tpu.memory_space<vmem>>, vector<8x8xf32>
    %c48 = arith.constant 48 : index
    %c0_160 = arith.constant 0 : index
    %208 = vector.load %arg15[%c48, %c0_160] : memref<128x8xf32, #tpu.memory_space<vmem>>, vector<8x8xf32>
    tpu.vector_store %arg15[%c48, %c0_160], %207 {strides = array<i32>} : memref<128x8xf32, #tpu.memory_space<vmem>>, vector<8x8xf32>,
    %c224 = arith.constant 224 : index
    %c0_161 = arith.constant 0 : index
    %209 = tpu.strided_load %arg13[%c224, %c0_161] {strides = array<i32: 2, 1>} : memref<512x8xf32, #tpu.memory_space<vmem>>, vector<8x8xf32>
    %c56 = arith.constant 56 : index
    %c0_162 = arith.constant 0 : index
    %210 = vector.load %arg15[%c56, %c0_162] : memref<128x8xf32, #tpu.memory_space<vmem>>, vector<8x8xf32>
    tpu.vector_store %arg15[%c56, %c0_162], %209 {strides = array<i32>} : memref<128x8xf32, #tpu.memory_space<vmem>>, vector<8x8xf32>,
    %c256 = arith.constant 256 : index
    %c0_163 = arith.constant 0 : index
    %211 = tpu.strided_load %arg13[%c256, %c0_163] {strides = array<i32: 2, 1>} : memref<512x8xf32, #tpu.memory_space<vmem>>, vector<8x8xf32>
    %c64_164 = arith.constant 64 : index
    %c0_165 = arith.constant 0 : index
    %212 = vector.load %arg15[%c64_164, %c0_165] : memref<128x8xf32, #tpu.memory_space<vmem>>, vector<8x8xf32>
    tpu.vector_store %arg15[%c64_164, %c0_165], %211 {strides = array<i32>} : memref<128x8xf32, #tpu.memory_space<vmem>>, vector<8x8xf32>,
    %c288 = arith.constant 288 : index
    %c0_166 = arith.constant 0 : index
    %213 = tpu.strided_load %arg13[%c288, %c0_166] {strides = array<i32: 2, 1>} : memref<512x8xf32, #tpu.memory_space<vmem>>, vector<8x8xf32>
    %c72 = arith.constant 72 : index
    %c0_167 = arith.constant 0 : index
    %214 = vector.load %arg15[%c72, %c0_167] : memref<128x8xf32, #tpu.memory_space<vmem>>, vector<8x8xf32>
    tpu.vector_store %arg15[%c72, %c0_167], %213 {strides = array<i32>} : memref<128x8xf32, #tpu.memory_space<vmem>>, vector<8x8xf32>,
    %c320 = arith.constant 320 : index
    %c0_168 = arith.constant 0 : index
    %215 = tpu.strided_load %arg13[%c320, %c0_168] {strides = array<i32: 2, 1>} : memref<512x8xf32, #tpu.memory_space<vmem>>, vector<8x8xf32>
    %c80 = arith.constant 80 : index
    %c0_169 = arith.constant 0 : index
    %216 = vector.load %arg15[%c80, %c0_169] : memref<128x8xf32, #tpu.memory_space<vmem>>, vector<8x8xf32>
    tpu.vector_store %arg15[%c80, %c0_169], %215 {strides = array<i32>} : memref<128x8xf32, #tpu.memory_space<vmem>>, vector<8x8xf32>,
    %c352 = arith.constant 352 : index
    %c0_170 = arith.constant 0 : index
    %217 = tpu.strided_load %arg13[%c352, %c0_170] {strides = array<i32: 2, 1>} : memref<512x8xf32, #tpu.memory_space<vmem>>, vector<8x8xf32>
    %c88 = arith.constant 88 : index
    %c0_171 = arith.constant 0 : index
    %218 = vector.load %arg15[%c88, %c0_171] : memref<128x8xf32, #tpu.memory_space<vmem>>, vector<8x8xf32>
    tpu.vector_store %arg15[%c88, %c0_171], %217 {strides = array<i32>} : memref<128x8xf32, #tpu.memory_space<vmem>>, vector<8x8xf32>,
    %c384 = arith.constant 384 : index
    %c0_172 = arith.constant 0 : index
    %219 = tpu.strided_load %arg13[%c384, %c0_172] {strides = array<i32: 2, 1>} : memref<512x8xf32, #tpu.memory_space<vmem>>, vector<8x8xf32>
    %c96_173 = arith.constant 96 : index
    %c0_174 = arith.constant 0 : index
    %220 = vector.load %arg15[%c96_173, %c0_174] : memref<128x8xf32, #tpu.memory_space<vmem>>, vector<8x8xf32>
    tpu.vector_store %arg15[%c96_173, %c0_174], %219 {strides = array<i32>} : memref<128x8xf32, #tpu.memory_space<vmem>>, vector<8x8xf32>,
    %c416 = arith.constant 416 : index
    %c0_175 = arith.constant 0 : index
    %221 = tpu.strided_load %arg13[%c416, %c0_175] {strides = array<i32: 2, 1>} : memref<512x8xf32, #tpu.memory_space<vmem>>, vector<8x8xf32>
    %c104 = arith.constant 104 : index
    %c0_176 = arith.constant 0 : index
    %222 = vector.load %arg15[%c104, %c0_176] : memref<128x8xf32, #tpu.memory_space<vmem>>, vector<8x8xf32>
    tpu.vector_store %arg15[%c104, %c0_176], %221 {strides = array<i32>} : memref<128x8xf32, #tpu.memory_space<vmem>>, vector<8x8xf32>,
    %c448 = arith.constant 448 : index
    %c0_177 = arith.constant 0 : index
    %223 = tpu.strided_load %arg13[%c448, %c0_177] {strides = array<i32: 2, 1>} : memref<512x8xf32, #tpu.memory_space<vmem>>, vector<8x8xf32>
    %c112 = arith.constant 112 : index
    %c0_178 = arith.constant 0 : index
    %224 = vector.load %arg15[%c112, %c0_178] : memref<128x8xf32, #tpu.memory_space<vmem>>, vector<8x8xf32>
    tpu.vector_store %arg15[%c112, %c0_178], %223 {strides = array<i32>} : memref<128x8xf32, #tpu.memory_space<vmem>>, vector<8x8xf32>,
    %c480 = arith.constant 480 : index
    %c0_179 = arith.constant 0 : index
    %225 = tpu.strided_load %arg13[%c480, %c0_179] {strides = array<i32: 2, 1>} : memref<512x8xf32, #tpu.memory_space<vmem>>, vector<8x8xf32>
    %c120 = arith.constant 120 : index
    %c0_180 = arith.constant 0 : index
    %226 = vector.load %arg15[%c120, %c0_180] : memref<128x8xf32, #tpu.memory_space<vmem>>, vector<8x8xf32>
    tpu.vector_store %arg15[%c120, %c0_180], %225 {strides = array<i32>} : memref<128x8xf32, #tpu.memory_space<vmem>>, vector<8x8xf32>,
    %c0_181 = arith.constant 0 : index
    %c0_182 = arith.constant 0 : index
    %227 = vector.load %arg15[%c0_181, %c0_182] : memref<128x8xf32, #tpu.memory_space<vmem>>, vector<128x8xf32>
    %c0_183 = arith.constant 0 : index
    %c0_184 = arith.constant 0 : index
    %228 = vector.load %arg2[%c0_183, %c0_184] : memref<8x8xf32, #tpu.memory_space<vmem>>, vector<8x8xf32>
    %cst_185 = arith.constant dense<0.000000e+00> : vector<128x8xf32>
    %229 = tpu.matmul %227, %228, %cst_185 {dimension_numbers = #tpu.dot_dimension_numbers<[1], [0], [0], [1], [0, 0, 1, 1], [], []>} : vector<128x8xf32>, vector<8x8xf32>, vector<128x8xf32> -> vector<128x8xf32>
    %c0_186 = arith.constant 0 : index
    %c0_187 = arith.constant 0 : index
    %230 = vector.load %arg6[%c0_186, %c0_187] : memref<2x8xf32, #tpu.memory_space<vmem>>, vector<2x8xf32>
    %cst_188 = arith.constant 1.000000e+00 : f32
    %231 = vector.broadcast %cst_188 : f32 to vector<1x128xf32>
    %cst_189 = arith.constant dense<0.000000e+00> : vector<1x8xf32>
    %232 = tpu.matmul %231, %229, %cst_189 {dimension_numbers = #tpu.dot_dimension_numbers<[1], [0], [0], [1], [0, 0, 1, 1], [], []>} : vector<1x128xf32>, vector<128x8xf32>, vector<1x8xf32> -> vector<1x8xf32>
    %cst_190 = arith.constant 7.812500e-03 : f32
    %233 = vector.broadcast %cst_190 : f32 to vector<1x8xf32>
    %234 = arith.mulf %232, %233 : vector<1x8xf32>
    %235 = vector.broadcast %234 : vector<1x8xf32> to vector<128x8xf32>
    %236 = arith.subf %229, %235 : vector<128x8xf32>
    %237 = arith.mulf %236, %236 : vector<128x8xf32>
    %cst_191 = arith.constant dense<0.000000e+00> : vector<1x8xf32>
    %238 = tpu.matmul %231, %237, %cst_191 {dimension_numbers = #tpu.dot_dimension_numbers<[1], [0], [0], [1], [0, 0, 1, 1], [], []>} : vector<1x128xf32>, vector<128x8xf32>, vector<1x8xf32> -> vector<1x8xf32>
    %cst_192 = arith.constant 7.812500e-03 : f32
    %239 = vector.broadcast %cst_192 : f32 to vector<1x8xf32>
    %240 = arith.mulf %238, %239 : vector<1x8xf32>
    %241 = vector.extract_strided_slice %230 {offsets = [0, 0], sizes = [1, 8], strides = [1, 1]} : vector<2x8xf32> to vector<1x8xf32>
    %cst_193 = arith.constant 9.99999974E-6 : f32
    %242 = vector.broadcast %cst_193 : f32 to vector<1x8xf32>
    %243 = arith.addf %240, %242 : vector<1x8xf32>
    %244 = math.rsqrt %243 : vector<1x8xf32>
    %245 = arith.mulf %241, %244 : vector<1x8xf32>
    %246 = vector.broadcast %245 : vector<1x8xf32> to vector<128x8xf32>
    %247 = arith.mulf %236, %246 : vector<128x8xf32>
    %248 = vector.extract_strided_slice %230 {offsets = [1, 0], sizes = [1, 8], strides = [1, 1]} : vector<2x8xf32> to vector<1x8xf32>
    %249 = vector.broadcast %248 : vector<1x8xf32> to vector<128x8xf32>
    %250 = arith.addf %247, %249 : vector<128x8xf32>
    %cst_194 = arith.constant 0.000000e+00 : f32
    %251 = vector.broadcast %cst_194 : f32 to vector<128x8xf32>
    %252 = arith.maximumf %250, %251 : vector<128x8xf32>
    %c0_195 = arith.constant 0 : index
    %c0_196 = arith.constant 0 : index
    %253 = vector.load %arg14[%c0_195, %c0_196] : memref<128x8xf32, #tpu.memory_space<vmem>>, vector<128x8xf32>
    tpu.vector_store %arg14[%c0_195, %c0_196], %252 {strides = array<i32>} : memref<128x8xf32, #tpu.memory_space<vmem>>, vector<128x8xf32>,
    %254 = vector.extract_strided_slice %252 {offsets = [0, 0], sizes = [64, 8], strides = [1, 1]} : vector<128x8xf32> to vector<64x8xf32>
    %cst_197 = arith.constant dense<0.000000e+00> : vector<8x64xf32>
    %255 = tpu.matmul %4, %254, %cst_197 {dimension_numbers = #tpu.dot_dimension_numbers<[1], [1], [0], [0], [0, 0, 1, 0], [], []>} : vector<8x8xf32>, vector<64x8xf32>, vector<8x64xf32> -> vector<8x64xf32>
    %c0_198 = arith.constant 0 : index
    %c0_199 = arith.constant 0 : index
    %c0_200 = arith.constant 0 : index
    %256 = vector.load %arg10[%c0_198, %c0_199, %c0_200] : memref<2x8x64xf32, #tpu.memory_space<vmem>>, vector<1x8x64xf32>
    %257 = vector.shape_cast %256 : vector<1x8x64xf32> to vector<8x64xf32>
    %258 = vector.shape_cast %255 : vector<8x64xf32> to vector<1x8x64xf32>
    tpu.vector_store %arg10[%c0_198, %c0_199, %c0_200], %258 {strides = array<i32>} : memref<2x8x64xf32, #tpu.memory_space<vmem>>, vector<1x8x64xf32>,
    %259 = vector.extract_strided_slice %252 {offsets = [64, 0], sizes = [64, 8], strides = [1, 1]} : vector<128x8xf32> to vector<64x8xf32>
    %cst_201 = arith.constant dense<0.000000e+00> : vector<8x64xf32>
    %260 = tpu.matmul %4, %259, %cst_201 {dimension_numbers = #tpu.dot_dimension_numbers<[1], [1], [0], [0], [0, 0, 1, 0], [], []>} : vector<8x8xf32>, vector<64x8xf32>, vector<8x64xf32> -> vector<8x64xf32>
    %c1_202 = arith.constant 1 : index
    %c0_203 = arith.constant 0 : index
    %c0_204 = arith.constant 0 : index
    %261 = vector.load %arg10[%c1_202, %c0_203, %c0_204] : memref<2x8x64xf32, #tpu.memory_space<vmem>>, vector<1x8x64xf32>
    %262 = vector.shape_cast %261 : vector<1x8x64xf32> to vector<8x64xf32>
    %263 = vector.shape_cast %260 : vector<8x64xf32> to vector<1x8x64xf32>
    tpu.vector_store %arg10[%c1_202, %c0_203, %c0_204], %263 {strides = array<i32>} : memref<2x8x64xf32, #tpu.memory_space<vmem>>, vector<1x8x64xf32>,
    %c0_205 = arith.constant 0 : index
    %c0_206 = arith.constant 0 : index
    %264 = tpu.strided_load %arg14[%c0_205, %c0_206] {strides = array<i32: 2, 1>} : memref<128x8xf32, #tpu.memory_space<vmem>>, vector<4x8xf32>
    %c0_207 = arith.constant 0 : index
    %c0_208 = arith.constant 0 : index
    %265 = vector.load %arg15[%c0_207, %c0_208] : memref<128x8xf32, #tpu.memory_space<vmem>>, vector<4x8xf32>
    tpu.vector_store %arg15[%c0_207, %c0_208], %264 {strides = array<i32>} : memref<128x8xf32, #tpu.memory_space<vmem>>, vector<4x8xf32>,
    %c16_209 = arith.constant 16 : index
    %c0_210 = arith.constant 0 : index
    %266 = tpu.strided_load %arg14[%c16_209, %c0_210] {strides = array<i32: 2, 1>} : memref<128x8xf32, #tpu.memory_space<vmem>>, vector<4x8xf32>
    %c4_211 = arith.constant 4 : index
    %c0_212 = arith.constant 0 : index
    %267 = vector.load %arg15[%c4_211, %c0_212] : memref<128x8xf32, #tpu.memory_space<vmem>>, vector<4x8xf32>
    tpu.vector_store %arg15[%c4_211, %c0_212], %266 {strides = array<i32>} : memref<128x8xf32, #tpu.memory_space<vmem>>, vector<4x8xf32>,
    %c32_213 = arith.constant 32 : index
    %c0_214 = arith.constant 0 : index
    %268 = tpu.strided_load %arg14[%c32_213, %c0_214] {strides = array<i32: 2, 1>} : memref<128x8xf32, #tpu.memory_space<vmem>>, vector<4x8xf32>
    %c8_215 = arith.constant 8 : index
    %c0_216 = arith.constant 0 : index
    %269 = vector.load %arg15[%c8_215, %c0_216] : memref<128x8xf32, #tpu.memory_space<vmem>>, vector<4x8xf32>
    tpu.vector_store %arg15[%c8_215, %c0_216], %268 {strides = array<i32>} : memref<128x8xf32, #tpu.memory_space<vmem>>, vector<4x8xf32>,
    %c48_217 = arith.constant 48 : index
    %c0_218 = arith.constant 0 : index
    %270 = tpu.strided_load %arg14[%c48_217, %c0_218] {strides = array<i32: 2, 1>} : memref<128x8xf32, #tpu.memory_space<vmem>>, vector<4x8xf32>
    %c12 = arith.constant 12 : index
    %c0_219 = arith.constant 0 : index
    %271 = vector.load %arg15[%c12, %c0_219] : memref<128x8xf32, #tpu.memory_space<vmem>>, vector<4x8xf32>
    tpu.vector_store %arg15[%c12, %c0_219], %270 {strides = array<i32>} : memref<128x8xf32, #tpu.memory_space<vmem>>, vector<4x8xf32>,
    %c64_220 = arith.constant 64 : index
    %c0_221 = arith.constant 0 : index
    %272 = tpu.strided_load %arg14[%c64_220, %c0_221] {strides = array<i32: 2, 1>} : memref<128x8xf32, #tpu.memory_space<vmem>>, vector<4x8xf32>
    %c16_222 = arith.constant 16 : index
    %c0_223 = arith.constant 0 : index
    %273 = vector.load %arg15[%c16_222, %c0_223] : memref<128x8xf32, #tpu.memory_space<vmem>>, vector<4x8xf32>
    tpu.vector_store %arg15[%c16_222, %c0_223], %272 {strides = array<i32>} : memref<128x8xf32, #tpu.memory_space<vmem>>, vector<4x8xf32>,
    %c80_224 = arith.constant 80 : index
    %c0_225 = arith.constant 0 : index
    %274 = tpu.strided_load %arg14[%c80_224, %c0_225] {strides = array<i32: 2, 1>} : memref<128x8xf32, #tpu.memory_space<vmem>>, vector<4x8xf32>
    %c20 = arith.constant 20 : index
    %c0_226 = arith.constant 0 : index
    %275 = vector.load %arg15[%c20, %c0_226] : memref<128x8xf32, #tpu.memory_space<vmem>>, vector<4x8xf32>
    tpu.vector_store %arg15[%c20, %c0_226], %274 {strides = array<i32>} : memref<128x8xf32, #tpu.memory_space<vmem>>, vector<4x8xf32>,
    %c96_227 = arith.constant 96 : index
    %c0_228 = arith.constant 0 : index
    %276 = tpu.strided_load %arg14[%c96_227, %c0_228] {strides = array<i32: 2, 1>} : memref<128x8xf32, #tpu.memory_space<vmem>>, vector<4x8xf32>
    %c24_229 = arith.constant 24 : index
    %c0_230 = arith.constant 0 : index
    %277 = vector.load %arg15[%c24_229, %c0_230] : memref<128x8xf32, #tpu.memory_space<vmem>>, vector<4x8xf32>
    tpu.vector_store %arg15[%c24_229, %c0_230], %276 {strides = array<i32>} : memref<128x8xf32, #tpu.memory_space<vmem>>, vector<4x8xf32>,
    %c112_231 = arith.constant 112 : index
    %c0_232 = arith.constant 0 : index
    %278 = tpu.strided_load %arg14[%c112_231, %c0_232] {strides = array<i32: 2, 1>} : memref<128x8xf32, #tpu.memory_space<vmem>>, vector<4x8xf32>
    %c28 = arith.constant 28 : index
    %c0_233 = arith.constant 0 : index
    %279 = vector.load %arg15[%c28, %c0_233] : memref<128x8xf32, #tpu.memory_space<vmem>>, vector<4x8xf32>
    tpu.vector_store %arg15[%c28, %c0_233], %278 {strides = array<i32>} : memref<128x8xf32, #tpu.memory_space<vmem>>, vector<4x8xf32>,
    %c0_234 = arith.constant 0 : index
    %c0_235 = arith.constant 0 : index
    %280 = vector.load %arg15[%c0_234, %c0_235] : memref<128x8xf32, #tpu.memory_space<vmem>>, vector<32x8xf32>
    %c0_236 = arith.constant 0 : index
    %c0_237 = arith.constant 0 : index
    %281 = vector.load %arg3[%c0_236, %c0_237] : memref<8x8xf32, #tpu.memory_space<vmem>>, vector<8x8xf32>
    %cst_238 = arith.constant dense<0.000000e+00> : vector<32x8xf32>
    %282 = tpu.matmul %280, %281, %cst_238 {dimension_numbers = #tpu.dot_dimension_numbers<[1], [0], [0], [1], [0, 0, 1, 1], [], []>} : vector<32x8xf32>, vector<8x8xf32>, vector<32x8xf32> -> vector<32x8xf32>
    %c0_239 = arith.constant 0 : index
    %c0_240 = arith.constant 0 : index
    %283 = vector.load %arg7[%c0_239, %c0_240] : memref<2x8xf32, #tpu.memory_space<vmem>>, vector<2x8xf32>
    %cst_241 = arith.constant 1.000000e+00 : f32
    %284 = vector.broadcast %cst_241 : f32 to vector<1x32xf32>
    %cst_242 = arith.constant dense<0.000000e+00> : vector<1x8xf32>
    %285 = tpu.matmul %284, %282, %cst_242 {dimension_numbers = #tpu.dot_dimension_numbers<[1], [0], [0], [1], [0, 0, 1, 1], [], []>} : vector<1x32xf32>, vector<32x8xf32>, vector<1x8xf32> -> vector<1x8xf32>
    %cst_243 = arith.constant 3.125000e-02 : f32
    %286 = vector.broadcast %cst_243 : f32 to vector<1x8xf32>
    %287 = arith.mulf %285, %286 : vector<1x8xf32>
    %288 = vector.broadcast %287 : vector<1x8xf32> to vector<32x8xf32>
    %289 = arith.subf %282, %288 : vector<32x8xf32>
    %290 = arith.mulf %289, %289 : vector<32x8xf32>
    %cst_244 = arith.constant dense<0.000000e+00> : vector<1x8xf32>
    %291 = tpu.matmul %284, %290, %cst_244 {dimension_numbers = #tpu.dot_dimension_numbers<[1], [0], [0], [1], [0, 0, 1, 1], [], []>} : vector<1x32xf32>, vector<32x8xf32>, vector<1x8xf32> -> vector<1x8xf32>
    %cst_245 = arith.constant 3.125000e-02 : f32
    %292 = vector.broadcast %cst_245 : f32 to vector<1x8xf32>
    %293 = arith.mulf %291, %292 : vector<1x8xf32>
    %294 = vector.extract_strided_slice %283 {offsets = [0, 0], sizes = [1, 8], strides = [1, 1]} : vector<2x8xf32> to vector<1x8xf32>
    %cst_246 = arith.constant 9.99999974E-6 : f32
    %295 = vector.broadcast %cst_246 : f32 to vector<1x8xf32>
    %296 = arith.addf %293, %295 : vector<1x8xf32>
    %297 = math.rsqrt %296 : vector<1x8xf32>
    %298 = arith.mulf %294, %297 : vector<1x8xf32>
    %299 = vector.broadcast %298 : vector<1x8xf32> to vector<32x8xf32>
    %300 = arith.mulf %289, %299 : vector<32x8xf32>
    %301 = vector.extract_strided_slice %283 {offsets = [1, 0], sizes = [1, 8], strides = [1, 1]} : vector<2x8xf32> to vector<1x8xf32>
    %302 = vector.broadcast %301 : vector<1x8xf32> to vector<32x8xf32>
    %303 = arith.addf %300, %302 : vector<32x8xf32>
    %cst_247 = arith.constant 0.000000e+00 : f32
    %304 = vector.broadcast %cst_247 : f32 to vector<32x8xf32>
    %305 = arith.maximumf %303, %304 : vector<32x8xf32>
    %306 = vector.extract_strided_slice %305 {offsets = [0, 0], sizes = [16, 8], strides = [1, 1]} : vector<32x8xf32> to vector<16x8xf32>
    %cst_248 = arith.constant dense<0.000000e+00> : vector<8x16xf32>
    %307 = tpu.matmul %4, %306, %cst_248 {dimension_numbers = #tpu.dot_dimension_numbers<[1], [1], [0], [0], [0, 0, 1, 0], [], []>} : vector<8x8xf32>, vector<16x8xf32>, vector<8x16xf32> -> vector<8x16xf32>
    %c0_249 = arith.constant 0 : index
    %c0_250 = arith.constant 0 : index
    %c0_251 = arith.constant 0 : index
    %308 = vector.load %arg11[%c0_249, %c0_250, %c0_251] : memref<2x8x16xf32, #tpu.memory_space<vmem>>, vector<1x8x16xf32>
    %309 = vector.shape_cast %308 : vector<1x8x16xf32> to vector<8x16xf32>
    %310 = vector.shape_cast %307 : vector<8x16xf32> to vector<1x8x16xf32>
    tpu.vector_store %arg11[%c0_249, %c0_250, %c0_251], %310 {strides = array<i32>} : memref<2x8x16xf32, #tpu.memory_space<vmem>>, vector<1x8x16xf32>,
    %311 = vector.extract_strided_slice %305 {offsets = [16, 0], sizes = [16, 8], strides = [1, 1]} : vector<32x8xf32> to vector<16x8xf32>
    %cst_252 = arith.constant dense<0.000000e+00> : vector<8x16xf32>
    %312 = tpu.matmul %4, %311, %cst_252 {dimension_numbers = #tpu.dot_dimension_numbers<[1], [1], [0], [0], [0, 0, 1, 0], [], []>} : vector<8x8xf32>, vector<16x8xf32>, vector<8x16xf32> -> vector<8x16xf32>
    %c1_253 = arith.constant 1 : index
    %c0_254 = arith.constant 0 : index
    %c0_255 = arith.constant 0 : index
    %313 = vector.load %arg11[%c1_253, %c0_254, %c0_255] : memref<2x8x16xf32, #tpu.memory_space<vmem>>, vector<1x8x16xf32>
    %314 = vector.shape_cast %313 : vector<1x8x16xf32> to vector<8x16xf32>
    %315 = vector.shape_cast %312 : vector<8x16xf32> to vector<1x8x16xf32>
    tpu.vector_store %arg11[%c1_253, %c0_254, %c0_255], %315 {strides = array<i32>} : memref<2x8x16xf32, #tpu.memory_space<vmem>>, vector<1x8x16xf32>,
    %cst_256 = arith.constant 0.000000e+00 : f32
    %316 = vector.broadcast %cst_256 : f32 to vector<2x26x8xf32>
    %c0_257 = arith.constant 0 : index
    %c0_258 = arith.constant 0 : index
    %c0_259 = arith.constant 0 : index
    %317 = vector.load %arg16[%c0_257, %c0_258, %c0_259] : memref<2x26x8xf32, #tpu.memory_space<vmem>>, vector<2x26x8xf32>
    tpu.vector_store %arg16[%c0_257, %c0_258, %c0_259], %316 {strides = array<i32>} : memref<2x26x8xf32, #tpu.memory_space<vmem>>, vector<2x26x8xf32>,
    %318 = vector.extract_strided_slice %305 {offsets = [0, 0], sizes = [16, 8], strides = [1, 1]} : vector<32x8xf32> to vector<16x8xf32>
    %c0_260 = arith.constant 0 : index
    %c5_261 = arith.constant 5 : index
    %c0_262 = arith.constant 0 : index
    %319 = vector.load %arg16[%c0_260, %c5_261, %c0_262] : memref<2x26x8xf32, #tpu.memory_space<vmem>>, vector<1x16x8xf32>
    %320 = vector.shape_cast %319 : vector<1x16x8xf32> to vector<16x8xf32>
    %321 = vector.shape_cast %318 : vector<16x8xf32> to vector<1x16x8xf32>
    tpu.vector_store %arg16[%c0_260, %c5_261, %c0_262], %321 {strides = array<i32>} : memref<2x26x8xf32, #tpu.memory_space<vmem>>, vector<1x16x8xf32>,
    %322 = vector.extract_strided_slice %305 {offsets = [16, 0], sizes = [16, 8], strides = [1, 1]} : vector<32x8xf32> to vector<16x8xf32>
    %c1_263 = arith.constant 1 : index
    %c5_264 = arith.constant 5 : index
    %c0_265 = arith.constant 0 : index
    %323 = vector.load %arg16[%c1_263, %c5_264, %c0_265] : memref<2x26x8xf32, #tpu.memory_space<vmem>>, vector<1x16x8xf32>
    %324 = vector.shape_cast %323 : vector<1x16x8xf32> to vector<16x8xf32>
    %325 = vector.shape_cast %322 : vector<16x8xf32> to vector<1x16x8xf32>
    tpu.vector_store %arg16[%c1_263, %c5_264, %c0_265], %325 {strides = array<i32>} : memref<2x26x8xf32, #tpu.memory_space<vmem>>, vector<1x16x8xf32>,
    %326 = tpu.iota {dimensions = array<i32: 0>} : vector<16x1xi32>
    %c4_i32 = arith.constant 4 : i32
    %c0_i32_266 = arith.constant 0 : i32
    %327 = arith.cmpi eq, %c4_i32, %c0_i32_266 : i32
    %c1_i32_267 = arith.constant 1 : i32
    %328 = arith.select %327, %c1_i32_267, %c4_i32 : i32
    %329 = vector.broadcast %328 : i32 to vector<16x1xi32>
    %330 = arith.remsi %326, %329 : vector<16x1xi32>
    %c0_i32_268 = arith.constant 0 : i32
    %331 = vector.broadcast %c0_i32_268 : i32 to vector<16x1xi32>
    %332 = arith.cmpi ne, %330, %331 : vector<16x1xi32>
    %c0_i32_269 = arith.constant 0 : i32
    %333 = vector.broadcast %c0_i32_269 : i32 to vector<16x1xi32>
    %334 = arith.cmpi slt, %330, %333 : vector<16x1xi32>
    %c0_i32_270 = arith.constant 0 : i32
    %335 = arith.cmpi slt, %328, %c0_i32_270 : i32
    %336 = vector.broadcast %335 : i1 to vector<16x1xi1>
    %337 = vector.broadcast %336 : vector<16x1xi1> to vector<16x1xi1>
    %338 = arith.xori %334, %337 : vector<16x1xi1>
    %339 = arith.andi %338, %332 : vector<16x1xi1>
    %340 = vector.broadcast %328 : i32 to vector<16x1xi32>
    %341 = arith.addi %330, %340 : vector<16x1xi32>
    %342 = arith.select %339, %341, %330 : vector<16x1xi1>, vector<16x1xi32>
    %c0_i32_271 = arith.constant 0 : i32
    %343 = vector.broadcast %c0_i32_271 : i32 to vector<16x1xi32>
    %344 = arith.cmpi ne, %342, %343 : vector<16x1xi32>
    %345 = arith.extui %344 : vector<16x1xi1> to vector<16x1xi32>
    %346 = arith.sitofp %345 : vector<16x1xi32> to vector<16x1xf32>
    %c3_i32 = arith.constant 3 : i32
    %347 = vector.broadcast %c3_i32 : i32 to vector<16x1xi32>
    %348 = arith.cmpi ne, %342, %347 : vector<16x1xi32>
    %349 = arith.extui %348 : vector<16x1xi1> to vector<16x1xi32>
    %350 = arith.sitofp %349 : vector<16x1xi32> to vector<16x1xf32>
    %cst_272 = arith.constant 0.000000e+00 : f32
    %351 = vector.broadcast %cst_272 : f32 to vector<16x8xf32>
    %cst_273 = arith.constant 0.000000e+00 : f32
    %352 = vector.broadcast %cst_273 : f32 to vector<16x8xf32>
    %c0_274 = arith.constant 0 : index
    %c0_275 = arith.constant 0 : index
    %c0_276 = arith.constant 0 : index
    %353 = vector.load %arg16[%c0_274, %c0_275, %c0_276] : memref<2x26x8xf32, #tpu.memory_space<vmem>>, vector<1x16x8xf32>
    %354 = vector.shape_cast %353 : vector<1x16x8xf32> to vector<16x8xf32>
    %c0_277 = arith.constant 0 : index
    %c0_278 = arith.constant 0 : index
    %c0_279 = arith.constant 0 : index
    %355 = vector.load %arg4[%c0_277, %c0_278, %c0_279] : memref<9x8x8xf32, #tpu.memory_space<vmem>>, vector<1x8x8xf32>
    %356 = vector.shape_cast %355 : vector<1x8x8xf32> to vector<8x8xf32>
    %cst_280 = arith.constant dense<0.000000e+00> : vector<16x8xf32>
    %357 = tpu.matmul %354, %356, %cst_280 {dimension_numbers = #tpu.dot_dimension_numbers<[1], [0], [0], [1], [0, 0, 1, 1], [], []>} : vector<16x8xf32>, vector<8x8xf32>, vector<16x8xf32> -> vector<16x8xf32>
    %358 = arith.addf %352, %357 : vector<16x8xf32>
    %c0_281 = arith.constant 0 : index
    %c4_282 = arith.constant 4 : index
    %c0_283 = arith.constant 0 : index
    %359 = vector.load %arg16[%c0_281, %c4_282, %c0_283] : memref<2x26x8xf32, #tpu.memory_space<vmem>>, vector<1x16x8xf32>
    %360 = vector.shape_cast %359 : vector<1x16x8xf32> to vector<16x8xf32>
    %c3_284 = arith.constant 3 : index
    %c0_285 = arith.constant 0 : index
    %c0_286 = arith.constant 0 : index
    %361 = vector.load %arg4[%c3_284, %c0_285, %c0_286] : memref<9x8x8xf32, #tpu.memory_space<vmem>>, vector<1x8x8xf32>
    %362 = vector.shape_cast %361 : vector<1x8x8xf32> to vector<8x8xf32>
    %cst_287 = arith.constant dense<0.000000e+00> : vector<16x8xf32>
    %363 = tpu.matmul %360, %362, %cst_287 {dimension_numbers = #tpu.dot_dimension_numbers<[1], [0], [0], [1], [0, 0, 1, 1], [], []>} : vector<16x8xf32>, vector<8x8xf32>, vector<16x8xf32> -> vector<16x8xf32>
    %364 = arith.addf %358, %363 : vector<16x8xf32>
    %c0_288 = arith.constant 0 : index
    %c8_289 = arith.constant 8 : index
    %c0_290 = arith.constant 0 : index
    %365 = vector.load %arg16[%c0_288, %c8_289, %c0_290] : memref<2x26x8xf32, #tpu.memory_space<vmem>>, vector<1x16x8xf32>
    %366 = vector.shape_cast %365 : vector<1x16x8xf32> to vector<16x8xf32>
    %c6_291 = arith.constant 6 : index
    %c0_292 = arith.constant 0 : index
    %c0_293 = arith.constant 0 : index
    %367 = vector.load %arg4[%c6_291, %c0_292, %c0_293] : memref<9x8x8xf32, #tpu.memory_space<vmem>>, vector<1x8x8xf32>
    %368 = vector.shape_cast %367 : vector<1x8x8xf32> to vector<8x8xf32>
    %cst_294 = arith.constant dense<0.000000e+00> : vector<16x8xf32>
    %369 = tpu.matmul %366, %368, %cst_294 {dimension_numbers = #tpu.dot_dimension_numbers<[1], [0], [0], [1], [0, 0, 1, 1], [], []>} : vector<16x8xf32>, vector<8x8xf32>, vector<16x8xf32> -> vector<16x8xf32>
    %370 = arith.addf %364, %369 : vector<16x8xf32>
    %371 = vector.broadcast %346 : vector<16x1xf32> to vector<16x8xf32>
    %372 = arith.mulf %370, %371 : vector<16x8xf32>
    %373 = arith.addf %351, %372 : vector<16x8xf32>
    %cst_295 = arith.constant 0.000000e+00 : f32
    %374 = vector.broadcast %cst_295 : f32 to vector<16x8xf32>
    %c0_296 = arith.constant 0 : index
    %c1_297 = arith.constant 1 : index
    %c0_298 = arith.constant 0 : index
    %375 = vector.load %arg16[%c0_296, %c1_297, %c0_298] : memref<2x26x8xf32, #tpu.memory_space<vmem>>, vector<1x16x8xf32>
    %376 = vector.shape_cast %375 : vector<1x16x8xf32> to vector<16x8xf32>
    %c1_299 = arith.constant 1 : index
    %c0_300 = arith.constant 0 : index
    %c0_301 = arith.constant 0 : index
    %377 = vector.load %arg4[%c1_299, %c0_300, %c0_301] : memref<9x8x8xf32, #tpu.memory_space<vmem>>, vector<1x8x8xf32>
    %378 = vector.shape_cast %377 : vector<1x8x8xf32> to vector<8x8xf32>
    %cst_302 = arith.constant dense<0.000000e+00> : vector<16x8xf32>
    %379 = tpu.matmul %376, %378, %cst_302 {dimension_numbers = #tpu.dot_dimension_numbers<[1], [0], [0], [1], [0, 0, 1, 1], [], []>} : vector<16x8xf32>, vector<8x8xf32>, vector<16x8xf32> -> vector<16x8xf32>
    %380 = arith.addf %374, %379 : vector<16x8xf32>
    %c0_303 = arith.constant 0 : index
    %c5_304 = arith.constant 5 : index
    %c0_305 = arith.constant 0 : index
    %381 = vector.load %arg16[%c0_303, %c5_304, %c0_305] : memref<2x26x8xf32, #tpu.memory_space<vmem>>, vector<1x16x8xf32>
    %382 = vector.shape_cast %381 : vector<1x16x8xf32> to vector<16x8xf32>
    %c4_306 = arith.constant 4 : index
    %c0_307 = arith.constant 0 : index
    %c0_308 = arith.constant 0 : index
    %383 = vector.load %arg4[%c4_306, %c0_307, %c0_308] : memref<9x8x8xf32, #tpu.memory_space<vmem>>, vector<1x8x8xf32>
    %384 = vector.shape_cast %383 : vector<1x8x8xf32> to vector<8x8xf32>
    %cst_309 = arith.constant dense<0.000000e+00> : vector<16x8xf32>
    %385 = tpu.matmul %382, %384, %cst_309 {dimension_numbers = #tpu.dot_dimension_numbers<[1], [0], [0], [1], [0, 0, 1, 1], [], []>} : vector<16x8xf32>, vector<8x8xf32>, vector<16x8xf32> -> vector<16x8xf32>
    %386 = arith.addf %380, %385 : vector<16x8xf32>
    %c0_310 = arith.constant 0 : index
    %c9 = arith.constant 9 : index
    %c0_311 = arith.constant 0 : index
    %387 = vector.load %arg16[%c0_310, %c9, %c0_311] : memref<2x26x8xf32, #tpu.memory_space<vmem>>, vector<1x16x8xf32>
    %388 = vector.shape_cast %387 : vector<1x16x8xf32> to vector<16x8xf32>
    %c7_312 = arith.constant 7 : index
    %c0_313 = arith.constant 0 : index
    %c0_314 = arith.constant 0 : index
    %389 = vector.load %arg4[%c7_312, %c0_313, %c0_314] : memref<9x8x8xf32, #tpu.memory_space<vmem>>, vector<1x8x8xf32>
    %390 = vector.shape_cast %389 : vector<1x8x8xf32> to vector<8x8xf32>
    %cst_315 = arith.constant dense<0.000000e+00> : vector<16x8xf32>
    %391 = tpu.matmul %388, %390, %cst_315 {dimension_numbers = #tpu.dot_dimension_numbers<[1], [0], [0], [1], [0, 0, 1, 1], [], []>} : vector<16x8xf32>, vector<8x8xf32>, vector<16x8xf32> -> vector<16x8xf32>
    %392 = arith.addf %386, %391 : vector<16x8xf32>
    %393 = arith.addf %373, %392 : vector<16x8xf32>
    %cst_316 = arith.constant 0.000000e+00 : f32
    %394 = vector.broadcast %cst_316 : f32 to vector<16x8xf32>
    %c0_317 = arith.constant 0 : index
    %c2_318 = arith.constant 2 : index
    %c0_319 = arith.constant 0 : index
    %395 = vector.load %arg16[%c0_317, %c2_318, %c0_319] : memref<2x26x8xf32, #tpu.memory_space<vmem>>, vector<1x16x8xf32>
    %396 = vector.shape_cast %395 : vector<1x16x8xf32> to vector<16x8xf32>
    %c2_320 = arith.constant 2 : index
    %c0_321 = arith.constant 0 : index
    %c0_322 = arith.constant 0 : index
    %397 = vector.load %arg4[%c2_320, %c0_321, %c0_322] : memref<9x8x8xf32, #tpu.memory_space<vmem>>, vector<1x8x8xf32>
    %398 = vector.shape_cast %397 : vector<1x8x8xf32> to vector<8x8xf32>
    %cst_323 = arith.constant dense<0.000000e+00> : vector<16x8xf32>
    %399 = tpu.matmul %396, %398, %cst_323 {dimension_numbers = #tpu.dot_dimension_numbers<[1], [0], [0], [1], [0, 0, 1, 1], [], []>} : vector<16x8xf32>, vector<8x8xf32>, vector<16x8xf32> -> vector<16x8xf32>
    %400 = arith.addf %394, %399 : vector<16x8xf32>
    %c0_324 = arith.constant 0 : index
    %c6_325 = arith.constant 6 : index
    %c0_326 = arith.constant 0 : index
    %401 = vector.load %arg16[%c0_324, %c6_325, %c0_326] : memref<2x26x8xf32, #tpu.memory_space<vmem>>, vector<1x16x8xf32>
    %402 = vector.shape_cast %401 : vector<1x16x8xf32> to vector<16x8xf32>
    %c5_327 = arith.constant 5 : index
    %c0_328 = arith.constant 0 : index
    %c0_329 = arith.constant 0 : index
    %403 = vector.load %arg4[%c5_327, %c0_328, %c0_329] : memref<9x8x8xf32, #tpu.memory_space<vmem>>, vector<1x8x8xf32>
    %404 = vector.shape_cast %403 : vector<1x8x8xf32> to vector<8x8xf32>
    %cst_330 = arith.constant dense<0.000000e+00> : vector<16x8xf32>
    %405 = tpu.matmul %402, %404, %cst_330 {dimension_numbers = #tpu.dot_dimension_numbers<[1], [0], [0], [1], [0, 0, 1, 1], [], []>} : vector<16x8xf32>, vector<8x8xf32>, vector<16x8xf32> -> vector<16x8xf32>
    %406 = arith.addf %400, %405 : vector<16x8xf32>
    %c0_331 = arith.constant 0 : index
    %c10 = arith.constant 10 : index
    %c0_332 = arith.constant 0 : index
    %407 = vector.load %arg16[%c0_331, %c10, %c0_332] : memref<2x26x8xf32, #tpu.memory_space<vmem>>, vector<1x16x8xf32>
    %408 = vector.shape_cast %407 : vector<1x16x8xf32> to vector<16x8xf32>
    %c8_333 = arith.constant 8 : index
    %c0_334 = arith.constant 0 : index
    %c0_335 = arith.constant 0 : index
    %409 = vector.load %arg4[%c8_333, %c0_334, %c0_335] : memref<9x8x8xf32, #tpu.memory_space<vmem>>, vector<1x8x8xf32>
    %410 = vector.shape_cast %409 : vector<1x8x8xf32> to vector<8x8xf32>
    %cst_336 = arith.constant dense<0.000000e+00> : vector<16x8xf32>
    %411 = tpu.matmul %408, %410, %cst_336 {dimension_numbers = #tpu.dot_dimension_numbers<[1], [0], [0], [1], [0, 0, 1, 1], [], []>} : vector<16x8xf32>, vector<8x8xf32>, vector<16x8xf32> -> vector<16x8xf32>
    %412 = arith.addf %406, %411 : vector<16x8xf32>
    %413 = vector.broadcast %350 : vector<16x1xf32> to vector<16x8xf32>
    %414 = arith.mulf %412, %413 : vector<16x8xf32>
    %415 = arith.addf %393, %414 : vector<16x8xf32>
    %cst_337 = arith.constant 0.000000e+00 : f32
    %416 = vector.broadcast %cst_337 : f32 to vector<16x8xf32>
    %cst_338 = arith.constant 0.000000e+00 : f32
    %417 = vector.broadcast %cst_338 : f32 to vector<16x8xf32>
    %c1_339 = arith.constant 1 : index
    %c0_340 = arith.constant 0 : index
    %c0_341 = arith.constant 0 : index
    %418 = vector.load %arg16[%c1_339, %c0_340, %c0_341] : memref<2x26x8xf32, #tpu.memory_space<vmem>>, vector<1x16x8xf32>
    %419 = vector.shape_cast %418 : vector<1x16x8xf32> to vector<16x8xf32>
    %c0_342 = arith.constant 0 : index
    %c0_343 = arith.constant 0 : index
    %c0_344 = arith.constant 0 : index
    %420 = vector.load %arg4[%c0_342, %c0_343, %c0_344] : memref<9x8x8xf32, #tpu.memory_space<vmem>>, vector<1x8x8xf32>
    %421 = vector.shape_cast %420 : vector<1x8x8xf32> to vector<8x8xf32>
    %cst_345 = arith.constant dense<0.000000e+00> : vector<16x8xf32>
    %422 = tpu.matmul %419, %421, %cst_345 {dimension_numbers = #tpu.dot_dimension_numbers<[1], [0], [0], [1], [0, 0, 1, 1], [], []>} : vector<16x8xf32>, vector<8x8xf32>, vector<16x8xf32> -> vector<16x8xf32>
    %423 = arith.addf %417, %422 : vector<16x8xf32>
    %c1_346 = arith.constant 1 : index
    %c4_347 = arith.constant 4 : index
    %c0_348 = arith.constant 0 : index
    %424 = vector.load %arg16[%c1_346, %c4_347, %c0_348] : memref<2x26x8xf32, #tpu.memory_space<vmem>>, vector<1x16x8xf32>
    %425 = vector.shape_cast %424 : vector<1x16x8xf32> to vector<16x8xf32>
    %c3_349 = arith.constant 3 : index
    %c0_350 = arith.constant 0 : index
    %c0_351 = arith.constant 0 : index
    %426 = vector.load %arg4[%c3_349, %c0_350, %c0_351] : memref<9x8x8xf32, #tpu.memory_space<vmem>>, vector<1x8x8xf32>
    %427 = vector.shape_cast %426 : vector<1x8x8xf32> to vector<8x8xf32>
    %cst_352 = arith.constant dense<0.000000e+00> : vector<16x8xf32>
    %428 = tpu.matmul %425, %427, %cst_352 {dimension_numbers = #tpu.dot_dimension_numbers<[1], [0], [0], [1], [0, 0, 1, 1], [], []>} : vector<16x8xf32>, vector<8x8xf32>, vector<16x8xf32> -> vector<16x8xf32>
    %429 = arith.addf %423, %428 : vector<16x8xf32>
    %c1_353 = arith.constant 1 : index
    %c8_354 = arith.constant 8 : index
    %c0_355 = arith.constant 0 : index
    %430 = vector.load %arg16[%c1_353, %c8_354, %c0_355] : memref<2x26x8xf32, #tpu.memory_space<vmem>>, vector<1x16x8xf32>
    %431 = vector.shape_cast %430 : vector<1x16x8xf32> to vector<16x8xf32>
    %c6_356 = arith.constant 6 : index
    %c0_357 = arith.constant 0 : index
    %c0_358 = arith.constant 0 : index
    %432 = vector.load %arg4[%c6_356, %c0_357, %c0_358] : memref<9x8x8xf32, #tpu.memory_space<vmem>>, vector<1x8x8xf32>
    %433 = vector.shape_cast %432 : vector<1x8x8xf32> to vector<8x8xf32>
    %cst_359 = arith.constant dense<0.000000e+00> : vector<16x8xf32>
    %434 = tpu.matmul %431, %433, %cst_359 {dimension_numbers = #tpu.dot_dimension_numbers<[1], [0], [0], [1], [0, 0, 1, 1], [], []>} : vector<16x8xf32>, vector<8x8xf32>, vector<16x8xf32> -> vector<16x8xf32>
    %435 = arith.addf %429, %434 : vector<16x8xf32>
    %436 = vector.broadcast %346 : vector<16x1xf32> to vector<16x8xf32>
    %437 = arith.mulf %435, %436 : vector<16x8xf32>
    %438 = arith.addf %416, %437 : vector<16x8xf32>
    %cst_360 = arith.constant 0.000000e+00 : f32
    %439 = vector.broadcast %cst_360 : f32 to vector<16x8xf32>
    %c1_361 = arith.constant 1 : index
    %c1_362 = arith.constant 1 : index
    %c0_363 = arith.constant 0 : index
    %440 = vector.load %arg16[%c1_361, %c1_362, %c0_363] : memref<2x26x8xf32, #tpu.memory_space<vmem>>, vector<1x16x8xf32>
    %441 = vector.shape_cast %440 : vector<1x16x8xf32> to vector<16x8xf32>
    %c1_364 = arith.constant 1 : index
    %c0_365 = arith.constant 0 : index
    %c0_366 = arith.constant 0 : index
    %442 = vector.load %arg4[%c1_364, %c0_365, %c0_366] : memref<9x8x8xf32, #tpu.memory_space<vmem>>, vector<1x8x8xf32>
    %443 = vector.shape_cast %442 : vector<1x8x8xf32> to vector<8x8xf32>
    %cst_367 = arith.constant dense<0.000000e+00> : vector<16x8xf32>
    %444 = tpu.matmul %441, %443, %cst_367 {dimension_numbers = #tpu.dot_dimension_numbers<[1], [0], [0], [1], [0, 0, 1, 1], [], []>} : vector<16x8xf32>, vector<8x8xf32>, vector<16x8xf32> -> vector<16x8xf32>
    %445 = arith.addf %439, %444 : vector<16x8xf32>
    %c1_368 = arith.constant 1 : index
    %c5_369 = arith.constant 5 : index
    %c0_370 = arith.constant 0 : index
    %446 = vector.load %arg16[%c1_368, %c5_369, %c0_370] : memref<2x26x8xf32, #tpu.memory_space<vmem>>, vector<1x16x8xf32>
    %447 = vector.shape_cast %446 : vector<1x16x8xf32> to vector<16x8xf32>
    %c4_371 = arith.constant 4 : index
    %c0_372 = arith.constant 0 : index
    %c0_373 = arith.constant 0 : index
    %448 = vector.load %arg4[%c4_371, %c0_372, %c0_373] : memref<9x8x8xf32, #tpu.memory_space<vmem>>, vector<1x8x8xf32>
    %449 = vector.shape_cast %448 : vector<1x8x8xf32> to vector<8x8xf32>
    %cst_374 = arith.constant dense<0.000000e+00> : vector<16x8xf32>
    %450 = tpu.matmul %447, %449, %cst_374 {dimension_numbers = #tpu.dot_dimension_numbers<[1], [0], [0], [1], [0, 0, 1, 1], [], []>} : vector<16x8xf32>, vector<8x8xf32>, vector<16x8xf32> -> vector<16x8xf32>
    %451 = arith.addf %445, %450 : vector<16x8xf32>
    %c1_375 = arith.constant 1 : index
    %c9_376 = arith.constant 9 : index
    %c0_377 = arith.constant 0 : index
    %452 = vector.load %arg16[%c1_375, %c9_376, %c0_377] : memref<2x26x8xf32, #tpu.memory_space<vmem>>, vector<1x16x8xf32>
    %453 = vector.shape_cast %452 : vector<1x16x8xf32> to vector<16x8xf32>
    %c7_378 = arith.constant 7 : index
    %c0_379 = arith.constant 0 : index
    %c0_380 = arith.constant 0 : index
    %454 = vector.load %arg4[%c7_378, %c0_379, %c0_380] : memref<9x8x8xf32, #tpu.memory_space<vmem>>, vector<1x8x8xf32>
    %455 = vector.shape_cast %454 : vector<1x8x8xf32> to vector<8x8xf32>
    %cst_381 = arith.constant dense<0.000000e+00> : vector<16x8xf32>
    %456 = tpu.matmul %453, %455, %cst_381 {dimension_numbers = #tpu.dot_dimension_numbers<[1], [0], [0], [1], [0, 0, 1, 1], [], []>} : vector<16x8xf32>, vector<8x8xf32>, vector<16x8xf32> -> vector<16x8xf32>
    %457 = arith.addf %451, %456 : vector<16x8xf32>
    %458 = arith.addf %438, %457 : vector<16x8xf32>
    %cst_382 = arith.constant 0.000000e+00 : f32
    %459 = vector.broadcast %cst_382 : f32 to vector<16x8xf32>
    %c1_383 = arith.constant 1 : index
    %c2_384 = arith.constant 2 : index
    %c0_385 = arith.constant 0 : index
    %460 = vector.load %arg16[%c1_383, %c2_384, %c0_385] : memref<2x26x8xf32, #tpu.memory_space<vmem>>, vector<1x16x8xf32>
    %461 = vector.shape_cast %460 : vector<1x16x8xf32> to vector<16x8xf32>
    %c2_386 = arith.constant 2 : index
    %c0_387 = arith.constant 0 : index
    %c0_388 = arith.constant 0 : index
    %462 = vector.load %arg4[%c2_386, %c0_387, %c0_388] : memref<9x8x8xf32, #tpu.memory_space<vmem>>, vector<1x8x8xf32>
    %463 = vector.shape_cast %462 : vector<1x8x8xf32> to vector<8x8xf32>
    %cst_389 = arith.constant dense<0.000000e+00> : vector<16x8xf32>
    %464 = tpu.matmul %461, %463, %cst_389 {dimension_numbers = #tpu.dot_dimension_numbers<[1], [0], [0], [1], [0, 0, 1, 1], [], []>} : vector<16x8xf32>, vector<8x8xf32>, vector<16x8xf32> -> vector<16x8xf32>
    %465 = arith.addf %459, %464 : vector<16x8xf32>
    %c1_390 = arith.constant 1 : index
    %c6_391 = arith.constant 6 : index
    %c0_392 = arith.constant 0 : index
    %466 = vector.load %arg16[%c1_390, %c6_391, %c0_392] : memref<2x26x8xf32, #tpu.memory_space<vmem>>, vector<1x16x8xf32>
    %467 = vector.shape_cast %466 : vector<1x16x8xf32> to vector<16x8xf32>
    %c5_393 = arith.constant 5 : index
    %c0_394 = arith.constant 0 : index
    %c0_395 = arith.constant 0 : index
    %468 = vector.load %arg4[%c5_393, %c0_394, %c0_395] : memref<9x8x8xf32, #tpu.memory_space<vmem>>, vector<1x8x8xf32>
    %469 = vector.shape_cast %468 : vector<1x8x8xf32> to vector<8x8xf32>
    %cst_396 = arith.constant dense<0.000000e+00> : vector<16x8xf32>
    %470 = tpu.matmul %467, %469, %cst_396 {dimension_numbers = #tpu.dot_dimension_numbers<[1], [0], [0], [1], [0, 0, 1, 1], [], []>} : vector<16x8xf32>, vector<8x8xf32>, vector<16x8xf32> -> vector<16x8xf32>
    %471 = arith.addf %465, %470 : vector<16x8xf32>
    %c1_397 = arith.constant 1 : index
    %c10_398 = arith.constant 10 : index
    %c0_399 = arith.constant 0 : index
    %472 = vector.load %arg16[%c1_397, %c10_398, %c0_399] : memref<2x26x8xf32, #tpu.memory_space<vmem>>, vector<1x16x8xf32>
    %473 = vector.shape_cast %472 : vector<1x16x8xf32> to vector<16x8xf32>
    %c8_400 = arith.constant 8 : index
    %c0_401 = arith.constant 0 : index
    %c0_402 = arith.constant 0 : index
    %474 = vector.load %arg4[%c8_400, %c0_401, %c0_402] : memref<9x8x8xf32, #tpu.memory_space<vmem>>, vector<1x8x8xf32>
    %475 = vector.shape_cast %474 : vector<1x8x8xf32> to vector<8x8xf32>
    %cst_403 = arith.constant dense<0.000000e+00> : vector<16x8xf32>
    %476 = tpu.matmul %473, %475, %cst_403 {dimension_numbers = #tpu.dot_dimension_numbers<[1], [0], [0], [1], [0, 0, 1, 1], [], []>} : vector<16x8xf32>, vector<8x8xf32>, vector<16x8xf32> -> vector<16x8xf32>
    %477 = arith.addf %471, %476 : vector<16x8xf32>
    %478 = vector.broadcast %350 : vector<16x1xf32> to vector<16x8xf32>
    %479 = arith.mulf %477, %478 : vector<16x8xf32>
    %480 = arith.addf %458, %479 : vector<16x8xf32>
    %481 = tpu.concatenate %415, %480 in 0 : vector<16x8xf32>, vector<16x8xf32> -> vector<32x8xf32>
    %c0_404 = arith.constant 0 : index
    %c0_405 = arith.constant 0 : index
    %482 = vector.load %arg8[%c0_404, %c0_405] : memref<2x8xf32, #tpu.memory_space<vmem>>, vector<2x8xf32>
    %cst_406 = arith.constant 1.000000e+00 : f32
    %483 = vector.broadcast %cst_406 : f32 to vector<1x32xf32>
    %cst_407 = arith.constant dense<0.000000e+00> : vector<1x8xf32>
    %484 = tpu.matmul %483, %481, %cst_407 {dimension_numbers = #tpu.dot_dimension_numbers<[1], [0], [0], [1], [0, 0, 1, 1], [], []>} : vector<1x32xf32>, vector<32x8xf32>, vector<1x8xf32> -> vector<1x8xf32>
    %cst_408 = arith.constant 3.125000e-02 : f32
    %485 = vector.broadcast %cst_408 : f32 to vector<1x8xf32>
    %486 = arith.mulf %484, %485 : vector<1x8xf32>
    %487 = vector.broadcast %486 : vector<1x8xf32> to vector<32x8xf32>
    %488 = arith.subf %481, %487 : vector<32x8xf32>
    %489 = arith.mulf %488, %488 : vector<32x8xf32>
    %cst_409 = arith.constant dense<0.000000e+00> : vector<1x8xf32>
    %490 = tpu.matmul %483, %489, %cst_409 {dimension_numbers = #tpu.dot_dimension_numbers<[1], [0], [0], [1], [0, 0, 1, 1], [], []>} : vector<1x32xf32>, vector<32x8xf32>, vector<1x8xf32> -> vector<1x8xf32>
    %cst_410 = arith.constant 3.125000e-02 : f32
    %491 = vector.broadcast %cst_410 : f32 to vector<1x8xf32>
    %492 = arith.mulf %490, %491 : vector<1x8xf32>
    %493 = vector.extract_strided_slice %482 {offsets = [0, 0], sizes = [1, 8], strides = [1, 1]} : vector<2x8xf32> to vector<1x8xf32>
    %cst_411 = arith.constant 9.99999974E-6 : f32
    %494 = vector.broadcast %cst_411 : f32 to vector<1x8xf32>
    %495 = arith.addf %492, %494 : vector<1x8xf32>
    %496 = math.rsqrt %495 : vector<1x8xf32>
    %497 = arith.mulf %493, %496 : vector<1x8xf32>
    %498 = vector.broadcast %497 : vector<1x8xf32> to vector<32x8xf32>
    %499 = arith.mulf %488, %498 : vector<32x8xf32>
    %500 = vector.extract_strided_slice %482 {offsets = [1, 0], sizes = [1, 8], strides = [1, 1]} : vector<2x8xf32> to vector<1x8xf32>
    %501 = vector.broadcast %500 : vector<1x8xf32> to vector<32x8xf32>
    %502 = arith.addf %499, %501 : vector<32x8xf32>
    %cst_412 = arith.constant 0.000000e+00 : f32
    %503 = vector.broadcast %cst_412 : f32 to vector<32x8xf32>
    %504 = arith.maximumf %502, %503 : vector<32x8xf32>
    %505 = vector.extract_strided_slice %504 {offsets = [0, 0], sizes = [16, 8], strides = [1, 1]} : vector<32x8xf32> to vector<16x8xf32>
    %cst_413 = arith.constant dense<0.000000e+00> : vector<8x16xf32>
    %506 = tpu.matmul %4, %505, %cst_413 {dimension_numbers = #tpu.dot_dimension_numbers<[1], [1], [0], [0], [0, 0, 1, 0], [], []>} : vector<8x8xf32>, vector<16x8xf32>, vector<8x16xf32> -> vector<8x16xf32>
    %c0_414 = arith.constant 0 : index
    %c0_415 = arith.constant 0 : index
    %c0_416 = arith.constant 0 : index
    %507 = vector.load %arg12[%c0_414, %c0_415, %c0_416] : memref<2x8x16xf32, #tpu.memory_space<vmem>>, vector<1x8x16xf32>
    %508 = vector.shape_cast %507 : vector<1x8x16xf32> to vector<8x16xf32>
    %509 = vector.shape_cast %506 : vector<8x16xf32> to vector<1x8x16xf32>
    tpu.vector_store %arg12[%c0_414, %c0_415, %c0_416], %509 {strides = array<i32>} : memref<2x8x16xf32, #tpu.memory_space<vmem>>, vector<1x8x16xf32>,
    %510 = vector.extract_strided_slice %504 {offsets = [16, 0], sizes = [16, 8], strides = [1, 1]} : vector<32x8xf32> to vector<16x8xf32>
    %cst_417 = arith.constant dense<0.000000e+00> : vector<8x16xf32>
    %511 = tpu.matmul %4, %510, %cst_417 {dimension_numbers = #tpu.dot_dimension_numbers<[1], [1], [0], [0], [0, 0, 1, 0], [], []>} : vector<8x8xf32>, vector<16x8xf32>, vector<8x16xf32> -> vector<8x16xf32>
    %c1_418 = arith.constant 1 : index
    %c0_419 = arith.constant 0 : index
    %c0_420 = arith.constant 0 : index
    %512 = vector.load %arg12[%c1_418, %c0_419, %c0_420] : memref<2x8x16xf32, #tpu.memory_space<vmem>>, vector<1x8x16xf32>
    %513 = vector.shape_cast %512 : vector<1x8x16xf32> to vector<8x16xf32>
    %514 = vector.shape_cast %511 : vector<8x16xf32> to vector<1x8x16xf32>
    tpu.vector_store %arg12[%c1_418, %c0_419, %c0_420], %514 {strides = array<i32>} : memref<2x8x16xf32, #tpu.memory_space<vmem>>, vector<1x8x16xf32>,
    return
  }
}

</mosaic_0001>

<llo_original>
// kernel: _lambda_.1
$region0: #{_lambda_.1}
  #allocation0 [shape = 'u32[]', space=smem, size = 0x4, offset = 0x4, fixed_abs, tag = 'smem constant byte address 0x4 - core index']
  #allocation1 [shape = 'u32[144,128]{1,0:T(1,128)}', space=vmem, size = 0x12000, scoped, tag = 'internal scratch']
  #allocation2 [shape = 'f32[512,8]{1,0:T(8,128)}', space=vmem, size = 0x40000, scoped, tag = 'scratch operand']
  #allocation3 [shape = 'f32[128,8]{1,0:T(8,128)}', space=vmem, size = 0x10000, scoped, tag = 'scratch operand']
  #allocation4 [shape = 'f32[128,8]{1,0:T(8,128)}', space=vmem, size = 0x10000, scoped, tag = 'scratch operand']
  #allocation5 [shape = 'f32[2,26,8]{2,1,0:T(8,128)}', space=vmem, size = 0x8000, scoped, tag = 'scratch operand']
  %s0 = inlined_call_operand.vmem [shape: f32[2,290,4], index: 0, kind: input, shape index: {}]
  %s1 = inlined_call_operand.vmem [shape: f32[9,4,8], index: 1, kind: input, shape index: {}]
  %s2 = inlined_call_operand.vmem [shape: f32[8,8], index: 2, kind: input, shape index: {}]
  %s3 = inlined_call_operand.vmem [shape: f32[8,8], index: 3, kind: input, shape index: {}]
  %s4 = inlined_call_operand.vmem [shape: f32[9,8,8], index: 4, kind: input, shape index: {}]
  %s5 = inlined_call_operand.vmem [shape: f32[2,8], index: 5, kind: input, shape index: {}]
  %s6 = inlined_call_operand.vmem [shape: f32[2,8], index: 6, kind: input, shape index: {}]
  %s7 = inlined_call_operand.vmem [shape: f32[2,8], index: 7, kind: input, shape index: {}]
  %s8 = inlined_call_operand.vmem [shape: f32[2,8], index: 8, kind: input, shape index: {}]
  %s9 = inlined_call_operand.vmem [shape: f32[2,8,256], index: 9, kind: output, shape index: {0}]
  %s10 = inlined_call_operand.vmem [shape: f32[2,8,64], index: 10, kind: output, shape index: {1}]
  %s11 = inlined_call_operand.vmem [shape: f32[2,8,16], index: 11, kind: output, shape index: {2}]
  %s12 = inlined_call_operand.vmem [shape: f32[2,8,16], index: 12, kind: output, shape index: {3}]
  %13 = xla_tuple %s9, %s10, %s11, %s12
  %s14 = sld [smem:[#allocation0]]
  $region70: #{_lambda_.1} parent=0
    _
  %s16 = ssub.s32 1, %s14
  %s17 = scalar_select 0, %s16, %s14
  // Predicated region
  $region2: #{_lambda_.1} parent=0 // pred_check
    _
  $region3: #{_lambda_.1} parent=0 // pred_check_branch
    %19 = sbr.rel (0) target = $region5
  $region4: #{_lambda_.1} parent=0 // pred_region
    _
  $region5: #{_lambda_.1} parent=0 // pred_fallthru
    _
  // Predicated region
  $region6: #{_lambda_.1} parent=0 // pred_check
    _
  $region7: #{_lambda_.1} parent=0 // pred_check_branch
    %21 = sbr.rel (0) target = $region9
  $region8: #{_lambda_.1} parent=0 // pred_region
    _
  $region9: #{_lambda_.1} parent=0 // pred_fallthru
    _
  // Predicated region
  $region10: #{_lambda_.1} parent=0 // pred_check
    _
  $region11: #{_lambda_.1} parent=0 // pred_check_branch
    %23 = sbr.rel (0) target = $region13
  $region12: #{_lambda_.1} parent=0 // pred_region
    _
  $region13: #{_lambda_.1} parent=0 // pred_fallthru
    _
  // Predicated region
  $region14: #{_lambda_.1} parent=0 // pred_check
    _
  $region15: #{_lambda_.1} parent=0 // pred_check_branch
    %25 = sbr.rel (0) target = $region17
  $region16: #{_lambda_.1} parent=0 // pred_region
    _
  $region17: #{_lambda_.1} parent=0 // pred_fallthru
    _
  // Predicated region
  $region18: #{_lambda_.1} parent=0 // pred_check
    _
  $region19: #{_lambda_.1} parent=0 // pred_check_branch
    %27 = sbr.rel (0) target = $region21
  $region20: #{_lambda_.1} parent=0 // pred_region
    _
  $region21: #{_lambda_.1} parent=0 // pred_fallthru
    _
  // Predicated region
  $region22: #{_lambda_.1} parent=0 // pred_check
    _
  $region23: #{_lambda_.1} parent=0 // pred_check_branch
    %29 = sbr.rel (0) target = $region25
  $region24: #{_lambda_.1} parent=0 // pred_region
    _
  $region25: #{_lambda_.1} parent=0 // pred_fallthru
    _
  // Predicated region
  $region26: #{_lambda_.1} parent=0 // pred_check
    _
  $region27: #{_lambda_.1} parent=0 // pred_check_branch
    %31 = sbr.rel (0) target = $region29
  $region28: #{_lambda_.1} parent=0 // pred_region
    _
  $region29: #{_lambda_.1} parent=0 // pred_fallthru
    _
  // Predicated region
  $region30: #{_lambda_.1} parent=0 // pred_check
    _
  $region31: #{_lambda_.1} parent=0 // pred_check_branch
    %33 = sbr.rel (0) target = $region33
  $region32: #{_lambda_.1} parent=0 // pred_region
    _
  $region33: #{_lambda_.1} parent=0 // pred_fallthru
    _
  // Predicated region
  $region34: #{_lambda_.1} parent=0 // pred_check
    _
  $region35: #{_lambda_.1} parent=0 // pred_check_branch
    %35 = sbr.rel (0) target = $region37
  $region36: #{_lambda_.1} parent=0 // pred_region
    _
  $region37: #{_lambda_.1} parent=0 // pred_fallthru
    _
  %v36 = vlaneseq
  %v37 = vshrl.u32 %v36, 7
  %v38 = vlaneseq
  %v39 = vand.u32 %v38, 127
  %vm40 = vcmp.eq.s32.totalorder %v37, %v39
  %v41 = vsel %vm40, 1, 0
  %v42 = vcvt.s32.f32 %v41
  %v43 = vadd.s32 %v37, 8
  %v44 = vadd.s32 %v37, 16
  %v45 = vadd.s32 %v37, 24
  %v46 = vadd.s32 %v37, 32
  %v47 = vadd.s32 %v37, 40
  %v48 = vadd.s32 %v37, 48
  %v49 = vadd.s32 %v37, 56
  %v50 = vadd.s32 %v37, 64
  %v51 = vadd.s32 %v37, 72
  %v52 = vadd.s32 %v37, 80
  %v53 = vadd.s32 %v37, 88
  %v54 = vadd.s32 %v37, 96
  %v55 = vadd.s32 %v37, 104
  %v56 = vadd.s32 %v37, 112
  %v57 = vadd.s32 %v37, 120
  %v58 = vadd.s32 %v37, 128
  %v59 = vadd.s32 %v37, 136
  %v60 = vadd.s32 %v37, 144
  %v61 = vadd.s32 %v37, 152
  %v62 = vadd.s32 %v37, 160
  %v63 = vadd.s32 %v37, 168
  %v64 = vadd.s32 %v37, 176
  %v65 = vadd.s32 %v37, 184
  %v66 = vadd.s32 %v37, 192
  %v67 = vadd.s32 %v37, 200
  %v68 = vadd.s32 %v37, 208
  %v69 = vadd.s32 %v37, 216
  %v70 = vadd.s32 %v37, 224
  %v71 = vadd.s32 %v37, 232
  %v72 = vadd.s32 %v37, 240
  %v73 = vadd.s32 %v37, 248
  %vm74 = vcmp.lt.s32.totalorder %v37, 0
  %v75 = vsub.s32 0, %v37
  %v76 = vsel %vm74, %v75, %v37
  %v77 = vshrl.u32 %v76, 4
  %v78 = vand.u32 %v76, 15
  %v79 = vsub.s32 0, %v78
  %v80 = vsel %vm74, %v79, %v78
  %vm81 = vcmp.lt.s32.totalorder %v43, 0
  %v82 = vsub.s32 0, %v43
  %v83 = vsel %vm81, %v82, %v43
  %v84 = vshrl.u32 %v83, 4
  %v85 = vand.u32 %v83, 15
  %v86 = vsub.s32 0, %v85
  %v87 = vsel %vm81, %v86, %v85
  %vm88 = vcmp.lt.s32.totalorder %v44, 0
  %v89 = vsub.s32 0, %v44
  %v90 = vsel %vm88, %v89, %v44
  %v91 = vshrl.u32 %v90, 4
  %v92 = vand.u32 %v90, 15
  %v93 = vsub.s32 0, %v92
  %v94 = vsel %vm88, %v93, %v92
  %vm95 = vcmp.lt.s32.totalorder %v45, 0
  %v96 = vsub.s32 0, %v45
  %v97 = vsel %vm95, %v96, %v45
  %v98 = vshrl.u32 %v97, 4
  %v99 = vand.u32 %v97, 15
  %v100 = vsub.s32 0, %v99
  %v101 = vsel %vm95, %v100, %v99
  %vm102 = vcmp.lt.s32.totalorder %v46, 0
  %v103 = vsub.s32 0, %v46
  %v104 = vsel %vm102, %v103, %v46
  %v105 = vshrl.u32 %v104, 4
  %v106 = vand.u32 %v104, 15
  %v107 = vsub.s32 0, %v106
  %v108 = vsel %vm102, %v107, %v106
  %vm109 = vcmp.lt.s32.totalorder %v47, 0
  %v110 = vsub.s32 0, %v47
  %v111 = vsel %vm109, %v110, %v47
  %v112 = vshrl.u32 %v111, 4
  %v113 = vand.u32 %v111, 15
  %v114 = vsub.s32 0, %v113
  %v115 = vsel %vm109, %v114, %v113
  %vm116 = vcmp.lt.s32.totalorder %v48, 0
  %v117 = vsub.s32 0, %v48
  %v118 = vsel %vm116, %v117, %v48
  %v119 = vshrl.u32 %v118, 4
  %v120 = vand.u32 %v118, 15
  %v121 = vsub.s32 0, %v120
  %v122 = vsel %vm116, %v121, %v120
  %vm123 = vcmp.lt.s32.totalorder %v49, 0
  %v124 = vsub.s32 0, %v49
  %v125 = vsel %vm123, %v124, %v49
  %v126 = vshrl.u32 %v125, 4
  %v127 = vand.u32 %v125, 15
  %v128 = vsub.s32 0, %v127
  %v129 = vsel %vm123, %v128, %v127
  %vm130 = vcmp.lt.s32.totalorder %v50, 0
  %v131 = vsub.s32 0, %v50
  %v132 = vsel %vm130, %v131, %v50
  %v133 = vshrl.u32 %v132, 4
  %v134 = vand.u32 %v132, 15
  %v135 = vsub.s32 0, %v134
  %v136 = vsel %vm130, %v135, %v134
  %vm137 = vcmp.lt.s32.totalorder %v51, 0
  %v138 = vsub.s32 0, %v51
  %v139 = vsel %vm137, %v138, %v51
  %v140 = vshrl.u32 %v139, 4
  %v141 = vand.u32 %v139, 15
  %v142 = vsub.s32 0, %v141
  %v143 = vsel %vm137, %v142, %v141
  %vm144 = vcmp.lt.s32.totalorder %v52, 0
  %v145 = vsub.s32 0, %v52
  %v146 = vsel %vm144, %v145, %v52
  %v147 = vshrl.u32 %v146, 4
  %v148 = vand.u32 %v146, 15
  %v149 = vsub.s32 0, %v148
  %v150 = vsel %vm144, %v149, %v148
  %vm151 = vcmp.lt.s32.totalorder %v53, 0
  %v152 = vsub.s32 0, %v53
  %v153 = vsel %vm151, %v152, %v53
  %v154 = vshrl.u32 %v153, 4
  %v155 = vand.u32 %v153, 15
  %v156 = vsub.s32 0, %v155
  %v157 = vsel %vm151, %v156, %v155
  %vm158 = vcmp.lt.s32.totalorder %v54, 0
  %v159 = vsub.s32 0, %v54
  %v160 = vsel %vm158, %v159, %v54
  %v161 = vshrl.u32 %v160, 4
  %v162 = vand.u32 %v160, 15
  %v163 = vsub.s32 0, %v162
  %v164 = vsel %vm158, %v163, %v162
  %vm165 = vcmp.lt.s32.totalorder %v55, 0
  %v166 = vsub.s32 0, %v55
  %v167 = vsel %vm165, %v166, %v55
  %v168 = vshrl.u32 %v167, 4
  %v169 = vand.u32 %v167, 15
  %v170 = vsub.s32 0, %v169
  %v171 = vsel %vm165, %v170, %v169
  %vm172 = vcmp.lt.s32.totalorder %v56, 0
  %v173 = vsub.s32 0, %v56
  %v174 = vsel %vm172, %v173, %v56
  %v175 = vshrl.u32 %v174, 4
  %v176 = vand.u32 %v174, 15
  %v177 = vsub.s32 0, %v176
  %v178 = vsel %vm172, %v177, %v176
  %vm179 = vcmp.lt.s32.totalorder %v57, 0
  %v180 = vsub.s32 0, %v57
  %v181 = vsel %vm179, %v180, %v57
  %v182 = vshrl.u32 %v181, 4
  %v183 = vand.u32 %v181, 15
  %v184 = vsub.s32 0, %v183
  %v185 = vsel %vm179, %v184, %v183
  %vm186 = vcmp.lt.s32.totalorder %v58, 0
  %v187 = vsub.s32 0, %v58
  %v188 = vsel %vm186, %v187, %v58
  %v189 = vshrl.u32 %v188, 4
  %v190 = vand.u32 %v188, 15
  %v191 = vsub.s32 0, %v190
  %v192 = vsel %vm186, %v191, %v190
  %vm193 = vcmp.lt.s32.totalorder %v59, 0
  %v194 = vsub.s32 0, %v59
  %v195 = vsel %vm193, %v194, %v59
  %v196 = vshrl.u32 %v195, 4
  %v197 = vand.u32 %v195, 15
  %v198 = vsub.s32 0, %v197
  %v199 = vsel %vm193, %v198, %v197
  %vm200 = vcmp.lt.s32.totalorder %v60, 0
  %v201 = vsub.s32 0, %v60
  %v202 = vsel %vm200, %v201, %v60
  %v203 = vshrl.u32 %v202, 4
  %v204 = vand.u32 %v202, 15
  %v205 = vsub.s32 0, %v204
  %v206 = vsel %vm200, %v205, %v204
  %vm207 = vcmp.lt.s32.totalorder %v61, 0
  %v208 = vsub.s32 0, %v61
  %v209 = vsel %vm207, %v208, %v61
  %v210 = vshrl.u32 %v209, 4
  %v211 = vand.u32 %v209, 15
  %v212 = vsub.s32 0, %v211
  %v213 = vsel %vm207, %v212, %v211
  %vm214 = vcmp.lt.s32.totalorder %v62, 0
  %v215 = vsub.s32 0, %v62
  %v216 = vsel %vm214, %v215, %v62
  %v217 = vshrl.u32 %v216, 4
  %v218 = vand.u32 %v216, 15
  %v219 = vsub.s32 0, %v218
  %v220 = vsel %vm214, %v219, %v218
  %vm221 = vcmp.lt.s32.totalorder %v63, 0
  %v222 = vsub.s32 0, %v63
  %v223 = vsel %vm221, %v222, %v63
  %v224 = vshrl.u32 %v223, 4
  %v225 = vand.u32 %v223, 15
  %v226 = vsub.s32 0, %v225
  %v227 = vsel %vm221, %v226, %v225
  %vm228 = vcmp.lt.s32.totalorder %v64, 0
  %v229 = vsub.s32 0, %v64
  %v230 = vsel %vm228, %v229, %v64
  %v231 = vshrl.u32 %v230, 4
  %v232 = vand.u32 %v230, 15
  %v233 = vsub.s32 0, %v232
  %v234 = vsel %vm228, %v233, %v232
  %vm235 = vcmp.lt.s32.totalorder %v65, 0
  %v236 = vsub.s32 0, %v65
  %v237 = vsel %vm235, %v236, %v65
  %v238 = vshrl.u32 %v237, 4
  %v239 = vand.u32 %v237, 15
  %v240 = vsub.s32 0, %v239
  %v241 = vsel %vm235, %v240, %v239
  %vm242 = vcmp.lt.s32.totalorder %v66, 0
  %v243 = vsub.s32 0, %v66
  %v244 = vsel %vm242, %v243, %v66
  %v245 = vshrl.u32 %v244, 4
  %v246 = vand.u32 %v244, 15
  %v247 = vsub.s32 0, %v246
  %v248 = vsel %vm242, %v247, %v246
  %vm249 = vcmp.lt.s32.totalorder %v67, 0
  %v250 = vsub.s32 0, %v67
  %v251 = vsel %vm249, %v250, %v67
  %v252 = vshrl.u32 %v251, 4
  %v253 = vand.u32 %v251, 15
  %v254 = vsub.s32 0, %v253
  %v255 = vsel %vm249, %v254, %v253
  %vm256 = vcmp.lt.s32.totalorder %v68, 0
  %v257 = vsub.s32 0, %v68
  %v258 = vsel %vm256, %v257, %v68
  %v259 = vshrl.u32 %v258, 4
  %v260 = vand.u32 %v258, 15
  %v261 = vsub.s32 0, %v260
  %v262 = vsel %vm256, %v261, %v260
  %vm263 = vcmp.lt.s32.totalorder %v69, 0
  %v264 = vsub.s32 0, %v69
  %v265 = vsel %vm263, %v264, %v69
  %v266 = vshrl.u32 %v265, 4
  %v267 = vand.u32 %v265, 15
  %v268 = vsub.s32 0, %v267
  %v269 = vsel %vm263, %v268, %v267
  %vm270 = vcmp.lt.s32.totalorder %v70, 0
  %v271 = vsub.s32 0, %v70
  %v272 = vsel %vm270, %v271, %v70
  %v273 = vshrl.u32 %v272, 4
  %v274 = vand.u32 %v272, 15
  %v275 = vsub.s32 0, %v274
  %v276 = vsel %vm270, %v275, %v274
  %vm277 = vcmp.lt.s32.totalorder %v71, 0
  %v278 = vsub.s32 0, %v71
  %v279 = vsel %vm277, %v278, %v71
  %v280 = vshrl.u32 %v279, 4
  %v281 = vand.u32 %v279, 15
  %v282 = vsub.s32 0, %v281
  %v283 = vsel %vm277, %v282, %v281
  %vm284 = vcmp.lt.s32.totalorder %v72, 0
  %v285 = vsub.s32 0, %v72
  %v286 = vsel %vm284, %v285, %v72
  %v287 = vshrl.u32 %v286, 4
  %v288 = vand.u32 %v286, 15
  %v289 = vsub.s32 0, %v288
  %v290 = vsel %vm284, %v289, %v288
  %vm291 = vcmp.lt.s32.totalorder %v73, 0
  %v292 = vsub.s32 0, %v73
  %v293 = vsel %vm291, %v292, %v73
  %v294 = vshrl.u32 %v293, 4
  %v295 = vand.u32 %v293, 15
  %v296 = vsub.s32 0, %v295
  %v297 = vsel %vm291, %v296, %v295
  %vm298 = vcmp.ne.s32.totalorder %v80, 0
  %vm299 = vcmp.ne.s32.totalorder %v87, 0
  %vm300 = vcmp.ne.s32.totalorder %v94, 0
  %vm301 = vcmp.ne.s32.totalorder %v101, 0
  %vm302 = vcmp.ne.s32.totalorder %v108, 0
  %vm303 = vcmp.ne.s32.totalorder %v115, 0
  %vm304 = vcmp.ne.s32.totalorder %v122, 0
  %vm305 = vcmp.ne.s32.totalorder %v129, 0
  %vm306 = vcmp.ne.s32.totalorder %v136, 0
  %vm307 = vcmp.ne.s32.totalorder %v143, 0
  %vm308 = vcmp.ne.s32.totalorder %v150, 0
  %vm309 = vcmp.ne.s32.totalorder %v157, 0
  %vm310 = vcmp.ne.s32.totalorder %v164, 0
  %vm311 = vcmp.ne.s32.totalorder %v171, 0
  %vm312 = vcmp.ne.s32.totalorder %v178, 0
  %vm313 = vcmp.ne.s32.totalorder %v185, 0
  %vm314 = vcmp.ne.s32.totalorder %v192, 0
  %vm315 = vcmp.ne.s32.totalorder %v199, 0
  %vm316 = vcmp.ne.s32.totalorder %v206, 0
  %vm317 = vcmp.ne.s32.totalorder %v213, 0
  %vm318 = vcmp.ne.s32.totalorder %v220, 0
  %vm319 = vcmp.ne.s32.totalorder %v227, 0
  %vm320 = vcmp.ne.s32.totalorder %v234, 0
  %vm321 = vcmp.ne.s32.totalorder %v241, 0
  %vm322 = vcmp.ne.s32.totalorder %v248, 0
  %vm323 = vcmp.ne.s32.totalorder %v255, 0
  %vm324 = vcmp.ne.s32.totalorder %v262, 0
  %vm325 = vcmp.ne.s32.totalorder %v269, 0
  %vm326 = vcmp.ne.s32.totalorder %v276, 0
  %vm327 = vcmp.ne.s32.totalorder %v283, 0
  %vm328 = vcmp.ne.s32.totalorder %v290, 0
  %vm329 = vcmp.ne.s32.totalorder %v297, 0
  %vm330 = vcmp.lt.s32.totalorder %v80, 0
  %vm331 = vcmp.lt.s32.totalorder %v87, 0
  %vm332 = vcmp.lt.s32.totalorder %v94, 0
  %vm333 = vcmp.lt.s32.totalorder %v101, 0
  %vm334 = vcmp.lt.s32.totalorder %v108, 0
  %vm335 = vcmp.lt.s32.totalorder %v115, 0
  %vm336 = vcmp.lt.s32.totalorder %v122, 0
  %vm337 = vcmp.lt.s32.totalorder %v129, 0
  %vm338 = vcmp.lt.s32.totalorder %v136, 0
  %vm339 = vcmp.lt.s32.totalorder %v143, 0
  %vm340 = vcmp.lt.s32.totalorder %v150, 0
  %vm341 = vcmp.lt.s32.totalorder %v157, 0
  %vm342 = vcmp.lt.s32.totalorder %v164, 0
  %vm343 = vcmp.lt.s32.totalorder %v171, 0
  %vm344 = vcmp.lt.s32.totalorder %v178, 0
  %vm345 = vcmp.lt.s32.totalorder %v185, 0
  %vm346 = vcmp.lt.s32.totalorder %v192, 0
  %vm347 = vcmp.lt.s32.totalorder %v199, 0
  %vm348 = vcmp.lt.s32.totalorder %v206, 0
  %vm349 = vcmp.lt.s32.totalorder %v213, 0
  %vm350 = vcmp.lt.s32.totalorder %v220, 0
  %vm351 = vcmp.lt.s32.totalorder %v227, 0
  %vm352 = vcmp.lt.s32.totalorder %v234, 0
  %vm353 = vcmp.lt.s32.totalorder %v241, 0
  %vm354 = vcmp.lt.s32.totalorder %v248, 0
  %vm355 = vcmp.lt.s32.totalorder %v255, 0
  %vm356 = vcmp.lt.s32.totalorder %v262, 0
  %vm357 = vcmp.lt.s32.totalorder %v269, 0
  %vm358 = vcmp.lt.s32.totalorder %v276, 0
  %vm359 = vcmp.lt.s32.totalorder %v283, 0
  %vm360 = vcmp.lt.s32.totalorder %v290, 0
  %vm361 = vcmp.lt.s32.totalorder %v297, 0
  %vm362 = vmand %vm330, %vm298
  %vm363 = vmand %vm331, %vm299
  %vm364 = vmand %vm332, %vm300
  %vm365 = vmand %vm333, %vm301
  %vm366 = vmand %vm334, %vm302
  %vm367 = vmand %vm335, %vm303
  %vm368 = vmand %vm336, %vm304
  %vm369 = vmand %vm337, %vm305
  %vm370 = vmand %vm338, %vm306
  %vm371 = vmand %vm339, %vm307
  %vm372 = vmand %vm340, %vm308
  %vm373 = vmand %vm341, %vm309
  %vm374 = vmand %vm342, %vm310
  %vm375 = vmand %vm343, %vm311
  %vm376 = vmand %vm344, %vm312
  %vm377 = vmand %vm345, %vm313
  %vm378 = vmand %vm346, %vm314
  %vm379 = vmand %vm347, %vm315
  %vm380 = vmand %vm348, %vm316
  %vm381 = vmand %vm349, %vm317
  %vm382 = vmand %vm350, %vm318
  %vm383 = vmand %vm351, %vm319
  %vm384 = vmand %vm352, %vm320
  %vm385 = vmand %vm353, %vm321
  %vm386 = vmand %vm354, %vm322
  %vm387 = vmand %vm355, %vm323
  %vm388 = vmand %vm356, %vm324
  %vm389 = vmand %vm357, %vm325
  %vm390 = vmand %vm358, %vm326
  %vm391 = vmand %vm359, %vm327
  %vm392 = vmand %vm360, %vm328
  %vm393 = vmand %vm361, %vm329
  %v394 = vadd.s32 %v80, 16
  %v395 = vadd.s32 %v87, 16
  %v396 = vadd.s32 %v94, 16
  %v397 = vadd.s32 %v101, 16
  %v398 = vadd.s32 %v108, 16
  %v399 = vadd.s32 %v115, 16
  %v400 = vadd.s32 %v122, 16
  %v401 = vadd.s32 %v129, 16
  %v402 = vadd.s32 %v136, 16
  %v403 = vadd.s32 %v143, 16
  %v404 = vadd.s32 %v150, 16
  %v405 = vadd.s32 %v157, 16
  %v406 = vadd.s32 %v164, 16
  %v407 = vadd.s32 %v171, 16
  %v408 = vadd.s32 %v178, 16
  %v409 = vadd.s32 %v185, 16
  %v410 = vadd.s32 %v192, 16
  %v411 = vadd.s32 %v199, 16
  %v412 = vadd.s32 %v206, 16
  %v413 = vadd.s32 %v213, 16
  %v414 = vadd.s32 %v220, 16
  %v415 = vadd.s32 %v227, 16
  %v416 = vadd.s32 %v234, 16
  %v417 = vadd.s32 %v241, 16
  %v418 = vadd.s32 %v248, 16
  %v419 = vadd.s32 %v255, 16
  %v420 = vadd.s32 %v262, 16
  %v421 = vadd.s32 %v269, 16
  %v422 = vadd.s32 %v276, 16
  %v423 = vadd.s32 %v283, 16
  %v424 = vadd.s32 %v290, 16
  %v425 = vadd.s32 %v297, 16
  %v426 = vsel %vm362, %v394, %v80
  %v427 = vsel %vm363, %v395, %v87
  %v428 = vsel %vm364, %v396, %v94
  %v429 = vsel %vm365, %v397, %v101
  %v430 = vsel %vm366, %v398, %v108
  %v431 = vsel %vm367, %v399, %v115
  %v432 = vsel %vm368, %v400, %v122
  %v433 = vsel %vm369, %v401, %v129
  %v434 = vsel %vm370, %v402, %v136
  %v435 = vsel %vm371, %v403, %v143
  %v436 = vsel %vm372, %v404, %v150
  %v437 = vsel %vm373, %v405, %v157
  %v438 = vsel %vm374, %v406, %v164
  %v439 = vsel %vm375, %v407, %v171
  %v440 = vsel %vm376, %v408, %v178
  %v441 = vsel %vm377, %v409, %v185
  %v442 = vsel %vm378, %v410, %v192
  %v443 = vsel %vm379, %v411, %v199
  %v444 = vsel %vm380, %v412, %v206
  %v445 = vsel %vm381, %v413, %v213
  %v446 = vsel %vm382, %v414, %v220
  %v447 = vsel %vm383, %v415, %v227
  %v448 = vsel %vm384, %v416, %v234
  %v449 = vsel %vm385, %v417, %v241
  %v450 = vsel %vm386, %v418, %v248
  %v451 = vsel %vm387, %v419, %v255
  %v452 = vsel %vm388, %v420, %v262
  %v453 = vsel %vm389, %v421, %v269
  %v454 = vsel %vm390, %v422, %v276
  %v455 = vsel %vm391, %v423, %v283
  %v456 = vsel %vm392, %v424, %v290
  %v457 = vsel %vm393, %v425, %v297
  %vm458 = vcmp.ne.s32.totalorder %v426, 0
  %vm459 = vcmp.ne.s32.totalorder %v427, 0
  %vm460 = vcmp.ne.s32.totalorder %v428, 0
  %vm461 = vcmp.ne.s32.totalorder %v429, 0
  %vm462 = vcmp.ne.s32.totalorder %v430, 0
  %vm463 = vcmp.ne.s32.totalorder %v431, 0
  %vm464 = vcmp.ne.s32.totalorder %v432, 0
  %vm465 = vcmp.ne.s32.totalorder %v433, 0
  %vm466 = vcmp.ne.s32.totalorder %v434, 0
  %vm467 = vcmp.ne.s32.totalorder %v435, 0
  %vm468 = vcmp.ne.s32.totalorder %v436, 0
  %vm469 = vcmp.ne.s32.totalorder %v437, 0
  %vm470 = vcmp.ne.s32.totalorder %v438, 0
  %vm471 = vcmp.ne.s32.totalorder %v439, 0
  %vm472 = vcmp.ne.s32.totalorder %v440, 0
  %vm473 = vcmp.ne.s32.totalorder %v441, 0
  %vm474 = vcmp.ne.s32.totalorder %v442, 0
  %vm475 = vcmp.ne.s32.totalorder %v443, 0
  %vm476 = vcmp.ne.s32.totalorder %v444, 0
  %vm477 = vcmp.ne.s32.totalorder %v445, 0
  %vm478 = vcmp.ne.s32.totalorder %v446, 0
  %vm479 = vcmp.ne.s32.totalorder %v447, 0
  %vm480 = vcmp.ne.s32.totalorder %v448, 0
  %vm481 = vcmp.ne.s32.totalorder %v449, 0
  %vm482 = vcmp.ne.s32.totalorder %v450, 0
  %vm483 = vcmp.ne.s32.totalorder %v451, 0
  %vm484 = vcmp.ne.s32.totalorder %v452, 0
  %vm485 = vcmp.ne.s32.totalorder %v453, 0
  %vm486 = vcmp.ne.s32.totalorder %v454, 0
  %vm487 = vcmp.ne.s32.totalorder %v455, 0
  %vm488 = vcmp.ne.s32.totalorder %v456, 0
  %vm489 = vcmp.ne.s32.totalorder %v457, 0
  %v490 = vsel %vm458, 1, 0
  %v491 = vsel %vm459, 1, 0
  %v492 = vsel %vm460, 1, 0
  %v493 = vsel %vm461, 1, 0
  %v494 = vsel %vm462, 1, 0
  %v495 = vsel %vm463, 1, 0
  %v496 = vsel %vm464, 1, 0
  %v497 = vsel %vm465, 1, 0
  %v498 = vsel %vm466, 1, 0
  %v499 = vsel %vm467, 1, 0
  %v500 = vsel %vm468, 1, 0
  %v501 = vsel %vm469, 1, 0
  %v502 = vsel %vm470, 1, 0
  %v503 = vsel %vm471, 1, 0
  %v504 = vsel %vm472, 1, 0
  %v505 = vsel %vm473, 1, 0
  %v506 = vsel %vm474, 1, 0
  %v507 = vsel %vm475, 1, 0
  %v508 = vsel %vm476, 1, 0
  %v509 = vsel %vm477, 1, 0
  %v510 = vsel %vm478, 1, 0
  %v511 = vsel %vm479, 1, 0
  %v512 = vsel %vm480, 1, 0
  %v513 = vsel %vm481, 1, 0
  %v514 = vsel %vm482, 1, 0
  %v515 = vsel %vm483, 1, 0
  %v516 = vsel %vm484, 1, 0
  %v517 = vsel %vm485, 1, 0
  %v518 = vsel %vm486, 1, 0
  %v519 = vsel %vm487, 1, 0
  %v520 = vsel %vm488, 1, 0
  %v521 = vsel %vm489, 1, 0
  %v522 = vcvt.s32.f32 %v490
  %v523 = vcvt.s32.f32 %v491
  %v524 = vcvt.s32.f32 %v492
  %v525 = vcvt.s32.f32 %v493
  %v526 = vcvt.s32.f32 %v494
  %v527 = vcvt.s32.f32 %v495
  %v528 = vcvt.s32.f32 %v496
  %v529 = vcvt.s32.f32 %v497
  %v530 = vcvt.s32.f32 %v498
  %v531 = vcvt.s32.f32 %v499
  %v532 = vcvt.s32.f32 %v500
  %v533 = vcvt.s32.f32 %v501
  %v534 = vcvt.s32.f32 %v502
  %v535 = vcvt.s32.f32 %v503
  %v536 = vcvt.s32.f32 %v504
  %v537 = vcvt.s32.f32 %v505
  %v538 = vcvt.s32.f32 %v506
  %v539 = vcvt.s32.f32 %v507
  %v540 = vcvt.s32.f32 %v508
  %v541 = vcvt.s32.f32 %v509
  %v542 = vcvt.s32.f32 %v510
  %v543 = vcvt.s32.f32 %v511
  %v544 = vcvt.s32.f32 %v512
  %v545 = vcvt.s32.f32 %v513
  %v546 = vcvt.s32.f32 %v514
  %v547 = vcvt.s32.f32 %v515
  %v548 = vcvt.s32.f32 %v516
  %v549 = vcvt.s32.f32 %v517
  %v550 = vcvt.s32.f32 %v518
  %v551 = vcvt.s32.f32 %v519
  %v552 = vcvt.s32.f32 %v520
  %v553 = vcvt.s32.f32 %v521
  %vm554 = vcmp.ne.s32.totalorder %v426, 15
  %vm555 = vcmp.ne.s32.totalorder %v427, 15
  %vm556 = vcmp.ne.s32.totalorder %v428, 15
  %vm557 = vcmp.ne.s32.totalorder %v429, 15
  %vm558 = vcmp.ne.s32.totalorder %v430, 15
  %vm559 = vcmp.ne.s32.totalorder %v431, 15
  %vm560 = vcmp.ne.s32.totalorder %v432, 15
  %vm561 = vcmp.ne.s32.totalorder %v433, 15
  %vm562 = vcmp.ne.s32.totalorder %v434, 15
  %vm563 = vcmp.ne.s32.totalorder %v435, 15
  %vm564 = vcmp.ne.s32.totalorder %v436, 15
  %vm565 = vcmp.ne.s32.totalorder %v437, 15
  %vm566 = vcmp.ne.s32.totalorder %v438, 15
  %vm567 = vcmp.ne.s32.totalorder %v439, 15
  %vm568 = vcmp.ne.s32.totalorder %v440, 15
  %vm569 = vcmp.ne.s32.totalorder %v441, 15
  %vm570 = vcmp.ne.s32.totalorder %v442, 15
  %vm571 = vcmp.ne.s32.totalorder %v443, 15
  %vm572 = vcmp.ne.s32.totalorder %v444, 15
  %vm573 = vcmp.ne.s32.totalorder %v445, 15
  %vm574 = vcmp.ne.s32.totalorder %v446, 15
  %vm575 = vcmp.ne.s32.totalorder %v447, 15
  %vm576 = vcmp.ne.s32.totalorder %v448, 15
  %vm577 = vcmp.ne.s32.totalorder %v449, 15
  %vm578 = vcmp.ne.s32.totalorder %v450, 15
  %vm579 = vcmp.ne.s32.totalorder %v451, 15
  %vm580 = vcmp.ne.s32.totalorder %v452, 15
  %vm581 = vcmp.ne.s32.totalorder %v453, 15
  %vm582 = vcmp.ne.s32.totalorder %v454, 15
  %vm583 = vcmp.ne.s32.totalorder %v455, 15
  %vm584 = vcmp.ne.s32.totalorder %v456, 15
  %vm585 = vcmp.ne.s32.totalorder %v457, 15
  %v586 = vsel %vm554, 1, 0
  %v587 = vsel %vm555, 1, 0
  %v588 = vsel %vm556, 1, 0
  %v589 = vsel %vm557, 1, 0
  %v590 = vsel %vm558, 1, 0
  %v591 = vsel %vm559, 1, 0
  %v592 = vsel %vm560, 1, 0
  %v593 = vsel %vm561, 1, 0
  %v594 = vsel %vm562, 1, 0
  %v595 = vsel %vm563, 1, 0
  %v596 = vsel %vm564, 1, 0
  %v597 = vsel %vm565, 1, 0
  %v598 = vsel %vm566, 1, 0
  %v599 = vsel %vm567, 1, 0
  %v600 = vsel %vm568, 1, 0
  %v601 = vsel %vm569, 1, 0
  %v602 = vsel %vm570, 1, 0
  %v603 = vsel %vm571, 1, 0
  %v604 = vsel %vm572, 1, 0
  %v605 = vsel %vm573, 1, 0
  %v606 = vsel %vm574, 1, 0
  %v607 = vsel %vm575, 1, 0
  %v608 = vsel %vm576, 1, 0
  %v609 = vsel %vm577, 1, 0
  %v610 = vsel %vm578, 1, 0
  %v611 = vsel %vm579, 1, 0
  %v612 = vsel %vm580, 1, 0
  %v613 = vsel %vm581, 1, 0
  %v614 = vsel %vm582, 1, 0
  %v615 = vsel %vm583, 1, 0
  %v616 = vsel %vm584, 1, 0
  %v617 = vsel %vm585, 1, 0
  %v618 = vcvt.s32.f32 %v586
  %v619 = vcvt.s32.f32 %v587
  %v620 = vcvt.s32.f32 %v588
  %v621 = vcvt.s32.f32 %v589
  %v622 = vcvt.s32.f32 %v590
  %v623 = vcvt.s32.f32 %v591
  %v624 = vcvt.s32.f32 %v592
  %v625 = vcvt.s32.f32 %v593
  %v626 = vcvt.s32.f32 %v594
  %v627 = vcvt.s32.f32 %v595
  %v628 = vcvt.s32.f32 %v596
  %v629 = vcvt.s32.f32 %v597
  %v630 = vcvt.s32.f32 %v598
  %v631 = vcvt.s32.f32 %v599
  %v632 = vcvt.s32.f32 %v600
  %v633 = vcvt.s32.f32 %v601
  %v634 = vcvt.s32.f32 %v602
  %v635 = vcvt.s32.f32 %v603
  %v636 = vcvt.s32.f32 %v604
  %v637 = vcvt.s32.f32 %v605
  %v638 = vcvt.s32.f32 %v606
  %v639 = vcvt.s32.f32 %v607
  %v640 = vcvt.s32.f32 %v608
  %v641 = vcvt.s32.f32 %v609
  %v642 = vcvt.s32.f32 %v610
  %v643 = vcvt.s32.f32 %v611
  %v644 = vcvt.s32.f32 %v612
  %v645 = vcvt.s32.f32 %v613
  %v646 = vcvt.s32.f32 %v614
  %v647 = vcvt.s32.f32 %v615
  %v648 = vcvt.s32.f32 %v616
  %v649 = vcvt.s32.f32 %v617
  %v650 = vld [vmem:[%s0] sm:$0xff]
  %v651 = vld [vmem:[%s0 + $0x8] sm:$0xff]
  %v652 = vld [vmem:[%s0 + $0x10] sm:$0xff]
  %v653 = vld [vmem:[%s0 + $0x18] sm:$0xff]
  %v654 = vld [vmem:[%s0 + $0x20] sm:$0xff]
  %v655 = vld [vmem:[%s0 + $0x28] sm:$0xff]
  %v656 = vld [vmem:[%s0 + $0x30] sm:$0xff]
  %v657 = vld [vmem:[%s0 + $0x38] sm:$0xff]
  %v658 = vld [vmem:[%s0 + $0x40] sm:$0xff]
  %v659 = vld [vmem:[%s0 + $0x48] sm:$0xff]
  %v660 = vld [vmem:[%s0 + $0x50] sm:$0xff]
  %v661 = vld [vmem:[%s0 + $0x58] sm:$0xff]
  %v662 = vld [vmem:[%s0 + $0x60] sm:$0xff]
  %v663 = vld [vmem:[%s0 + $0x68] sm:$0xff]
  %v664 = vld [vmem:[%s0 + $0x70] sm:$0xff]
  %v665 = vld [vmem:[%s0 + $0x78] sm:$0xff]
  %v666 = vld [vmem:[%s0 + $0x80] sm:$0xff]
  %v667 = vld [vmem:[%s0 + $0x88] sm:$0xff]
  %v668 = vld [vmem:[%s0 + $0x90] sm:$0xff]
  %v669 = vld [vmem:[%s0 + $0x98] sm:$0xff]
  %v670 = vld [vmem:[%s0 + $0xa0] sm:$0xff]
  %v671 = vld [vmem:[%s0 + $0xa8] sm:$0xff]
  %v672 = vld [vmem:[%s0 + $0xb0] sm:$0xff]
  %v673 = vld [vmem:[%s0 + $0xb8] sm:$0xff]
  %v674 = vld [vmem:[%s0 + $0xc0] sm:$0xff]
  %v675 = vld [vmem:[%s0 + $0xc8] sm:$0xff]
  %v676 = vld [vmem:[%s0 + $0xd0] sm:$0xff]
  %v677 = vld [vmem:[%s0 + $0xd8] sm:$0xff]
  %v678 = vld [vmem:[%s0 + $0xe0] sm:$0xff]
  %v679 = vld [vmem:[%s0 + $0xe8] sm:$0xff]
  %v680 = vld [vmem:[%s0 + $0xf0] sm:$0xff]
  %v681 = vld [vmem:[%s0 + $0xf8] sm:$0xff]
  %v682 = vld [vmem:[%s1] sm:$0xf]
  %v683 = vld [vmem:[%s0 + $0x100] sm:$0xff]
  %v684 = vld [vmem:[%s0 + $0x108] sm:$0xff]
  %s685 = scalar_lea.vmem %s1, 12
  %v686 = vld [vmem:[%s685] sm:$0xf]
  %vm687 = vcmask 31744
  %v689 = vsel %vm687, %v652, 0
  %v692 = vsel %vm687, %v653, 0
  %v695 = vsel %vm687, %v654, 0
  %v698 = vsel %vm687, %v655, 0
  %v701 = vsel %vm687, %v656, 0
  %v704 = vsel %vm687, %v657, 0
  %v707 = vsel %vm687, %v658, 0
  %v710 = vsel %vm687, %v659, 0
  %v713 = vsel %vm687, %v660, 0
  %v716 = vsel %vm687, %v661, 0
  %v719 = vsel %vm687, %v662, 0
  %v722 = vsel %vm687, %v663, 0
  %v725 = vsel %vm687, %v664, 0
  %v728 = vsel %vm687, %v665, 0
  %v731 = vsel %vm687, %v666, 0
  %v734 = vsel %vm687, %v667, 0
  %v737 = vsel %vm687, %v668, 0
  %v740 = vsel %vm687, %v669, 0
  %v743 = vsel %vm687, %v670, 0
  %v746 = vsel %vm687, %v671, 0
  %v749 = vsel %vm687, %v672, 0
  %v752 = vsel %vm687, %v673, 0
  %v755 = vsel %vm687, %v674, 0
  %v758 = vsel %vm687, %v675, 0
  %v761 = vsel %vm687, %v676, 0
  %v764 = vsel %vm687, %v677, 0
  %v767 = vsel %vm687, %v678, 0
  %v770 = vsel %vm687, %v679, 0
  %v773 = vsel %vm687, %v680, 0
  %v776 = vsel %vm687, %v681, 0
  %v779 = vsel %vm687, %v683, 0
  %v782 = vsel %vm687, %v684, 0
  %vm784 = vcmask 1043456
  %v786 = vsel %vm784, %v686, 0
  %788 = vmatprep.subr.mxu0 0.0
  %789 = vmatpush1.msra.mxu0 %v786
  %790 = vmatprep.subr.mxu0 0.0
  %791 = vmatpush1.msra.mxu0 0.0
  %792 = vmatprep.subr.mxu0 0.0
  %793 = vmatpush1.msra.mxu0 0.0
  %794 = vmatprep.subr.mxu0 0.0
  %795 = vmatpush1.msra.mxu0 0.0
  %796 = vmatprep.subr.mxu0 0.0
  %797 = vmatpush1.msra.mxu0 0.0
  %798 = vmatprep.subr.mxu0 0.0
  %799 = vmatpush1.msra.mxu0 0.0
  %800 = vmatprep.subr.mxu0 0.0
  %801 = vmatpush1.msra.mxu0 0.0
  %802 = vmatprep.subr.mxu0 0.0
  %803 = vmatpush1.msra.mxu0 0.0
  %804 = vmatprep.subr.mxu0 0.0
  %805 = vmatpush1.msra.mxu0 0.0
  %806 = vmatprep.subr.mxu0 0.0
  %807 = vmatpush1.msra.mxu0 0.0
  %808 = vmatprep.subr.mxu0 0.0
  %809 = vmatpush1.msra.mxu0 0.0
  %810 = vmatprep.subr.mxu0 0.0
  %811 = vmatpush1.msra.mxu0 0.0
  %812 = vmatprep.subr.mxu0 0.0
  %813 = vmatpush1.msra.mxu0 0.0
  %814 = vmatprep.subr.mxu0 0.0
  %815 = vmatpush1.msra.mxu0 0.0
  %816 = vmatprep.subr.mxu0 0.0
  %817 = vmatpush1.msra.mxu0 0.0
  %818 = vmatprep.subr.mxu0 0.0
  %819 = vmatpush1.msra.mxu0 0.0
  %820 = vmatprep.subr.mxu0 0.0
  %821 = vmatpush1.msra.mxu0 0.0
  %822 = vmatprep.subr.mxu0 0.0
  %823 = vmatpush1.msra.mxu0 0.0
  %824 = vmatprep.subr.mxu0 0.0
  %825 = vmatpush1.msra.mxu0 0.0
  %826 = vmatprep.subr.mxu0 0.0
  %827 = vmatpush1.msra.mxu0 0.0
  %828 = vmatprep.subr.mxu0 0.0
  %829 = vmatpush1.msra.mxu0 0.0
  %830 = vmatprep.subr.mxu0 0.0
  %831 = vmatpush1.msra.mxu0 0.0
  %832 = vmatprep.subr.mxu0 0.0
  %833 = vmatpush1.msra.mxu0 0.0
  %834 = vmatprep.subr.mxu0 0.0
  %835 = vmatpush1.msra.mxu0 0.0
  %836 = vmatprep.subr.mxu0 0.0
  %837 = vmatpush1.msra.mxu0 0.0
  %838 = vmatprep.subr.mxu0 0.0
  %839 = vmatpush1.msra.mxu0 0.0
  %840 = vmatprep.subr.mxu0 0.0
  %841 = vmatpush1.msra.mxu0 0.0
  %842 = vmatprep.subr.mxu0 0.0
  %843 = vmatpush1.msra.mxu0 0.0
  %844 = vmatprep.subr.mxu0 0.0
  %845 = vmatpush1.msra.mxu0 0.0
  %846 = vmatprep.subr.mxu0 0.0
  %847 = vmatpush1.msra.mxu0 0.0
  %848 = vmatprep.subr.mxu0 0.0
  %849 = vmatpush1.msra.mxu0 0.0
  %850 = vmatprep.subr.mxu0 0.0
  %851 = vmatpush1.msra.mxu0 0.0
  %852 = vmatprep.mubr.f32.mxu0 0.0
  %853 = vmatmul.mubr.f32.gmra.mrb[0].mxu0 %v689
  %v854 = vpop.f32.mrb[0].mxu0
  %v855 = vadd.f32 0.0, %v854
  %v856 = vpop.f32.mrb[0].mxu0
  %857 = vmatprep.mubr.f32.mxu0 0.0
  %858 = vmatmul.mubr.f32.gmra.mrb[0].mxu0 %v692
  %v859 = vpop.f32.mrb[0].mxu0
  %v860 = vadd.f32 0.0, %v859
  %v861 = vpop.f32.mrb[0].mxu0
  %862 = vmatprep.mubr.f32.mxu0 0.0
  %863 = vmatmul.mubr.f32.gmra.mrb[0].mxu0 %v695
  %v864 = vpop.f32.mrb[0].mxu0
  %v865 = vadd.f32 0.0, %v864
  %v866 = vpop.f32.mrb[0].mxu0
  %867 = vmatprep.mubr.f32.mxu0 0.0
  %868 = vmatmul.mubr.f32.gmra.mrb[0].mxu0 %v698
  %v869 = vpop.f32.mrb[0].mxu0
  %v870 = vadd.f32 0.0, %v869
  %v871 = vpop.f32.mrb[0].mxu0
  %872 = vmatprep.mubr.f32.mxu0 0.0
  %873 = vmatmul.mubr.f32.gmra.mrb[0].mxu0 %v701
  %v874 = vpop.f32.mrb[0].mxu0
  %v875 = vadd.f32 0.0, %v874
  %v876 = vpop.f32.mrb[0].mxu0
  %877 = vmatprep.mubr.f32.mxu0 0.0
  %878 = vmatmul.mubr.f32.gmra.mrb[0].mxu0 %v704
  %v879 = vpop.f32.mrb[0].mxu0
  %v880 = vadd.f32 0.0, %v879
  %v881 = vpop.f32.mrb[0].mxu0
  %882 = vmatprep.mubr.f32.mxu0 0.0
  %883 = vmatmul.mubr.f32.gmra.mrb[0].mxu0 %v707
  %v884 = vpop.f32.mrb[0].mxu0
  %v885 = vadd.f32 0.0, %v884
  %v886 = vpop.f32.mrb[0].mxu0
  %887 = vmatprep.mubr.f32.mxu0 0.0
  %888 = vmatmul.mubr.f32.gmra.mrb[0].mxu0 %v710
  %v889 = vpop.f32.mrb[0].mxu0
  %v890 = vadd.f32 0.0, %v889
  %v891 = vpop.f32.mrb[0].mxu0
  %892 = vmatprep.mubr.f32.mxu0 0.0
  %893 = vmatmul.mubr.f32.gmra.mrb[0].mxu0 %v713
  %v894 = vpop.f32.mrb[0].mxu0
  %v895 = vadd.f32 0.0, %v894
  %v896 = vpop.f32.mrb[0].mxu0
  %897 = vmatprep.mubr.f32.mxu0 0.0
  %898 = vmatmul.mubr.f32.gmra.mrb[0].mxu0 %v716
  %v899 = vpop.f32.mrb[0].mxu0
  %v900 = vadd.f32 0.0, %v899
  %v901 = vpop.f32.mrb[0].mxu0
  %902 = vmatprep.mubr.f32.mxu0 0.0
  %903 = vmatmul.mubr.f32.gmra.mrb[0].mxu0 %v719
  %v904 = vpop.f32.mrb[0].mxu0
  %v905 = vadd.f32 0.0, %v904
  %v906 = vpop.f32.mrb[0].mxu0
  %907 = vmatprep.mubr.f32.mxu0 0.0
  %908 = vmatmul.mubr.f32.gmra.mrb[0].mxu0 %v722
  %v909 = vpop.f32.mrb[0].mxu0
  %v910 = vadd.f32 0.0, %v909
  %v911 = vpop.f32.mrb[0].mxu0
  %912 = vmatprep.mubr.f32.mxu0 0.0
  %913 = vmatmul.mubr.f32.gmra.mrb[0].mxu0 %v725
  %v914 = vpop.f32.mrb[0].mxu0
  %v915 = vadd.f32 0.0, %v914
  %v916 = vpop.f32.mrb[0].mxu0
  %917 = vmatprep.mubr.f32.mxu0 0.0
  %918 = vmatmul.mubr.f32.gmra.mrb[0].mxu0 %v728
  %v919 = vpop.f32.mrb[0].mxu0
  %v920 = vadd.f32 0.0, %v919
  %v921 = vpop.f32.mrb[0].mxu0
  %922 = vmatprep.mubr.f32.mxu0 0.0
  %923 = vmatmul.mubr.f32.gmra.mrb[0].mxu0 %v731
  %v924 = vpop.f32.mrb[0].mxu0
  %v925 = vadd.f32 0.0, %v924
  %v926 = vpop.f32.mrb[0].mxu0
  %927 = vmatprep.mubr.f32.mxu0 0.0
  %928 = vmatmul.mubr.f32.gmra.mrb[0].mxu0 %v734
  %v929 = vpop.f32.mrb[0].mxu0
  %v930 = vadd.f32 0.0, %v929
  %v931 = vpop.f32.mrb[0].mxu0
  %932 = vmatprep.mubr.f32.mxu0 0.0
  %933 = vmatmul.mubr.f32.gmra.mrb[0].mxu0 %v737
  %v934 = vpop.f32.mrb[0].mxu0
  %v935 = vadd.f32 0.0, %v934
  %v936 = vpop.f32.mrb[0].mxu0
  %937 = vmatprep.mubr.f32.mxu0 0.0
  %938 = vmatmul.mubr.f32.gmra.mrb[0].mxu0 %v740
  %v939 = vpop.f32.mrb[0].mxu0
  %v940 = vadd.f32 0.0, %v939
  %v941 = vpop.f32.mrb[0].mxu0
  %942 = vmatprep.mubr.f32.mxu0 0.0
  %943 = vmatmul.mubr.f32.gmra.mrb[0].mxu0 %v743
  %v944 = vpop.f32.mrb[0].mxu0
  %v945 = vadd.f32 0.0, %v944
  %v946 = vpop.f32.mrb[0].mxu0
  %947 = vmatprep.mubr.f32.mxu0 0.0
  %948 = vmatmul.mubr.f32.gmra.mrb[0].mxu0 %v746
  %v949 = vpop.f32.mrb[0].mxu0
  %v950 = vadd.f32 0.0, %v949
  %v951 = vpop.f32.mrb[0].mxu0
  %952 = vmatprep.mubr.f32.mxu0 0.0
  %953 = vmatmul.mubr.f32.gmra.mrb[0].mxu0 %v749
  %v954 = vpop.f32.mrb[0].mxu0
  %v955 = vadd.f32 0.0, %v954
  %v956 = vpop.f32.mrb[0].mxu0
  %957 = vmatprep.mubr.f32.mxu0 0.0
  %958 = vmatmul.mubr.f32.gmra.mrb[0].mxu0 %v752
  %v959 = vpop.f32.mrb[0].mxu0
  %v960 = vadd.f32 0.0, %v959
  %v961 = vpop.f32.mrb[0].mxu0
  %962 = vmatprep.mubr.f32.mxu0 0.0
  %963 = vmatmul.mubr.f32.gmra.mrb[0].mxu0 %v755
  %v964 = vpop.f32.mrb[0].mxu0
  %v965 = vadd.f32 0.0, %v964
  %v966 = vpop.f32.mrb[0].mxu0
  %967 = vmatprep.mubr.f32.mxu0 0.0
  %968 = vmatmul.mubr.f32.gmra.mrb[0].mxu0 %v758
  %v969 = vpop.f32.mrb[0].mxu0
  %v970 = vadd.f32 0.0, %v969
  %v971 = vpop.f32.mrb[0].mxu0
  %972 = vmatprep.mubr.f32.mxu0 0.0
  %973 = vmatmul.mubr.f32.gmra.mrb[0].mxu0 %v761
  %v974 = vpop.f32.mrb[0].mxu0
  %v975 = vadd.f32 0.0, %v974
  %v976 = vpop.f32.mrb[0].mxu0
  %977 = vmatprep.mubr.f32.mxu0 0.0
  %978 = vmatmul.mubr.f32.gmra.mrb[0].mxu0 %v764
  %v979 = vpop.f32.mrb[0].mxu0
  %v980 = vadd.f32 0.0, %v979
  %v981 = vpop.f32.mrb[0].mxu0
  %982 = vmatprep.mubr.f32.mxu0 0.0
  %983 = vmatmul.mubr.f32.gmra.mrb[0].mxu0 %v767
  %v984 = vpop.f32.mrb[0].mxu0
  %v985 = vadd.f32 0.0, %v984
  %v986 = vpop.f32.mrb[0].mxu0
  %987 = vmatprep.mubr.f32.mxu0 0.0
  %988 = vmatmul.mubr.f32.gmra.mrb[0].mxu0 %v770
  %v989 = vpop.f32.mrb[0].mxu0
  %v990 = vadd.f32 0.0, %v989
  %v991 = vpop.f32.mrb[0].mxu0
  %992 = vmatprep.mubr.f32.mxu0 0.0
  %993 = vmatmul.mubr.f32.gmra.mrb[0].mxu0 %v773
  %v994 = vpop.f32.mrb[0].mxu0
  %v995 = vadd.f32 0.0, %v994
  %v996 = vpop.f32.mrb[0].mxu0
  %997 = vmatprep.mubr.f32.mxu0 0.0
  %998 = vmatmul.mubr.f32.gmra.mrb[0].mxu0 %v776
  %v999 = vpop.f32.mrb[0].mxu0
  %v1000 = vadd.f32 0.0, %v999
  %v1001 = vpop.f32.mrb[0].mxu0
  %1002 = vmatprep.mubr.f32.mxu0 0.0
  %1003 = vmatmul.mubr.f32.gmra.mrb[0].mxu0 %v779
  %v1004 = vpop.f32.mrb[0].mxu0
  %v1005 = vadd.f32 0.0, %v1004
  %v1006 = vpop.f32.mrb[0].mxu0
  %1007 = vmatprep.mubr.f32.mxu0 0.0
  %1008 = vmatmul.mubr.f32.gmra.mrb[0].mxu0 %v782
  %v1009 = vpop.f32.mrb[0].mxu0
  %v1010 = vadd.f32 0.0, %v1009
  %v1011 = vpop.f32.mrb[0].mxu0
  %1012 = vdwg.mxu0
  %v1014 = vsel %vm687, %v650, 0
  %v1017 = vsel %vm687, %v651, 0
  %v1020 = vsel %vm784, %v682, 0
  %1022 = vmatprep.subr.mxu0 0.0
  %1023 = vmatpush1.msra.mxu0 %v1020
  %1024 = vmatprep.subr.mxu0 0.0
  %1025 = vmatpush1.msra.mxu0 0.0
  %1026 = vmatprep.subr.mxu0 0.0
  %1027 = vmatpush1.msra.mxu0 0.0
  %1028 = vmatprep.subr.mxu0 0.0
  %1029 = vmatpush1.msra.mxu0 0.0
  %1030 = vmatprep.subr.mxu0 0.0
  %1031 = vmatpush1.msra.mxu0 0.0
  %1032 = vmatprep.subr.mxu0 0.0
  %1033 = vmatpush1.msra.mxu0 0.0
  %1034 = vmatprep.subr.mxu0 0.0
  %1035 = vmatpush1.msra.mxu0 0.0
  %1036 = vmatprep.subr.mxu0 0.0
  %1037 = vmatpush1.msra.mxu0 0.0
  %1038 = vmatprep.subr.mxu0 0.0
  %1039 = vmatpush1.msra.mxu0 0.0
  %1040 = vmatprep.subr.mxu0 0.0
  %1041 = vmatpush1.msra.mxu0 0.0
  %1042 = vmatprep.subr.mxu0 0.0
  %1043 = vmatpush1.msra.mxu0 0.0
  %1044 = vmatprep.subr.mxu0 0.0
  %1045 = vmatpush1.msra.mxu0 0.0
  %1046 = vmatprep.subr.mxu0 0.0
  %1047 = vmatpush1.msra.mxu0 0.0
  %1048 = vmatprep.subr.mxu0 0.0
  %1049 = vmatpush1.msra.mxu0 0.0
  %1050 = vmatprep.subr.mxu0 0.0
  %1051 = vmatpush1.msra.mxu0 0.0
  %1052 = vmatprep.subr.mxu0 0.0
  %1053 = vmatpush1.msra.mxu0 0.0
  %1054 = vmatprep.subr.mxu0 0.0
  %1055 = vmatpush1.msra.mxu0 0.0
  %1056 = vmatprep.subr.mxu0 0.0
  %1057 = vmatpush1.msra.mxu0 0.0
  %1058 = vmatprep.subr.mxu0 0.0
  %1059 = vmatpush1.msra.mxu0 0.0
  %1060 = vmatprep.subr.mxu0 0.0
  %1061 = vmatpush1.msra.mxu0 0.0
  %1062 = vmatprep.subr.mxu0 0.0
  %1063 = vmatpush1.msra.mxu0 0.0
  %1064 = vmatprep.subr.mxu0 0.0
  %1065 = vmatpush1.msra.mxu0 0.0
  %1066 = vmatprep.subr.mxu0 0.0
  %1067 = vmatpush1.msra.mxu0 0.0
  %1068 = vmatprep.subr.mxu0 0.0
  %1069 = vmatpush1.msra.mxu0 0.0
  %1070 = vmatprep.subr.mxu0 0.0
  %1071 = vmatpush1.msra.mxu0 0.0
  %1072 = vmatprep.subr.mxu0 0.0
  %1073 = vmatpush1.msra.mxu0 0.0
  %1074 = vmatprep.subr.mxu0 0.0
  %1075 = vmatpush1.msra.mxu0 0.0
  %1076 = vmatprep.subr.mxu0 0.0
  %1077 = vmatpush1.msra.mxu0 0.0
  %1078 = vmatprep.subr.mxu0 0.0
  %1079 = vmatpush1.msra.mxu0 0.0
  %1080 = vmatprep.subr.mxu0 0.0
  %1081 = vmatpush1.msra.mxu0 0.0
  %1082 = vmatprep.subr.mxu0 0.0
  %1083 = vmatpush1.msra.mxu0 0.0
  %1084 = vmatprep.subr.mxu0 0.0
  %1085 = vmatpush1.msra.mxu0 0.0
  %1086 = vmatprep.mubr.f32.mxu0 0.0
  %1087 = vmatmul.mubr.f32.gmra.mrb[0].mxu0 %v1014
  %v1088 = vpop.f32.mrb[0].mxu0
  %v1089 = vadd.f32 %v855, %v1088
  %v1090 = vpop.f32.mrb[0].mxu0
  %1091 = vmatprep.mubr.f32.mxu0 0.0
  %1092 = vmatmul.mubr.f32.gmra.mrb[0].mxu0 %v1017
  %v1093 = vpop.f32.mrb[0].mxu0
  %v1094 = vadd.f32 %v860, %v1093
  %v1095 = vpop.f32.mrb[0].mxu0
  %1096 = vmatprep.mubr.f32.mxu0 0.0
  %1097 = vmatmul.mubr.f32.gmra.mrb[0].mxu0 %v689
  %v1098 = vpop.f32.mrb[0].mxu0
  %v1099 = vadd.f32 %v865, %v1098
  %v1100 = vpop.f32.mrb[0].mxu0
  %1101 = vmatprep.mubr.f32.mxu0 0.0
  %1102 = vmatmul.mubr.f32.gmra.mrb[0].mxu0 %v692
  %v1103 = vpop.f32.mrb[0].mxu0
  %v1104 = vadd.f32 %v870, %v1103
  %v1105 = vpop.f32.mrb[0].mxu0
  %1106 = vmatprep.mubr.f32.mxu0 0.0
  %1107 = vmatmul.mubr.f32.gmra.mrb[0].mxu0 %v695
  %v1108 = vpop.f32.mrb[0].mxu0
  %v1109 = vadd.f32 %v875, %v1108
  %v1110 = vpop.f32.mrb[0].mxu0
  %1111 = vmatprep.mubr.f32.mxu0 0.0
  %1112 = vmatmul.mubr.f32.gmra.mrb[0].mxu0 %v698
  %v1113 = vpop.f32.mrb[0].mxu0
  %v1114 = vadd.f32 %v880, %v1113
  %v1115 = vpop.f32.mrb[0].mxu0
  %1116 = vmatprep.mubr.f32.mxu0 0.0
  %1117 = vmatmul.mubr.f32.gmra.mrb[0].mxu0 %v701
  %v1118 = vpop.f32.mrb[0].mxu0
  %v1119 = vadd.f32 %v885, %v1118
  %v1120 = vpop.f32.mrb[0].mxu0
  %1121 = vmatprep.mubr.f32.mxu0 0.0
  %1122 = vmatmul.mubr.f32.gmra.mrb[0].mxu0 %v704
  %v1123 = vpop.f32.mrb[0].mxu0
  %v1124 = vadd.f32 %v890, %v1123
  %v1125 = vpop.f32.mrb[0].mxu0
  %1126 = vmatprep.mubr.f32.mxu0 0.0
  %1127 = vmatmul.mubr.f32.gmra.mrb[0].mxu0 %v707
  %v1128 = vpop.f32.mrb[0].mxu0
  %v1129 = vadd.f32 %v895, %v1128
  %v1130 = vpop.f32.mrb[0].mxu0
  %1131 = vmatprep.mubr.f32.mxu0 0.0
  %1132 = vmatmul.mubr.f32.gmra.mrb[0].mxu0 %v710
  %v1133 = vpop.f32.mrb[0].mxu0
  %v1134 = vadd.f32 %v900, %v1133
  %v1135 = vpop.f32.mrb[0].mxu0
  %1136 = vmatprep.mubr.f32.mxu0 0.0
  %1137 = vmatmul.mubr.f32.gmra.mrb[0].mxu0 %v713
  %v1138 = vpop.f32.mrb[0].mxu0
  %v1139 = vadd.f32 %v905, %v1138
  %v1140 = vpop.f32.mrb[0].mxu0
  %1141 = vmatprep.mubr.f32.mxu0 0.0
  %1142 = vmatmul.mubr.f32.gmra.mrb[0].mxu0 %v716
  %v1143 = vpop.f32.mrb[0].mxu0
  %v1144 = vadd.f32 %v910, %v1143
  %v1145 = vpop.f32.mrb[0].mxu0
  %1146 = vmatprep.mubr.f32.mxu0 0.0
  %1147 = vmatmul.mubr.f32.gmra.mrb[0].mxu0 %v719
  %v1148 = vpop.f32.mrb[0].mxu0
  %v1149 = vadd.f32 %v915, %v1148
  %v1150 = vpop.f32.mrb[0].mxu0
  %1151 = vmatprep.mubr.f32.mxu0 0.0
  %1152 = vmatmul.mubr.f32.gmra.mrb[0].mxu0 %v722
  %v1153 = vpop.f32.mrb[0].mxu0
  %v1154 = vadd.f32 %v920, %v1153
  %v1155 = vpop.f32.mrb[0].mxu0
  %1156 = vmatprep.mubr.f32.mxu0 0.0
  %1157 = vmatmul.mubr.f32.gmra.mrb[0].mxu0 %v725
  %v1158 = vpop.f32.mrb[0].mxu0
  %v1159 = vadd.f32 %v925, %v1158
  %v1160 = vpop.f32.mrb[0].mxu0
  %1161 = vmatprep.mubr.f32.mxu0 0.0
  %1162 = vmatmul.mubr.f32.gmra.mrb[0].mxu0 %v728
  %v1163 = vpop.f32.mrb[0].mxu0
  %v1164 = vadd.f32 %v930, %v1163
  %v1165 = vpop.f32.mrb[0].mxu0
  %1166 = vmatprep.mubr.f32.mxu0 0.0
  %1167 = vmatmul.mubr.f32.gmra.mrb[0].mxu0 %v731
  %v1168 = vpop.f32.mrb[0].mxu0
  %v1169 = vadd.f32 %v935, %v1168
  %v1170 = vpop.f32.mrb[0].mxu0
  %1171 = vmatprep.mubr.f32.mxu0 0.0
  %1172 = vmatmul.mubr.f32.gmra.mrb[0].mxu0 %v734
  %v1173 = vpop.f32.mrb[0].mxu0
  %v1174 = vadd.f32 %v940, %v1173
  %v1175 = vpop.f32.mrb[0].mxu0
  %1176 = vmatprep.mubr.f32.mxu0 0.0
  %1177 = vmatmul.mubr.f32.gmra.mrb[0].mxu0 %v737
  %v1178 = vpop.f32.mrb[0].mxu0
  %v1179 = vadd.f32 %v945, %v1178
  %v1180 = vpop.f32.mrb[0].mxu0
  %1181 = vmatprep.mubr.f32.mxu0 0.0
  %1182 = vmatmul.mubr.f32.gmra.mrb[0].mxu0 %v740
  %v1183 = vpop.f32.mrb[0].mxu0
  %v1184 = vadd.f32 %v950, %v1183
  %v1185 = vpop.f32.mrb[0].mxu0
  %1186 = vmatprep.mubr.f32.mxu0 0.0
  %1187 = vmatmul.mubr.f32.gmra.mrb[0].mxu0 %v743
  %v1188 = vpop.f32.mrb[0].mxu0
  %v1189 = vadd.f32 %v955, %v1188
  %v1190 = vpop.f32.mrb[0].mxu0
  %1191 = vmatprep.mubr.f32.mxu0 0.0
  %1192 = vmatmul.mubr.f32.gmra.mrb[0].mxu0 %v746
  %v1193 = vpop.f32.mrb[0].mxu0
  %v1194 = vadd.f32 %v960, %v1193
  %v1195 = vpop.f32.mrb[0].mxu0
  %1196 = vmatprep.mubr.f32.mxu0 0.0
  %1197 = vmatmul.mubr.f32.gmra.mrb[0].mxu0 %v749
  %v1198 = vpop.f32.mrb[0].mxu0
  %v1199 = vadd.f32 %v965, %v1198
  %v1200 = vpop.f32.mrb[0].mxu0
  %1201 = vmatprep.mubr.f32.mxu0 0.0
  %1202 = vmatmul.mubr.f32.gmra.mrb[0].mxu0 %v752
  %v1203 = vpop.f32.mrb[0].mxu0
  %v1204 = vadd.f32 %v970, %v1203
  %v1205 = vpop.f32.mrb[0].mxu0
  %1206 = vmatprep.mubr.f32.mxu0 0.0
  %1207 = vmatmul.mubr.f32.gmra.mrb[0].mxu0 %v755
  %v1208 = vpop.f32.mrb[0].mxu0
  %v1209 = vadd.f32 %v975, %v1208
  %v1210 = vpop.f32.mrb[0].mxu0
  %1211 = vmatprep.mubr.f32.mxu0 0.0
  %1212 = vmatmul.mubr.f32.gmra.mrb[0].mxu0 %v758
  %v1213 = vpop.f32.mrb[0].mxu0
  %v1214 = vadd.f32 %v980, %v1213
  %v1215 = vpop.f32.mrb[0].mxu0
  %1216 = vmatprep.mubr.f32.mxu0 0.0
  %1217 = vmatmul.mubr.f32.gmra.mrb[0].mxu0 %v761
  %v1218 = vpop.f32.mrb[0].mxu0
  %v1219 = vadd.f32 %v985, %v1218
  %v1220 = vpop.f32.mrb[0].mxu0
  %1221 = vmatprep.mubr.f32.mxu0 0.0
  %1222 = vmatmul.mubr.f32.gmra.mrb[0].mxu0 %v764
  %v1223 = vpop.f32.mrb[0].mxu0
  %v1224 = vadd.f32 %v990, %v1223
  %v1225 = vpop.f32.mrb[0].mxu0
  %1226 = vmatprep.mubr.f32.mxu0 0.0
  %1227 = vmatmul.mubr.f32.gmra.mrb[0].mxu0 %v767
  %v1228 = vpop.f32.mrb[0].mxu0
  %v1229 = vadd.f32 %v995, %v1228
  %v1230 = vpop.f32.mrb[0].mxu0
  %1231 = vmatprep.mubr.f32.mxu0 0.0
  %1232 = vmatmul.mubr.f32.gmra.mrb[0].mxu0 %v770
  %v1233 = vpop.f32.mrb[0].mxu0
  %v1234 = vadd.f32 %v1000, %v1233
  %v1235 = vpop.f32.mrb[0].mxu0
  %1236 = vmatprep.mubr.f32.mxu0 0.0
  %1237 = vmatmul.mubr.f32.gmra.mrb[0].mxu0 %v773
  %v1238 = vpop.f32.mrb[0].mxu0
  %v1239 = vadd.f32 %v1005, %v1238
  %v1240 = vpop.f32.mrb[0].mxu0
  %1241 = vmatprep.mubr.f32.mxu0 0.0
  %1242 = vmatmul.mubr.f32.gmra.mrb[0].mxu0 %v776
  %v1243 = vpop.f32.mrb[0].mxu0
  %v1244 = vadd.f32 %v1010, %v1243
  %v1245 = vpop.f32.mrb[0].mxu0
  %1246 = vdwg.mxu0
  %v1247 = vld [vmem:[%s0 + $0x20] sm:$0xff]
  %v1248 = vld [vmem:[%s0 + $0x28] sm:$0xff]
  %v1249 = vld [vmem:[%s0 + $0x30] sm:$0xff]
  %v1250 = vld [vmem:[%s0 + $0x38] sm:$0xff]
  %v1251 = vld [vmem:[%s0 + $0x40] sm:$0xff]
  %v1252 = vld [vmem:[%s0 + $0x48] sm:$0xff]
  %v1253 = vld [vmem:[%s0 + $0x50] sm:$0xff]
  %v1254 = vld [vmem:[%s0 + $0x58] sm:$0xff]
  %v1255 = vld [vmem:[%s0 + $0x60] sm:$0xff]
  %v1256 = vld [vmem:[%s0 + $0x68] sm:$0xff]
  %v1257 = vld [vmem:[%s0 + $0x70] sm:$0xff]
  %v1258 = vld [vmem:[%s0 + $0x78] sm:$0xff]
  %v1259 = vld [vmem:[%s0 + $0x80] sm:$0xff]
  %v1260 = vld [vmem:[%s0 + $0x88] sm:$0xff]
  %v1261 = vld [vmem:[%s0 + $0x90] sm:$0xff]
  %v1262 = vld [vmem:[%s0 + $0x98] sm:$0xff]
  %v1263 = vld [vmem:[%s0 + $0xa0] sm:$0xff]
  %v1264 = vld [vmem:[%s0 + $0xa8] sm:$0xff]
  %v1265 = vld [vmem:[%s0 + $0xb0] sm:$0xff]
  %v1266 = vld [vmem:[%s0 + $0xb8] sm:$0xff]
  %v1267 = vld [vmem:[%s0 + $0xc0] sm:$0xff]
  %v1268 = vld [vmem:[%s0 + $0xc8] sm:$0xff]
  %v1269 = vld [vmem:[%s0 + $0xd0] sm:$0xff]
  %v1270 = vld [vmem:[%s0 + $0xd8] sm:$0xff]
  %v1271 = vld [vmem:[%s0 + $0xe0] sm:$0xff]
  %v1272 = vld [vmem:[%s0 + $0xe8] sm:$0xff]
  %v1273 = vld [vmem:[%s0 + $0xf0] sm:$0xff]
  %v1274 = vld [vmem:[%s0 + $0xf8] sm:$0xff]
  %v1275 = vld [vmem:[%s0 + $0x100] sm:$0xff]
  %v1276 = vld [vmem:[%s0 + $0x108] sm:$0xff]
  %v1277 = vld [vmem:[%s0 + $0x110] sm:$0xff]
  %v1278 = vld [vmem:[%s0 + $0x118] sm:$0xff]
  %s1279 = scalar_lea.vmem %s1, 24
  %v1280 = vld [vmem:[%s1279] sm:$0xf]
  %v1282 = vsel %vm687, %v1247, 0
  %v1285 = vsel %vm687, %v1248, 0
  %v1288 = vsel %vm687, %v1249, 0
  %v1291 = vsel %vm687, %v1250, 0
  %v1294 = vsel %vm687, %v1251, 0
  %v1297 = vsel %vm687, %v1252, 0
  %v1300 = vsel %vm687, %v1253, 0
  %v1303 = vsel %vm687, %v1254, 0
  %v1306 = vsel %vm687, %v1255, 0
  %v1309 = vsel %vm687, %v1256, 0
  %v1312 = vsel %vm687, %v1257, 0
  %v1315 = vsel %vm687, %v1258, 0
  %v1318 = vsel %vm687, %v1259, 0
  %v1321 = vsel %vm687, %v1260, 0
  %v1324 = vsel %vm687, %v1261, 0
  %v1327 = vsel %vm687, %v1262, 0
  %v1330 = vsel %vm687, %v1263, 0
  %v1333 = vsel %vm687, %v1264, 0
  %v1336 = vsel %vm687, %v1265, 0
  %v1339 = vsel %vm687, %v1266, 0
  %v1342 = vsel %vm687, %v1267, 0
  %v1345 = vsel %vm687, %v1268, 0
  %v1348 = vsel %vm687, %v1269, 0
  %v1351 = vsel %vm687, %v1270, 0
  %v1354 = vsel %vm687, %v1271, 0
  %v1357 = vsel %vm687, %v1272, 0
  %v1360 = vsel %vm687, %v1273, 0
  %v1363 = vsel %vm687, %v1274, 0
  %v1366 = vsel %vm687, %v1275, 0
  %v1369 = vsel %vm687, %v1276, 0
  %v1372 = vsel %vm687, %v1277, 0
  %v1375 = vsel %vm687, %v1278, 0
  %v1378 = vsel %vm784, %v1280, 0
  %1380 = vmatprep.subr.mxu0 0.0
  %1381 = vmatpush1.msra.mxu0 %v1378
  %1382 = vmatprep.subr.mxu0 0.0
  %1383 = vmatpush1.msra.mxu0 0.0
  %1384 = vmatprep.subr.mxu0 0.0
  %1385 = vmatpush1.msra.mxu0 0.0
  %1386 = vmatprep.subr.mxu0 0.0
  %1387 = vmatpush1.msra.mxu0 0.0
  %1388 = vmatprep.subr.mxu0 0.0
  %1389 = vmatpush1.msra.mxu0 0.0
  %1390 = vmatprep.subr.mxu0 0.0
  %1391 = vmatpush1.msra.mxu0 0.0
  %1392 = vmatprep.subr.mxu0 0.0
  %1393 = vmatpush1.msra.mxu0 0.0
  %1394 = vmatprep.subr.mxu0 0.0
  %1395 = vmatpush1.msra.mxu0 0.0
  %1396 = vmatprep.subr.mxu0 0.0
  %1397 = vmatpush1.msra.mxu0 0.0
  %1398 = vmatprep.subr.mxu0 0.0
  %1399 = vmatpush1.msra.mxu0 0.0
  %1400 = vmatprep.subr.mxu0 0.0
  %1401 = vmatpush1.msra.mxu0 0.0
  %1402 = vmatprep.subr.mxu0 0.0
  %1403 = vmatpush1.msra.mxu0 0.0
  %1404 = vmatprep.subr.mxu0 0.0
  %1405 = vmatpush1.msra.mxu0 0.0
  %1406 = vmatprep.subr.mxu0 0.0
  %1407 = vmatpush1.msra.mxu0 0.0
  %1408 = vmatprep.subr.mxu0 0.0
  %1409 = vmatpush1.msra.mxu0 0.0
  %1410 = vmatprep.subr.mxu0 0.0
  %1411 = vmatpush1.msra.mxu0 0.0
  %1412 = vmatprep.subr.mxu0 0.0
  %1413 = vmatpush1.msra.mxu0 0.0
  %1414 = vmatprep.subr.mxu0 0.0
  %1415 = vmatpush1.msra.mxu0 0.0
  %1416 = vmatprep.subr.mxu0 0.0
  %1417 = vmatpush1.msra.mxu0 0.0
  %1418 = vmatprep.subr.mxu0 0.0
  %1419 = vmatpush1.msra.mxu0 0.0
  %1420 = vmatprep.subr.mxu0 0.0
  %1421 = vmatpush1.msra.mxu0 0.0
  %1422 = vmatprep.subr.mxu0 0.0
  %1423 = vmatpush1.msra.mxu0 0.0
  %1424 = vmatprep.subr.mxu0 0.0
  %1425 = vmatpush1.msra.mxu0 0.0
  %1426 = vmatprep.subr.mxu0 0.0
  %1427 = vmatpush1.msra.mxu0 0.0
  %1428 = vmatprep.subr.mxu0 0.0
  %1429 = vmatpush1.msra.mxu0 0.0
  %1430 = vmatprep.subr.mxu0 0.0
  %1431 = vmatpush1.msra.mxu0 0.0
  %1432 = vmatprep.subr.mxu0 0.0
  %1433 = vmatpush1.msra.mxu0 0.0
  %1434 = vmatprep.subr.mxu0 0.0
  %1435 = vmatpush1.msra.mxu0 0.0
  %1436 = vmatprep.subr.mxu0 0.0
  %1437 = vmatpush1.msra.mxu0 0.0
  %1438 = vmatprep.subr.mxu0 0.0
  %1439 = vmatpush1.msra.mxu0 0.0
  %1440 = vmatprep.subr.mxu0 0.0
  %1441 = vmatpush1.msra.mxu0 0.0
  %1442 = vmatprep.subr.mxu0 0.0
  %1443 = vmatpush1.msra.mxu0 0.0
  %1444 = vmatprep.mubr.f32.mxu0 0.0
  %1445 = vmatmul.mubr.f32.gmra.mrb[0].mxu0 %v1282
  %v1446 = vpop.f32.mrb[0].mxu0
  %v1447 = vadd.f32 0.0, %v1446
  %v1448 = vpop.f32.mrb[0].mxu0
  %1449 = vmatprep.mubr.f32.mxu0 0.0
  %1450 = vmatmul.mubr.f32.gmra.mrb[0].mxu0 %v1285
  %v1451 = vpop.f32.mrb[0].mxu0
  %v1452 = vadd.f32 0.0, %v1451
  %v1453 = vpop.f32.mrb[0].mxu0
  %1454 = vmatprep.mubr.f32.mxu0 0.0
  %1455 = vmatmul.mubr.f32.gmra.mrb[0].mxu0 %v1288
  %v1456 = vpop.f32.mrb[0].mxu0
  %v1457 = vadd.f32 0.0, %v1456
  %v1458 = vpop.f32.mrb[0].mxu0
  %1459 = vmatprep.mubr.f32.mxu0 0.0
  %1460 = vmatmul.mubr.f32.gmra.mrb[0].mxu0 %v1291
  %v1461 = vpop.f32.mrb[0].mxu0
  %v1462 = vadd.f32 0.0, %v1461
  %v1463 = vpop.f32.mrb[0].mxu0
  %1464 = vmatprep.mubr.f32.mxu0 0.0
  %1465 = vmatmul.mubr.f32.gmra.mrb[0].mxu0 %v1294
  %v1466 = vpop.f32.mrb[0].mxu0
  %v1467 = vadd.f32 0.0, %v1466
  %v1468 = vpop.f32.mrb[0].mxu0
  %1469 = vmatprep.mubr.f32.mxu0 0.0
  %1470 = vmatmul.mubr.f32.gmra.mrb[0].mxu0 %v1297
  %v1471 = vpop.f32.mrb[0].mxu0
  %v1472 = vadd.f32 0.0, %v1471
  %v1473 = vpop.f32.mrb[0].mxu0
  %1474 = vmatprep.mubr.f32.mxu0 0.0
  %1475 = vmatmul.mubr.f32.gmra.mrb[0].mxu0 %v1300
  %v1476 = vpop.f32.mrb[0].mxu0
  %v1477 = vadd.f32 0.0, %v1476
  %v1478 = vpop.f32.mrb[0].mxu0
  %1479 = vmatprep.mubr.f32.mxu0 0.0
  %1480 = vmatmul.mubr.f32.gmra.mrb[0].mxu0 %v1303
  %v1481 = vpop.f32.mrb[0].mxu0
  %v1482 = vadd.f32 0.0, %v1481
  %v1483 = vpop.f32.mrb[0].mxu0
  %1484 = vmatprep.mubr.f32.mxu0 0.0
  %1485 = vmatmul.mubr.f32.gmra.mrb[0].mxu0 %v1306
  %v1486 = vpop.f32.mrb[0].mxu0
  %v1487 = vadd.f32 0.0, %v1486
  %v1488 = vpop.f32.mrb[0].mxu0
  %1489 = vmatprep.mubr.f32.mxu0 0.0
  %1490 = vmatmul.mubr.f32.gmra.mrb[0].mxu0 %v1309
  %v1491 = vpop.f32.mrb[0].mxu0
  %v1492 = vadd.f32 0.0, %v1491
  %v1493 = vpop.f32.mrb[0].mxu0
  %1494 = vmatprep.mubr.f32.mxu0 0.0
  %1495 = vmatmul.mubr.f32.gmra.mrb[0].mxu0 %v1312
  %v1496 = vpop.f32.mrb[0].mxu0
  %v1497 = vadd.f32 0.0, %v1496
  %v1498 = vpop.f32.mrb[0].mxu0
  %1499 = vmatprep.mubr.f32.mxu0 0.0
  %1500 = vmatmul.mubr.f32.gmra.mrb[0].mxu0 %v1315
  %v1501 = vpop.f32.mrb[0].mxu0
  %v1502 = vadd.f32 0.0, %v1501
  %v1503 = vpop.f32.mrb[0].mxu0
  %1504 = vmatprep.mubr.f32.mxu0 0.0
  %1505 = vmatmul.mubr.f32.gmra.mrb[0].mxu0 %v1318
  %v1506 = vpop.f32.mrb[0].mxu0
  %v1507 = vadd.f32 0.0, %v1506
  %v1508 = vpop.f32.mrb[0].mxu0
  %1509 = vmatprep.mubr.f32.mxu0 0.0
  %1510 = vmatmul.mubr.f32.gmra.mrb[0].mxu0 %v1321
  %v1511 = vpop.f32.mrb[0].mxu0
  %v1512 = vadd.f32 0.0, %v1511
  %v1513 = vpop.f32.mrb[0].mxu0
  %1514 = vmatprep.mubr.f32.mxu0 0.0
  %1515 = vmatmul.mubr.f32.gmra.mrb[0].mxu0 %v1324
  %v1516 = vpop.f32.mrb[0].mxu0
  %v1517 = vadd.f32 0.0, %v1516
  %v1518 = vpop.f32.mrb[0].mxu0
  %1519 = vmatprep.mubr.f32.mxu0 0.0
  %1520 = vmatmul.mubr.f32.gmra.mrb[0].mxu0 %v1327
  %v1521 = vpop.f32.mrb[0].mxu0
  %v1522 = vadd.f32 0.0, %v1521
  %v1523 = vpop.f32.mrb[0].mxu0
  %1524 = vmatprep.mubr.f32.mxu0 0.0
  %1525 = vmatmul.mubr.f32.gmra.mrb[0].mxu0 %v1330
  %v1526 = vpop.f32.mrb[0].mxu0
  %v1527 = vadd.f32 0.0, %v1526
  %v1528 = vpop.f32.mrb[0].mxu0
  %1529 = vmatprep.mubr.f32.mxu0 0.0
  %1530 = vmatmul.mubr.f32.gmra.mrb[0].mxu0 %v1333
  %v1531 = vpop.f32.mrb[0].mxu0
  %v1532 = vadd.f32 0.0, %v1531
  %v1533 = vpop.f32.mrb[0].mxu0
  %1534 = vmatprep.mubr.f32.mxu0 0.0
  %1535 = vmatmul.mubr.f32.gmra.mrb[0].mxu0 %v1336
  %v1536 = vpop.f32.mrb[0].mxu0
  %v1537 = vadd.f32 0.0, %v1536
  %v1538 = vpop.f32.mrb[0].mxu0
  %1539 = vmatprep.mubr.f32.mxu0 0.0
  %1540 = vmatmul.mubr.f32.gmra.mrb[0].mxu0 %v1339
  %v1541 = vpop.f32.mrb[0].mxu0
  %v1542 = vadd.f32 0.0, %v1541
  %v1543 = vpop.f32.mrb[0].mxu0
  %1544 = vmatprep.mubr.f32.mxu0 0.0
  %1545 = vmatmul.mubr.f32.gmra.mrb[0].mxu0 %v1342
  %v1546 = vpop.f32.mrb[0].mxu0
  %v1547 = vadd.f32 0.0, %v1546
  %v1548 = vpop.f32.mrb[0].mxu0
  %1549 = vmatprep.mubr.f32.mxu0 0.0
  %1550 = vmatmul.mubr.f32.gmra.mrb[0].mxu0 %v1345
  %v1551 = vpop.f32.mrb[0].mxu0
  %v1552 = vadd.f32 0.0, %v1551
  %v1553 = vpop.f32.mrb[0].mxu0
  %1554 = vmatprep.mubr.f32.mxu0 0.0
  %1555 = vmatmul.mubr.f32.gmra.mrb[0].mxu0 %v1348
  %v1556 = vpop.f32.mrb[0].mxu0
  %v1557 = vadd.f32 0.0, %v1556
  %v1558 = vpop.f32.mrb[0].mxu0
  %1559 = vmatprep.mubr.f32.mxu0 0.0
  %1560 = vmatmul.mubr.f32.gmra.mrb[0].mxu0 %v1351
  %v1561 = vpop.f32.mrb[0].mxu0
  %v1562 = vadd.f32 0.0, %v1561
  %v1563 = vpop.f32.mrb[0].mxu0
  %1564 = vmatprep.mubr.f32.mxu0 0.0
  %1565 = vmatmul.mubr.f32.gmra.mrb[0].mxu0 %v1354
  %v1566 = vpop.f32.mrb[0].mxu0
  %v1567 = vadd.f32 0.0, %v1566
  %v1568 = vpop.f32.mrb[0].mxu0
  %1569 = vmatprep.mubr.f32.mxu0 0.0
  %1570 = vmatmul.mubr.f32.gmra.mrb[0].mxu0 %v1357
  %v1571 = vpop.f32.mrb[0].mxu0
  %v1572 = vadd.f32 0.0, %v1571
  %v1573 = vpop.f32.mrb[0].mxu0
  %1574 = vmatprep.mubr.f32.mxu0 0.0
  %1575 = vmatmul.mubr.f32.gmra.mrb[0].mxu0 %v1360
  %v1576 = vpop.f32.mrb[0].mxu0
  %v1577 = vadd.f32 0.0, %v1576
  %v1578 = vpop.f32.mrb[0].mxu0
  %1579 = vmatprep.mubr.f32.mxu0 0.0
  %1580 = vmatmul.mubr.f32.gmra.mrb[0].mxu0 %v1363
  %v1581 = vpop.f32.mrb[0].mxu0
  %v1582 = vadd.f32 0.0, %v1581
  %v1583 = vpop.f32.mrb[0].mxu0
  %1584 = vmatprep.mubr.f32.mxu0 0.0
  %1585 = vmatmul.mubr.f32.gmra.mrb[0].mxu0 %v1366
  %v1586 = vpop.f32.mrb[0].mxu0
  %v1587 = vadd.f32 0.0, %v1586
  %v1588 = vpop.f32.mrb[0].mxu0
  %1589 = vmatprep.mubr.f32.mxu0 0.0
  %1590 = vmatmul.mubr.f32.gmra.mrb[0].mxu0 %v1369
  %v1591 = vpop.f32.mrb[0].mxu0
  %v1592 = vadd.f32 0.0, %v1591
  %v1593 = vpop.f32.mrb[0].mxu0
  %1594 = vmatprep.mubr.f32.mxu0 0.0
  %1595 = vmatmul.mubr.f32.gmra.mrb[0].mxu0 %v1372
  %v1596 = vpop.f32.mrb[0].mxu0
  %v1597 = vadd.f32 0.0, %v1596
  %v1598 = vpop.f32.mrb[0].mxu0
  %1599 = vmatprep.mubr.f32.mxu0 0.0
  %1600 = vmatmul.mubr.f32.gmra.mrb[0].mxu0 %v1375
  %v1601 = vpop.f32.mrb[0].mxu0
  %v1602 = vadd.f32 0.0, %v1601
  %v1603 = vpop.f32.mrb[0].mxu0
  %1604 = vdwg.mxu0
  %v1605 = vadd.f32 %v1089, %v1447
  %v1606 = vadd.f32 %v1094, %v1452
  %v1607 = vadd.f32 %v1099, %v1457
  %v1608 = vadd.f32 %v1104, %v1462
  %v1609 = vadd.f32 %v1109, %v1467
  %v1610 = vadd.f32 %v1114, %v1472
  %v1611 = vadd.f32 %v1119, %v1477
  %v1612 = vadd.f32 %v1124, %v1482
  %v1613 = vadd.f32 %v1129, %v1487
  %v1614 = vadd.f32 %v1134, %v1492
  %v1615 = vadd.f32 %v1139, %v1497
  %v1616 = vadd.f32 %v1144, %v1502
  %v1617 = vadd.f32 %v1149, %v1507
  %v1618 = vadd.f32 %v1154, %v1512
  %v1619 = vadd.f32 %v1159, %v1517
  %v1620 = vadd.f32 %v1164, %v1522
  %v1621 = vadd.f32 %v1169, %v1527
  %v1622 = vadd.f32 %v1174, %v1532
  %v1623 = vadd.f32 %v1179, %v1537
  %v1624 = vadd.f32 %v1184, %v1542
  %v1625 = vadd.f32 %v1189, %v1547
  %v1626 = vadd.f32 %v1194, %v1552
  %v1627 = vadd.f32 %v1199, %v1557
  %v1628 = vadd.f32 %v1204, %v1562
  %v1629 = vadd.f32 %v1209, %v1567
  %v1630 = vadd.f32 %v1214, %v1572
  %v1631 = vadd.f32 %v1219, %v1577
  %v1632 = vadd.f32 %v1224, %v1582
  %v1633 = vadd.f32 %v1229, %v1587
  %v1634 = vadd.f32 %v1234, %v1592
  %v1635 = vadd.f32 %v1239, %v1597
  %v1636 = vadd.f32 %v1244, %v1602
  %v1637 = vmul.f32 %v1605, %v522
  %v1638 = vmul.f32 %v1606, %v523
  %v1639 = vmul.f32 %v1607, %v524
  %v1640 = vmul.f32 %v1608, %v525
  %v1641 = vmul.f32 %v1609, %v526
  %v1642 = vmul.f32 %v1610, %v527
  %v1643 = vmul.f32 %v1611, %v528
  %v1644 = vmul.f32 %v1612, %v529
  %v1645 = vmul.f32 %v1613, %v530
  %v1646 = vmul.f32 %v1614, %v531
  %v1647 = vmul.f32 %v1615, %v532
  %v1648 = vmul.f32 %v1616, %v533
  %v1649 = vmul.f32 %v1617, %v534
  %v1650 = vmul.f32 %v1618, %v535
  %v1651 = vmul.f32 %v1619, %v536
  %v1652 = vmul.f32 %v1620, %v537
  %v1653 = vmul.f32 %v1621, %v538
  %v1654 = vmul.f32 %v1622, %v539
  %v1655 = vmul.f32 %v1623, %v540
  %v1656 = vmul.f32 %v1624, %v541
  %v1657 = vmul.f32 %v1625, %v542
  %v1658 = vmul.f32 %v1626, %v543
  %v1659 = vmul.f32 %v1627, %v544
  %v1660 = vmul.f32 %v1628, %v545
  %v1661 = vmul.f32 %v1629, %v546
  %v1662 = vmul.f32 %v1630, %v547
  %v1663 = vmul.f32 %v1631, %v548
  %v1664 = vmul.f32 %v1632, %v549
  %v1665 = vmul.f32 %v1633, %v550
  %v1666 = vmul.f32 %v1634, %v551
  %v1667 = vmul.f32 %v1635, %v552
  %v1668 = vmul.f32 %v1636, %v553
  %v1669 = vadd.f32 %v1637, 0.0
  %v1670 = vadd.f32 %v1638, 0.0
  %v1671 = vadd.f32 %v1639, 0.0
  %v1672 = vadd.f32 %v1640, 0.0
  %v1673 = vadd.f32 %v1641, 0.0
  %v1674 = vadd.f32 %v1642, 0.0
  %v1675 = vadd.f32 %v1643, 0.0
  %v1676 = vadd.f32 %v1644, 0.0
  %v1677 = vadd.f32 %v1645, 0.0
  %v1678 = vadd.f32 %v1646, 0.0
  %v1679 = vadd.f32 %v1647, 0.0
  %v1680 = vadd.f32 %v1648, 0.0
  %v1681 = vadd.f32 %v1649, 0.0
  %v1682 = vadd.f32 %v1650, 0.0
  %v1683 = vadd.f32 %v1651, 0.0
  %v1684 = vadd.f32 %v1652, 0.0
  %v1685 = vadd.f32 %v1653, 0.0
  %v1686 = vadd.f32 %v1654, 0.0
  %v1687 = vadd.f32 %v1655, 0.0
  %v1688 = vadd.f32 %v1656, 0.0
  %v1689 = vadd.f32 %v1657, 0.0
  %v1690 = vadd.f32 %v1658, 0.0
  %v1691 = vadd.f32 %v1659, 0.0
  %v1692 = vadd.f32 %v1660, 0.0
  %v1693 = vadd.f32 %v1661, 0.0
  %v1694 = vadd.f32 %v1662, 0.0
  %v1695 = vadd.f32 %v1663, 0.0
  %v1696 = vadd.f32 %v1664, 0.0
  %v1697 = vadd.f32 %v1665, 0.0
  %v1698 = vadd.f32 %v1666, 0.0
  %v1699 = vadd.f32 %v1667, 0.0
  %v1700 = vadd.f32 %v1668, 0.0
  %v1701 = vld [vmem:[%s0 + $0x1] sm:$0xff]
  %v1702 = vld [vmem:[%s0 + $0x9] sm:$0xff]
  %v1703 = vld [vmem:[%s0 + $0x11] sm:$0xff]
  %v1704 = vld [vmem:[%s0 + $0x19] sm:$0xff]
  %v1705 = vld [vmem:[%s0 + $0x21] sm:$0xff]
  %v1706 = vld [vmem:[%s0 + $0x29] sm:$0xff]
  %v1707 = vld [vmem:[%s0 + $0x31] sm:$0xff]
  %v1708 = vld [vmem:[%s0 + $0x39] sm:$0xff]
  %v1709 = vld [vmem:[%s0 + $0x41] sm:$0xff]
  %v1710 = vld [vmem:[%s0 + $0x49] sm:$0xff]
  %v1711 = vld [vmem:[%s0 + $0x51] sm:$0xff]
  %v1712 = vld [vmem:[%s0 + $0x59] sm:$0xff]
  %v1713 = vld [vmem:[%s0 + $0x61] sm:$0xff]
  %v1714 = vld [vmem:[%s0 + $0x69] sm:$0xff]
  %v1715 = vld [vmem:[%s0 + $0x71] sm:$0xff]
  %v1716 = vld [vmem:[%s0 + $0x79] sm:$0xff]
  %v1717 = vld [vmem:[%s0 + $0x81] sm:$0xff]
  %v1718 = vld [vmem:[%s0 + $0x89] sm:$0xff]
  %v1719 = vld [vmem:[%s0 + $0x91] sm:$0xff]
  %v1720 = vld [vmem:[%s0 + $0x99] sm:$0xff]
  %v1721 = vld [vmem:[%s0 + $0xa1] sm:$0xff]
  %v1722 = vld [vmem:[%s0 + $0xa9] sm:$0xff]
  %v1723 = vld [vmem:[%s0 + $0xb1] sm:$0xff]
  %v1724 = vld [vmem:[%s0 + $0xb9] sm:$0xff]
  %v1725 = vld [vmem:[%s0 + $0xc1] sm:$0xff]
  %v1726 = vld [vmem:[%s0 + $0xc9] sm:$0xff]
  %v1727 = vld [vmem:[%s0 + $0xd1] sm:$0xff]
  %v1728 = vld [vmem:[%s0 + $0xd9] sm:$0xff]
  %v1729 = vld [vmem:[%s0 + $0xe1] sm:$0xff]
  %v1730 = vld [vmem:[%s0 + $0xe9] sm:$0xff]
  %v1731 = vld [vmem:[%s0 + $0xf1] sm:$0xff]
  %v1732 = vld [vmem:[%s0 + $0xf9] sm:$0xff]
  %s1733 = scalar_lea.vmem %s1, 4
  %v1734 = vld [vmem:[%s1733] sm:$0xf]
  %v1735 = vld [vmem:[%s0 + $0x101] sm:$0xff]
  %v1736 = vld [vmem:[%s0 + $0x109] sm:$0xff]
  %s1737 = scalar_lea.vmem %s1, 16
  %v1738 = vld [vmem:[%s1737] sm:$0xf]
  %v1740 = vsel %vm687, %v1703, 0
  %v1743 = vsel %vm687, %v1704, 0
  %v1746 = vsel %vm687, %v1705, 0
  %v1749 = vsel %vm687, %v1706, 0
  %v1752 = vsel %vm687, %v1707, 0
  %v1755 = vsel %vm687, %v1708, 0
  %v1758 = vsel %vm687, %v1709, 0
  %v1761 = vsel %vm687, %v1710, 0
  %v1764 = vsel %vm687, %v1711, 0
  %v1767 = vsel %vm687, %v1712, 0
  %v1770 = vsel %vm687, %v1713, 0
  %v1773 = vsel %vm687, %v1714, 0
  %v1776 = vsel %vm687, %v1715, 0
  %v1779 = vsel %vm687, %v1716, 0
  %v1782 = vsel %vm687, %v1717, 0
  %v1785 = vsel %vm687, %v1718, 0
  %v1788 = vsel %vm687, %v1719, 0
  %v1791 = vsel %vm687, %v1720, 0
  %v1794 = vsel %vm687, %v1721, 0
  %v1797 = vsel %vm687, %v1722, 0
  %v1800 = vsel %vm687, %v1723, 0
  %v1803 = vsel %vm687, %v1724, 0
  %v1806 = vsel %vm687, %v1725, 0
  %v1809 = vsel %vm687, %v1726, 0
  %v1812 = vsel %vm687, %v1727, 0
  %v1815 = vsel %vm687, %v1728, 0
  %v1818 = vsel %vm687, %v1729, 0
  %v1821 = vsel %vm687, %v1730, 0
  %v1824 = vsel %vm687, %v1731, 0
  %v1827 = vsel %vm687, %v1732, 0
  %v1830 = vsel %vm687, %v1735, 0
  %v1833 = vsel %vm687, %v1736, 0
  %v1836 = vsel %vm784, %v1738, 0
  %1838 = vmatprep.subr.mxu0 0.0
  %1839 = vmatpush1.msra.mxu0 %v1836
  %1840 = vmatprep.subr.mxu0 0.0
  %1841 = vmatpush1.msra.mxu0 0.0
  %1842 = vmatprep.subr.mxu0 0.0
  %1843 = vmatpush1.msra.mxu0 0.0
  %1844 = vmatprep.subr.mxu0 0.0
  %1845 = vmatpush1.msra.mxu0 0.0
  %1846 = vmatprep.subr.mxu0 0.0
  %1847 = vmatpush1.msra.mxu0 0.0
  %1848 = vmatprep.subr.mxu0 0.0
  %1849 = vmatpush1.msra.mxu0 0.0
  %1850 = vmatprep.subr.mxu0 0.0
  %1851 = vmatpush1.msra.mxu0 0.0
  %1852 = vmatprep.subr.mxu0 0.0
  %1853 = vmatpush1.msra.mxu0 0.0
  %1854 = vmatprep.subr.mxu0 0.0
  %1855 = vmatpush1.msra.mxu0 0.0
  %1856 = vmatprep.subr.mxu0 0.0
  %1857 = vmatpush1.msra.mxu0 0.0
  %1858 = vmatprep.subr.mxu0 0.0
  %1859 = vmatpush1.msra.mxu0 0.0
  %1860 = vmatprep.subr.mxu0 0.0
  %1861 = vmatpush1.msra.mxu0 0.0
  %1862 = vmatprep.subr.mxu0 0.0
  %1863 = vmatpush1.msra.mxu0 0.0
  %1864 = vmatprep.subr.mxu0 0.0
  %1865 = vmatpush1.msra.mxu0 0.0
  %1866 = vmatprep.subr.mxu0 0.0
  %1867 = vmatpush1.msra.mxu0 0.0
  %1868 = vmatprep.subr.mxu0 0.0
  %1869 = vmatpush1.msra.mxu0 0.0
  %1870 = vmatprep.subr.mxu0 0.0
  %1871 = vmatpush1.msra.mxu0 0.0
  %1872 = vmatprep.subr.mxu0 0.0
  %1873 = vmatpush1.msra.mxu0 0.0
  %1874 = vmatprep.subr.mxu0 0.0
  %1875 = vmatpush1.msra.mxu0 0.0
  %1876 = vmatprep.subr.mxu0 0.0
  %1877 = vmatpush1.msra.mxu0 0.0
  %1878 = vmatprep.subr.mxu0 0.0
  %1879 = vmatpush1.msra.mxu0 0.0
  %1880 = vmatprep.subr.mxu0 0.0
  %1881 = vmatpush1.msra.mxu0 0.0
  %1882 = vmatprep.subr.mxu0 0.0
  %1883 = vmatpush1.msra.mxu0 0.0
  %1884 = vmatprep.subr.mxu0 0.0
  %1885 = vmatpush1.msra.mxu0 0.0
  %1886 = vmatprep.subr.mxu0 0.0
  %1887 = vmatpush1.msra.mxu0 0.0
  %1888 = vmatprep.subr.mxu0 0.0
  %1889 = vmatpush1.msra.mxu0 0.0
  %1890 = vmatprep.subr.mxu0 0.0
  %1891 = vmatpush1.msra.mxu0 0.0
  %1892 = vmatprep.subr.mxu0 0.0
  %1893 = vmatpush1.msra.mxu0 0.0
  %1894 = vmatprep.subr.mxu0 0.0
  %1895 = vmatpush1.msra.mxu0 0.0
  %1896 = vmatprep.subr.mxu0 0.0
  %1897 = vmatpush1.msra.mxu0 0.0
  %1898 = vmatprep.subr.mxu0 0.0
  %1899 = vmatpush1.msra.mxu0 0.0
  %1900 = vmatprep.subr.mxu0 0.0
  %1901 = vmatpush1.msra.mxu0 0.0
  %1902 = vmatprep.mubr.f32.mxu0 0.0
  %1903 = vmatmul.mubr.f32.gmra.mrb[0].mxu0 %v1740
  %v1904 = vpop.f32.mrb[0].mxu0
  %v1905 = vadd.f32 0.0, %v1904
  %v1906 = vpop.f32.mrb[0].mxu0
  %1907 = vmatprep.mubr.f32.mxu0 0.0
  %1908 = vmatmul.mubr.f32.gmra.mrb[0].mxu0 %v1743
  %v1909 = vpop.f32.mrb[0].mxu0
  %v1910 = vadd.f32 0.0, %v1909
  %v1911 = vpop.f32.mrb[0].mxu0
  %1912 = vmatprep.mubr.f32.mxu0 0.0
  %1913 = vmatmul.mubr.f32.gmra.mrb[0].mxu0 %v1746
  %v1914 = vpop.f32.mrb[0].mxu0
  %v1915 = vadd.f32 0.0, %v1914
  %v1916 = vpop.f32.mrb[0].mxu0
  %1917 = vmatprep.mubr.f32.mxu0 0.0
  %1918 = vmatmul.mubr.f32.gmra.mrb[0].mxu0 %v1749
  %v1919 = vpop.f32.mrb[0].mxu0
  %v1920 = vadd.f32 0.0, %v1919
  %v1921 = vpop.f32.mrb[0].mxu0
  %1922 = vmatprep.mubr.f32.mxu0 0.0
  %1923 = vmatmul.mubr.f32.gmra.mrb[0].mxu0 %v1752
  %v1924 = vpop.f32.mrb[0].mxu0
  %v1925 = vadd.f32 0.0, %v1924
  %v1926 = vpop.f32.mrb[0].mxu0
  %1927 = vmatprep.mubr.f32.mxu0 0.0
  %1928 = vmatmul.mubr.f32.gmra.mrb[0].mxu0 %v1755
  %v1929 = vpop.f32.mrb[0].mxu0
  %v1930 = vadd.f32 0.0, %v1929
  %v1931 = vpop.f32.mrb[0].mxu0
  %1932 = vmatprep.mubr.f32.mxu0 0.0
  %1933 = vmatmul.mubr.f32.gmra.mrb[0].mxu0 %v1758
  %v1934 = vpop.f32.mrb[0].mxu0
  %v1935 = vadd.f32 0.0, %v1934
  %v1936 = vpop.f32.mrb[0].mxu0
  %1937 = vmatprep.mubr.f32.mxu0 0.0
  %1938 = vmatmul.mubr.f32.gmra.mrb[0].mxu0 %v1761
  %v1939 = vpop.f32.mrb[0].mxu0
  %v1940 = vadd.f32 0.0, %v1939
  %v1941 = vpop.f32.mrb[0].mxu0
  %1942 = vmatprep.mubr.f32.mxu0 0.0
  %1943 = vmatmul.mubr.f32.gmra.mrb[0].mxu0 %v1764
  %v1944 = vpop.f32.mrb[0].mxu0
  %v1945 = vadd.f32 0.0, %v1944
  %v1946 = vpop.f32.mrb[0].mxu0
  %1947 = vmatprep.mubr.f32.mxu0 0.0
  %1948 = vmatmul.mubr.f32.gmra.mrb[0].mxu0 %v1767
  %v1949 = vpop.f32.mrb[0].mxu0
  %v1950 = vadd.f32 0.0, %v1949
  %v1951 = vpop.f32.mrb[0].mxu0
  %1952 = vmatprep.mubr.f32.mxu0 0.0
  %1953 = vmatmul.mubr.f32.gmra.mrb[0].mxu0 %v1770
  %v1954 = vpop.f32.mrb[0].mxu0
  %v1955 = vadd.f32 0.0, %v1954
  %v1956 = vpop.f32.mrb[0].mxu0
  %1957 = vmatprep.mubr.f32.mxu0 0.0
  %1958 = vmatmul.mubr.f32.gmra.mrb[0].mxu0 %v1773
  %v1959 = vpop.f32.mrb[0].mxu0
  %v1960 = vadd.f32 0.0, %v1959
  %v1961 = vpop.f32.mrb[0].mxu0
  %1962 = vmatprep.mubr.f32.mxu0 0.0
  %1963 = vmatmul.mubr.f32.gmra.mrb[0].mxu0 %v1776
  %v1964 = vpop.f32.mrb[0].mxu0
  %v1965 = vadd.f32 0.0, %v1964
  %v1966 = vpop.f32.mrb[0].mxu0
  %1967 = vmatprep.mubr.f32.mxu0 0.0
  %1968 = vmatmul.mubr.f32.gmra.mrb[0].mxu0 %v1779
  %v1969 = vpop.f32.mrb[0].mxu0
  %v1970 = vadd.f32 0.0, %v1969
  %v1971 = vpop.f32.mrb[0].mxu0
  %1972 = vmatprep.mubr.f32.mxu0 0.0
  %1973 = vmatmul.mubr.f32.gmra.mrb[0].mxu0 %v1782
  %v1974 = vpop.f32.mrb[0].mxu0
  %v1975 = vadd.f32 0.0, %v1974
  %v1976 = vpop.f32.mrb[0].mxu0
  %1977 = vmatprep.mubr.f32.mxu0 0.0
  %1978 = vmatmul.mubr.f32.gmra.mrb[0].mxu0 %v1785
  %v1979 = vpop.f32.mrb[0].mxu0
  %v1980 = vadd.f32 0.0, %v1979
  %v1981 = vpop.f32.mrb[0].mxu0
  %1982 = vmatprep.mubr.f32.mxu0 0.0
  %1983 = vmatmul.mubr.f32.gmra.mrb[0].mxu0 %v1788
  %v1984 = vpop.f32.mrb[0].mxu0
  %v1985 = vadd.f32 0.0, %v1984
  %v1986 = vpop.f32.mrb[0].mxu0
  %1987 = vmatprep.mubr.f32.mxu0 0.0
  %1988 = vmatmul.mubr.f32.gmra.mrb[0].mxu0 %v1791
  %v1989 = vpop.f32.mrb[0].mxu0
  %v1990 = vadd.f32 0.0, %v1989
  %v1991 = vpop.f32.mrb[0].mxu0
  %1992 = vmatprep.mubr.f32.mxu0 0.0
  %1993 = vmatmul.mubr.f32.gmra.mrb[0].mxu0 %v1794
  %v1994 = vpop.f32.mrb[0].mxu0
  %v1995 = vadd.f32 0.0, %v1994
  %v1996 = vpop.f32.mrb[0].mxu0
  %1997 = vmatprep.mubr.f32.mxu0 0.0
  %1998 = vmatmul.mubr.f32.gmra.mrb[0].mxu0 %v1797
  %v1999 = vpop.f32.mrb[0].mxu0
  %v2000 = vadd.f32 0.0, %v1999
  %v2001 = vpop.f32.mrb[0].mxu0
  %2002 = vmatprep.mubr.f32.mxu0 0.0
  %2003 = vmatmul.mubr.f32.gmra.mrb[0].mxu0 %v1800
  %v2004 = vpop.f32.mrb[0].mxu0
  %v2005 = vadd.f32 0.0, %v2004
  %v2006 = vpop.f32.mrb[0].mxu0
  %2007 = vmatprep.mubr.f32.mxu0 0.0
  %2008 = vmatmul.mubr.f32.gmra.mrb[0].mxu0 %v1803
  %v2009 = vpop.f32.mrb[0].mxu0
  %v2010 = vadd.f32 0.0, %v2009
  %v2011 = vpop.f32.mrb[0].mxu0
  %2012 = vmatprep.mubr.f32.mxu0 0.0
  %2013 = vmatmul.mubr.f32.gmra.mrb[0].mxu0 %v1806
  %v2014 = vpop.f32.mrb[0].mxu0
  %v2015 = vadd.f32 0.0, %v2014
  %v2016 = vpop.f32.mrb[0].mxu0
  %2017 = vmatprep.mubr.f32.mxu0 0.0
  %2018 = vmatmul.mubr.f32.gmra.mrb[0].mxu0 %v1809
  %v2019 = vpop.f32.mrb[0].mxu0
  %v2020 = vadd.f32 0.0, %v2019
  %v2021 = vpop.f32.mrb[0].mxu0
  %2022 = vmatprep.mubr.f32.mxu0 0.0
  %2023 = vmatmul.mubr.f32.gmra.mrb[0].mxu0 %v1812
  %v2024 = vpop.f32.mrb[0].mxu0
  %v2025 = vadd.f32 0.0, %v2024
  %v2026 = vpop.f32.mrb[0].mxu0
  %2027 = vmatprep.mubr.f32.mxu0 0.0
  %2028 = vmatmul.mubr.f32.gmra.mrb[0].mxu0 %v1815
  %v2029 = vpop.f32.mrb[0].mxu0
  %v2030 = vadd.f32 0.0, %v2029
  %v2031 = vpop.f32.mrb[0].mxu0
  %2032 = vmatprep.mubr.f32.mxu0 0.0
  %2033 = vmatmul.mubr.f32.gmra.mrb[0].mxu0 %v1818
  %v2034 = vpop.f32.mrb[0].mxu0
  %v2035 = vadd.f32 0.0, %v2034
  %v2036 = vpop.f32.mrb[0].mxu0
  %2037 = vmatprep.mubr.f32.mxu0 0.0
  %2038 = vmatmul.mubr.f32.gmra.mrb[0].mxu0 %v1821
  %v2039 = vpop.f32.mrb[0].mxu0
  %v2040 = vadd.f32 0.0, %v2039
  %v2041 = vpop.f32.mrb[0].mxu0
  %2042 = vmatprep.mubr.f32.mxu0 0.0
  %2043 = vmatmul.mubr.f32.gmra.mrb[0].mxu0 %v1824
  %v2044 = vpop.f32.mrb[0].mxu0
  %v2045 = vadd.f32 0.0, %v2044
  %v2046 = vpop.f32.mrb[0].mxu0
  %2047 = vmatprep.mubr.f32.mxu0 0.0
  %2048 = vmatmul.mubr.f32.gmra.mrb[0].mxu0 %v1827
  %v2049 = vpop.f32.mrb[0].mxu0
  %v2050 = vadd.f32 0.0, %v2049
  %v2051 = vpop.f32.mrb[0].mxu0
  %2052 = vmatprep.mubr.f32.mxu0 0.0
  %2053 = vmatmul.mubr.f32.gmra.mrb[0].mxu0 %v1830
  %v2054 = vpop.f32.mrb[0].mxu0
  %v2055 = vadd.f32 0.0, %v2054
  %v2056 = vpop.f32.mrb[0].mxu0
  %2057 = vmatprep.mubr.f32.mxu0 0.0
  %2058 = vmatmul.mubr.f32.gmra.mrb[0].mxu0 %v1833
  %v2059 = vpop.f32.mrb[0].mxu0
  %v2060 = vadd.f32 0.0, %v2059
  %v2061 = vpop.f32.mrb[0].mxu0
  %2062 = vdwg.mxu0
  %v2064 = vsel %vm687, %v1701, 0
  %v2067 = vsel %vm687, %v1702, 0
  %v2070 = vsel %vm784, %v1734, 0
  %2072 = vmatprep.subr.mxu0 0.0
  %2073 = vmatpush1.msra.mxu0 %v2070
  %2074 = vmatprep.subr.mxu0 0.0
  %2075 = vmatpush1.msra.mxu0 0.0
  %2076 = vmatprep.subr.mxu0 0.0
  %2077 = vmatpush1.msra.mxu0 0.0
  %2078 = vmatprep.subr.mxu0 0.0
  %2079 = vmatpush1.msra.mxu0 0.0
  %2080 = vmatprep.subr.mxu0 0.0
  %2081 = vmatpush1.msra.mxu0 0.0
  %2082 = vmatprep.subr.mxu0 0.0
  %2083 = vmatpush1.msra.mxu0 0.0
  %2084 = vmatprep.subr.mxu0 0.0
  %2085 = vmatpush1.msra.mxu0 0.0
  %2086 = vmatprep.subr.mxu0 0.0
  %2087 = vmatpush1.msra.mxu0 0.0
  %2088 = vmatprep.subr.mxu0 0.0
  %2089 = vmatpush1.msra.mxu0 0.0
  %2090 = vmatprep.subr.mxu0 0.0
  %2091 = vmatpush1.msra.mxu0 0.0
  %2092 = vmatprep.subr.mxu0 0.0
  %2093 = vmatpush1.msra.mxu0 0.0
  %2094 = vmatprep.subr.mxu0 0.0
  %2095 = vmatpush1.msra.mxu0 0.0
  %2096 = vmatprep.subr.mxu0 0.0
  %2097 = vmatpush1.msra.mxu0 0.0
  %2098 = vmatprep.subr.mxu0 0.0
  %2099 = vmatpush1.msra.mxu0 0.0
  %2100 = vmatprep.subr.mxu0 0.0
  %2101 = vmatpush1.msra.mxu0 0.0
  %2102 = vmatprep.subr.mxu0 0.0
  %2103 = vmatpush1.msra.mxu0 0.0
  %2104 = vmatprep.subr.mxu0 0.0
  %2105 = vmatpush1.msra.mxu0 0.0
  %2106 = vmatprep.subr.mxu0 0.0
  %2107 = vmatpush1.msra.mxu0 0.0
  %2108 = vmatprep.subr.mxu0 0.0
  %2109 = vmatpush1.msra.mxu0 0.0
  %2110 = vmatprep.subr.mxu0 0.0
  %2111 = vmatpush1.msra.mxu0 0.0
  %2112 = vmatprep.subr.mxu0 0.0
  %2113 = vmatpush1.msra.mxu0 0.0
  %2114 = vmatprep.subr.mxu0 0.0
  %2115 = vmatpush1.msra.mxu0 0.0
  %2116 = vmatprep.subr.mxu0 0.0
  %2117 = vmatpush1.msra.mxu0 0.0
  %2118 = vmatprep.subr.mxu0 0.0
  %2119 = vmatpush1.msra.mxu0 0.0
  %2120 = vmatprep.subr.mxu0 0.0
  %2121 = vmatpush1.msra.mxu0 0.0
  %2122 = vmatprep.subr.mxu0 0.0
  %2123 = vmatpush1.msra.mxu0 0.0
  %2124 = vmatprep.subr.mxu0 0.0
  %2125 = vmatpush1.msra.mxu0 0.0
  %2126 = vmatprep.subr.mxu0 0.0
  %2127 = vmatpush1.msra.mxu0 0.0
  %2128 = vmatprep.subr.mxu0 0.0
  %2129 = vmatpush1.msra.mxu0 0.0
  %2130 = vmatprep.subr.mxu0 0.0
  %2131 = vmatpush1.msra.mxu0 0.0
  %2132 = vmatprep.subr.mxu0 0.0
  %2133 = vmatpush1.msra.mxu0 0.0
  %2134 = vmatprep.subr.mxu0 0.0
  %2135 = vmatpush1.msra.mxu0 0.0
  %2136 = vmatprep.mubr.f32.mxu0 0.0
  %2137 = vmatmul.mubr.f32.gmra.mrb[0].mxu0 %v2064
  %v2138 = vpop.f32.mrb[0].mxu0
  %v2139 = vadd.f32 %v1905, %v2138
  %v2140 = vpop.f32.mrb[0].mxu0
  %2141 = vmatprep.mubr.f32.mxu0 0.0
  %2142 = vmatmul.mubr.f32.gmra.mrb[0].mxu0 %v2067
  %v2143 = vpop.f32.mrb[0].mxu0
  %v2144 = vadd.f32 %v1910, %v2143
  %v2145 = vpop.f32.mrb[0].mxu0
  %2146 = vmatprep.mubr.f32.mxu0 0.0
  %2147 = vmatmul.mubr.f32.gmra.mrb[0].mxu0 %v1740
  %v2148 = vpop.f32.mrb[0].mxu0
  %v2149 = vadd.f32 %v1915, %v2148
  %v2150 = vpop.f32.mrb[0].mxu0
  %2151 = vmatprep.mubr.f32.mxu0 0.0
  %2152 = vmatmul.mubr.f32.gmra.mrb[0].mxu0 %v1743
  %v2153 = vpop.f32.mrb[0].mxu0
  %v2154 = vadd.f32 %v1920, %v2153
  %v2155 = vpop.f32.mrb[0].mxu0
  %2156 = vmatprep.mubr.f32.mxu0 0.0
  %2157 = vmatmul.mubr.f32.gmra.mrb[0].mxu0 %v1746
  %v2158 = vpop.f32.mrb[0].mxu0
  %v2159 = vadd.f32 %v1925, %v2158
  %v2160 = vpop.f32.mrb[0].mxu0
  %2161 = vmatprep.mubr.f32.mxu0 0.0
  %2162 = vmatmul.mubr.f32.gmra.mrb[0].mxu0 %v1749
  %v2163 = vpop.f32.mrb[0].mxu0
  %v2164 = vadd.f32 %v1930, %v2163
  %v2165 = vpop.f32.mrb[0].mxu0
  %2166 = vmatprep.mubr.f32.mxu0 0.0
  %2167 = vmatmul.mubr.f32.gmra.mrb[0].mxu0 %v1752
  %v2168 = vpop.f32.mrb[0].mxu0
  %v2169 = vadd.f32 %v1935, %v2168
  %v2170 = vpop.f32.mrb[0].mxu0
  %2171 = vmatprep.mubr.f32.mxu0 0.0
  %2172 = vmatmul.mubr.f32.gmra.mrb[0].mxu0 %v1755
  %v2173 = vpop.f32.mrb[0].mxu0
  %v2174 = vadd.f32 %v1940, %v2173
  %v2175 = vpop.f32.mrb[0].mxu0
  %2176 = vmatprep.mubr.f32.mxu0 0.0
  %2177 = vmatmul.mubr.f32.gmra.mrb[0].mxu0 %v1758
  %v2178 = vpop.f32.mrb[0].mxu0
  %v2179 = vadd.f32 %v1945, %v2178
  %v2180 = vpop.f32.mrb[0].mxu0
  %2181 = vmatprep.mubr.f32.mxu0 0.0
  %2182 = vmatmul.mubr.f32.gmra.mrb[0].mxu0 %v1761
  %v2183 = vpop.f32.mrb[0].mxu0
  %v2184 = vadd.f32 %v1950, %v2183
  %v2185 = vpop.f32.mrb[0].mxu0
  %2186 = vmatprep.mubr.f32.mxu0 0.0
  %2187 = vmatmul.mubr.f32.gmra.mrb[0].mxu0 %v1764
  %v2188 = vpop.f32.mrb[0].mxu0
  %v2189 = vadd.f32 %v1955, %v2188
  %v2190 = vpop.f32.mrb[0].mxu0
  %2191 = vmatprep.mubr.f32.mxu0 0.0
  %2192 = vmatmul.mubr.f32.gmra.mrb[0].mxu0 %v1767
  %v2193 = vpop.f32.mrb[0].mxu0
  %v2194 = vadd.f32 %v1960, %v2193
  %v2195 = vpop.f32.mrb[0].mxu0
  %2196 = vmatprep.mubr.f32.mxu0 0.0
  %2197 = vmatmul.mubr.f32.gmra.mrb[0].mxu0 %v1770
  %v2198 = vpop.f32.mrb[0].mxu0
  %v2199 = vadd.f32 %v1965, %v2198
  %v2200 = vpop.f32.mrb[0].mxu0
  %2201 = vmatprep.mubr.f32.mxu0 0.0
  %2202 = vmatmul.mubr.f32.gmra.mrb[0].mxu0 %v1773
  %v2203 = vpop.f32.mrb[0].mxu0
  %v2204 = vadd.f32 %v1970, %v2203
  %v2205 = vpop.f32.mrb[0].mxu0
  %2206 = vmatprep.mubr.f32.mxu0 0.0
  %2207 = vmatmul.mubr.f32.gmra.mrb[0].mxu0 %v1776
  %v2208 = vpop.f32.mrb[0].mxu0
  %v2209 = vadd.f32 %v1975, %v2208
  %v2210 = vpop.f32.mrb[0].mxu0
  %2211 = vmatprep.mubr.f32.mxu0 0.0
  %2212 = vmatmul.mubr.f32.gmra.mrb[0].mxu0 %v1779
  %v2213 = vpop.f32.mrb[0].mxu0
  %v2214 = vadd.f32 %v1980, %v2213
  %v2215 = vpop.f32.mrb[0].mxu0
  %2216 = vmatprep.mubr.f32.mxu0 0.0
  %2217 = vmatmul.mubr.f32.gmra.mrb[0].mxu0 %v1782
  %v2218 = vpop.f32.mrb[0].mxu0
  %v2219 = vadd.f32 %v1985, %v2218
  %v2220 = vpop.f32.mrb[0].mxu0
  %2221 = vmatprep.mubr.f32.mxu0 0.0
  %2222 = vmatmul.mubr.f32.gmra.mrb[0].mxu0 %v1785
  %v2223 = vpop.f32.mrb[0].mxu0
  %v2224 = vadd.f32 %v1990, %v2223
  %v2225 = vpop.f32.mrb[0].mxu0
  %2226 = vmatprep.mubr.f32.mxu0 0.0
  %2227 = vmatmul.mubr.f32.gmra.mrb[0].mxu0 %v1788
  %v2228 = vpop.f32.mrb[0].mxu0
  %v2229 = vadd.f32 %v1995, %v2228
  %v2230 = vpop.f32.mrb[0].mxu0
  %2231 = vmatprep.mubr.f32.mxu0 0.0
  %2232 = vmatmul.mubr.f32.gmra.mrb[0].mxu0 %v1791
  %v2233 = vpop.f32.mrb[0].mxu0
  %v2234 = vadd.f32 %v2000, %v2233
  %v2235 = vpop.f32.mrb[0].mxu0
  %2236 = vmatprep.mubr.f32.mxu0 0.0
  %2237 = vmatmul.mubr.f32.gmra.mrb[0].mxu0 %v1794
  %v2238 = vpop.f32.mrb[0].mxu0
  %v2239 = vadd.f32 %v2005, %v2238
  %v2240 = vpop.f32.mrb[0].mxu0
  %2241 = vmatprep.mubr.f32.mxu0 0.0
  %2242 = vmatmul.mubr.f32.gmra.mrb[0].mxu0 %v1797
  %v2243 = vpop.f32.mrb[0].mxu0
  %v2244 = vadd.f32 %v2010, %v2243
  %v2245 = vpop.f32.mrb[0].mxu0
  %2246 = vmatprep.mubr.f32.mxu0 0.0
  %2247 = vmatmul.mubr.f32.gmra.mrb[0].mxu0 %v1800
  %v2248 = vpop.f32.mrb[0].mxu0
  %v2249 = vadd.f32 %v2015, %v2248
  %v2250 = vpop.f32.mrb[0].mxu0
  %2251 = vmatprep.mubr.f32.mxu0 0.0
  %2252 = vmatmul.mubr.f32.gmra.mrb[0].mxu0 %v1803
  %v2253 = vpop.f32.mrb[0].mxu0
  %v2254 = vadd.f32 %v2020, %v2253
  %v2255 = vpop.f32.mrb[0].mxu0
  %2256 = vmatprep.mubr.f32.mxu0 0.0
  %2257 = vmatmul.mubr.f32.gmra.mrb[0].mxu0 %v1806
  %v2258 = vpop.f32.mrb[0].mxu0
  %v2259 = vadd.f32 %v2025, %v2258
  %v2260 = vpop.f32.mrb[0].mxu0
  %2261 = vmatprep.mubr.f32.mxu0 0.0
  %2262 = vmatmul.mubr.f32.gmra.mrb[0].mxu0 %v1809
  %v2263 = vpop.f32.mrb[0].mxu0
  %v2264 = vadd.f32 %v2030, %v2263
  %v2265 = vpop.f32.mrb[0].mxu0
  %2266 = vmatprep.mubr.f32.mxu0 0.0
  %2267 = vmatmul.mubr.f32.gmra.mrb[0].mxu0 %v1812
  %v2268 = vpop.f32.mrb[0].mxu0
  %v2269 = vadd.f32 %v2035, %v2268
  %v2270 = vpop.f32.mrb[0].mxu0
  %2271 = vmatprep.mubr.f32.mxu0 0.0
  %2272 = vmatmul.mubr.f32.gmra.mrb[0].mxu0 %v1815
  %v2273 = vpop.f32.mrb[0].mxu0
  %v2274 = vadd.f32 %v2040, %v2273
  %v2275 = vpop.f32.mrb[0].mxu0
  %2276 = vmatprep.mubr.f32.mxu0 0.0
  %2277 = vmatmul.mubr.f32.gmra.mrb[0].mxu0 %v1818
  %v2278 = vpop.f32.mrb[0].mxu0
  %v2279 = vadd.f32 %v2045, %v2278
  %v2280 = vpop.f32.mrb[0].mxu0
  %2281 = vmatprep.mubr.f32.mxu0 0.0
  %2282 = vmatmul.mubr.f32.gmra.mrb[0].mxu0 %v1821
  %v2283 = vpop.f32.mrb[0].mxu0
  %v2284 = vadd.f32 %v2050, %v2283
  %v2285 = vpop.f32.mrb[0].mxu0
  %2286 = vmatprep.mubr.f32.mxu0 0.0
  %2287 = vmatmul.mubr.f32.gmra.mrb[0].mxu0 %v1824
  %v2288 = vpop.f32.mrb[0].mxu0
  %v2289 = vadd.f32 %v2055, %v2288
  %v2290 = vpop.f32.mrb[0].mxu0
  %2291 = vmatprep.mubr.f32.mxu0 0.0
  %2292 = vmatmul.mubr.f32.gmra.mrb[0].mxu0 %v1827
  %v2293 = vpop.f32.mrb[0].mxu0
  %v2294 = vadd.f32 %v2060, %v2293
  %v2295 = vpop.f32.mrb[0].mxu0
  %2296 = vdwg.mxu0
  %v2297 = vld [vmem:[%s0 + $0x21] sm:$0xff]
  %v2298 = vld [vmem:[%s0 + $0x29] sm:$0xff]
  %v2299 = vld [vmem:[%s0 + $0x31] sm:$0xff]
  %v2300 = vld [vmem:[%s0 + $0x39] sm:$0xff]
  %v2301 = vld [vmem:[%s0 + $0x41] sm:$0xff]
  %v2302 = vld [vmem:[%s0 + $0x49] sm:$0xff]
  %v2303 = vld [vmem:[%s0 + $0x51] sm:$0xff]
  %v2304 = vld [vmem:[%s0 + $0x59] sm:$0xff]
  %v2305 = vld [vmem:[%s0 + $0x61] sm:$0xff]
  %v2306 = vld [vmem:[%s0 + $0x69] sm:$0xff]
  %v2307 = vld [vmem:[%s0 + $0x71] sm:$0xff]
  %v2308 = vld [vmem:[%s0 + $0x79] sm:$0xff]
  %v2309 = vld [vmem:[%s0 + $0x81] sm:$0xff]
  %v2310 = vld [vmem:[%s0 + $0x89] sm:$0xff]
  %v2311 = vld [vmem:[%s0 + $0x91] sm:$0xff]
  %v2312 = vld [vmem:[%s0 + $0x99] sm:$0xff]
  %v2313 = vld [vmem:[%s0 + $0xa1] sm:$0xff]
  %v2314 = vld [vmem:[%s0 + $0xa9] sm:$0xff]
  %v2315 = vld [vmem:[%s0 + $0xb1] sm:$0xff]
  %v2316 = vld [vmem:[%s0 + $0xb9] sm:$0xff]
  %v2317 = vld [vmem:[%s0 + $0xc1] sm:$0xff]
  %v2318 = vld [vmem:[%s0 + $0xc9] sm:$0xff]
  %v2319 = vld [vmem:[%s0 + $0xd1] sm:$0xff]
  %v2320 = vld [vmem:[%s0 + $0xd9] sm:$0xff]
  %v2321 = vld [vmem:[%s0 + $0xe1] sm:$0xff]
  %v2322 = vld [vmem:[%s0 + $0xe9] sm:$0xff]
  %v2323 = vld [vmem:[%s0 + $0xf1] sm:$0xff]
  %v2324 = vld [vmem:[%s0 + $0xf9] sm:$0xff]
  %v2325 = vld [vmem:[%s0 + $0x101] sm:$0xff]
  %v2326 = vld [vmem:[%s0 + $0x109] sm:$0xff]
  %v2327 = vld [vmem:[%s0 + $0x111] sm:$0xff]
  %v2328 = vld [vmem:[%s0 + $0x119] sm:$0xff]
  %s2329 = scalar_lea.vmem %s1, 28
  %v2330 = vld [vmem:[%s2329] sm:$0xf]
  %v2332 = vsel %vm687, %v2297, 0
  %v2335 = vsel %vm687, %v2298, 0
  %v2338 = vsel %vm687, %v2299, 0
  %v2341 = vsel %vm687, %v2300, 0
  %v2344 = vsel %vm687, %v2301, 0
  %v2347 = vsel %vm687, %v2302, 0
  %v2350 = vsel %vm687, %v2303, 0
  %v2353 = vsel %vm687, %v2304, 0
  %v2356 = vsel %vm687, %v2305, 0
  %v2359 = vsel %vm687, %v2306, 0
  %v2362 = vsel %vm687, %v2307, 0
  %v2365 = vsel %vm687, %v2308, 0
  %v2368 = vsel %vm687, %v2309, 0
  %v2371 = vsel %vm687, %v2310, 0
  %v2374 = vsel %vm687, %v2311, 0
  %v2377 = vsel %vm687, %v2312, 0
  %v2380 = vsel %vm687, %v2313, 0
  %v2383 = vsel %vm687, %v2314, 0
  %v2386 = vsel %vm687, %v2315, 0
  %v2389 = vsel %vm687, %v2316, 0
  %v2392 = vsel %vm687, %v2317, 0
  %v2395 = vsel %vm687, %v2318, 0
  %v2398 = vsel %vm687, %v2319, 0
  %v2401 = vsel %vm687, %v2320, 0
  %v2404 = vsel %vm687, %v2321, 0
  %v2407 = vsel %vm687, %v2322, 0
  %v2410 = vsel %vm687, %v2323, 0
  %v2413 = vsel %vm687, %v2324, 0
  %v2416 = vsel %vm687, %v2325, 0
  %v2419 = vsel %vm687, %v2326, 0
  %v2422 = vsel %vm687, %v2327, 0
  %v2425 = vsel %vm687, %v2328, 0
  %v2428 = vsel %vm784, %v2330, 0
  %2430 = vmatprep.subr.mxu0 0.0
  %2431 = vmatpush1.msra.mxu0 %v2428
  %2432 = vmatprep.subr.mxu0 0.0
  %2433 = vmatpush1.msra.mxu0 0.0
  %2434 = vmatprep.subr.mxu0 0.0
  %2435 = vmatpush1.msra.mxu0 0.0
  %2436 = vmatprep.subr.mxu0 0.0
  %2437 = vmatpush1.msra.mxu0 0.0
  %2438 = vmatprep.subr.mxu0 0.0
  %2439 = vmatpush1.msra.mxu0 0.0
  %2440 = vmatprep.subr.mxu0 0.0
  %2441 = vmatpush1.msra.mxu0 0.0
  %2442 = vmatprep.subr.mxu0 0.0
  %2443 = vmatpush1.msra.mxu0 0.0
  %2444 = vmatprep.subr.mxu0 0.0
  %2445 = vmatpush1.msra.mxu0 0.0
  %2446 = vmatprep.subr.mxu0 0.0
  %2447 = vmatpush1.msra.mxu0 0.0
  %2448 = vmatprep.subr.mxu0 0.0
  %2449 = vmatpush1.msra.mxu0 0.0
  %2450 = vmatprep.subr.mxu0 0.0
  %2451 = vmatpush1.msra.mxu0 0.0
  %2452 = vmatprep.subr.mxu0 0.0
  %2453 = vmatpush1.msra.mxu0 0.0
  %2454 = vmatprep.subr.mxu0 0.0
  %2455 = vmatpush1.msra.mxu0 0.0
  %2456 = vmatprep.subr.mxu0 0.0
  %2457 = vmatpush1.msra.mxu0 0.0
  %2458 = vmatprep.subr.mxu0 0.0
  %2459 = vmatpush1.msra.mxu0 0.0
  %2460 = vmatprep.subr.mxu0 0.0
  %2461 = vmatpush1.msra.mxu0 0.0
  %2462 = vmatprep.subr.mxu0 0.0
  %2463 = vmatpush1.msra.mxu0 0.0
  %2464 = vmatprep.subr.mxu0 0.0
  %2465 = vmatpush1.msra.mxu0 0.0
  %2466 = vmatprep.subr.mxu0 0.0
  %2467 = vmatpush1.msra.mxu0 0.0
  %2468 = vmatprep.subr.mxu0 0.0
  %2469 = vmatpush1.msra.mxu0 0.0
  %2470 = vmatprep.subr.mxu0 0.0
  %2471 = vmatpush1.msra.mxu0 0.0
  %2472 = vmatprep.subr.mxu0 0.0
  %2473 = vmatpush1.msra.mxu0 0.0
  %2474 = vmatprep.subr.mxu0 0.0
  %2475 = vmatpush1.msra.mxu0 0.0
  %2476 = vmatprep.subr.mxu0 0.0
  %2477 = vmatpush1.msra.mxu0 0.0
  %2478 = vmatprep.subr.mxu0 0.0
  %2479 = vmatpush1.msra.mxu0 0.0
  %2480 = vmatprep.subr.mxu0 0.0
  %2481 = vmatpush1.msra.mxu0 0.0
  %2482 = vmatprep.subr.mxu0 0.0
  %2483 = vmatpush1.msra.mxu0 0.0
  %2484 = vmatprep.subr.mxu0 0.0
  %2485 = vmatpush1.msra.mxu0 0.0
  %2486 = vmatprep.subr.mxu0 0.0
  %2487 = vmatpush1.msra.mxu0 0.0
  %2488 = vmatprep.subr.mxu0 0.0
  %2489 = vmatpush1.msra.mxu0 0.0
  %2490 = vmatprep.subr.mxu0 0.0
  %2491 = vmatpush1.msra.mxu0 0.0
  %2492 = vmatprep.subr.mxu0 0.0
  %2493 = vmatpush1.msra.mxu0 0.0
  %2494 = vmatprep.mubr.f32.mxu0 0.0
  %2495 = vmatmul.mubr.f32.gmra.mrb[0].mxu0 %v2332
  %v2496 = vpop.f32.mrb[0].mxu0
  %v2497 = vadd.f32 0.0, %v2496
  %v2498 = vpop.f32.mrb[0].mxu0
  %2499 = vmatprep.mubr.f32.mxu0 0.0
  %2500 = vmatmul.mubr.f32.gmra.mrb[0].mxu0 %v2335
  %v2501 = vpop.f32.mrb[0].mxu0
  %v2502 = vadd.f32 0.0, %v2501
  %v2503 = vpop.f32.mrb[0].mxu0
  %2504 = vmatprep.mubr.f32.mxu0 0.0
  %2505 = vmatmul.mubr.f32.gmra.mrb[0].mxu0 %v2338
  %v2506 = vpop.f32.mrb[0].mxu0
  %v2507 = vadd.f32 0.0, %v2506
  %v2508 = vpop.f32.mrb[0].mxu0
  %2509 = vmatprep.mubr.f32.mxu0 0.0
  %2510 = vmatmul.mubr.f32.gmra.mrb[0].mxu0 %v2341
  %v2511 = vpop.f32.mrb[0].mxu0
  %v2512 = vadd.f32 0.0, %v2511
  %v2513 = vpop.f32.mrb[0].mxu0
  %2514 = vmatprep.mubr.f32.mxu0 0.0
  %2515 = vmatmul.mubr.f32.gmra.mrb[0].mxu0 %v2344
  %v2516 = vpop.f32.mrb[0].mxu0
  %v2517 = vadd.f32 0.0, %v2516
  %v2518 = vpop.f32.mrb[0].mxu0
  %2519 = vmatprep.mubr.f32.mxu0 0.0
  %2520 = vmatmul.mubr.f32.gmra.mrb[0].mxu0 %v2347
  %v2521 = vpop.f32.mrb[0].mxu0
  %v2522 = vadd.f32 0.0, %v2521
  %v2523 = vpop.f32.mrb[0].mxu0
  %2524 = vmatprep.mubr.f32.mxu0 0.0
  %2525 = vmatmul.mubr.f32.gmra.mrb[0].mxu0 %v2350
  %v2526 = vpop.f32.mrb[0].mxu0
  %v2527 = vadd.f32 0.0, %v2526
  %v2528 = vpop.f32.mrb[0].mxu0
  %2529 = vmatprep.mubr.f32.mxu0 0.0
  %2530 = vmatmul.mubr.f32.gmra.mrb[0].mxu0 %v2353
  %v2531 = vpop.f32.mrb[0].mxu0
  %v2532 = vadd.f32 0.0, %v2531
  %v2533 = vpop.f32.mrb[0].mxu0
  %2534 = vmatprep.mubr.f32.mxu0 0.0
  %2535 = vmatmul.mubr.f32.gmra.mrb[0].mxu0 %v2356
  %v2536 = vpop.f32.mrb[0].mxu0
  %v2537 = vadd.f32 0.0, %v2536
  %v2538 = vpop.f32.mrb[0].mxu0
  %2539 = vmatprep.mubr.f32.mxu0 0.0
  %2540 = vmatmul.mubr.f32.gmra.mrb[0].mxu0 %v2359
  %v2541 = vpop.f32.mrb[0].mxu0
  %v2542 = vadd.f32 0.0, %v2541
  %v2543 = vpop.f32.mrb[0].mxu0
  %2544 = vmatprep.mubr.f32.mxu0 0.0
  %2545 = vmatmul.mubr.f32.gmra.mrb[0].mxu0 %v2362
  %v2546 = vpop.f32.mrb[0].mxu0
  %v2547 = vadd.f32 0.0, %v2546
  %v2548 = vpop.f32.mrb[0].mxu0
  %2549 = vmatprep.mubr.f32.mxu0 0.0
  %2550 = vmatmul.mubr.f32.gmra.mrb[0].mxu0 %v2365
  %v2551 = vpop.f32.mrb[0].mxu0
  %v2552 = vadd.f32 0.0, %v2551
  %v2553 = vpop.f32.mrb[0].mxu0
  %2554 = vmatprep.mubr.f32.mxu0 0.0
  %2555 = vmatmul.mubr.f32.gmra.mrb[0].mxu0 %v2368
  %v2556 = vpop.f32.mrb[0].mxu0
  %v2557 = vadd.f32 0.0, %v2556
  %v2558 = vpop.f32.mrb[0].mxu0
  %2559 = vmatprep.mubr.f32.mxu0 0.0
  %2560 = vmatmul.mubr.f32.gmra.mrb[0].mxu0 %v2371
  %v2561 = vpop.f32.mrb[0].mxu0
  %v2562 = vadd.f32 0.0, %v2561
  %v2563 = vpop.f32.mrb[0].mxu0
  %2564 = vmatprep.mubr.f32.mxu0 0.0
  %2565 = vmatmul.mubr.f32.gmra.mrb[0].mxu0 %v2374
  %v2566 = vpop.f32.mrb[0].mxu0
  %v2567 = vadd.f32 0.0, %v2566
  %v2568 = vpop.f32.mrb[0].mxu0
  %2569 = vmatprep.mubr.f32.mxu0 0.0
  %2570 = vmatmul.mubr.f32.gmra.mrb[0].mxu0 %v2377
  %v2571 = vpop.f32.mrb[0].mxu0
  %v2572 = vadd.f32 0.0, %v2571
  %v2573 = vpop.f32.mrb[0].mxu0
  %2574 = vmatprep.mubr.f32.mxu0 0.0
  %2575 = vmatmul.mubr.f32.gmra.mrb[0].mxu0 %v2380
  %v2576 = vpop.f32.mrb[0].mxu0
  %v2577 = vadd.f32 0.0, %v2576
  %v2578 = vpop.f32.mrb[0].mxu0
  %2579 = vmatprep.mubr.f32.mxu0 0.0
  %2580 = vmatmul.mubr.f32.gmra.mrb[0].mxu0 %v2383
  %v2581 = vpop.f32.mrb[0].mxu0
  %v2582 = vadd.f32 0.0, %v2581
  %v2583 = vpop.f32.mrb[0].mxu0
  %2584 = vmatprep.mubr.f32.mxu0 0.0
  %2585 = vmatmul.mubr.f32.gmra.mrb[0].mxu0 %v2386
  %v2586 = vpop.f32.mrb[0].mxu0
  %v2587 = vadd.f32 0.0, %v2586
  %v2588 = vpop.f32.mrb[0].mxu0
  %2589 = vmatprep.mubr.f32.mxu0 0.0
  %2590 = vmatmul.mubr.f32.gmra.mrb[0].mxu0 %v2389
  %v2591 = vpop.f32.mrb[0].mxu0
  %v2592 = vadd.f32 0.0, %v2591
  %v2593 = vpop.f32.mrb[0].mxu0
  %2594 = vmatprep.mubr.f32.mxu0 0.0
  %2595 = vmatmul.mubr.f32.gmra.mrb[0].mxu0 %v2392
  %v2596 = vpop.f32.mrb[0].mxu0
  %v2597 = vadd.f32 0.0, %v2596
  %v2598 = vpop.f32.mrb[0].mxu0
  %2599 = vmatprep.mubr.f32.mxu0 0.0
  %2600 = vmatmul.mubr.f32.gmra.mrb[0].mxu0 %v2395
  %v2601 = vpop.f32.mrb[0].mxu0
  %v2602 = vadd.f32 0.0, %v2601
  %v2603 = vpop.f32.mrb[0].mxu0
  %2604 = vmatprep.mubr.f32.mxu0 0.0
  %2605 = vmatmul.mubr.f32.gmra.mrb[0].mxu0 %v2398
  %v2606 = vpop.f32.mrb[0].mxu0
  %v2607 = vadd.f32 0.0, %v2606
  %v2608 = vpop.f32.mrb[0].mxu0
  %2609 = vmatprep.mubr.f32.mxu0 0.0
  %2610 = vmatmul.mubr.f32.gmra.mrb[0].mxu0 %v2401
  %v2611 = vpop.f32.mrb[0].mxu0
  %v2612 = vadd.f32 0.0, %v2611
  %v2613 = vpop.f32.mrb[0].mxu0
  %2614 = vmatprep.mubr.f32.mxu0 0.0
  %2615 = vmatmul.mubr.f32.gmra.mrb[0].mxu0 %v2404
  %v2616 = vpop.f32.mrb[0].mxu0
  %v2617 = vadd.f32 0.0, %v2616
  %v2618 = vpop.f32.mrb[0].mxu0
  %2619 = vmatprep.mubr.f32.mxu0 0.0
  %2620 = vmatmul.mubr.f32.gmra.mrb[0].mxu0 %v2407
  %v2621 = vpop.f32.mrb[0].mxu0
  %v2622 = vadd.f32 0.0, %v2621
  %v2623 = vpop.f32.mrb[0].mxu0
  %2624 = vmatprep.mubr.f32.mxu0 0.0
  %2625 = vmatmul.mubr.f32.gmra.mrb[0].mxu0 %v2410
  %v2626 = vpop.f32.mrb[0].mxu0
  %v2627 = vadd.f32 0.0, %v2626
  %v2628 = vpop.f32.mrb[0].mxu0
  %2629 = vmatprep.mubr.f32.mxu0 0.0
  %2630 = vmatmul.mubr.f32.gmra.mrb[0].mxu0 %v2413
  %v2631 = vpop.f32.mrb[0].mxu0
  %v2632 = vadd.f32 0.0, %v2631
  %v2633 = vpop.f32.mrb[0].mxu0
  %2634 = vmatprep.mubr.f32.mxu0 0.0
  %2635 = vmatmul.mubr.f32.gmra.mrb[0].mxu0 %v2416
  %v2636 = vpop.f32.mrb[0].mxu0
  %v2637 = vadd.f32 0.0, %v2636
  %v2638 = vpop.f32.mrb[0].mxu0
  %2639 = vmatprep.mubr.f32.mxu0 0.0
  %2640 = vmatmul.mubr.f32.gmra.mrb[0].mxu0 %v2419
  %v2641 = vpop.f32.mrb[0].mxu0
  %v2642 = vadd.f32 0.0, %v2641
  %v2643 = vpop.f32.mrb[0].mxu0
  %2644 = vmatprep.mubr.f32.mxu0 0.0
  %2645 = vmatmul.mubr.f32.gmra.mrb[0].mxu0 %v2422
  %v2646 = vpop.f32.mrb[0].mxu0
  %v2647 = vadd.f32 0.0, %v2646
  %v2648 = vpop.f32.mrb[0].mxu0
  %2649 = vmatprep.mubr.f32.mxu0 0.0
  %2650 = vmatmul.mubr.f32.gmra.mrb[0].mxu0 %v2425
  %v2651 = vpop.f32.mrb[0].mxu0
  %v2652 = vadd.f32 0.0, %v2651
  %v2653 = vpop.f32.mrb[0].mxu0
  %2654 = vdwg.mxu0
  %v2655 = vadd.f32 %v2139, %v2497
  %v2656 = vadd.f32 %v2144, %v2502
  %v2657 = vadd.f32 %v2149, %v2507
  %v2658 = vadd.f32 %v2154, %v2512
  %v2659 = vadd.f32 %v2159, %v2517
  %v2660 = vadd.f32 %v2164, %v2522
  %v2661 = vadd.f32 %v2169, %v2527
  %v2662 = vadd.f32 %v2174, %v2532
  %v2663 = vadd.f32 %v2179, %v2537
  %v2664 = vadd.f32 %v2184, %v2542
  %v2665 = vadd.f32 %v2189, %v2547
  %v2666 = vadd.f32 %v2194, %v2552
  %v2667 = vadd.f32 %v2199, %v2557
  %v2668 = vadd.f32 %v2204, %v2562
  %v2669 = vadd.f32 %v2209, %v2567
  %v2670 = vadd.f32 %v2214, %v2572
  %v2671 = vadd.f32 %v2219, %v2577
  %v2672 = vadd.f32 %v2224, %v2582
  %v2673 = vadd.f32 %v2229, %v2587
  %v2674 = vadd.f32 %v2234, %v2592
  %v2675 = vadd.f32 %v2239, %v2597
  %v2676 = vadd.f32 %v2244, %v2602
  %v2677 = vadd.f32 %v2249, %v2607
  %v2678 = vadd.f32 %v2254, %v2612
  %v2679 = vadd.f32 %v2259, %v2617
  %v2680 = vadd.f32 %v2264, %v2622
  %v2681 = vadd.f32 %v2269, %v2627
  %v2682 = vadd.f32 %v2274, %v2632
  %v2683 = vadd.f32 %v2279, %v2637
  %v2684 = vadd.f32 %v2284, %v2642
  %v2685 = vadd.f32 %v2289, %v2647
  %v2686 = vadd.f32 %v2294, %v2652
  %v2687 = vadd.f32 %v1669, %v2655
  %v2688 = vadd.f32 %v1670, %v2656
  %v2689 = vadd.f32 %v1671, %v2657
  %v2690 = vadd.f32 %v1672, %v2658
  %v2691 = vadd.f32 %v1673, %v2659
  %v2692 = vadd.f32 %v1674, %v2660
  %v2693 = vadd.f32 %v1675, %v2661
  %v2694 = vadd.f32 %v1676, %v2662
  %v2695 = vadd.f32 %v1677, %v2663
  %v2696 = vadd.f32 %v1678, %v2664
  %v2697 = vadd.f32 %v1679, %v2665
  %v2698 = vadd.f32 %v1680, %v2666
  %v2699 = vadd.f32 %v1681, %v2667
  %v2700 = vadd.f32 %v1682, %v2668
  %v2701 = vadd.f32 %v1683, %v2669
  %v2702 = vadd.f32 %v1684, %v2670
  %v2703 = vadd.f32 %v1685, %v2671
  %v2704 = vadd.f32 %v1686, %v2672
  %v2705 = vadd.f32 %v1687, %v2673
  %v2706 = vadd.f32 %v1688, %v2674
  %v2707 = vadd.f32 %v1689, %v2675
  %v2708 = vadd.f32 %v1690, %v2676
  %v2709 = vadd.f32 %v1691, %v2677
  %v2710 = vadd.f32 %v1692, %v2678
  %v2711 = vadd.f32 %v1693, %v2679
  %v2712 = vadd.f32 %v1694, %v2680
  %v2713 = vadd.f32 %v1695, %v2681
  %v2714 = vadd.f32 %v1696, %v2682
  %v2715 = vadd.f32 %v1697, %v2683
  %v2716 = vadd.f32 %v1698, %v2684
  %v2717 = vadd.f32 %v1699, %v2685
  %v2718 = vadd.f32 %v1700, %v2686
  %v2719 = vld [vmem:[%s0 + $0x2] sm:$0xff]
  %v2720 = vld [vmem:[%s0 + $0xa] sm:$0xff]
  %v2721 = vld [vmem:[%s0 + $0x12] sm:$0xff]
  %v2722 = vld [vmem:[%s0 + $0x1a] sm:$0xff]
  %v2723 = vld [vmem:[%s0 + $0x22] sm:$0xff]
  %v2724 = vld [vmem:[%s0 + $0x2a] sm:$0xff]
  %v2725 = vld [vmem:[%s0 + $0x32] sm:$0xff]
  %v2726 = vld [vmem:[%s0 + $0x3a] sm:$0xff]
  %v2727 = vld [vmem:[%s0 + $0x42] sm:$0xff]
  %v2728 = vld [vmem:[%s0 + $0x4a] sm:$0xff]
  %v2729 = vld [vmem:[%s0 + $0x52] sm:$0xff]
  %v2730 = vld [vmem:[%s0 + $0x5a] sm:$0xff]
  %v2731 = vld [vmem:[%s0 + $0x62] sm:$0xff]
  %v2732 = vld [vmem:[%s0 + $0x6a] sm:$0xff]
  %v2733 = vld [vmem:[%s0 + $0x72] sm:$0xff]
  %v2734 = vld [vmem:[%s0 + $0x7a] sm:$0xff]
  %v2735 = vld [vmem:[%s0 + $0x82] sm:$0xff]
  %v2736 = vld [vmem:[%s0 + $0x8a] sm:$0xff]
  %v2737 = vld [vmem:[%s0 + $0x92] sm:$0xff]
  %v2738 = vld [vmem:[%s0 + $0x9a] sm:$0xff]
  %v2739 = vld [vmem:[%s0 + $0xa2] sm:$0xff]
  %v2740 = vld [vmem:[%s0 + $0xaa] sm:$0xff]
  %v2741 = vld [vmem:[%s0 + $0xb2] sm:$0xff]
  %v2742 = vld [vmem:[%s0 + $0xba] sm:$0xff]
  %v2743 = vld [vmem:[%s0 + $0xc2] sm:$0xff]
  %v2744 = vld [vmem:[%s0 + $0xca] sm:$0xff]
  %v2745 = vld [vmem:[%s0 + $0xd2] sm:$0xff]
  %v2746 = vld [vmem:[%s0 + $0xda] sm:$0xff]
  %v2747 = vld [vmem:[%s0 + $0xe2] sm:$0xff]
  %v2748 = vld [vmem:[%s0 + $0xea] sm:$0xff]
  %v2749 = vld [vmem:[%s0 + $0xf2] sm:$0xff]
  %v2750 = vld [vmem:[%s0 + $0xfa] sm:$0xff]
  %s2751 = scalar_lea.vmem %s1, 8
  %v2752 = vld [vmem:[%s2751] sm:$0xf]
  %v2753 = vld [vmem:[%s0 + $0x102] sm:$0xff]
  %v2754 = vld [vmem:[%s0 + $0x10a] sm:$0xff]
  %s2755 = scalar_lea.vmem %s1, 20
  %v2756 = vld [vmem:[%s2755] sm:$0xf]
  %v2758 = vsel %vm687, %v2721, 0
  %v2761 = vsel %vm687, %v2722, 0
  %v2764 = vsel %vm687, %v2723, 0
  %v2767 = vsel %vm687, %v2724, 0
  %v2770 = vsel %vm687, %v2725, 0
  %v2773 = vsel %vm687, %v2726, 0
  %v2776 = vsel %vm687, %v2727, 0
  %v2779 = vsel %vm687, %v2728, 0
  %v2782 = vsel %vm687, %v2729, 0
  %v2785 = vsel %vm687, %v2730, 0
  %v2788 = vsel %vm687, %v2731, 0
  %v2791 = vsel %vm687, %v2732, 0
  %v2794 = vsel %vm687, %v2733, 0
  %v2797 = vsel %vm687, %v2734, 0
  %v2800 = vsel %vm687, %v2735, 0
  %v2803 = vsel %vm687, %v2736, 0
  %v2806 = vsel %vm687, %v2737, 0
  %v2809 = vsel %vm687, %v2738, 0
  %v2812 = vsel %vm687, %v2739, 0
  %v2815 = vsel %vm687, %v2740, 0
  %v2818 = vsel %vm687, %v2741, 0
  %v2821 = vsel %vm687, %v2742, 0
  %v2824 = vsel %vm687, %v2743, 0
  %v2827 = vsel %vm687, %v2744, 0
  %v2830 = vsel %vm687, %v2745, 0
  %v2833 = vsel %vm687, %v2746, 0
  %v2836 = vsel %vm687, %v2747, 0
  %v2839 = vsel %vm687, %v2748, 0
  %v2842 = vsel %vm687, %v2749, 0
  %v2845 = vsel %vm687, %v2750, 0
  %v2848 = vsel %vm687, %v2753, 0
  %v2851 = vsel %vm687, %v2754, 0
  %v2854 = vsel %vm784, %v2756, 0
  %2856 = vmatprep.subr.mxu0 0.0
  %2857 = vmatpush1.msra.mxu0 %v2854
  %2858 = vmatprep.subr.mxu0 0.0
  %2859 = vmatpush1.msra.mxu0 0.0
  %2860 = vmatprep.subr.mxu0 0.0
  %2861 = vmatpush1.msra.mxu0 0.0
  %2862 = vmatprep.subr.mxu0 0.0
  %2863 = vmatpush1.msra.mxu0 0.0
  %2864 = vmatprep.subr.mxu0 0.0
  %2865 = vmatpush1.msra.mxu0 0.0
  %2866 = vmatprep.subr.mxu0 0.0
  %2867 = vmatpush1.msra.mxu0 0.0
  %2868 = vmatprep.subr.mxu0 0.0
  %2869 = vmatpush1.msra.mxu0 0.0
  %2870 = vmatprep.subr.mxu0 0.0
  %2871 = vmatpush1.msra.mxu0 0.0
  %2872 = vmatprep.subr.mxu0 0.0
  %2873 = vmatpush1.msra.mxu0 0.0
  %2874 = vmatprep.subr.mxu0 0.0
  %2875 = vmatpush1.msra.mxu0 0.0
  %2876 = vmatprep.subr.mxu0 0.0
  %2877 = vmatpush1.msra.mxu0 0.0
  %2878 = vmatprep.subr.mxu0 0.0
  %2879 = vmatpush1.msra.mxu0 0.0
  %2880 = vmatprep.subr.mxu0 0.0
  %2881 = vmatpush1.msra.mxu0 0.0
  %2882 = vmatprep.subr.mxu0 0.0
  %2883 = vmatpush1.msra.mxu0 0.0
  %2884 = vmatprep.subr.mxu0 0.0
  %2885 = vmatpush1.msra.mxu0 0.0
  %2886 = vmatprep.subr.mxu0 0.0
  %2887 = vmatpush1.msra.mxu0 0.0
  %2888 = vmatprep.subr.mxu0 0.0
  %2889 = vmatpush1.msra.mxu0 0.0
  %2890 = vmatprep.subr.mxu0 0.0
  %2891 = vmatpush1.msra.mxu0 0.0
  %2892 = vmatprep.subr.mxu0 0.0
  %2893 = vmatpush1.msra.mxu0 0.0
  %2894 = vmatprep.subr.mxu0 0.0
  %2895 = vmatpush1.msra.mxu0 0.0
  %2896 = vmatprep.subr.mxu0 0.0
  %2897 = vmatpush1.msra.mxu0 0.0
  %2898 = vmatprep.subr.mxu0 0.0
  %2899 = vmatpush1.msra.mxu0 0.0
  %2900 = vmatprep.subr.mxu0 0.0
  %2901 = vmatpush1.msra.mxu0 0.0
  %2902 = vmatprep.subr.mxu0 0.0
  %2903 = vmatpush1.msra.mxu0 0.0
  %2904 = vmatprep.subr.mxu0 0.0
  %2905 = vmatpush1.msra.mxu0 0.0
  %2906 = vmatprep.subr.mxu0 0.0
  %2907 = vmatpush1.msra.mxu0 0.0
  %2908 = vmatprep.subr.mxu0 0.0
  %2909 = vmatpush1.msra.mxu0 0.0
  %2910 = vmatprep.subr.mxu0 0.0
  %2911 = vmatpush1.msra.mxu0 0.0
  %2912 = vmatprep.subr.mxu0 0.0
  %2913 = vmatpush1.msra.mxu0 0.0
  %2914 = vmatprep.subr.mxu0 0.0
  %2915 = vmatpush1.msra.mxu0 0.0
  %2916 = vmatprep.subr.mxu0 0.0
  %2917 = vmatpush1.msra.mxu0 0.0
  %2918 = vmatprep.subr.mxu0 0.0
  %2919 = vmatpush1.msra.mxu0 0.0
  %2920 = vmatprep.mubr.f32.mxu0 0.0
  %2921 = vmatmul.mubr.f32.gmra.mrb[0].mxu0 %v2758
  %v2922 = vpop.f32.mrb[0].mxu0
  %v2923 = vadd.f32 0.0, %v2922
  %v2924 = vpop.f32.mrb[0].mxu0
  %2925 = vmatprep.mubr.f32.mxu0 0.0
  %2926 = vmatmul.mubr.f32.gmra.mrb[0].mxu0 %v2761
  %v2927 = vpop.f32.mrb[0].mxu0
  %v2928 = vadd.f32 0.0, %v2927
  %v2929 = vpop.f32.mrb[0].mxu0
  %2930 = vmatprep.mubr.f32.mxu0 0.0
  %2931 = vmatmul.mubr.f32.gmra.mrb[0].mxu0 %v2764
  %v2932 = vpop.f32.mrb[0].mxu0
  %v2933 = vadd.f32 0.0, %v2932
  %v2934 = vpop.f32.mrb[0].mxu0
  %2935 = vmatprep.mubr.f32.mxu0 0.0
  %2936 = vmatmul.mubr.f32.gmra.mrb[0].mxu0 %v2767
  %v2937 = vpop.f32.mrb[0].mxu0
  %v2938 = vadd.f32 0.0, %v2937
  %v2939 = vpop.f32.mrb[0].mxu0
  %2940 = vmatprep.mubr.f32.mxu0 0.0
  %2941 = vmatmul.mubr.f32.gmra.mrb[0].mxu0 %v2770
  %v2942 = vpop.f32.mrb[0].mxu0
  %v2943 = vadd.f32 0.0, %v2942
  %v2944 = vpop.f32.mrb[0].mxu0
  %2945 = vmatprep.mubr.f32.mxu0 0.0
  %2946 = vmatmul.mubr.f32.gmra.mrb[0].mxu0 %v2773
  %v2947 = vpop.f32.mrb[0].mxu0
  %v2948 = vadd.f32 0.0, %v2947
  %v2949 = vpop.f32.mrb[0].mxu0
  %2950 = vmatprep.mubr.f32.mxu0 0.0
  %2951 = vmatmul.mubr.f32.gmra.mrb[0].mxu0 %v2776
  %v2952 = vpop.f32.mrb[0].mxu0
  %v2953 = vadd.f32 0.0, %v2952
  %v2954 = vpop.f32.mrb[0].mxu0
  %2955 = vmatprep.mubr.f32.mxu0 0.0
  %2956 = vmatmul.mubr.f32.gmra.mrb[0].mxu0 %v2779
  %v2957 = vpop.f32.mrb[0].mxu0
  %v2958 = vadd.f32 0.0, %v2957
  %v2959 = vpop.f32.mrb[0].mxu0
  %2960 = vmatprep.mubr.f32.mxu0 0.0
  %2961 = vmatmul.mubr.f32.gmra.mrb[0].mxu0 %v2782
  %v2962 = vpop.f32.mrb[0].mxu0
  %v2963 = vadd.f32 0.0, %v2962
  %v2964 = vpop.f32.mrb[0].mxu0
  %2965 = vmatprep.mubr.f32.mxu0 0.0
  %2966 = vmatmul.mubr.f32.gmra.mrb[0].mxu0 %v2785
  %v2967 = vpop.f32.mrb[0].mxu0
  %v2968 = vadd.f32 0.0, %v2967
  %v2969 = vpop.f32.mrb[0].mxu0
  %2970 = vmatprep.mubr.f32.mxu0 0.0
  %2971 = vmatmul.mubr.f32.gmra.mrb[0].mxu0 %v2788
  %v2972 = vpop.f32.mrb[0].mxu0
  %v2973 = vadd.f32 0.0, %v2972
  %v2974 = vpop.f32.mrb[0].mxu0
  %2975 = vmatprep.mubr.f32.mxu0 0.0
  %2976 = vmatmul.mubr.f32.gmra.mrb[0].mxu0 %v2791
  %v2977 = vpop.f32.mrb[0].mxu0
  %v2978 = vadd.f32 0.0, %v2977
  %v2979 = vpop.f32.mrb[0].mxu0
  %2980 = vmatprep.mubr.f32.mxu0 0.0
  %2981 = vmatmul.mubr.f32.gmra.mrb[0].mxu0 %v2794
  %v2982 = vpop.f32.mrb[0].mxu0
  %v2983 = vadd.f32 0.0, %v2982
  %v2984 = vpop.f32.mrb[0].mxu0
  %2985 = vmatprep.mubr.f32.mxu0 0.0
  %2986 = vmatmul.mubr.f32.gmra.mrb[0].mxu0 %v2797
  %v2987 = vpop.f32.mrb[0].mxu0
  %v2988 = vadd.f32 0.0, %v2987
  %v2989 = vpop.f32.mrb[0].mxu0
  %2990 = vmatprep.mubr.f32.mxu0 0.0
  %2991 = vmatmul.mubr.f32.gmra.mrb[0].mxu0 %v2800
  %v2992 = vpop.f32.mrb[0].mxu0
  %v2993 = vadd.f32 0.0, %v2992
  %v2994 = vpop.f32.mrb[0].mxu0
  %2995 = vmatprep.mubr.f32.mxu0 0.0
  %2996 = vmatmul.mubr.f32.gmra.mrb[0].mxu0 %v2803
  %v2997 = vpop.f32.mrb[0].mxu0
  %v2998 = vadd.f32 0.0, %v2997
  %v2999 = vpop.f32.mrb[0].mxu0
  %3000 = vmatprep.mubr.f32.mxu0 0.0
  %3001 = vmatmul.mubr.f32.gmra.mrb[0].mxu0 %v2806
  %v3002 = vpop.f32.mrb[0].mxu0
  %v3003 = vadd.f32 0.0, %v3002
  %v3004 = vpop.f32.mrb[0].mxu0
  %3005 = vmatprep.mubr.f32.mxu0 0.0
  %3006 = vmatmul.mubr.f32.gmra.mrb[0].mxu0 %v2809
  %v3007 = vpop.f32.mrb[0].mxu0
  %v3008 = vadd.f32 0.0, %v3007
  %v3009 = vpop.f32.mrb[0].mxu0
  %3010 = vmatprep.mubr.f32.mxu0 0.0
  %3011 = vmatmul.mubr.f32.gmra.mrb[0].mxu0 %v2812
  %v3012 = vpop.f32.mrb[0].mxu0
  %v3013 = vadd.f32 0.0, %v3012
  %v3014 = vpop.f32.mrb[0].mxu0
  %3015 = vmatprep.mubr.f32.mxu0 0.0
  %3016 = vmatmul.mubr.f32.gmra.mrb[0].mxu0 %v2815
  %v3017 = vpop.f32.mrb[0].mxu0
  %v3018 = vadd.f32 0.0, %v3017
  %v3019 = vpop.f32.mrb[0].mxu0
  %3020 = vmatprep.mubr.f32.mxu0 0.0
  %3021 = vmatmul.mubr.f32.gmra.mrb[0].mxu0 %v2818
  %v3022 = vpop.f32.mrb[0].mxu0
  %v3023 = vadd.f32 0.0, %v3022
  %v3024 = vpop.f32.mrb[0].mxu0
  %3025 = vmatprep.mubr.f32.mxu0 0.0
  %3026 = vmatmul.mubr.f32.gmra.mrb[0].mxu0 %v2821
  %v3027 = vpop.f32.mrb[0].mxu0
  %v3028 = vadd.f32 0.0, %v3027
  %v3029 = vpop.f32.mrb[0].mxu0
  %3030 = vmatprep.mubr.f32.mxu0 0.0
  %3031 = vmatmul.mubr.f32.gmra.mrb[0].mxu0 %v2824
  %v3032 = vpop.f32.mrb[0].mxu0
  %v3033 = vadd.f32 0.0, %v3032
  %v3034 = vpop.f32.mrb[0].mxu0
  %3035 = vmatprep.mubr.f32.mxu0 0.0
  %3036 = vmatmul.mubr.f32.gmra.mrb[0].mxu0 %v2827
  %v3037 = vpop.f32.mrb[0].mxu0
  %v3038 = vadd.f32 0.0, %v3037
  %v3039 = vpop.f32.mrb[0].mxu0
  %3040 = vmatprep.mubr.f32.mxu0 0.0
  %3041 = vmatmul.mubr.f32.gmra.mrb[0].mxu0 %v2830
  %v3042 = vpop.f32.mrb[0].mxu0
  %v3043 = vadd.f32 0.0, %v3042
  %v3044 = vpop.f32.mrb[0].mxu0
  %3045 = vmatprep.mubr.f32.mxu0 0.0
  %3046 = vmatmul.mubr.f32.gmra.mrb[0].mxu0 %v2833
  %v3047 = vpop.f32.mrb[0].mxu0
  %v3048 = vadd.f32 0.0, %v3047
  %v3049 = vpop.f32.mrb[0].mxu0
  %3050 = vmatprep.mubr.f32.mxu0 0.0
  %3051 = vmatmul.mubr.f32.gmra.mrb[0].mxu0 %v2836
  %v3052 = vpop.f32.mrb[0].mxu0
  %v3053 = vadd.f32 0.0, %v3052
  %v3054 = vpop.f32.mrb[0].mxu0
  %3055 = vmatprep.mubr.f32.mxu0 0.0
  %3056 = vmatmul.mubr.f32.gmra.mrb[0].mxu0 %v2839
  %v3057 = vpop.f32.mrb[0].mxu0
  %v3058 = vadd.f32 0.0, %v3057
  %v3059 = vpop.f32.mrb[0].mxu0
  %3060 = vmatprep.mubr.f32.mxu0 0.0
  %3061 = vmatmul.mubr.f32.gmra.mrb[0].mxu0 %v2842
  %v3062 = vpop.f32.mrb[0].mxu0
  %v3063 = vadd.f32 0.0, %v3062
  %v3064 = vpop.f32.mrb[0].mxu0
  %3065 = vmatprep.mubr.f32.mxu0 0.0
  %3066 = vmatmul.mubr.f32.gmra.mrb[0].mxu0 %v2845
  %v3067 = vpop.f32.mrb[0].mxu0
  %v3068 = vadd.f32 0.0, %v3067
  %v3069 = vpop.f32.mrb[0].mxu0
  %3070 = vmatprep.mubr.f32.mxu0 0.0
  %3071 = vmatmul.mubr.f32.gmra.mrb[0].mxu0 %v2848
  %v3072 = vpop.f32.mrb[0].mxu0
  %v3073 = vadd.f32 0.0, %v3072
  %v3074 = vpop.f32.mrb[0].mxu0
  %3075 = vmatprep.mubr.f32.mxu0 0.0
  %3076 = vmatmul.mubr.f32.gmra.mrb[0].mxu0 %v2851
  %v3077 = vpop.f32.mrb[0].mxu0
  %v3078 = vadd.f32 0.0, %v3077
  %v3079 = vpop.f32.mrb[0].mxu0
  %3080 = vdwg.mxu0
  %v3082 = vsel %vm687, %v2719, 0
  %v3085 = vsel %vm687, %v2720, 0
  %v3088 = vsel %vm784, %v2752, 0
  %3090 = vmatprep.subr.mxu0 0.0
  %3091 = vmatpush1.msra.mxu0 %v3088
  %3092 = vmatprep.subr.mxu0 0.0
  %3093 = vmatpush1.msra.mxu0 0.0
  %3094 = vmatprep.subr.mxu0 0.0
  %3095 = vmatpush1.msra.mxu0 0.0
  %3096 = vmatprep.subr.mxu0 0.0
  %3097 = vmatpush1.msra.mxu0 0.0
  %3098 = vmatprep.subr.mxu0 0.0
  %3099 = vmatpush1.msra.mxu0 0.0
  %3100 = vmatprep.subr.mxu0 0.0
  %3101 = vmatpush1.msra.mxu0 0.0
  %3102 = vmatprep.subr.mxu0 0.0
  %3103 = vmatpush1.msra.mxu0 0.0
  %3104 = vmatprep.subr.mxu0 0.0
  %3105 = vmatpush1.msra.mxu0 0.0
  %3106 = vmatprep.subr.mxu0 0.0
  %3107 = vmatpush1.msra.mxu0 0.0
  %3108 = vmatprep.subr.mxu0 0.0
  %3109 = vmatpush1.msra.mxu0 0.0
  %3110 = vmatprep.subr.mxu0 0.0
  %3111 = vmatpush1.msra.mxu0 0.0
  %3112 = vmatprep.subr.mxu0 0.0
  %3113 = vmatpush1.msra.mxu0 0.0
  %3114 = vmatprep.subr.mxu0 0.0
  %3115 = vmatpush1.msra.mxu0 0.0
  %3116 = vmatprep.subr.mxu0 0.0
  %3117 = vmatpush1.msra.mxu0 0.0
  %3118 = vmatprep.subr.mxu0 0.0
  %3119 = vmatpush1.msra.mxu0 0.0
  %3120 = vmatprep.subr.mxu0 0.0
  %3121 = vmatpush1.msra.mxu0 0.0
  %3122 = vmatprep.subr.mxu0 0.0
  %3123 = vmatpush1.msra.mxu0 0.0
  %3124 = vmatprep.subr.mxu0 0.0
  %3125 = vmatpush1.msra.mxu0 0.0
  %3126 = vmatprep.subr.mxu0 0.0
  %3127 = vmatpush1.msra.mxu0 0.0
  %3128 = vmatprep.subr.mxu0 0.0
  %3129 = vmatpush1.msra.mxu0 0.0
  %3130 = vmatprep.subr.mxu0 0.0
  %3131 = vmatpush1.msra.mxu0 0.0
  %3132 = vmatprep.subr.mxu0 0.0
  %3133 = vmatpush1.msra.mxu0 0.0
  %3134 = vmatprep.subr.mxu0 0.0
  %3135 = vmatpush1.msra.mxu0 0.0
  %3136 = vmatprep.subr.mxu0 0.0
  %3137 = vmatpush1.msra.mxu0 0.0
  %3138 = vmatprep.subr.mxu0 0.0
  %3139 = vmatpush1.msra.mxu0 0.0
  %3140 = vmatprep.subr.mxu0 0.0
  %3141 = vmatpush1.msra.mxu0 0.0
  %3142 = vmatprep.subr.mxu0 0.0
  %3143 = vmatpush1.msra.mxu0 0.0
  %3144 = vmatprep.subr.mxu0 0.0
  %3145 = vmatpush1.msra.mxu0 0.0
  %3146 = vmatprep.subr.mxu0 0.0
  %3147 = vmatpush1.msra.mxu0 0.0
  %3148 = vmatprep.subr.mxu0 0.0
  %3149 = vmatpush1.msra.mxu0 0.0
  %3150 = vmatprep.subr.mxu0 0.0
  %3151 = vmatpush1.msra.mxu0 0.0
  %3152 = vmatprep.subr.mxu0 0.0
  %3153 = vmatpush1.msra.mxu0 0.0
  %3154 = vmatprep.mubr.f32.mxu0 0.0
  %3155 = vmatmul.mubr.f32.gmra.mrb[0].mxu0 %v3082
  %v3156 = vpop.f32.mrb[0].mxu0
  %v3157 = vadd.f32 %v2923, %v3156
  %v3158 = vpop.f32.mrb[0].mxu0
  %3159 = vmatprep.mubr.f32.mxu0 0.0
  %3160 = vmatmul.mubr.f32.gmra.mrb[0].mxu0 %v3085
  %v3161 = vpop.f32.mrb[0].mxu0
  %v3162 = vadd.f32 %v2928, %v3161
  %v3163 = vpop.f32.mrb[0].mxu0
  %3164 = vmatprep.mubr.f32.mxu0 0.0
  %3165 = vmatmul.mubr.f32.gmra.mrb[0].mxu0 %v2758
  %v3166 = vpop.f32.mrb[0].mxu0
  %v3167 = vadd.f32 %v2933, %v3166
  %v3168 = vpop.f32.mrb[0].mxu0
  %3169 = vmatprep.mubr.f32.mxu0 0.0
  %3170 = vmatmul.mubr.f32.gmra.mrb[0].mxu0 %v2761
  %v3171 = vpop.f32.mrb[0].mxu0
  %v3172 = vadd.f32 %v2938, %v3171
  %v3173 = vpop.f32.mrb[0].mxu0
  %3174 = vmatprep.mubr.f32.mxu0 0.0
  %3175 = vmatmul.mubr.f32.gmra.mrb[0].mxu0 %v2764
  %v3176 = vpop.f32.mrb[0].mxu0
  %v3177 = vadd.f32 %v2943, %v3176
  %v3178 = vpop.f32.mrb[0].mxu0
  %3179 = vmatprep.mubr.f32.mxu0 0.0
  %3180 = vmatmul.mubr.f32.gmra.mrb[0].mxu0 %v2767
  %v3181 = vpop.f32.mrb[0].mxu0
  %v3182 = vadd.f32 %v2948, %v3181
  %v3183 = vpop.f32.mrb[0].mxu0
  %3184 = vmatprep.mubr.f32.mxu0 0.0
  %3185 = vmatmul.mubr.f32.gmra.mrb[0].mxu0 %v2770
  %v3186 = vpop.f32.mrb[0].mxu0
  %v3187 = vadd.f32 %v2953, %v3186
  %v3188 = vpop.f32.mrb[0].mxu0
  %3189 = vmatprep.mubr.f32.mxu0 0.0
  %3190 = vmatmul.mubr.f32.gmra.mrb[0].mxu0 %v2773
  %v3191 = vpop.f32.mrb[0].mxu0
  %v3192 = vadd.f32 %v2958, %v3191
  %v3193 = vpop.f32.mrb[0].mxu0
  %3194 = vmatprep.mubr.f32.mxu0 0.0
  %3195 = vmatmul.mubr.f32.gmra.mrb[0].mxu0 %v2776
  %v3196 = vpop.f32.mrb[0].mxu0
  %v3197 = vadd.f32 %v2963, %v3196
  %v3198 = vpop.f32.mrb[0].mxu0
  %3199 = vmatprep.mubr.f32.mxu0 0.0
  %3200 = vmatmul.mubr.f32.gmra.mrb[0].mxu0 %v2779
  %v3201 = vpop.f32.mrb[0].mxu0
  %v3202 = vadd.f32 %v2968, %v3201
  %v3203 = vpop.f32.mrb[0].mxu0
  %3204 = vmatprep.mubr.f32.mxu0 0.0
  %3205 = vmatmul.mubr.f32.gmra.mrb[0].mxu0 %v2782
  %v3206 = vpop.f32.mrb[0].mxu0
  %v3207 = vadd.f32 %v2973, %v3206
  %v3208 = vpop.f32.mrb[0].mxu0
  %3209 = vmatprep.mubr.f32.mxu0 0.0
  %3210 = vmatmul.mubr.f32.gmra.mrb[0].mxu0 %v2785
  %v3211 = vpop.f32.mrb[0].mxu0
  %v3212 = vadd.f32 %v2978, %v3211
  %v3213 = vpop.f32.mrb[0].mxu0
  %3214 = vmatprep.mubr.f32.mxu0 0.0
  %3215 = vmatmul.mubr.f32.gmra.mrb[0].mxu0 %v2788
  %v3216 = vpop.f32.mrb[0].mxu0
  %v3217 = vadd.f32 %v2983, %v3216
  %v3218 = vpop.f32.mrb[0].mxu0
  %3219 = vmatprep.mubr.f32.mxu0 0.0
  %3220 = vmatmul.mubr.f32.gmra.mrb[0].mxu0 %v2791
  %v3221 = vpop.f32.mrb[0].mxu0
  %v3222 = vadd.f32 %v2988, %v3221
  %v3223 = vpop.f32.mrb[0].mxu0
  %3224 = vmatprep.mubr.f32.mxu0 0.0
  %3225 = vmatmul.mubr.f32.gmra.mrb[0].mxu0 %v2794
  %v3226 = vpop.f32.mrb[0].mxu0
  %v3227 = vadd.f32 %v2993, %v3226
  %v3228 = vpop.f32.mrb[0].mxu0
  %3229 = vmatprep.mubr.f32.mxu0 0.0
  %3230 = vmatmul.mubr.f32.gmra.mrb[0].mxu0 %v2797
  %v3231 = vpop.f32.mrb[0].mxu0
  %v3232 = vadd.f32 %v2998, %v3231
  %v3233 = vpop.f32.mrb[0].mxu0
  %3234 = vmatprep.mubr.f32.mxu0 0.0
  %3235 = vmatmul.mubr.f32.gmra.mrb[0].mxu0 %v2800
  %v3236 = vpop.f32.mrb[0].mxu0
  %v3237 = vadd.f32 %v3003, %v3236
  %v3238 = vpop.f32.mrb[0].mxu0
  %3239 = vmatprep.mubr.f32.mxu0 0.0
  %3240 = vmatmul.mubr.f32.gmra.mrb[0].mxu0 %v2803
  %v3241 = vpop.f32.mrb[0].mxu0
  %v3242 = vadd.f32 %v3008, %v3241
  %v3243 = vpop.f32.mrb[0].mxu0
  %3244 = vmatprep.mubr.f32.mxu0 0.0
  %3245 = vmatmul.mubr.f32.gmra.mrb[0].mxu0 %v2806
  %v3246 = vpop.f32.mrb[0].mxu0
  %v3247 = vadd.f32 %v3013, %v3246
  %v3248 = vpop.f32.mrb[0].mxu0
  %3249 = vmatprep.mubr.f32.mxu0 0.0
  %3250 = vmatmul.mubr.f32.gmra.mrb[0].mxu0 %v2809
  %v3251 = vpop.f32.mrb[0].mxu0
  %v3252 = vadd.f32 %v3018, %v3251
  %v3253 = vpop.f32.mrb[0].mxu0
  %3254 = vmatprep.mubr.f32.mxu0 0.0
  %3255 = vmatmul.mubr.f32.gmra.mrb[0].mxu0 %v2812
  %v3256 = vpop.f32.mrb[0].mxu0
  %v3257 = vadd.f32 %v3023, %v3256
  %v3258 = vpop.f32.mrb[0].mxu0
  %3259 = vmatprep.mubr.f32.mxu0 0.0
  %3260 = vmatmul.mubr.f32.gmra.mrb[0].mxu0 %v2815
  %v3261 = vpop.f32.mrb[0].mxu0
  %v3262 = vadd.f32 %v3028, %v3261
  %v3263 = vpop.f32.mrb[0].mxu0
  %3264 = vmatprep.mubr.f32.mxu0 0.0
  %3265 = vmatmul.mubr.f32.gmra.mrb[0].mxu0 %v2818
  %v3266 = vpop.f32.mrb[0].mxu0
  %v3267 = vadd.f32 %v3033, %v3266
  %v3268 = vpop.f32.mrb[0].mxu0
  %3269 = vmatprep.mubr.f32.mxu0 0.0
  %3270 = vmatmul.mubr.f32.gmra.mrb[0].mxu0 %v2821
  %v3271 = vpop.f32.mrb[0].mxu0
  %v3272 = vadd.f32 %v3038, %v3271
  %v3273 = vpop.f32.mrb[0].mxu0
  %3274 = vmatprep.mubr.f32.mxu0 0.0
  %3275 = vmatmul.mubr.f32.gmra.mrb[0].mxu0 %v2824
  %v3276 = vpop.f32.mrb[0].mxu0
  %v3277 = vadd.f32 %v3043, %v3276
  %v3278 = vpop.f32.mrb[0].mxu0
  %3279 = vmatprep.mubr.f32.mxu0 0.0
  %3280 = vmatmul.mubr.f32.gmra.mrb[0].mxu0 %v2827
  %v3281 = vpop.f32.mrb[0].mxu0
  %v3282 = vadd.f32 %v3048, %v3281
  %v3283 = vpop.f32.mrb[0].mxu0
  %3284 = vmatprep.mubr.f32.mxu0 0.0
  %3285 = vmatmul.mubr.f32.gmra.mrb[0].mxu0 %v2830
  %v3286 = vpop.f32.mrb[0].mxu0
  %v3287 = vadd.f32 %v3053, %v3286
  %v3288 = vpop.f32.mrb[0].mxu0
  %3289 = vmatprep.mubr.f32.mxu0 0.0
  %3290 = vmatmul.mubr.f32.gmra.mrb[0].mxu0 %v2833
  %v3291 = vpop.f32.mrb[0].mxu0
  %v3292 = vadd.f32 %v3058, %v3291
  %v3293 = vpop.f32.mrb[0].mxu0
  %3294 = vmatprep.mubr.f32.mxu0 0.0
  %3295 = vmatmul.mubr.f32.gmra.mrb[0].mxu0 %v2836
  %v3296 = vpop.f32.mrb[0].mxu0
  %v3297 = vadd.f32 %v3063, %v3296
  %v3298 = vpop.f32.mrb[0].mxu0
  %3299 = vmatprep.mubr.f32.mxu0 0.0
  %3300 = vmatmul.mubr.f32.gmra.mrb[0].mxu0 %v2839
  %v3301 = vpop.f32.mrb[0].mxu0
  %v3302 = vadd.f32 %v3068, %v3301
  %v3303 = vpop.f32.mrb[0].mxu0
  %3304 = vmatprep.mubr.f32.mxu0 0.0
  %3305 = vmatmul.mubr.f32.gmra.mrb[0].mxu0 %v2842
  %v3306 = vpop.f32.mrb[0].mxu0
  %v3307 = vadd.f32 %v3073, %v3306
  %v3308 = vpop.f32.mrb[0].mxu0
  %3309 = vmatprep.mubr.f32.mxu0 0.0
  %3310 = vmatmul.mubr.f32.gmra.mrb[0].mxu0 %v2845
  %v3311 = vpop.f32.mrb[0].mxu0
  %v3312 = vadd.f32 %v3078, %v3311
  %v3313 = vpop.f32.mrb[0].mxu0
  %3314 = vdwg.mxu0
  %v3315 = vld [vmem:[%s0 + $0x22] sm:$0xff]
  %v3316 = vld [vmem:[%s0 + $0x2a] sm:$0xff]
  %v3317 = vld [vmem:[%s0 + $0x32] sm:$0xff]
  %v3318 = vld [vmem:[%s0 + $0x3a] sm:$0xff]
  %v3319 = vld [vmem:[%s0 + $0x42] sm:$0xff]
  %v3320 = vld [vmem:[%s0 + $0x4a] sm:$0xff]
  %v3321 = vld [vmem:[%s0 + $0x52] sm:$0xff]
  %v3322 = vld [vmem:[%s0 + $0x5a] sm:$0xff]
  %v3323 = vld [vmem:[%s0 + $0x62] sm:$0xff]
  %v3324 = vld [vmem:[%s0 + $0x6a] sm:$0xff]
  %v3325 = vld [vmem:[%s0 + $0x72] sm:$0xff]
  %v3326 = vld [vmem:[%s0 + $0x7a] sm:$0xff]
  %v3327 = vld [vmem:[%s0 + $0x82] sm:$0xff]
  %v3328 = vld [vmem:[%s0 + $0x8a] sm:$0xff]
  %v3329 = vld [vmem:[%s0 + $0x92] sm:$0xff]
  %v3330 = vld [vmem:[%s0 + $0x9a] sm:$0xff]
  %v3331 = vld [vmem:[%s0 + $0xa2] sm:$0xff]
  %v3332 = vld [vmem:[%s0 + $0xaa] sm:$0xff]
  %v3333 = vld [vmem:[%s0 + $0xb2] sm:$0xff]
  %v3334 = vld [vmem:[%s0 + $0xba] sm:$0xff]
  %v3335 = vld [vmem:[%s0 + $0xc2] sm:$0xff]
  %v3336 = vld [vmem:[%s0 + $0xca] sm:$0xff]
  %v3337 = vld [vmem:[%s0 + $0xd2] sm:$0xff]
  %v3338 = vld [vmem:[%s0 + $0xda] sm:$0xff]
  %v3339 = vld [vmem:[%s0 + $0xe2] sm:$0xff]
  %v3340 = vld [vmem:[%s0 + $0xea] sm:$0xff]
  %v3341 = vld [vmem:[%s0 + $0xf2] sm:$0xff]
  %v3342 = vld [vmem:[%s0 + $0xfa] sm:$0xff]
  %v3343 = vld [vmem:[%s0 + $0x102] sm:$0xff]
  %v3344 = vld [vmem:[%s0 + $0x10a] sm:$0xff]
  %v3345 = vld [vmem:[%s0 + $0x112] sm:$0xff]
  %v3346 = vld [vmem:[%s0 + $0x11a] sm:$0xff]
  %s3347 = scalar_lea.vmem %s1, 32
  %v3348 = vld [vmem:[%s3347] sm:$0xf]
  %v3350 = vsel %vm687, %v3315, 0
  %v3353 = vsel %vm687, %v3316, 0
  %v3356 = vsel %vm687, %v3317, 0
  %v3359 = vsel %vm687, %v3318, 0
  %v3362 = vsel %vm687, %v3319, 0
  %v3365 = vsel %vm687, %v3320, 0
  %v3368 = vsel %vm687, %v3321, 0
  %v3371 = vsel %vm687, %v3322, 0
  %v3374 = vsel %vm687, %v3323, 0
  %v3377 = vsel %vm687, %v3324, 0
  %v3380 = vsel %vm687, %v3325, 0
  %v3383 = vsel %vm687, %v3326, 0
  %v3386 = vsel %vm687, %v3327, 0
  %v3389 = vsel %vm687, %v3328, 0
  %v3392 = vsel %vm687, %v3329, 0
  %v3395 = vsel %vm687, %v3330, 0
  %v3398 = vsel %vm687, %v3331, 0
  %v3401 = vsel %vm687, %v3332, 0
  %v3404 = vsel %vm687, %v3333, 0
  %v3407 = vsel %vm687, %v3334, 0
  %v3410 = vsel %vm687, %v3335, 0
  %v3413 = vsel %vm687, %v3336, 0
  %v3416 = vsel %vm687, %v3337, 0
  %v3419 = vsel %vm687, %v3338, 0
  %v3422 = vsel %vm687, %v3339, 0
  %v3425 = vsel %vm687, %v3340, 0
  %v3428 = vsel %vm687, %v3341, 0
  %v3431 = vsel %vm687, %v3342, 0
  %v3434 = vsel %vm687, %v3343, 0
  %v3437 = vsel %vm687, %v3344, 0
  %v3440 = vsel %vm687, %v3345, 0
  %v3443 = vsel %vm687, %v3346, 0
  %v3446 = vsel %vm784, %v3348, 0
  %3448 = vmatprep.subr.mxu0 0.0
  %3449 = vmatpush1.msra.mxu0 %v3446
  %3450 = vmatprep.subr.mxu0 0.0
  %3451 = vmatpush1.msra.mxu0 0.0
  %3452 = vmatprep.subr.mxu0 0.0
  %3453 = vmatpush1.msra.mxu0 0.0
  %3454 = vmatprep.subr.mxu0 0.0
  %3455 = vmatpush1.msra.mxu0 0.0
  %3456 = vmatprep.subr.mxu0 0.0
  %3457 = vmatpush1.msra.mxu0 0.0
  %3458 = vmatprep.subr.mxu0 0.0
  %3459 = vmatpush1.msra.mxu0 0.0
  %3460 = vmatprep.subr.mxu0 0.0
  %3461 = vmatpush1.msra.mxu0 0.0
  %3462 = vmatprep.subr.mxu0 0.0
  %3463 = vmatpush1.msra.mxu0 0.0
  %3464 = vmatprep.subr.mxu0 0.0
  %3465 = vmatpush1.msra.mxu0 0.0
  %3466 = vmatprep.subr.mxu0 0.0
  %3467 = vmatpush1.msra.mxu0 0.0
  %3468 = vmatprep.subr.mxu0 0.0
  %3469 = vmatpush1.msra.mxu0 0.0
  %3470 = vmatprep.subr.mxu0 0.0
  %3471 = vmatpush1.msra.mxu0 0.0
  %3472 = vmatprep.subr.mxu0 0.0
  %3473 = vmatpush1.msra.mxu0 0.0
  %3474 = vmatprep.subr.mxu0 0.0
  %3475 = vmatpush1.msra.mxu0 0.0
  %3476 = vmatprep.subr.mxu0 0.0
  %3477 = vmatpush1.msra.mxu0 0.0
  %3478 = vmatprep.subr.mxu0 0.0
  %3479 = vmatpush1.msra.mxu0 0.0
  %3480 = vmatprep.subr.mxu0 0.0
  %3481 = vmatpush1.msra.mxu0 0.0
  %3482 = vmatprep.subr.mxu0 0.0
  %3483 = vmatpush1.msra.mxu0 0.0
  %3484 = vmatprep.subr.mxu0 0.0
  %3485 = vmatpush1.msra.mxu0 0.0
  %3486 = vmatprep.subr.mxu0 0.0
  %3487 = vmatpush1.msra.mxu0 0.0
  %3488 = vmatprep.subr.mxu0 0.0
  %3489 = vmatpush1.msra.mxu0 0.0
  %3490 = vmatprep.subr.mxu0 0.0
  %3491 = vmatpush1.msra.mxu0 0.0
  %3492 = vmatprep.subr.mxu0 0.0
  %3493 = vmatpush1.msra.mxu0 0.0
  %3494 = vmatprep.subr.mxu0 0.0
  %3495 = vmatpush1.msra.mxu0 0.0
  %3496 = vmatprep.subr.mxu0 0.0
  %3497 = vmatpush1.msra.mxu0 0.0
  %3498 = vmatprep.subr.mxu0 0.0
  %3499 = vmatpush1.msra.mxu0 0.0
  %3500 = vmatprep.subr.mxu0 0.0
  %3501 = vmatpush1.msra.mxu0 0.0
  %3502 = vmatprep.subr.mxu0 0.0
  %3503 = vmatpush1.msra.mxu0 0.0
  %3504 = vmatprep.subr.mxu0 0.0
  %3505 = vmatpush1.msra.mxu0 0.0
  %3506 = vmatprep.subr.mxu0 0.0
  %3507 = vmatpush1.msra.mxu0 0.0
  %3508 = vmatprep.subr.mxu0 0.0
  %3509 = vmatpush1.msra.mxu0 0.0
  %3510 = vmatprep.subr.mxu0 0.0
  %3511 = vmatpush1.msra.mxu0 0.0
  %3512 = vmatprep.mubr.f32.mxu0 0.0
  %3513 = vmatmul.mubr.f32.gmra.mrb[0].mxu0 %v3350
  %v3514 = vpop.f32.mrb[0].mxu0
  %v3515 = vadd.f32 0.0, %v3514
  %v3516 = vpop.f32.mrb[0].mxu0
  %3517 = vmatprep.mubr.f32.mxu0 0.0
  %3518 = vmatmul.mubr.f32.gmra.mrb[0].mxu0 %v3353
  %v3519 = vpop.f32.mrb[0].mxu0
  %v3520 = vadd.f32 0.0, %v3519
  %v3521 = vpop.f32.mrb[0].mxu0
  %3522 = vmatprep.mubr.f32.mxu0 0.0
  %3523 = vmatmul.mubr.f32.gmra.mrb[0].mxu0 %v3356
  %v3524 = vpop.f32.mrb[0].mxu0
  %v3525 = vadd.f32 0.0, %v3524
  %v3526 = vpop.f32.mrb[0].mxu0
  %3527 = vmatprep.mubr.f32.mxu0 0.0
  %3528 = vmatmul.mubr.f32.gmra.mrb[0].mxu0 %v3359
  %v3529 = vpop.f32.mrb[0].mxu0
  %v3530 = vadd.f32 0.0, %v3529
  %v3531 = vpop.f32.mrb[0].mxu0
  %3532 = vmatprep.mubr.f32.mxu0 0.0
  %3533 = vmatmul.mubr.f32.gmra.mrb[0].mxu0 %v3362
  %v3534 = vpop.f32.mrb[0].mxu0
  %v3535 = vadd.f32 0.0, %v3534
  %v3536 = vpop.f32.mrb[0].mxu0
  %3537 = vmatprep.mubr.f32.mxu0 0.0
  %3538 = vmatmul.mubr.f32.gmra.mrb[0].mxu0 %v3365
  %v3539 = vpop.f32.mrb[0].mxu0
  %v3540 = vadd.f32 0.0, %v3539
  %v3541 = vpop.f32.mrb[0].mxu0
  %3542 = vmatprep.mubr.f32.mxu0 0.0
  %3543 = vmatmul.mubr.f32.gmra.mrb[0].mxu0 %v3368
  %v3544 = vpop.f32.mrb[0].mxu0
  %v3545 = vadd.f32 0.0, %v3544
  %v3546 = vpop.f32.mrb[0].mxu0
  %3547 = vmatprep.mubr.f32.mxu0 0.0
  %3548 = vmatmul.mubr.f32.gmra.mrb[0].mxu0 %v3371
  %v3549 = vpop.f32.mrb[0].mxu0
  %v3550 = vadd.f32 0.0, %v3549
  %v3551 = vpop.f32.mrb[0].mxu0
  %3552 = vmatprep.mubr.f32.mxu0 0.0
  %3553 = vmatmul.mubr.f32.gmra.mrb[0].mxu0 %v3374
  %v3554 = vpop.f32.mrb[0].mxu0
  %v3555 = vadd.f32 0.0, %v3554
  %v3556 = vpop.f32.mrb[0].mxu0
  %3557 = vmatprep.mubr.f32.mxu0 0.0
  %3558 = vmatmul.mubr.f32.gmra.mrb[0].mxu0 %v3377
  %v3559 = vpop.f32.mrb[0].mxu0
  %v3560 = vadd.f32 0.0, %v3559
  %v3561 = vpop.f32.mrb[0].mxu0
  %3562 = vmatprep.mubr.f32.mxu0 0.0
  %3563 = vmatmul.mubr.f32.gmra.mrb[0].mxu0 %v3380
  %v3564 = vpop.f32.mrb[0].mxu0
  %v3565 = vadd.f32 0.0, %v3564
  %v3566 = vpop.f32.mrb[0].mxu0
  %3567 = vmatprep.mubr.f32.mxu0 0.0
  %3568 = vmatmul.mubr.f32.gmra.mrb[0].mxu0 %v3383
  %v3569 = vpop.f32.mrb[0].mxu0
  %v3570 = vadd.f32 0.0, %v3569
  %v3571 = vpop.f32.mrb[0].mxu0
  %3572 = vmatprep.mubr.f32.mxu0 0.0
  %3573 = vmatmul.mubr.f32.gmra.mrb[0].mxu0 %v3386
  %v3574 = vpop.f32.mrb[0].mxu0
  %v3575 = vadd.f32 0.0, %v3574
  %v3576 = vpop.f32.mrb[0].mxu0
  %3577 = vmatprep.mubr.f32.mxu0 0.0
  %3578 = vmatmul.mubr.f32.gmra.mrb[0].mxu0 %v3389
  %v3579 = vpop.f32.mrb[0].mxu0
  %v3580 = vadd.f32 0.0, %v3579
  %v3581 = vpop.f32.mrb[0].mxu0
  %3582 = vmatprep.mubr.f32.mxu0 0.0
  %3583 = vmatmul.mubr.f32.gmra.mrb[0].mxu0 %v3392
  %v3584 = vpop.f32.mrb[0].mxu0
  %v3585 = vadd.f32 0.0, %v3584
  %v3586 = vpop.f32.mrb[0].mxu0
  %3587 = vmatprep.mubr.f32.mxu0 0.0
  %3588 = vmatmul.mubr.f32.gmra.mrb[0].mxu0 %v3395
  %v3589 = vpop.f32.mrb[0].mxu0
  %v3590 = vadd.f32 0.0, %v3589
  %v3591 = vpop.f32.mrb[0].mxu0
  %3592 = vmatprep.mubr.f32.mxu0 0.0
  %3593 = vmatmul.mubr.f32.gmra.mrb[0].mxu0 %v3398
  %v3594 = vpop.f32.mrb[0].mxu0
  %v3595 = vadd.f32 0.0, %v3594
  %v3596 = vpop.f32.mrb[0].mxu0
  %3597 = vmatprep.mubr.f32.mxu0 0.0
  %3598 = vmatmul.mubr.f32.gmra.mrb[0].mxu0 %v3401
  %v3599 = vpop.f32.mrb[0].mxu0
  %v3600 = vadd.f32 0.0, %v3599
  %v3601 = vpop.f32.mrb[0].mxu0
  %3602 = vmatprep.mubr.f32.mxu0 0.0
  %3603 = vmatmul.mubr.f32.gmra.mrb[0].mxu0 %v3404
  %v3604 = vpop.f32.mrb[0].mxu0
  %v3605 = vadd.f32 0.0, %v3604
  %v3606 = vpop.f32.mrb[0].mxu0
  %3607 = vmatprep.mubr.f32.mxu0 0.0
  %3608 = vmatmul.mubr.f32.gmra.mrb[0].mxu0 %v3407
  %v3609 = vpop.f32.mrb[0].mxu0
  %v3610 = vadd.f32 0.0, %v3609
  %v3611 = vpop.f32.mrb[0].mxu0
  %3612 = vmatprep.mubr.f32.mxu0 0.0
  %3613 = vmatmul.mubr.f32.gmra.mrb[0].mxu0 %v3410
  %v3614 = vpop.f32.mrb[0].mxu0
  %v3615 = vadd.f32 0.0, %v3614
  %v3616 = vpop.f32.mrb[0].mxu0
  %3617 = vmatprep.mubr.f32.mxu0 0.0
  %3618 = vmatmul.mubr.f32.gmra.mrb[0].mxu0 %v3413
  %v3619 = vpop.f32.mrb[0].mxu0
  %v3620 = vadd.f32 0.0, %v3619
  %v3621 = vpop.f32.mrb[0].mxu0
  %3622 = vmatprep.mubr.f32.mxu0 0.0
  %3623 = vmatmul.mubr.f32.gmra.mrb[0].mxu0 %v3416
  %v3624 = vpop.f32.mrb[0].mxu0
  %v3625 = vadd.f32 0.0, %v3624
  %v3626 = vpop.f32.mrb[0].mxu0
  %3627 = vmatprep.mubr.f32.mxu0 0.0
  %3628 = vmatmul.mubr.f32.gmra.mrb[0].mxu0 %v3419
  %v3629 = vpop.f32.mrb[0].mxu0
  %v3630 = vadd.f32 0.0, %v3629
  %v3631 = vpop.f32.mrb[0].mxu0
  %3632 = vmatprep.mubr.f32.mxu0 0.0
  %3633 = vmatmul.mubr.f32.gmra.mrb[0].mxu0 %v3422
  %v3634 = vpop.f32.mrb[0].mxu0
  %v3635 = vadd.f32 0.0, %v3634
  %v3636 = vpop.f32.mrb[0].mxu0
  %3637 = vmatprep.mubr.f32.mxu0 0.0
  %3638 = vmatmul.mubr.f32.gmra.mrb[0].mxu0 %v3425
  %v3639 = vpop.f32.mrb[0].mxu0
  %v3640 = vadd.f32 0.0, %v3639
  %v3641 = vpop.f32.mrb[0].mxu0
  %3642 = vmatprep.mubr.f32.mxu0 0.0
  %3643 = vmatmul.mubr.f32.gmra.mrb[0].mxu0 %v3428
  %v3644 = vpop.f32.mrb[0].mxu0
  %v3645 = vadd.f32 0.0, %v3644
  %v3646 = vpop.f32.mrb[0].mxu0
  %3647 = vmatprep.mubr.f32.mxu0 0.0
  %3648 = vmatmul.mubr.f32.gmra.mrb[0].mxu0 %v3431
  %v3649 = vpop.f32.mrb[0].mxu0
  %v3650 = vadd.f32 0.0, %v3649
  %v3651 = vpop.f32.mrb[0].mxu0
  %3652 = vmatprep.mubr.f32.mxu0 0.0
  %3653 = vmatmul.mubr.f32.gmra.mrb[0].mxu0 %v3434
  %v3654 = vpop.f32.mrb[0].mxu0
  %v3655 = vadd.f32 0.0, %v3654
  %v3656 = vpop.f32.mrb[0].mxu0
  %3657 = vmatprep.mubr.f32.mxu0 0.0
  %3658 = vmatmul.mubr.f32.gmra.mrb[0].mxu0 %v3437
  %v3659 = vpop.f32.mrb[0].mxu0
  %v3660 = vadd.f32 0.0, %v3659
  %v3661 = vpop.f32.mrb[0].mxu0
  %3662 = vmatprep.mubr.f32.mxu0 0.0
  %3663 = vmatmul.mubr.f32.gmra.mrb[0].mxu0 %v3440
  %v3664 = vpop.f32.mrb[0].mxu0
  %v3665 = vadd.f32 0.0, %v3664
  %v3666 = vpop.f32.mrb[0].mxu0
  %3667 = vmatprep.mubr.f32.mxu0 0.0
  %3668 = vmatmul.mubr.f32.gmra.mrb[0].mxu0 %v3443
  %v3669 = vpop.f32.mrb[0].mxu0
  %v3670 = vadd.f32 0.0, %v3669
  %v3671 = vpop.f32.mrb[0].mxu0
  %3672 = vdwg.mxu0
  %v3673 = vadd.f32 %v3157, %v3515
  %v3674 = vadd.f32 %v3162, %v3520
  %v3675 = vadd.f32 %v3167, %v3525
  %v3676 = vadd.f32 %v3172, %v3530
  %v3677 = vadd.f32 %v3177, %v3535
  %v3678 = vadd.f32 %v3182, %v3540
  %v3679 = vadd.f32 %v3187, %v3545
  %v3680 = vadd.f32 %v3192, %v3550
  %v3681 = vadd.f32 %v3197, %v3555
  %v3682 = vadd.f32 %v3202, %v3560
  %v3683 = vadd.f32 %v3207, %v3565
  %v3684 = vadd.f32 %v3212, %v3570
  %v3685 = vadd.f32 %v3217, %v3575
  %v3686 = vadd.f32 %v3222, %v3580
  %v3687 = vadd.f32 %v3227, %v3585
  %v3688 = vadd.f32 %v3232, %v3590
  %v3689 = vadd.f32 %v3237, %v3595
  %v3690 = vadd.f32 %v3242, %v3600
  %v3691 = vadd.f32 %v3247, %v3605
  %v3692 = vadd.f32 %v3252, %v3610
  %v3693 = vadd.f32 %v3257, %v3615
  %v3694 = vadd.f32 %v3262, %v3620
  %v3695 = vadd.f32 %v3267, %v3625
  %v3696 = vadd.f32 %v3272, %v3630
  %v3697 = vadd.f32 %v3277, %v3635
  %v3698 = vadd.f32 %v3282, %v3640
  %v3699 = vadd.f32 %v3287, %v3645
  %v3700 = vadd.f32 %v3292, %v3650
  %v3701 = vadd.f32 %v3297, %v3655
  %v3702 = vadd.f32 %v3302, %v3660
  %v3703 = vadd.f32 %v3307, %v3665
  %v3704 = vadd.f32 %v3312, %v3670
  %v3705 = vmul.f32 %v3673, %v618
  %v3706 = vmul.f32 %v3674, %v619
  %v3707 = vmul.f32 %v3675, %v620
  %v3708 = vmul.f32 %v3676, %v621
  %v3709 = vmul.f32 %v3677, %v622
  %v3710 = vmul.f32 %v3678, %v623
  %v3711 = vmul.f32 %v3679, %v624
  %v3712 = vmul.f32 %v3680, %v625
  %v3713 = vmul.f32 %v3681, %v626
  %v3714 = vmul.f32 %v3682, %v627
  %v3715 = vmul.f32 %v3683, %v628
  %v3716 = vmul.f32 %v3684, %v629
  %v3717 = vmul.f32 %v3685, %v630
  %v3718 = vmul.f32 %v3686, %v631
  %v3719 = vmul.f32 %v3687, %v632
  %v3720 = vmul.f32 %v3688, %v633
  %v3721 = vmul.f32 %v3689, %v634
  %v3722 = vmul.f32 %v3690, %v635
  %v3723 = vmul.f32 %v3691, %v636
  %v3724 = vmul.f32 %v3692, %v637
  %v3725 = vmul.f32 %v3693, %v638
  %v3726 = vmul.f32 %v3694, %v639
  %v3727 = vmul.f32 %v3695, %v640
  %v3728 = vmul.f32 %v3696, %v641
  %v3729 = vmul.f32 %v3697, %v642
  %v3730 = vmul.f32 %v3698, %v643
  %v3731 = vmul.f32 %v3699, %v644
  %v3732 = vmul.f32 %v3700, %v645
  %v3733 = vmul.f32 %v3701, %v646
  %v3734 = vmul.f32 %v3702, %v647
  %v3735 = vmul.f32 %v3703, %v648
  %v3736 = vmul.f32 %v3704, %v649
  %v3737 = vadd.f32 %v2687, %v3705
  %v3738 = vadd.f32 %v2688, %v3706
  %v3739 = vadd.f32 %v2689, %v3707
  %v3740 = vadd.f32 %v2690, %v3708
  %v3741 = vadd.f32 %v2691, %v3709
  %v3742 = vadd.f32 %v2692, %v3710
  %v3743 = vadd.f32 %v2693, %v3711
  %v3744 = vadd.f32 %v2694, %v3712
  %v3745 = vadd.f32 %v2695, %v3713
  %v3746 = vadd.f32 %v2696, %v3714
  %v3747 = vadd.f32 %v2697, %v3715
  %v3748 = vadd.f32 %v2698, %v3716
  %v3749 = vadd.f32 %v2699, %v3717
  %v3750 = vadd.f32 %v2700, %v3718
  %v3751 = vadd.f32 %v2701, %v3719
  %v3752 = vadd.f32 %v2702, %v3720
  %v3753 = vadd.f32 %v2703, %v3721
  %v3754 = vadd.f32 %v2704, %v3722
  %v3755 = vadd.f32 %v2705, %v3723
  %v3756 = vadd.f32 %v2706, %v3724
  %v3757 = vadd.f32 %v2707, %v3725
  %v3758 = vadd.f32 %v2708, %v3726
  %v3759 = vadd.f32 %v2709, %v3727
  %v3760 = vadd.f32 %v2710, %v3728
  %v3761 = vadd.f32 %v2711, %v3729
  %v3762 = vadd.f32 %v2712, %v3730
  %v3763 = vadd.f32 %v2713, %v3731
  %v3764 = vadd.f32 %v2714, %v3732
  %v3765 = vadd.f32 %v2715, %v3733
  %v3766 = vadd.f32 %v2716, %v3734
  %v3767 = vadd.f32 %v2717, %v3735
  %v3768 = vadd.f32 %v2718, %v3736
  %s3769 = scalar_lea.vmem %s0, 296
  %v3770 = vld [vmem:[%s3769] sm:$0xff]
  %v3771 = vld [vmem:[%s3769 + $0x8] sm:$0xff]
  %v3772 = vld [vmem:[%s3769 + $0x10] sm:$0xff]
  %v3773 = vld [vmem:[%s3769 + $0x18] sm:$0xff]
  %v3774 = vld [vmem:[%s3769 + $0x20] sm:$0xff]
  %v3775 = vld [vmem:[%s3769 + $0x28] sm:$0xff]
  %v3776 = vld [vmem:[%s3769 + $0x30] sm:$0xff]
  %v3777 = vld [vmem:[%s3769 + $0x38] sm:$0xff]
  %v3778 = vld [vmem:[%s3769 + $0x40] sm:$0xff]
  %v3779 = vld [vmem:[%s3769 + $0x48] sm:$0xff]
  %v3780 = vld [vmem:[%s3769 + $0x50] sm:$0xff]
  %v3781 = vld [vmem:[%s3769 + $0x58] sm:$0xff]
  %v3782 = vld [vmem:[%s3769 + $0x60] sm:$0xff]
  %v3783 = vld [vmem:[%s3769 + $0x68] sm:$0xff]
  %v3784 = vld [vmem:[%s3769 + $0x70] sm:$0xff]
  %v3785 = vld [vmem:[%s3769 + $0x78] sm:$0xff]
  %v3786 = vld [vmem:[%s3769 + $0x80] sm:$0xff]
  %v3787 = vld [vmem:[%s3769 + $0x88] sm:$0xff]
  %v3788 = vld [vmem:[%s3769 + $0x90] sm:$0xff]
  %v3789 = vld [vmem:[%s3769 + $0x98] sm:$0xff]
  %v3790 = vld [vmem:[%s3769 + $0xa0] sm:$0xff]
  %v3791 = vld [vmem:[%s3769 + $0xa8] sm:$0xff]
  %v3792 = vld [vmem:[%s3769 + $0xb0] sm:$0xff]
  %v3793 = vld [vmem:[%s3769 + $0xb8] sm:$0xff]
  %v3794 = vld [vmem:[%s3769 + $0xc0] sm:$0xff]
  %v3795 = vld [vmem:[%s3769 + $0xc8] sm:$0xff]
  %v3796 = vld [vmem:[%s3769 + $0xd0] sm:$0xff]
  %v3797 = vld [vmem:[%s3769 + $0xd8] sm:$0xff]
  %v3798 = vld [vmem:[%s3769 + $0xe0] sm:$0xff]
  %v3799 = vld [vmem:[%s3769 + $0xe8] sm:$0xff]
  %v3800 = vld [vmem:[%s3769 + $0xf0] sm:$0xff]
  %v3801 = vld [vmem:[%s3769 + $0xf8] sm:$0xff]
  %v3802 = vld [vmem:[%s3769 + $0x100] sm:$0xff]
  %v3803 = vld [vmem:[%s3769 + $0x108] sm:$0xff]
  %v3805 = vsel %vm687, %v3772, 0
  %v3808 = vsel %vm687, %v3773, 0
  %v3811 = vsel %vm687, %v3774, 0
  %v3814 = vsel %vm687, %v3775, 0
  %v3817 = vsel %vm687, %v3776, 0
  %v3820 = vsel %vm687, %v3777, 0
  %v3823 = vsel %vm687, %v3778, 0
  %v3826 = vsel %vm687, %v3779, 0
  %v3829 = vsel %vm687, %v3780, 0
  %v3832 = vsel %vm687, %v3781, 0
  %v3835 = vsel %vm687, %v3782, 0
  %v3838 = vsel %vm687, %v3783, 0
  %v3841 = vsel %vm687, %v3784, 0
  %v3844 = vsel %vm687, %v3785, 0
  %v3847 = vsel %vm687, %v3786, 0
  %v3850 = vsel %vm687, %v3787, 0
  %v3853 = vsel %vm687, %v3788, 0
  %v3856 = vsel %vm687, %v3789, 0
  %v3859 = vsel %vm687, %v3790, 0
  %v3862 = vsel %vm687, %v3791, 0
  %v3865 = vsel %vm687, %v3792, 0
  %v3868 = vsel %vm687, %v3793, 0
  %v3871 = vsel %vm687, %v3794, 0
  %v3874 = vsel %vm687, %v3795, 0
  %v3877 = vsel %vm687, %v3796, 0
  %v3880 = vsel %vm687, %v3797, 0
  %v3883 = vsel %vm687, %v3798, 0
  %v3886 = vsel %vm687, %v3799, 0
  %v3889 = vsel %vm687, %v3800, 0
  %v3892 = vsel %vm687, %v3801, 0
  %v3895 = vsel %vm687, %v3802, 0
  %v3898 = vsel %vm687, %v3803, 0
  %3900 = vmatprep.subr.mxu0 0.0
  %3901 = vmatpush1.msra.mxu0 %v786
  %3902 = vmatprep.subr.mxu0 0.0
  %3903 = vmatpush1.msra.mxu0 0.0
  %3904 = vmatprep.subr.mxu0 0.0
  %3905 = vmatpush1.msra.mxu0 0.0
  %3906 = vmatprep.subr.mxu0 0.0
  %3907 = vmatpush1.msra.mxu0 0.0
  %3908 = vmatprep.subr.mxu0 0.0
  %3909 = vmatpush1.msra.mxu0 0.0
  %3910 = vmatprep.subr.mxu0 0.0
  %3911 = vmatpush1.msra.mxu0 0.0
  %3912 = vmatprep.subr.mxu0 0.0
  %3913 = vmatpush1.msra.mxu0 0.0
  %3914 = vmatprep.subr.mxu0 0.0
  %3915 = vmatpush1.msra.mxu0 0.0
  %3916 = vmatprep.subr.mxu0 0.0
  %3917 = vmatpush1.msra.mxu0 0.0
  %3918 = vmatprep.subr.mxu0 0.0
  %3919 = vmatpush1.msra.mxu0 0.0
  %3920 = vmatprep.subr.mxu0 0.0
  %3921 = vmatpush1.msra.mxu0 0.0
  %3922 = vmatprep.subr.mxu0 0.0
  %3923 = vmatpush1.msra.mxu0 0.0
  %3924 = vmatprep.subr.mxu0 0.0
  %3925 = vmatpush1.msra.mxu0 0.0
  %3926 = vmatprep.subr.mxu0 0.0
  %3927 = vmatpush1.msra.mxu0 0.0
  %3928 = vmatprep.subr.mxu0 0.0
  %3929 = vmatpush1.msra.mxu0 0.0
  %3930 = vmatprep.subr.mxu0 0.0
  %3931 = vmatpush1.msra.mxu0 0.0
  %3932 = vmatprep.subr.mxu0 0.0
  %3933 = vmatpush1.msra.mxu0 0.0
  %3934 = vmatprep.subr.mxu0 0.0
  %3935 = vmatpush1.msra.mxu0 0.0
  %3936 = vmatprep.subr.mxu0 0.0
  %3937 = vmatpush1.msra.mxu0 0.0
  %3938 = vmatprep.subr.mxu0 0.0
  %3939 = vmatpush1.msra.mxu0 0.0
  %3940 = vmatprep.subr.mxu0 0.0
  %3941 = vmatpush1.msra.mxu0 0.0
  %3942 = vmatprep.subr.mxu0 0.0
  %3943 = vmatpush1.msra.mxu0 0.0
  %3944 = vmatprep.subr.mxu0 0.0
  %3945 = vmatpush1.msra.mxu0 0.0
  %3946 = vmatprep.subr.mxu0 0.0
  %3947 = vmatpush1.msra.mxu0 0.0
  %3948 = vmatprep.subr.mxu0 0.0
  %3949 = vmatpush1.msra.mxu0 0.0
  %3950 = vmatprep.subr.mxu0 0.0
  %3951 = vmatpush1.msra.mxu0 0.0
  %3952 = vmatprep.subr.mxu0 0.0
  %3953 = vmatpush1.msra.mxu0 0.0
  %3954 = vmatprep.subr.mxu0 0.0
  %3955 = vmatpush1.msra.mxu0 0.0
  %3956 = vmatprep.subr.mxu0 0.0
  %3957 = vmatpush1.msra.mxu0 0.0
  %3958 = vmatprep.subr.mxu0 0.0
  %3959 = vmatpush1.msra.mxu0 0.0
  %3960 = vmatprep.subr.mxu0 0.0
  %3961 = vmatpush1.msra.mxu0 0.0
  %3962 = vmatprep.subr.mxu0 0.0
  %3963 = vmatpush1.msra.mxu0 0.0
  %3964 = vmatprep.mubr.f32.mxu0 0.0
  %3965 = vmatmul.mubr.f32.gmra.mrb[0].mxu0 %v3805
  %v3966 = vpop.f32.mrb[0].mxu0
  %v3967 = vadd.f32 0.0, %v3966
  %v3968 = vpop.f32.mrb[0].mxu0
  %3969 = vmatprep.mubr.f32.mxu0 0.0
  %3970 = vmatmul.mubr.f32.gmra.mrb[0].mxu0 %v3808
  %v3971 = vpop.f32.mrb[0].mxu0
  %v3972 = vadd.f32 0.0, %v3971
  %v3973 = vpop.f32.mrb[0].mxu0
  %3974 = vmatprep.mubr.f32.mxu0 0.0
  %3975 = vmatmul.mubr.f32.gmra.mrb[0].mxu0 %v3811
  %v3976 = vpop.f32.mrb[0].mxu0
  %v3977 = vadd.f32 0.0, %v3976
  %v3978 = vpop.f32.mrb[0].mxu0
  %3979 = vmatprep.mubr.f32.mxu0 0.0
  %3980 = vmatmul.mubr.f32.gmra.mrb[0].mxu0 %v3814
  %v3981 = vpop.f32.mrb[0].mxu0
  %v3982 = vadd.f32 0.0, %v3981
  %v3983 = vpop.f32.mrb[0].mxu0
  %3984 = vmatprep.mubr.f32.mxu0 0.0
  %3985 = vmatmul.mubr.f32.gmra.mrb[0].mxu0 %v3817
  %v3986 = vpop.f32.mrb[0].mxu0
  %v3987 = vadd.f32 0.0, %v3986
  %v3988 = vpop.f32.mrb[0].mxu0
  %3989 = vmatprep.mubr.f32.mxu0 0.0
  %3990 = vmatmul.mubr.f32.gmra.mrb[0].mxu0 %v3820
  %v3991 = vpop.f32.mrb[0].mxu0
  %v3992 = vadd.f32 0.0, %v3991
  %v3993 = vpop.f32.mrb[0].mxu0
  %3994 = vmatprep.mubr.f32.mxu0 0.0
  %3995 = vmatmul.mubr.f32.gmra.mrb[0].mxu0 %v3823
  %v3996 = vpop.f32.mrb[0].mxu0
  %v3997 = vadd.f32 0.0, %v3996
  %v3998 = vpop.f32.mrb[0].mxu0
  %3999 = vmatprep.mubr.f32.mxu0 0.0
  %4000 = vmatmul.mubr.f32.gmra.mrb[0].mxu0 %v3826
  %v4001 = vpop.f32.mrb[0].mxu0
  %v4002 = vadd.f32 0.0, %v4001
  %v4003 = vpop.f32.mrb[0].mxu0
  %4004 = vmatprep.mubr.f32.mxu0 0.0
  %4005 = vmatmul.mubr.f32.gmra.mrb[0].mxu0 %v3829
  %v4006 = vpop.f32.mrb[0].mxu0
  %v4007 = vadd.f32 0.0, %v4006
  %v4008 = vpop.f32.mrb[0].mxu0
  %4009 = vmatprep.mubr.f32.mxu0 0.0
  %4010 = vmatmul.mubr.f32.gmra.mrb[0].mxu0 %v3832
  %v4011 = vpop.f32.mrb[0].mxu0
  %v4012 = vadd.f32 0.0, %v4011
  %v4013 = vpop.f32.mrb[0].mxu0
  %4014 = vmatprep.mubr.f32.mxu0 0.0
  %4015 = vmatmul.mubr.f32.gmra.mrb[0].mxu0 %v3835
  %v4016 = vpop.f32.mrb[0].mxu0
  %v4017 = vadd.f32 0.0, %v4016
  %v4018 = vpop.f32.mrb[0].mxu0
  %4019 = vmatprep.mubr.f32.mxu0 0.0
  %4020 = vmatmul.mubr.f32.gmra.mrb[0].mxu0 %v3838
  %v4021 = vpop.f32.mrb[0].mxu0
  %v4022 = vadd.f32 0.0, %v4021
  %v4023 = vpop.f32.mrb[0].mxu0
  %4024 = vmatprep.mubr.f32.mxu0 0.0
  %4025 = vmatmul.mubr.f32.gmra.mrb[0].mxu0 %v3841
  %v4026 = vpop.f32.mrb[0].mxu0
  %v4027 = vadd.f32 0.0, %v4026
  %v4028 = vpop.f32.mrb[0].mxu0
  %4029 = vmatprep.mubr.f32.mxu0 0.0
  %4030 = vmatmul.mubr.f32.gmra.mrb[0].mxu0 %v3844
  %v4031 = vpop.f32.mrb[0].mxu0
  %v4032 = vadd.f32 0.0, %v4031
  %v4033 = vpop.f32.mrb[0].mxu0
  %4034 = vmatprep.mubr.f32.mxu0 0.0
  %4035 = vmatmul.mubr.f32.gmra.mrb[0].mxu0 %v3847
  %v4036 = vpop.f32.mrb[0].mxu0
  %v4037 = vadd.f32 0.0, %v4036
  %v4038 = vpop.f32.mrb[0].mxu0
  %4039 = vmatprep.mubr.f32.mxu0 0.0
  %4040 = vmatmul.mubr.f32.gmra.mrb[0].mxu0 %v3850
  %v4041 = vpop.f32.mrb[0].mxu0
  %v4042 = vadd.f32 0.0, %v4041
  %v4043 = vpop.f32.mrb[0].mxu0
  %4044 = vmatprep.mubr.f32.mxu0 0.0
  %4045 = vmatmul.mubr.f32.gmra.mrb[0].mxu0 %v3853
  %v4046 = vpop.f32.mrb[0].mxu0
  %v4047 = vadd.f32 0.0, %v4046
  %v4048 = vpop.f32.mrb[0].mxu0
  %4049 = vmatprep.mubr.f32.mxu0 0.0
  %4050 = vmatmul.mubr.f32.gmra.mrb[0].mxu0 %v3856
  %v4051 = vpop.f32.mrb[0].mxu0
  %v4052 = vadd.f32 0.0, %v4051
  %v4053 = vpop.f32.mrb[0].mxu0
  %4054 = vmatprep.mubr.f32.mxu0 0.0
  %4055 = vmatmul.mubr.f32.gmra.mrb[0].mxu0 %v3859
  %v4056 = vpop.f32.mrb[0].mxu0
  %v4057 = vadd.f32 0.0, %v4056
  %v4058 = vpop.f32.mrb[0].mxu0
  %4059 = vmatprep.mubr.f32.mxu0 0.0
  %4060 = vmatmul.mubr.f32.gmra.mrb[0].mxu0 %v3862
  %v4061 = vpop.f32.mrb[0].mxu0
  %v4062 = vadd.f32 0.0, %v4061
  %v4063 = vpop.f32.mrb[0].mxu0
  %4064 = vmatprep.mubr.f32.mxu0 0.0
  %4065 = vmatmul.mubr.f32.gmra.mrb[0].mxu0 %v3865
  %v4066 = vpop.f32.mrb[0].mxu0
  %v4067 = vadd.f32 0.0, %v4066
  %v4068 = vpop.f32.mrb[0].mxu0
  %4069 = vmatprep.mubr.f32.mxu0 0.0
  %4070 = vmatmul.mubr.f32.gmra.mrb[0].mxu0 %v3868
  %v4071 = vpop.f32.mrb[0].mxu0
  %v4072 = vadd.f32 0.0, %v4071
  %v4073 = vpop.f32.mrb[0].mxu0
  %4074 = vmatprep.mubr.f32.mxu0 0.0
  %4075 = vmatmul.mubr.f32.gmra.mrb[0].mxu0 %v3871
  %v4076 = vpop.f32.mrb[0].mxu0
  %v4077 = vadd.f32 0.0, %v4076
  %v4078 = vpop.f32.mrb[0].mxu0
  %4079 = vmatprep.mubr.f32.mxu0 0.0
  %4080 = vmatmul.mubr.f32.gmra.mrb[0].mxu0 %v3874
  %v4081 = vpop.f32.mrb[0].mxu0
  %v4082 = vadd.f32 0.0, %v4081
  %v4083 = vpop.f32.mrb[0].mxu0
  %4084 = vmatprep.mubr.f32.mxu0 0.0
  %4085 = vmatmul.mubr.f32.gmra.mrb[0].mxu0 %v3877
  %v4086 = vpop.f32.mrb[0].mxu0
  %v4087 = vadd.f32 0.0, %v4086
  %v4088 = vpop.f32.mrb[0].mxu0
  %4089 = vmatprep.mubr.f32.mxu0 0.0
  %4090 = vmatmul.mubr.f32.gmra.mrb[0].mxu0 %v3880
  %v4091 = vpop.f32.mrb[0].mxu0
  %v4092 = vadd.f32 0.0, %v4091
  %v4093 = vpop.f32.mrb[0].mxu0
  %4094 = vmatprep.mubr.f32.mxu0 0.0
  %4095 = vmatmul.mubr.f32.gmra.mrb[0].mxu0 %v3883
  %v4096 = vpop.f32.mrb[0].mxu0
  %v4097 = vadd.f32 0.0, %v4096
  %v4098 = vpop.f32.mrb[0].mxu0
  %4099 = vmatprep.mubr.f32.mxu0 0.0
  %4100 = vmatmul.mubr.f32.gmra.mrb[0].mxu0 %v3886
  %v4101 = vpop.f32.mrb[0].mxu0
  %v4102 = vadd.f32 0.0, %v4101
  %v4103 = vpop.f32.mrb[0].mxu0
  %4104 = vmatprep.mubr.f32.mxu0 0.0
  %4105 = vmatmul.mubr.f32.gmra.mrb[0].mxu0 %v3889
  %v4106 = vpop.f32.mrb[0].mxu0
  %v4107 = vadd.f32 0.0, %v4106
  %v4108 = vpop.f32.mrb[0].mxu0
  %4109 = vmatprep.mubr.f32.mxu0 0.0
  %4110 = vmatmul.mubr.f32.gmra.mrb[0].mxu0 %v3892
  %v4111 = vpop.f32.mrb[0].mxu0
  %v4112 = vadd.f32 0.0, %v4111
  %v4113 = vpop.f32.mrb[0].mxu0
  %4114 = vmatprep.mubr.f32.mxu0 0.0
  %4115 = vmatmul.mubr.f32.gmra.mrb[0].mxu0 %v3895
  %v4116 = vpop.f32.mrb[0].mxu0
  %v4117 = vadd.f32 0.0, %v4116
  %v4118 = vpop.f32.mrb[0].mxu0
  %4119 = vmatprep.mubr.f32.mxu0 0.0
  %4120 = vmatmul.mubr.f32.gmra.mrb[0].mxu0 %v3898
  %v4121 = vpop.f32.mrb[0].mxu0
  %v4122 = vadd.f32 0.0, %v4121
  %v4123 = vpop.f32.mrb[0].mxu0
  %4124 = vdwg.mxu0
  %v4126 = vsel %vm687, %v3770, 0
  %v4129 = vsel %vm687, %v3771, 0
  %4131 = vmatprep.subr.mxu0 0.0
  %4132 = vmatpush1.msra.mxu0 %v1020
  %4133 = vmatprep.subr.mxu0 0.0
  %4134 = vmatpush1.msra.mxu0 0.0
  %4135 = vmatprep.subr.mxu0 0.0
  %4136 = vmatpush1.msra.mxu0 0.0
  %4137 = vmatprep.subr.mxu0 0.0
  %4138 = vmatpush1.msra.mxu0 0.0
  %4139 = vmatprep.subr.mxu0 0.0
  %4140 = vmatpush1.msra.mxu0 0.0
  %4141 = vmatprep.subr.mxu0 0.0
  %4142 = vmatpush1.msra.mxu0 0.0
  %4143 = vmatprep.subr.mxu0 0.0
  %4144 = vmatpush1.msra.mxu0 0.0
  %4145 = vmatprep.subr.mxu0 0.0
  %4146 = vmatpush1.msra.mxu0 0.0
  %4147 = vmatprep.subr.mxu0 0.0
  %4148 = vmatpush1.msra.mxu0 0.0
  %4149 = vmatprep.subr.mxu0 0.0
  %4150 = vmatpush1.msra.mxu0 0.0
  %4151 = vmatprep.subr.mxu0 0.0
  %4152 = vmatpush1.msra.mxu0 0.0
  %4153 = vmatprep.subr.mxu0 0.0
  %4154 = vmatpush1.msra.mxu0 0.0
  %4155 = vmatprep.subr.mxu0 0.0
  %4156 = vmatpush1.msra.mxu0 0.0
  %4157 = vmatprep.subr.mxu0 0.0
  %4158 = vmatpush1.msra.mxu0 0.0
  %4159 = vmatprep.subr.mxu0 0.0
  %4160 = vmatpush1.msra.mxu0 0.0
  %4161 = vmatprep.subr.mxu0 0.0
  %4162 = vmatpush1.msra.mxu0 0.0
  %4163 = vmatprep.subr.mxu0 0.0
  %4164 = vmatpush1.msra.mxu0 0.0
  %4165 = vmatprep.subr.mxu0 0.0
  %4166 = vmatpush1.msra.mxu0 0.0
  %4167 = vmatprep.subr.mxu0 0.0
  %4168 = vmatpush1.msra.mxu0 0.0
  %4169 = vmatprep.subr.mxu0 0.0
  %4170 = vmatpush1.msra.mxu0 0.0
  %4171 = vmatprep.subr.mxu0 0.0
  %4172 = vmatpush1.msra.mxu0 0.0
  %4173 = vmatprep.subr.mxu0 0.0
  %4174 = vmatpush1.msra.mxu0 0.0
  %4175 = vmatprep.subr.mxu0 0.0
  %4176 = vmatpush1.msra.mxu0 0.0
  %4177 = vmatprep.subr.mxu0 0.0
  %4178 = vmatpush1.msra.mxu0 0.0
  %4179 = vmatprep.subr.mxu0 0.0
  %4180 = vmatpush1.msra.mxu0 0.0
  %4181 = vmatprep.subr.mxu0 0.0
  %4182 = vmatpush1.msra.mxu0 0.0
  %4183 = vmatprep.subr.mxu0 0.0
  %4184 = vmatpush1.msra.mxu0 0.0
  %4185 = vmatprep.subr.mxu0 0.0
  %4186 = vmatpush1.msra.mxu0 0.0
  %4187 = vmatprep.subr.mxu0 0.0
  %4188 = vmatpush1.msra.mxu0 0.0
  %4189 = vmatprep.subr.mxu0 0.0
  %4190 = vmatpush1.msra.mxu0 0.0
  %4191 = vmatprep.subr.mxu0 0.0
  %4192 = vmatpush1.msra.mxu0 0.0
  %4193 = vmatprep.subr.mxu0 0.0
  %4194 = vmatpush1.msra.mxu0 0.0
  %4195 = vmatprep.mubr.f32.mxu0 0.0
  %4196 = vmatmul.mubr.f32.gmra.mrb[0].mxu0 %v4126
  %v4197 = vpop.f32.mrb[0].mxu0
  %v4198 = vadd.f32 %v3967, %v4197
  %v4199 = vpop.f32.mrb[0].mxu0
  %4200 = vmatprep.mubr.f32.mxu0 0.0
  %4201 = vmatmul.mubr.f32.gmra.mrb[0].mxu0 %v4129
  %v4202 = vpop.f32.mrb[0].mxu0
  %v4203 = vadd.f32 %v3972, %v4202
  %v4204 = vpop.f32.mrb[0].mxu0
  %4205 = vmatprep.mubr.f32.mxu0 0.0
  %4206 = vmatmul.mubr.f32.gmra.mrb[0].mxu0 %v3805
  %v4207 = vpop.f32.mrb[0].mxu0
  %v4208 = vadd.f32 %v3977, %v4207
  %v4209 = vpop.f32.mrb[0].mxu0
  %4210 = vmatprep.mubr.f32.mxu0 0.0
  %4211 = vmatmul.mubr.f32.gmra.mrb[0].mxu0 %v3808
  %v4212 = vpop.f32.mrb[0].mxu0
  %v4213 = vadd.f32 %v3982, %v4212
  %v4214 = vpop.f32.mrb[0].mxu0
  %4215 = vmatprep.mubr.f32.mxu0 0.0
  %4216 = vmatmul.mubr.f32.gmra.mrb[0].mxu0 %v3811
  %v4217 = vpop.f32.mrb[0].mxu0
  %v4218 = vadd.f32 %v3987, %v4217
  %v4219 = vpop.f32.mrb[0].mxu0
  %4220 = vmatprep.mubr.f32.mxu0 0.0
  %4221 = vmatmul.mubr.f32.gmra.mrb[0].mxu0 %v3814
  %v4222 = vpop.f32.mrb[0].mxu0
  %v4223 = vadd.f32 %v3992, %v4222
  %v4224 = vpop.f32.mrb[0].mxu0
  %4225 = vmatprep.mubr.f32.mxu0 0.0
  %4226 = vmatmul.mubr.f32.gmra.mrb[0].mxu0 %v3817
  %v4227 = vpop.f32.mrb[0].mxu0
  %v4228 = vadd.f32 %v3997, %v4227
  %v4229 = vpop.f32.mrb[0].mxu0
  %4230 = vmatprep.mubr.f32.mxu0 0.0
  %4231 = vmatmul.mubr.f32.gmra.mrb[0].mxu0 %v3820
  %v4232 = vpop.f32.mrb[0].mxu0
  %v4233 = vadd.f32 %v4002, %v4232
  %v4234 = vpop.f32.mrb[0].mxu0
  %4235 = vmatprep.mubr.f32.mxu0 0.0
  %4236 = vmatmul.mubr.f32.gmra.mrb[0].mxu0 %v3823
  %v4237 = vpop.f32.mrb[0].mxu0
  %v4238 = vadd.f32 %v4007, %v4237
  %v4239 = vpop.f32.mrb[0].mxu0
  %4240 = vmatprep.mubr.f32.mxu0 0.0
  %4241 = vmatmul.mubr.f32.gmra.mrb[0].mxu0 %v3826
  %v4242 = vpop.f32.mrb[0].mxu0
  %v4243 = vadd.f32 %v4012, %v4242
  %v4244 = vpop.f32.mrb[0].mxu0
  %4245 = vmatprep.mubr.f32.mxu0 0.0
  %4246 = vmatmul.mubr.f32.gmra.mrb[0].mxu0 %v3829
  %v4247 = vpop.f32.mrb[0].mxu0
  %v4248 = vadd.f32 %v4017, %v4247
  %v4249 = vpop.f32.mrb[0].mxu0
  %4250 = vmatprep.mubr.f32.mxu0 0.0
  %4251 = vmatmul.mubr.f32.gmra.mrb[0].mxu0 %v3832
  %v4252 = vpop.f32.mrb[0].mxu0
  %v4253 = vadd.f32 %v4022, %v4252
  %v4254 = vpop.f32.mrb[0].mxu0
  %4255 = vmatprep.mubr.f32.mxu0 0.0
  %4256 = vmatmul.mubr.f32.gmra.mrb[0].mxu0 %v3835
  %v4257 = vpop.f32.mrb[0].mxu0
  %v4258 = vadd.f32 %v4027, %v4257
  %v4259 = vpop.f32.mrb[0].mxu0
  %4260 = vmatprep.mubr.f32.mxu0 0.0
  %4261 = vmatmul.mubr.f32.gmra.mrb[0].mxu0 %v3838
  %v4262 = vpop.f32.mrb[0].mxu0
  %v4263 = vadd.f32 %v4032, %v4262
  %v4264 = vpop.f32.mrb[0].mxu0
  %4265 = vmatprep.mubr.f32.mxu0 0.0
  %4266 = vmatmul.mubr.f32.gmra.mrb[0].mxu0 %v3841
  %v4267 = vpop.f32.mrb[0].mxu0
  %v4268 = vadd.f32 %v4037, %v4267
  %v4269 = vpop.f32.mrb[0].mxu0
  %4270 = vmatprep.mubr.f32.mxu0 0.0
  %4271 = vmatmul.mubr.f32.gmra.mrb[0].mxu0 %v3844
  %v4272 = vpop.f32.mrb[0].mxu0
  %v4273 = vadd.f32 %v4042, %v4272
  %v4274 = vpop.f32.mrb[0].mxu0
  %4275 = vmatprep.mubr.f32.mxu0 0.0
  %4276 = vmatmul.mubr.f32.gmra.mrb[0].mxu0 %v3847
  %v4277 = vpop.f32.mrb[0].mxu0
  %v4278 = vadd.f32 %v4047, %v4277
  %v4279 = vpop.f32.mrb[0].mxu0
  %4280 = vmatprep.mubr.f32.mxu0 0.0
  %4281 = vmatmul.mubr.f32.gmra.mrb[0].mxu0 %v3850
  %v4282 = vpop.f32.mrb[0].mxu0
  %v4283 = vadd.f32 %v4052, %v4282
  %v4284 = vpop.f32.mrb[0].mxu0
  %4285 = vmatprep.mubr.f32.mxu0 0.0
  %4286 = vmatmul.mubr.f32.gmra.mrb[0].mxu0 %v3853
  %v4287 = vpop.f32.mrb[0].mxu0
  %v4288 = vadd.f32 %v4057, %v4287
  %v4289 = vpop.f32.mrb[0].mxu0
  %4290 = vmatprep.mubr.f32.mxu0 0.0
  %4291 = vmatmul.mubr.f32.gmra.mrb[0].mxu0 %v3856
  %v4292 = vpop.f32.mrb[0].mxu0
  %v4293 = vadd.f32 %v4062, %v4292
  %v4294 = vpop.f32.mrb[0].mxu0
  %4295 = vmatprep.mubr.f32.mxu0 0.0
  %4296 = vmatmul.mubr.f32.gmra.mrb[0].mxu0 %v3859
  %v4297 = vpop.f32.mrb[0].mxu0
  %v4298 = vadd.f32 %v4067, %v4297
  %v4299 = vpop.f32.mrb[0].mxu0
  %4300 = vmatprep.mubr.f32.mxu0 0.0
  %4301 = vmatmul.mubr.f32.gmra.mrb[0].mxu0 %v3862
  %v4302 = vpop.f32.mrb[0].mxu0
  %v4303 = vadd.f32 %v4072, %v4302
  %v4304 = vpop.f32.mrb[0].mxu0
  %4305 = vmatprep.mubr.f32.mxu0 0.0
  %4306 = vmatmul.mubr.f32.gmra.mrb[0].mxu0 %v3865
  %v4307 = vpop.f32.mrb[0].mxu0
  %v4308 = vadd.f32 %v4077, %v4307
  %v4309 = vpop.f32.mrb[0].mxu0
  %4310 = vmatprep.mubr.f32.mxu0 0.0
  %4311 = vmatmul.mubr.f32.gmra.mrb[0].mxu0 %v3868
  %v4312 = vpop.f32.mrb[0].mxu0
  %v4313 = vadd.f32 %v4082, %v4312
  %v4314 = vpop.f32.mrb[0].mxu0
  %4315 = vmatprep.mubr.f32.mxu0 0.0
  %4316 = vmatmul.mubr.f32.gmra.mrb[0].mxu0 %v3871
  %v4317 = vpop.f32.mrb[0].mxu0
  %v4318 = vadd.f32 %v4087, %v4317
  %v4319 = vpop.f32.mrb[0].mxu0
  %4320 = vmatprep.mubr.f32.mxu0 0.0
  %4321 = vmatmul.mubr.f32.gmra.mrb[0].mxu0 %v3874
  %v4322 = vpop.f32.mrb[0].mxu0
  %v4323 = vadd.f32 %v4092, %v4322
  %v4324 = vpop.f32.mrb[0].mxu0
  %4325 = vmatprep.mubr.f32.mxu0 0.0
  %4326 = vmatmul.mubr.f32.gmra.mrb[0].mxu0 %v3877
  %v4327 = vpop.f32.mrb[0].mxu0
  %v4328 = vadd.f32 %v4097, %v4327
  %v4329 = vpop.f32.mrb[0].mxu0
  %4330 = vmatprep.mubr.f32.mxu0 0.0
  %4331 = vmatmul.mubr.f32.gmra.mrb[0].mxu0 %v3880
  %v4332 = vpop.f32.mrb[0].mxu0
  %v4333 = vadd.f32 %v4102, %v4332
  %v4334 = vpop.f32.mrb[0].mxu0
  %4335 = vmatprep.mubr.f32.mxu0 0.0
  %4336 = vmatmul.mubr.f32.gmra.mrb[0].mxu0 %v3883
  %v4337 = vpop.f32.mrb[0].mxu0
  %v4338 = vadd.f32 %v4107, %v4337
  %v4339 = vpop.f32.mrb[0].mxu0
  %4340 = vmatprep.mubr.f32.mxu0 0.0
  %4341 = vmatmul.mubr.f32.gmra.mrb[0].mxu0 %v3886
  %v4342 = vpop.f32.mrb[0].mxu0
  %v4343 = vadd.f32 %v4112, %v4342
  %v4344 = vpop.f32.mrb[0].mxu0
  %4345 = vmatprep.mubr.f32.mxu0 0.0
  %4346 = vmatmul.mubr.f32.gmra.mrb[0].mxu0 %v3889
  %v4347 = vpop.f32.mrb[0].mxu0
  %v4348 = vadd.f32 %v4117, %v4347
  %v4349 = vpop.f32.mrb[0].mxu0
  %4350 = vmatprep.mubr.f32.mxu0 0.0
  %4351 = vmatmul.mubr.f32.gmra.mrb[0].mxu0 %v3892
  %v4352 = vpop.f32.mrb[0].mxu0
  %v4353 = vadd.f32 %v4122, %v4352
  %v4354 = vpop.f32.mrb[0].mxu0
  %4355 = vdwg.mxu0
  %v4356 = vld [vmem:[%s3769 + $0x20] sm:$0xff]
  %v4357 = vld [vmem:[%s3769 + $0x28] sm:$0xff]
  %v4358 = vld [vmem:[%s3769 + $0x30] sm:$0xff]
  %v4359 = vld [vmem:[%s3769 + $0x38] sm:$0xff]
  %v4360 = vld [vmem:[%s3769 + $0x40] sm:$0xff]
  %v4361 = vld [vmem:[%s3769 + $0x48] sm:$0xff]
  %v4362 = vld [vmem:[%s3769 + $0x50] sm:$0xff]
  %v4363 = vld [vmem:[%s3769 + $0x58] sm:$0xff]
  %v4364 = vld [vmem:[%s3769 + $0x60] sm:$0xff]
  %v4365 = vld [vmem:[%s3769 + $0x68] sm:$0xff]
  %v4366 = vld [vmem:[%s3769 + $0x70] sm:$0xff]
  %v4367 = vld [vmem:[%s3769 + $0x78] sm:$0xff]
  %v4368 = vld [vmem:[%s3769 + $0x80] sm:$0xff]
  %v4369 = vld [vmem:[%s3769 + $0x88] sm:$0xff]
  %v4370 = vld [vmem:[%s3769 + $0x90] sm:$0xff]
  %v4371 = vld [vmem:[%s3769 + $0x98] sm:$0xff]
  %v4372 = vld [vmem:[%s3769 + $0xa0] sm:$0xff]
  %v4373 = vld [vmem:[%s3769 + $0xa8] sm:$0xff]
  %v4374 = vld [vmem:[%s3769 + $0xb0] sm:$0xff]
  %v4375 = vld [vmem:[%s3769 + $0xb8] sm:$0xff]
  %v4376 = vld [vmem:[%s3769 + $0xc0] sm:$0xff]
  %v4377 = vld [vmem:[%s3769 + $0xc8] sm:$0xff]
  %v4378 = vld [vmem:[%s3769 + $0xd0] sm:$0xff]
  %v4379 = vld [vmem:[%s3769 + $0xd8] sm:$0xff]
  %v4380 = vld [vmem:[%s3769 + $0xe0] sm:$0xff]
  %v4381 = vld [vmem:[%s3769 + $0xe8] sm:$0xff]
  %v4382 = vld [vmem:[%s3769 + $0xf0] sm:$0xff]
  %v4383 = vld [vmem:[%s3769 + $0xf8] sm:$0xff]
  %v4384 = vld [vmem:[%s3769 + $0x100] sm:$0xff]
  %v4385 = vld [vmem:[%s3769 + $0x108] sm:$0xff]
  %v4386 = vld [vmem:[%s3769 + $0x110] sm:$0xff]
  %v4387 = vld [vmem:[%s3769 + $0x118] sm:$0xff]
  %v4389 = vsel %vm687, %v4356, 0
  %v4392 = vsel %vm687, %v4357, 0
  %v4395 = vsel %vm687, %v4358, 0
  %v4398 = vsel %vm687, %v4359, 0
  %v4401 = vsel %vm687, %v4360, 0
  %v4404 = vsel %vm687, %v4361, 0
  %v4407 = vsel %vm687, %v4362, 0
  %v4410 = vsel %vm687, %v4363, 0
  %v4413 = vsel %vm687, %v4364, 0
  %v4416 = vsel %vm687, %v4365, 0
  %v4419 = vsel %vm687, %v4366, 0
  %v4422 = vsel %vm687, %v4367, 0
  %v4425 = vsel %vm687, %v4368, 0
  %v4428 = vsel %vm687, %v4369, 0
  %v4431 = vsel %vm687, %v4370, 0
  %v4434 = vsel %vm687, %v4371, 0
  %v4437 = vsel %vm687, %v4372, 0
  %v4440 = vsel %vm687, %v4373, 0
  %v4443 = vsel %vm687, %v4374, 0
  %v4446 = vsel %vm687, %v4375, 0
  %v4449 = vsel %vm687, %v4376, 0
  %v4452 = vsel %vm687, %v4377, 0
  %v4455 = vsel %vm687, %v4378, 0
  %v4458 = vsel %vm687, %v4379, 0
  %v4461 = vsel %vm687, %v4380, 0
  %v4464 = vsel %vm687, %v4381, 0
  %v4467 = vsel %vm687, %v4382, 0
  %v4470 = vsel %vm687, %v4383, 0
  %v4473 = vsel %vm687, %v4384, 0
  %v4476 = vsel %vm687, %v4385, 0
  %v4479 = vsel %vm687, %v4386, 0
  %v4482 = vsel %vm687, %v4387, 0
  %4484 = vmatprep.subr.mxu0 0.0
  %4485 = vmatpush1.msra.mxu0 %v1378
  %4486 = vmatprep.subr.mxu0 0.0
  %4487 = vmatpush1.msra.mxu0 0.0
  %4488 = vmatprep.subr.mxu0 0.0
  %4489 = vmatpush1.msra.mxu0 0.0
  %4490 = vmatprep.subr.mxu0 0.0
  %4491 = vmatpush1.msra.mxu0 0.0
  %4492 = vmatprep.subr.mxu0 0.0
  %4493 = vmatpush1.msra.mxu0 0.0
  %4494 = vmatprep.subr.mxu0 0.0
  %4495 = vmatpush1.msra.mxu0 0.0
  %4496 = vmatprep.subr.mxu0 0.0
  %4497 = vmatpush1.msra.mxu0 0.0
  %4498 = vmatprep.subr.mxu0 0.0
  %4499 = vmatpush1.msra.mxu0 0.0
  %4500 = vmatprep.subr.mxu0 0.0
  %4501 = vmatpush1.msra.mxu0 0.0
  %4502 = vmatprep.subr.mxu0 0.0
  %4503 = vmatpush1.msra.mxu0 0.0
  %4504 = vmatprep.subr.mxu0 0.0
  %4505 = vmatpush1.msra.mxu0 0.0
  %4506 = vmatprep.subr.mxu0 0.0
  %4507 = vmatpush1.msra.mxu0 0.0
  %4508 = vmatprep.subr.mxu0 0.0
  %4509 = vmatpush1.msra.mxu0 0.0
  %4510 = vmatprep.subr.mxu0 0.0
  %4511 = vmatpush1.msra.mxu0 0.0
  %4512 = vmatprep.subr.mxu0 0.0
  %4513 = vmatpush1.msra.mxu0 0.0
  %4514 = vmatprep.subr.mxu0 0.0
  %4515 = vmatpush1.msra.mxu0 0.0
  %4516 = vmatprep.subr.mxu0 0.0
  %4517 = vmatpush1.msra.mxu0 0.0
  %4518 = vmatprep.subr.mxu0 0.0
  %4519 = vmatpush1.msra.mxu0 0.0
  %4520 = vmatprep.subr.mxu0 0.0
  %4521 = vmatpush1.msra.mxu0 0.0
  %4522 = vmatprep.subr.mxu0 0.0
  %4523 = vmatpush1.msra.mxu0 0.0
  %4524 = vmatprep.subr.mxu0 0.0
  %4525 = vmatpush1.msra.mxu0 0.0
  %4526 = vmatprep.subr.mxu0 0.0
  %4527 = vmatpush1.msra.mxu0 0.0
  %4528 = vmatprep.subr.mxu0 0.0
  %4529 = vmatpush1.msra.mxu0 0.0
  %4530 = vmatprep.subr.mxu0 0.0
  %4531 = vmatpush1.msra.mxu0 0.0
  %4532 = vmatprep.subr.mxu0 0.0
  %4533 = vmatpush1.msra.mxu0 0.0
  %4534 = vmatprep.subr.mxu0 0.0
  %4535 = vmatpush1.msra.mxu0 0.0
  %4536 = vmatprep.subr.mxu0 0.0
  %4537 = vmatpush1.msra.mxu0 0.0
  %4538 = vmatprep.subr.mxu0 0.0
  %4539 = vmatpush1.msra.mxu0 0.0
  %4540 = vmatprep.subr.mxu0 0.0
  %4541 = vmatpush1.msra.mxu0 0.0
  %4542 = vmatprep.subr.mxu0 0.0
  %4543 = vmatpush1.msra.mxu0 0.0
  %4544 = vmatprep.subr.mxu0 0.0
  %4545 = vmatpush1.msra.mxu0 0.0
  %4546 = vmatprep.subr.mxu0 0.0
  %4547 = vmatpush1.msra.mxu0 0.0
  %4548 = vmatprep.mubr.f32.mxu0 0.0
  %4549 = vmatmul.mubr.f32.gmra.mrb[0].mxu0 %v4389
  %v4550 = vpop.f32.mrb[0].mxu0
  %v4551 = vadd.f32 0.0, %v4550
  %v4552 = vpop.f32.mrb[0].mxu0
  %4553 = vmatprep.mubr.f32.mxu0 0.0
  %4554 = vmatmul.mubr.f32.gmra.mrb[0].mxu0 %v4392
  %v4555 = vpop.f32.mrb[0].mxu0
  %v4556 = vadd.f32 0.0, %v4555
  %v4557 = vpop.f32.mrb[0].mxu0
  %4558 = vmatprep.mubr.f32.mxu0 0.0
  %4559 = vmatmul.mubr.f32.gmra.mrb[0].mxu0 %v4395
  %v4560 = vpop.f32.mrb[0].mxu0
  %v4561 = vadd.f32 0.0, %v4560
  %v4562 = vpop.f32.mrb[0].mxu0
  %4563 = vmatprep.mubr.f32.mxu0 0.0
  %4564 = vmatmul.mubr.f32.gmra.mrb[0].mxu0 %v4398
  %v4565 = vpop.f32.mrb[0].mxu0
  %v4566 = vadd.f32 0.0, %v4565
  %v4567 = vpop.f32.mrb[0].mxu0
  %4568 = vmatprep.mubr.f32.mxu0 0.0
  %4569 = vmatmul.mubr.f32.gmra.mrb[0].mxu0 %v4401
  %v4570 = vpop.f32.mrb[0].mxu0
  %v4571 = vadd.f32 0.0, %v4570
  %v4572 = vpop.f32.mrb[0].mxu0
  %4573 = vmatprep.mubr.f32.mxu0 0.0
  %4574 = vmatmul.mubr.f32.gmra.mrb[0].mxu0 %v4404
  %v4575 = vpop.f32.mrb[0].mxu0
  %v4576 = vadd.f32 0.0, %v4575
  %v4577 = vpop.f32.mrb[0].mxu0
  %4578 = vmatprep.mubr.f32.mxu0 0.0
  %4579 = vmatmul.mubr.f32.gmra.mrb[0].mxu0 %v4407
  %v4580 = vpop.f32.mrb[0].mxu0
  %v4581 = vadd.f32 0.0, %v4580
  %v4582 = vpop.f32.mrb[0].mxu0
  %4583 = vmatprep.mubr.f32.mxu0 0.0
  %4584 = vmatmul.mubr.f32.gmra.mrb[0].mxu0 %v4410
  %v4585 = vpop.f32.mrb[0].mxu0
  %v4586 = vadd.f32 0.0, %v4585
  %v4587 = vpop.f32.mrb[0].mxu0
  %4588 = vmatprep.mubr.f32.mxu0 0.0
  %4589 = vmatmul.mubr.f32.gmra.mrb[0].mxu0 %v4413
  %v4590 = vpop.f32.mrb[0].mxu0
  %v4591 = vadd.f32 0.0, %v4590
  %v4592 = vpop.f32.mrb[0].mxu0
  %4593 = vmatprep.mubr.f32.mxu0 0.0
  %4594 = vmatmul.mubr.f32.gmra.mrb[0].mxu0 %v4416
  %v4595 = vpop.f32.mrb[0].mxu0
  %v4596 = vadd.f32 0.0, %v4595
  %v4597 = vpop.f32.mrb[0].mxu0
  %4598 = vmatprep.mubr.f32.mxu0 0.0
  %4599 = vmatmul.mubr.f32.gmra.mrb[0].mxu0 %v4419
  %v4600 = vpop.f32.mrb[0].mxu0
  %v4601 = vadd.f32 0.0, %v4600
  %v4602 = vpop.f32.mrb[0].mxu0
  %4603 = vmatprep.mubr.f32.mxu0 0.0
  %4604 = vmatmul.mubr.f32.gmra.mrb[0].mxu0 %v4422
  %v4605 = vpop.f32.mrb[0].mxu0
  %v4606 = vadd.f32 0.0, %v4605
  %v4607 = vpop.f32.mrb[0].mxu0
  %4608 = vmatprep.mubr.f32.mxu0 0.0
  %4609 = vmatmul.mubr.f32.gmra.mrb[0].mxu0 %v4425
  %v4610 = vpop.f32.mrb[0].mxu0
  %v4611 = vadd.f32 0.0, %v4610
  %v4612 = vpop.f32.mrb[0].mxu0
  %4613 = vmatprep.mubr.f32.mxu0 0.0
  %4614 = vmatmul.mubr.f32.gmra.mrb[0].mxu0 %v4428
  %v4615 = vpop.f32.mrb[0].mxu0
  %v4616 = vadd.f32 0.0, %v4615
  %v4617 = vpop.f32.mrb[0].mxu0
  %4618 = vmatprep.mubr.f32.mxu0 0.0
  %4619 = vmatmul.mubr.f32.gmra.mrb[0].mxu0 %v4431
  %v4620 = vpop.f32.mrb[0].mxu0
  %v4621 = vadd.f32 0.0, %v4620
  %v4622 = vpop.f32.mrb[0].mxu0
  %4623 = vmatprep.mubr.f32.mxu0 0.0
  %4624 = vmatmul.mubr.f32.gmra.mrb[0].mxu0 %v4434
  %v4625 = vpop.f32.mrb[0].mxu0
  %v4626 = vadd.f32 0.0, %v4625
  %v4627 = vpop.f32.mrb[0].mxu0
  %4628 = vmatprep.mubr.f32.mxu0 0.0
  %4629 = vmatmul.mubr.f32.gmra.mrb[0].mxu0 %v4437
  %v4630 = vpop.f32.mrb[0].mxu0
  %v4631 = vadd.f32 0.0, %v4630
  %v4632 = vpop.f32.mrb[0].mxu0
  %4633 = vmatprep.mubr.f32.mxu0 0.0
  %4634 = vmatmul.mubr.f32.gmra.mrb[0].mxu0 %v4440
  %v4635 = vpop.f32.mrb[0].mxu0
  %v4636 = vadd.f32 0.0, %v4635
  %v4637 = vpop.f32.mrb[0].mxu0
  %4638 = vmatprep.mubr.f32.mxu0 0.0
  %4639 = vmatmul.mubr.f32.gmra.mrb[0].mxu0 %v4443
  %v4640 = vpop.f32.mrb[0].mxu0
  %v4641 = vadd.f32 0.0, %v4640
  %v4642 = vpop.f32.mrb[0].mxu0
  %4643 = vmatprep.mubr.f32.mxu0 0.0
  %4644 = vmatmul.mubr.f32.gmra.mrb[0].mxu0 %v4446
  %v4645 = vpop.f32.mrb[0].mxu0
  %v4646 = vadd.f32 0.0, %v4645
  %v4647 = vpop.f32.mrb[0].mxu0
  %4648 = vmatprep.mubr.f32.mxu0 0.0
  %4649 = vmatmul.mubr.f32.gmra.mrb[0].mxu0 %v4449
  %v4650 = vpop.f32.mrb[0].mxu0
  %v4651 = vadd.f32 0.0, %v4650
  %v4652 = vpop.f32.mrb[0].mxu0
  %4653 = vmatprep.mubr.f32.mxu0 0.0
  %4654 = vmatmul.mubr.f32.gmra.mrb[0].mxu0 %v4452
  %v4655 = vpop.f32.mrb[0].mxu0
  %v4656 = vadd.f32 0.0, %v4655
  %v4657 = vpop.f32.mrb[0].mxu0
  %4658 = vmatprep.mubr.f32.mxu0 0.0
  %4659 = vmatmul.mubr.f32.gmra.mrb[0].mxu0 %v4455
  %v4660 = vpop.f32.mrb[0].mxu0
  %v4661 = vadd.f32 0.0, %v4660
  %v4662 = vpop.f32.mrb[0].mxu0
  %4663 = vmatprep.mubr.f32.mxu0 0.0
  %4664 = vmatmul.mubr.f32.gmra.mrb[0].mxu0 %v4458
  %v4665 = vpop.f32.mrb[0].mxu0
  %v4666 = vadd.f32 0.0, %v4665
  %v4667 = vpop.f32.mrb[0].mxu0
  %4668 = vmatprep.mubr.f32.mxu0 0.0
  %4669 = vmatmul.mubr.f32.gmra.mrb[0].mxu0 %v4461
  %v4670 = vpop.f32.mrb[0].mxu0
  %v4671 = vadd.f32 0.0, %v4670
  %v4672 = vpop.f32.mrb[0].mxu0
  %4673 = vmatprep.mubr.f32.mxu0 0.0
  %4674 = vmatmul.mubr.f32.gmra.mrb[0].mxu0 %v4464
  %v4675 = vpop.f32.mrb[0].mxu0
  %v4676 = vadd.f32 0.0, %v4675
  %v4677 = vpop.f32.mrb[0].mxu0
  %4678 = vmatprep.mubr.f32.mxu0 0.0
  %4679 = vmatmul.mubr.f32.gmra.mrb[0].mxu0 %v4467
  %v4680 = vpop.f32.mrb[0].mxu0
  %v4681 = vadd.f32 0.0, %v4680
  %v4682 = vpop.f32.mrb[0].mxu0
  %4683 = vmatprep.mubr.f32.mxu0 0.0
  %4684 = vmatmul.mubr.f32.gmra.mrb[0].mxu0 %v4470
  %v4685 = vpop.f32.mrb[0].mxu0
  %v4686 = vadd.f32 0.0, %v4685
  %v4687 = vpop.f32.mrb[0].mxu0
  %4688 = vmatprep.mubr.f32.mxu0 0.0
  %4689 = vmatmul.mubr.f32.gmra.mrb[0].mxu0 %v4473
  %v4690 = vpop.f32.mrb[0].mxu0
  %v4691 = vadd.f32 0.0, %v4690
  %v4692 = vpop.f32.mrb[0].mxu0
  %4693 = vmatprep.mubr.f32.mxu0 0.0
  %4694 = vmatmul.mubr.f32.gmra.mrb[0].mxu0 %v4476
  %v4695 = vpop.f32.mrb[0].mxu0
  %v4696 = vadd.f32 0.0, %v4695
  %v4697 = vpop.f32.mrb[0].mxu0
  %4698 = vmatprep.mubr.f32.mxu0 0.0
  %4699 = vmatmul.mubr.f32.gmra.mrb[0].mxu0 %v4479
  %v4700 = vpop.f32.mrb[0].mxu0
  %v4701 = vadd.f32 0.0, %v4700
  %v4702 = vpop.f32.mrb[0].mxu0
  %4703 = vmatprep.mubr.f32.mxu0 0.0
  %4704 = vmatmul.mubr.f32.gmra.mrb[0].mxu0 %v4482
  %v4705 = vpop.f32.mrb[0].mxu0
  %v4706 = vadd.f32 0.0, %v4705
  %v4707 = vpop.f32.mrb[0].mxu0
  %4708 = vdwg.mxu0
  %v4709 = vadd.f32 %v4198, %v4551
  %v4710 = vadd.f32 %v4203, %v4556
  %v4711 = vadd.f32 %v4208, %v4561
  %v4712 = vadd.f32 %v4213, %v4566
  %v4713 = vadd.f32 %v4218, %v4571
  %v4714 = vadd.f32 %v4223, %v4576
  %v4715 = vadd.f32 %v4228, %v4581
  %v4716 = vadd.f32 %v4233, %v4586
  %v4717 = vadd.f32 %v4238, %v4591
  %v4718 = vadd.f32 %v4243, %v4596
  %v4719 = vadd.f32 %v4248, %v4601
  %v4720 = vadd.f32 %v4253, %v4606
  %v4721 = vadd.f32 %v4258, %v4611
  %v4722 = vadd.f32 %v4263, %v4616
  %v4723 = vadd.f32 %v4268, %v4621
  %v4724 = vadd.f32 %v4273, %v4626
  %v4725 = vadd.f32 %v4278, %v4631
  %v4726 = vadd.f32 %v4283, %v4636
  %v4727 = vadd.f32 %v4288, %v4641
  %v4728 = vadd.f32 %v4293, %v4646
  %v4729 = vadd.f32 %v4298, %v4651
  %v4730 = vadd.f32 %v4303, %v4656
  %v4731 = vadd.f32 %v4308, %v4661
  %v4732 = vadd.f32 %v4313, %v4666
  %v4733 = vadd.f32 %v4318, %v4671
  %v4734 = vadd.f32 %v4323, %v4676
  %v4735 = vadd.f32 %v4328, %v4681
  %v4736 = vadd.f32 %v4333, %v4686
  %v4737 = vadd.f32 %v4338, %v4691
  %v4738 = vadd.f32 %v4343, %v4696
  %v4739 = vadd.f32 %v4348, %v4701
  %v4740 = vadd.f32 %v4353, %v4706
  %v4741 = vmul.f32 %v4709, %v522
  %v4742 = vmul.f32 %v4710, %v523
  %v4743 = vmul.f32 %v4711, %v524
  %v4744 = vmul.f32 %v4712, %v525
  %v4745 = vmul.f32 %v4713, %v526
  %v4746 = vmul.f32 %v4714, %v527
  %v4747 = vmul.f32 %v4715, %v528
  %v4748 = vmul.f32 %v4716, %v529
  %v4749 = vmul.f32 %v4717, %v530
  %v4750 = vmul.f32 %v4718, %v531
  %v4751 = vmul.f32 %v4719, %v532
  %v4752 = vmul.f32 %v4720, %v533
  %v4753 = vmul.f32 %v4721, %v534
  %v4754 = vmul.f32 %v4722, %v535
  %v4755 = vmul.f32 %v4723, %v536
  %v4756 = vmul.f32 %v4724, %v537
  %v4757 = vmul.f32 %v4725, %v538
  %v4758 = vmul.f32 %v4726, %v539
  %v4759 = vmul.f32 %v4727, %v540
  %v4760 = vmul.f32 %v4728, %v541
  %v4761 = vmul.f32 %v4729, %v542
  %v4762 = vmul.f32 %v4730, %v543
  %v4763 = vmul.f32 %v4731, %v544
  %v4764 = vmul.f32 %v4732, %v545
  %v4765 = vmul.f32 %v4733, %v546
  %v4766 = vmul.f32 %v4734, %v547
  %v4767 = vmul.f32 %v4735, %v548
  %v4768 = vmul.f32 %v4736, %v549
  %v4769 = vmul.f32 %v4737, %v550
  %v4770 = vmul.f32 %v4738, %v551
  %v4771 = vmul.f32 %v4739, %v552
  %v4772 = vmul.f32 %v4740, %v553
  %v4773 = vadd.f32 %v4741, 0.0
  %v4774 = vadd.f32 %v4742, 0.0
  %v4775 = vadd.f32 %v4743, 0.0
  %v4776 = vadd.f32 %v4744, 0.0
  %v4777 = vadd.f32 %v4745, 0.0
  %v4778 = vadd.f32 %v4746, 0.0
  %v4779 = vadd.f32 %v4747, 0.0
  %v4780 = vadd.f32 %v4748, 0.0
  %v4781 = vadd.f32 %v4749, 0.0
  %v4782 = vadd.f32 %v4750, 0.0
  %v4783 = vadd.f32 %v4751, 0.0
  %v4784 = vadd.f32 %v4752, 0.0
  %v4785 = vadd.f32 %v4753, 0.0
  %v4786 = vadd.f32 %v4754, 0.0
  %v4787 = vadd.f32 %v4755, 0.0
  %v4788 = vadd.f32 %v4756, 0.0
  %v4789 = vadd.f32 %v4757, 0.0
  %v4790 = vadd.f32 %v4758, 0.0
  %v4791 = vadd.f32 %v4759, 0.0
  %v4792 = vadd.f32 %v4760, 0.0
  %v4793 = vadd.f32 %v4761, 0.0
  %v4794 = vadd.f32 %v4762, 0.0
  %v4795 = vadd.f32 %v4763, 0.0
  %v4796 = vadd.f32 %v4764, 0.0
  %v4797 = vadd.f32 %v4765, 0.0
  %v4798 = vadd.f32 %v4766, 0.0
  %v4799 = vadd.f32 %v4767, 0.0
  %v4800 = vadd.f32 %v4768, 0.0
  %v4801 = vadd.f32 %v4769, 0.0
  %v4802 = vadd.f32 %v4770, 0.0
  %v4803 = vadd.f32 %v4771, 0.0
  %v4804 = vadd.f32 %v4772, 0.0
  %v4805 = vld [vmem:[%s3769 + $0x1] sm:$0xff]
  %v4806 = vld [vmem:[%s3769 + $0x9] sm:$0xff]
  %v4807 = vld [vmem:[%s3769 + $0x11] sm:$0xff]
  %v4808 = vld [vmem:[%s3769 + $0x19] sm:$0xff]
  %v4809 = vld [vmem:[%s3769 + $0x21] sm:$0xff]
  %v4810 = vld [vmem:[%s3769 + $0x29] sm:$0xff]
  %v4811 = vld [vmem:[%s3769 + $0x31] sm:$0xff]
  %v4812 = vld [vmem:[%s3769 + $0x39] sm:$0xff]
  %v4813 = vld [vmem:[%s3769 + $0x41] sm:$0xff]
  %v4814 = vld [vmem:[%s3769 + $0x49] sm:$0xff]
  %v4815 = vld [vmem:[%s3769 + $0x51] sm:$0xff]
  %v4816 = vld [vmem:[%s3769 + $0x59] sm:$0xff]
  %v4817 = vld [vmem:[%s3769 + $0x61] sm:$0xff]
  %v4818 = vld [vmem:[%s3769 + $0x69] sm:$0xff]
  %v4819 = vld [vmem:[%s3769 + $0x71] sm:$0xff]
  %v4820 = vld [vmem:[%s3769 + $0x79] sm:$0xff]
  %v4821 = vld [vmem:[%s3769 + $0x81] sm:$0xff]
  %v4822 = vld [vmem:[%s3769 + $0x89] sm:$0xff]
  %v4823 = vld [vmem:[%s3769 + $0x91] sm:$0xff]
  %v4824 = vld [vmem:[%s3769 + $0x99] sm:$0xff]
  %v4825 = vld [vmem:[%s3769 + $0xa1] sm:$0xff]
  %v4826 = vld [vmem:[%s3769 + $0xa9] sm:$0xff]
  %v4827 = vld [vmem:[%s3769 + $0xb1] sm:$0xff]
  %v4828 = vld [vmem:[%s3769 + $0xb9] sm:$0xff]
  %v4829 = vld [vmem:[%s3769 + $0xc1] sm:$0xff]
  %v4830 = vld [vmem:[%s3769 + $0xc9] sm:$0xff]
  %v4831 = vld [vmem:[%s3769 + $0xd1] sm:$0xff]
  %v4832 = vld [vmem:[%s3769 + $0xd9] sm:$0xff]
  %v4833 = vld [vmem:[%s3769 + $0xe1] sm:$0xff]
  %v4834 = vld [vmem:[%s3769 + $0xe9] sm:$0xff]
  %v4835 = vld [vmem:[%s3769 + $0xf1] sm:$0xff]
  %v4836 = vld [vmem:[%s3769 + $0xf9] sm:$0xff]
  %v4837 = vld [vmem:[%s3769 + $0x101] sm:$0xff]
  %v4838 = vld [vmem:[%s3769 + $0x109] sm:$0xff]
  %v4840 = vsel %vm687, %v4807, 0
  %v4843 = vsel %vm687, %v4808, 0
  %v4846 = vsel %vm687, %v4809, 0
  %v4849 = vsel %vm687, %v4810, 0
  %v4852 = vsel %vm687, %v4811, 0
  %v4855 = vsel %vm687, %v4812, 0
  %v4858 = vsel %vm687, %v4813, 0
  %v4861 = vsel %vm687, %v4814, 0
  %v4864 = vsel %vm687, %v4815, 0
  %v4867 = vsel %vm687, %v4816, 0
  %v4870 = vsel %vm687, %v4817, 0
  %v4873 = vsel %vm687, %v4818, 0
  %v4876 = vsel %vm687, %v4819, 0
  %v4879 = vsel %vm687, %v4820, 0
  %v4882 = vsel %vm687, %v4821, 0
  %v4885 = vsel %vm687, %v4822, 0
  %v4888 = vsel %vm687, %v4823, 0
  %v4891 = vsel %vm687, %v4824, 0
  %v4894 = vsel %vm687, %v4825, 0
  %v4897 = vsel %vm687, %v4826, 0
  %v4900 = vsel %vm687, %v4827, 0
  %v4903 = vsel %vm687, %v4828, 0
  %v4906 = vsel %vm687, %v4829, 0
  %v4909 = vsel %vm687, %v4830, 0
  %v4912 = vsel %vm687, %v4831, 0
  %v4915 = vsel %vm687, %v4832, 0
  %v4918 = vsel %vm687, %v4833, 0
  %v4921 = vsel %vm687, %v4834, 0
  %v4924 = vsel %vm687, %v4835, 0
  %v4927 = vsel %vm687, %v4836, 0
  %v4930 = vsel %vm687, %v4837, 0
  %v4933 = vsel %vm687, %v4838, 0
  %4935 = vmatprep.subr.mxu0 0.0
  %4936 = vmatpush1.msra.mxu0 %v1836
  %4937 = vmatprep.subr.mxu0 0.0
  %4938 = vmatpush1.msra.mxu0 0.0
  %4939 = vmatprep.subr.mxu0 0.0
  %4940 = vmatpush1.msra.mxu0 0.0
  %4941 = vmatprep.subr.mxu0 0.0
  %4942 = vmatpush1.msra.mxu0 0.0
  %4943 = vmatprep.subr.mxu0 0.0
  %4944 = vmatpush1.msra.mxu0 0.0
  %4945 = vmatprep.subr.mxu0 0.0
  %4946 = vmatpush1.msra.mxu0 0.0
  %4947 = vmatprep.subr.mxu0 0.0
  %4948 = vmatpush1.msra.mxu0 0.0
  %4949 = vmatprep.subr.mxu0 0.0
  %4950 = vmatpush1.msra.mxu0 0.0
  %4951 = vmatprep.subr.mxu0 0.0
  %4952 = vmatpush1.msra.mxu0 0.0
  %4953 = vmatprep.subr.mxu0 0.0
  %4954 = vmatpush1.msra.mxu0 0.0
  %4955 = vmatprep.subr.mxu0 0.0
  %4956 = vmatpush1.msra.mxu0 0.0
  %4957 = vmatprep.subr.mxu0 0.0
  %4958 = vmatpush1.msra.mxu0 0.0
  %4959 = vmatprep.subr.mxu0 0.0
  %4960 = vmatpush1.msra.mxu0 0.0
  %4961 = vmatprep.subr.mxu0 0.0
  %4962 = vmatpush1.msra.mxu0 0.0
  %4963 = vmatprep.subr.mxu0 0.0
  %4964 = vmatpush1.msra.mxu0 0.0
  %4965 = vmatprep.subr.mxu0 0.0
  %4966 = vmatpush1.msra.mxu0 0.0
  %4967 = vmatprep.subr.mxu0 0.0
  %4968 = vmatpush1.msra.mxu0 0.0
  %4969 = vmatprep.subr.mxu0 0.0
  %4970 = vmatpush1.msra.mxu0 0.0
  %4971 = vmatprep.subr.mxu0 0.0
  %4972 = vmatpush1.msra.mxu0 0.0
  %4973 = vmatprep.subr.mxu0 0.0
  %4974 = vmatpush1.msra.mxu0 0.0
  %4975 = vmatprep.subr.mxu0 0.0
  %4976 = vmatpush1.msra.mxu0 0.0
  %4977 = vmatprep.subr.mxu0 0.0
  %4978 = vmatpush1.msra.mxu0 0.0
  %4979 = vmatprep.subr.mxu0 0.0
  %4980 = vmatpush1.msra.mxu0 0.0
  %4981 = vmatprep.subr.mxu0 0.0
  %4982 = vmatpush1.msra.mxu0 0.0
  %4983 = vmatprep.subr.mxu0 0.0
  %4984 = vmatpush1.msra.mxu0 0.0
  %4985 = vmatprep.subr.mxu0 0.0
  %4986 = vmatpush1.msra.mxu0 0.0
  %4987 = vmatprep.subr.mxu0 0.0
  %4988 = vmatpush1.msra.mxu0 0.0
  %4989 = vmatprep.subr.mxu0 0.0
  %4990 = vmatpush1.msra.mxu0 0.0
  %4991 = vmatprep.subr.mxu0 0.0
  %4992 = vmatpush1.msra.mxu0 0.0
  %4993 = vmatprep.subr.mxu0 0.0
  %4994 = vmatpush1.msra.mxu0 0.0
  %4995 = vmatprep.subr.mxu0 0.0
  %4996 = vmatpush1.msra.mxu0 0.0
  %4997 = vmatprep.subr.mxu0 0.0
  %4998 = vmatpush1.msra.mxu0 0.0
  %4999 = vmatprep.mubr.f32.mxu0 0.0
  %5000 = vmatmul.mubr.f32.gmra.mrb[0].mxu0 %v4840
  %v5001 = vpop.f32.mrb[0].mxu0
  %v5002 = vadd.f32 0.0, %v5001
  %v5003 = vpop.f32.mrb[0].mxu0
  %5004 = vmatprep.mubr.f32.mxu0 0.0
  %5005 = vmatmul.mubr.f32.gmra.mrb[0].mxu0 %v4843
  %v5006 = vpop.f32.mrb[0].mxu0
  %v5007 = vadd.f32 0.0, %v5006
  %v5008 = vpop.f32.mrb[0].mxu0
  %5009 = vmatprep.mubr.f32.mxu0 0.0
  %5010 = vmatmul.mubr.f32.gmra.mrb[0].mxu0 %v4846
  %v5011 = vpop.f32.mrb[0].mxu0
  %v5012 = vadd.f32 0.0, %v5011
  %v5013 = vpop.f32.mrb[0].mxu0
  %5014 = vmatprep.mubr.f32.mxu0 0.0
  %5015 = vmatmul.mubr.f32.gmra.mrb[0].mxu0 %v4849
  %v5016 = vpop.f32.mrb[0].mxu0
  %v5017 = vadd.f32 0.0, %v5016
  %v5018 = vpop.f32.mrb[0].mxu0
  %5019 = vmatprep.mubr.f32.mxu0 0.0
  %5020 = vmatmul.mubr.f32.gmra.mrb[0].mxu0 %v4852
  %v5021 = vpop.f32.mrb[0].mxu0
  %v5022 = vadd.f32 0.0, %v5021
  %v5023 = vpop.f32.mrb[0].mxu0
  %5024 = vmatprep.mubr.f32.mxu0 0.0
  %5025 = vmatmul.mubr.f32.gmra.mrb[0].mxu0 %v4855
  %v5026 = vpop.f32.mrb[0].mxu0
  %v5027 = vadd.f32 0.0, %v5026
  %v5028 = vpop.f32.mrb[0].mxu0
  %5029 = vmatprep.mubr.f32.mxu0 0.0
  %5030 = vmatmul.mubr.f32.gmra.mrb[0].mxu0 %v4858
  %v5031 = vpop.f32.mrb[0].mxu0
  %v5032 = vadd.f32 0.0, %v5031
  %v5033 = vpop.f32.mrb[0].mxu0
  %5034 = vmatprep.mubr.f32.mxu0 0.0
  %5035 = vmatmul.mubr.f32.gmra.mrb[0].mxu0 %v4861
  %v5036 = vpop.f32.mrb[0].mxu0
  %v5037 = vadd.f32 0.0, %v5036
  %v5038 = vpop.f32.mrb[0].mxu0
  %5039 = vmatprep.mubr.f32.mxu0 0.0
  %5040 = vmatmul.mubr.f32.gmra.mrb[0].mxu0 %v4864
  %v5041 = vpop.f32.mrb[0].mxu0
  %v5042 = vadd.f32 0.0, %v5041
  %v5043 = vpop.f32.mrb[0].mxu0
  %5044 = vmatprep.mubr.f32.mxu0 0.0
  %5045 = vmatmul.mubr.f32.gmra.mrb[0].mxu0 %v4867
  %v5046 = vpop.f32.mrb[0].mxu0
  %v5047 = vadd.f32 0.0, %v5046
  %v5048 = vpop.f32.mrb[0].mxu0
  %5049 = vmatprep.mubr.f32.mxu0 0.0
  %5050 = vmatmul.mubr.f32.gmra.mrb[0].mxu0 %v4870
  %v5051 = vpop.f32.mrb[0].mxu0
  %v5052 = vadd.f32 0.0, %v5051
  %v5053 = vpop.f32.mrb[0].mxu0
  %5054 = vmatprep.mubr.f32.mxu0 0.0
  %5055 = vmatmul.mubr.f32.gmra.mrb[0].mxu0 %v4873
  %v5056 = vpop.f32.mrb[0].mxu0
  %v5057 = vadd.f32 0.0, %v5056
  %v5058 = vpop.f32.mrb[0].mxu0
  %5059 = vmatprep.mubr.f32.mxu0 0.0
  %5060 = vmatmul.mubr.f32.gmra.mrb[0].mxu0 %v4876
  %v5061 = vpop.f32.mrb[0].mxu0
  %v5062 = vadd.f32 0.0, %v5061
  %v5063 = vpop.f32.mrb[0].mxu0
  %5064 = vmatprep.mubr.f32.mxu0 0.0
  %5065 = vmatmul.mubr.f32.gmra.mrb[0].mxu0 %v4879
  %v5066 = vpop.f32.mrb[0].mxu0
  %v5067 = vadd.f32 0.0, %v5066
  %v5068 = vpop.f32.mrb[0].mxu0
  %5069 = vmatprep.mubr.f32.mxu0 0.0
  %5070 = vmatmul.mubr.f32.gmra.mrb[0].mxu0 %v4882
  %v5071 = vpop.f32.mrb[0].mxu0
  %v5072 = vadd.f32 0.0, %v5071
  %v5073 = vpop.f32.mrb[0].mxu0
  %5074 = vmatprep.mubr.f32.mxu0 0.0
  %5075 = vmatmul.mubr.f32.gmra.mrb[0].mxu0 %v4885
  %v5076 = vpop.f32.mrb[0].mxu0
  %v5077 = vadd.f32 0.0, %v5076
  %v5078 = vpop.f32.mrb[0].mxu0
  %5079 = vmatprep.mubr.f32.mxu0 0.0
  %5080 = vmatmul.mubr.f32.gmra.mrb[0].mxu0 %v4888
  %v5081 = vpop.f32.mrb[0].mxu0
  %v5082 = vadd.f32 0.0, %v5081
  %v5083 = vpop.f32.mrb[0].mxu0
  %5084 = vmatprep.mubr.f32.mxu0 0.0
  %5085 = vmatmul.mubr.f32.gmra.mrb[0].mxu0 %v4891
  %v5086 = vpop.f32.mrb[0].mxu0
  %v5087 = vadd.f32 0.0, %v5086
  %v5088 = vpop.f32.mrb[0].mxu0
  %5089 = vmatprep.mubr.f32.mxu0 0.0
  %5090 = vmatmul.mubr.f32.gmra.mrb[0].mxu0 %v4894
  %v5091 = vpop.f32.mrb[0].mxu0
  %v5092 = vadd.f32 0.0, %v5091
  %v5093 = vpop.f32.mrb[0].mxu0
  %5094 = vmatprep.mubr.f32.mxu0 0.0
  %5095 = vmatmul.mubr.f32.gmra.mrb[0].mxu0 %v4897
  %v5096 = vpop.f32.mrb[0].mxu0
  %v5097 = vadd.f32 0.0, %v5096
  %v5098 = vpop.f32.mrb[0].mxu0
  %5099 = vmatprep.mubr.f32.mxu0 0.0
  %5100 = vmatmul.mubr.f32.gmra.mrb[0].mxu0 %v4900
  %v5101 = vpop.f32.mrb[0].mxu0
  %v5102 = vadd.f32 0.0, %v5101
  %v5103 = vpop.f32.mrb[0].mxu0
  %5104 = vmatprep.mubr.f32.mxu0 0.0
  %5105 = vmatmul.mubr.f32.gmra.mrb[0].mxu0 %v4903
  %v5106 = vpop.f32.mrb[0].mxu0
  %v5107 = vadd.f32 0.0, %v5106
  %v5108 = vpop.f32.mrb[0].mxu0
  %5109 = vmatprep.mubr.f32.mxu0 0.0
  %5110 = vmatmul.mubr.f32.gmra.mrb[0].mxu0 %v4906
  %v5111 = vpop.f32.mrb[0].mxu0
  %v5112 = vadd.f32 0.0, %v5111
  %v5113 = vpop.f32.mrb[0].mxu0
  %5114 = vmatprep.mubr.f32.mxu0 0.0
  %5115 = vmatmul.mubr.f32.gmra.mrb[0].mxu0 %v4909
  %v5116 = vpop.f32.mrb[0].mxu0
  %v5117 = vadd.f32 0.0, %v5116
  %v5118 = vpop.f32.mrb[0].mxu0
  %5119 = vmatprep.mubr.f32.mxu0 0.0
  %5120 = vmatmul.mubr.f32.gmra.mrb[0].mxu0 %v4912
  %v5121 = vpop.f32.mrb[0].mxu0
  %v5122 = vadd.f32 0.0, %v5121
  %v5123 = vpop.f32.mrb[0].mxu0
  %5124 = vmatprep.mubr.f32.mxu0 0.0
  %5125 = vmatmul.mubr.f32.gmra.mrb[0].mxu0 %v4915
  %v5126 = vpop.f32.mrb[0].mxu0
  %v5127 = vadd.f32 0.0, %v5126
  %v5128 = vpop.f32.mrb[0].mxu0
  %5129 = vmatprep.mubr.f32.mxu0 0.0
  %5130 = vmatmul.mubr.f32.gmra.mrb[0].mxu0 %v4918
  %v5131 = vpop.f32.mrb[0].mxu0
  %v5132 = vadd.f32 0.0, %v5131
  %v5133 = vpop.f32.mrb[0].mxu0
  %5134 = vmatprep.mubr.f32.mxu0 0.0
  %5135 = vmatmul.mubr.f32.gmra.mrb[0].mxu0 %v4921
  %v5136 = vpop.f32.mrb[0].mxu0
  %v5137 = vadd.f32 0.0, %v5136
  %v5138 = vpop.f32.mrb[0].mxu0
  %5139 = vmatprep.mubr.f32.mxu0 0.0
  %5140 = vmatmul.mubr.f32.gmra.mrb[0].mxu0 %v4924
  %v5141 = vpop.f32.mrb[0].mxu0
  %v5142 = vadd.f32 0.0, %v5141
  %v5143 = vpop.f32.mrb[0].mxu0
  %5144 = vmatprep.mubr.f32.mxu0 0.0
  %5145 = vmatmul.mubr.f32.gmra.mrb[0].mxu0 %v4927
  %v5146 = vpop.f32.mrb[0].mxu0
  %v5147 = vadd.f32 0.0, %v5146
  %v5148 = vpop.f32.mrb[0].mxu0
  %5149 = vmatprep.mubr.f32.mxu0 0.0
  %5150 = vmatmul.mubr.f32.gmra.mrb[0].mxu0 %v4930
  %v5151 = vpop.f32.mrb[0].mxu0
  %v5152 = vadd.f32 0.0, %v5151
  %v5153 = vpop.f32.mrb[0].mxu0
  %5154 = vmatprep.mubr.f32.mxu0 0.0
  %5155 = vmatmul.mubr.f32.gmra.mrb[0].mxu0 %v4933
  %v5156 = vpop.f32.mrb[0].mxu0
  %v5157 = vadd.f32 0.0, %v5156
  %v5158 = vpop.f32.mrb[0].mxu0
  %5159 = vdwg.mxu0
  %v5161 = vsel %vm687, %v4805, 0
  %v5164 = vsel %vm687, %v4806, 0
  %5166 = vmatprep.subr.mxu0 0.0
  %5167 = vmatpush1.msra.mxu0 %v2070
  %5168 = vmatprep.subr.mxu0 0.0
  %5169 = vmatpush1.msra.mxu0 0.0
  %5170 = vmatprep.subr.mxu0 0.0
  %5171 = vmatpush1.msra.mxu0 0.0
  %5172 = vmatprep.subr.mxu0 0.0
  %5173 = vmatpush1.msra.mxu0 0.0
  %5174 = vmatprep.subr.mxu0 0.0
  %5175 = vmatpush1.msra.mxu0 0.0
  %5176 = vmatprep.subr.mxu0 0.0
  %5177 = vmatpush1.msra.mxu0 0.0
  %5178 = vmatprep.subr.mxu0 0.0
  %5179 = vmatpush1.msra.mxu0 0.0
  %5180 = vmatprep.subr.mxu0 0.0
  %5181 = vmatpush1.msra.mxu0 0.0
  %5182 = vmatprep.subr.mxu0 0.0
  %5183 = vmatpush1.msra.mxu0 0.0
  %5184 = vmatprep.subr.mxu0 0.0
  %5185 = vmatpush1.msra.mxu0 0.0
  %5186 = vmatprep.subr.mxu0 0.0
  %5187 = vmatpush1.msra.mxu0 0.0
  %5188 = vmatprep.subr.mxu0 0.0
  %5189 = vmatpush1.msra.mxu0 0.0
  %5190 = vmatprep.subr.mxu0 0.0
  %5191 = vmatpush1.msra.mxu0 0.0
  %5192 = vmatprep.subr.mxu0 0.0
  %5193 = vmatpush1.msra.mxu0 0.0
  %5194 = vmatprep.subr.mxu0 0.0
  %5195 = vmatpush1.msra.mxu0 0.0
  %5196 = vmatprep.subr.mxu0 0.0
  %5197 = vmatpush1.msra.mxu0 0.0
  %5198 = vmatprep.subr.mxu0 0.0
  %5199 = vmatpush1.msra.mxu0 0.0
  %5200 = vmatprep.subr.mxu0 0.0
  %5201 = vmatpush1.msra.mxu0 0.0
  %5202 = vmatprep.subr.mxu0 0.0
  %5203 = vmatpush1.msra.mxu0 0.0
  %5204 = vmatprep.subr.mxu0 0.0
  %5205 = vmatpush1.msra.mxu0 0.0
  %5206 = vmatprep.subr.mxu0 0.0
  %5207 = vmatpush1.msra.mxu0 0.0
  %5208 = vmatprep.subr.mxu0 0.0
  %5209 = vmatpush1.msra.mxu0 0.0
  %5210 = vmatprep.subr.mxu0 0.0
  %5211 = vmatpush1.msra.mxu0 0.0
  %5212 = vmatprep.subr.mxu0 0.0
  %5213 = vmatpush1.msra.mxu0 0.0
  %5214 = vmatprep.subr.mxu0 0.0
  %5215 = vmatpush1.msra.mxu0 0.0
  %5216 = vmatprep.subr.mxu0 0.0
  %5217 = vmatpush1.msra.mxu0 0.0
  %5218 = vmatprep.subr.mxu0 0.0
  %5219 = vmatpush1.msra.mxu0 0.0
  %5220 = vmatprep.subr.mxu0 0.0
  %5221 = vmatpush1.msra.mxu0 0.0
  %5222 = vmatprep.subr.mxu0 0.0
  %5223 = vmatpush1.msra.mxu0 0.0
  %5224 = vmatprep.subr.mxu0 0.0
  %5225 = vmatpush1.msra.mxu0 0.0
  %5226 = vmatprep.subr.mxu0 0.0
  %5227 = vmatpush1.msra.mxu0 0.0
  %5228 = vmatprep.subr.mxu0 0.0
  %5229 = vmatpush1.msra.mxu0 0.0
  %5230 = vmatprep.mubr.f32.mxu0 0.0
  %5231 = vmatmul.mubr.f32.gmra.mrb[0].mxu0 %v5161
  %v5232 = vpop.f32.mrb[0].mxu0
  %v5233 = vadd.f32 %v5002, %v5232
  %v5234 = vpop.f32.mrb[0].mxu0
  %5235 = vmatprep.mubr.f32.mxu0 0.0
  %5236 = vmatmul.mubr.f32.gmra.mrb[0].mxu0 %v5164
  %v5237 = vpop.f32.mrb[0].mxu0
  %v5238 = vadd.f32 %v5007, %v5237
  %v5239 = vpop.f32.mrb[0].mxu0
  %5240 = vmatprep.mubr.f32.mxu0 0.0
  %5241 = vmatmul.mubr.f32.gmra.mrb[0].mxu0 %v4840
  %v5242 = vpop.f32.mrb[0].mxu0
  %v5243 = vadd.f32 %v5012, %v5242
  %v5244 = vpop.f32.mrb[0].mxu0
  %5245 = vmatprep.mubr.f32.mxu0 0.0
  %5246 = vmatmul.mubr.f32.gmra.mrb[0].mxu0 %v4843
  %v5247 = vpop.f32.mrb[0].mxu0
  %v5248 = vadd.f32 %v5017, %v5247
  %v5249 = vpop.f32.mrb[0].mxu0
  %5250 = vmatprep.mubr.f32.mxu0 0.0
  %5251 = vmatmul.mubr.f32.gmra.mrb[0].mxu0 %v4846
  %v5252 = vpop.f32.mrb[0].mxu0
  %v5253 = vadd.f32 %v5022, %v5252
  %v5254 = vpop.f32.mrb[0].mxu0
  %5255 = vmatprep.mubr.f32.mxu0 0.0
  %5256 = vmatmul.mubr.f32.gmra.mrb[0].mxu0 %v4849
  %v5257 = vpop.f32.mrb[0].mxu0
  %v5258 = vadd.f32 %v5027, %v5257
  %v5259 = vpop.f32.mrb[0].mxu0
  %5260 = vmatprep.mubr.f32.mxu0 0.0
  %5261 = vmatmul.mubr.f32.gmra.mrb[0].mxu0 %v4852
  %v5262 = vpop.f32.mrb[0].mxu0
  %v5263 = vadd.f32 %v5032, %v5262
  %v5264 = vpop.f32.mrb[0].mxu0
  %5265 = vmatprep.mubr.f32.mxu0 0.0
  %5266 = vmatmul.mubr.f32.gmra.mrb[0].mxu0 %v4855
  %v5267 = vpop.f32.mrb[0].mxu0
  %v5268 = vadd.f32 %v5037, %v5267
  %v5269 = vpop.f32.mrb[0].mxu0
  %5270 = vmatprep.mubr.f32.mxu0 0.0
  %5271 = vmatmul.mubr.f32.gmra.mrb[0].mxu0 %v4858
  %v5272 = vpop.f32.mrb[0].mxu0
  %v5273 = vadd.f32 %v5042, %v5272
  %v5274 = vpop.f32.mrb[0].mxu0
  %5275 = vmatprep.mubr.f32.mxu0 0.0
  %5276 = vmatmul.mubr.f32.gmra.mrb[0].mxu0 %v4861
  %v5277 = vpop.f32.mrb[0].mxu0
  %v5278 = vadd.f32 %v5047, %v5277
  %v5279 = vpop.f32.mrb[0].mxu0
  %5280 = vmatprep.mubr.f32.mxu0 0.0
  %5281 = vmatmul.mubr.f32.gmra.mrb[0].mxu0 %v4864
  %v5282 = vpop.f32.mrb[0].mxu0
  %v5283 = vadd.f32 %v5052, %v5282
  %v5284 = vpop.f32.mrb[0].mxu0
  %5285 = vmatprep.mubr.f32.mxu0 0.0
  %5286 = vmatmul.mubr.f32.gmra.mrb[0].mxu0 %v4867
  %v5287 = vpop.f32.mrb[0].mxu0
  %v5288 = vadd.f32 %v5057, %v5287
  %v5289 = vpop.f32.mrb[0].mxu0
  %5290 = vmatprep.mubr.f32.mxu0 0.0
  %5291 = vmatmul.mubr.f32.gmra.mrb[0].mxu0 %v4870
  %v5292 = vpop.f32.mrb[0].mxu0
  %v5293 = vadd.f32 %v5062, %v5292
  %v5294 = vpop.f32.mrb[0].mxu0
  %5295 = vmatprep.mubr.f32.mxu0 0.0
  %5296 = vmatmul.mubr.f32.gmra.mrb[0].mxu0 %v4873
  %v5297 = vpop.f32.mrb[0].mxu0
  %v5298 = vadd.f32 %v5067, %v5297
  %v5299 = vpop.f32.mrb[0].mxu0
  %5300 = vmatprep.mubr.f32.mxu0 0.0
  %5301 = vmatmul.mubr.f32.gmra.mrb[0].mxu0 %v4876
  %v5302 = vpop.f32.mrb[0].mxu0
  %v5303 = vadd.f32 %v5072, %v5302
  %v5304 = vpop.f32.mrb[0].mxu0
  %5305 = vmatprep.mubr.f32.mxu0 0.0
  %5306 = vmatmul.mubr.f32.gmra.mrb[0].mxu0 %v4879
  %v5307 = vpop.f32.mrb[0].mxu0
  %v5308 = vadd.f32 %v5077, %v5307
  %v5309 = vpop.f32.mrb[0].mxu0
  %5310 = vmatprep.mubr.f32.mxu0 0.0
  %5311 = vmatmul.mubr.f32.gmra.mrb[0].mxu0 %v4882
  %v5312 = vpop.f32.mrb[0].mxu0
  %v5313 = vadd.f32 %v5082, %v5312
  %v5314 = vpop.f32.mrb[0].mxu0
  %5315 = vmatprep.mubr.f32.mxu0 0.0
  %5316 = vmatmul.mubr.f32.gmra.mrb[0].mxu0 %v4885
  %v5317 = vpop.f32.mrb[0].mxu0
  %v5318 = vadd.f32 %v5087, %v5317
  %v5319 = vpop.f32.mrb[0].mxu0
  %5320 = vmatprep.mubr.f32.mxu0 0.0
  %5321 = vmatmul.mubr.f32.gmra.mrb[0].mxu0 %v4888
  %v5322 = vpop.f32.mrb[0].mxu0
  %v5323 = vadd.f32 %v5092, %v5322
  %v5324 = vpop.f32.mrb[0].mxu0
  %5325 = vmatprep.mubr.f32.mxu0 0.0
  %5326 = vmatmul.mubr.f32.gmra.mrb[0].mxu0 %v4891
  %v5327 = vpop.f32.mrb[0].mxu0
  %v5328 = vadd.f32 %v5097, %v5327
  %v5329 = vpop.f32.mrb[0].mxu0
  %5330 = vmatprep.mubr.f32.mxu0 0.0
  %5331 = vmatmul.mubr.f32.gmra.mrb[0].mxu0 %v4894
  %v5332 = vpop.f32.mrb[0].mxu0
  %v5333 = vadd.f32 %v5102, %v5332
  %v5334 = vpop.f32.mrb[0].mxu0
  %5335 = vmatprep.mubr.f32.mxu0 0.0
  %5336 = vmatmul.mubr.f32.gmra.mrb[0].mxu0 %v4897
  %v5337 = vpop.f32.mrb[0].mxu0
  %v5338 = vadd.f32 %v5107, %v5337
  %v5339 = vpop.f32.mrb[0].mxu0
  %5340 = vmatprep.mubr.f32.mxu0 0.0
  %5341 = vmatmul.mubr.f32.gmra.mrb[0].mxu0 %v4900
  %v5342 = vpop.f32.mrb[0].mxu0
  %v5343 = vadd.f32 %v5112, %v5342
  %v5344 = vpop.f32.mrb[0].mxu0
  %5345 = vmatprep.mubr.f32.mxu0 0.0
  %5346 = vmatmul.mubr.f32.gmra.mrb[0].mxu0 %v4903
  %v5347 = vpop.f32.mrb[0].mxu0
  %v5348 = vadd.f32 %v5117, %v5347
  %v5349 = vpop.f32.mrb[0].mxu0
  %5350 = vmatprep.mubr.f32.mxu0 0.0
  %5351 = vmatmul.mubr.f32.gmra.mrb[0].mxu0 %v4906
  %v5352 = vpop.f32.mrb[0].mxu0
  %v5353 = vadd.f32 %v5122, %v5352
  %v5354 = vpop.f32.mrb[0].mxu0
  %5355 = vmatprep.mubr.f32.mxu0 0.0
  %5356 = vmatmul.mubr.f32.gmra.mrb[0].mxu0 %v4909
  %v5357 = vpop.f32.mrb[0].mxu0
  %v5358 = vadd.f32 %v5127, %v5357
  %v5359 = vpop.f32.mrb[0].mxu0
  %5360 = vmatprep.mubr.f32.mxu0 0.0
  %5361 = vmatmul.mubr.f32.gmra.mrb[0].mxu0 %v4912
  %v5362 = vpop.f32.mrb[0].mxu0
  %v5363 = vadd.f32 %v5132, %v5362
  %v5364 = vpop.f32.mrb[0].mxu0
  %5365 = vmatprep.mubr.f32.mxu0 0.0
  %5366 = vmatmul.mubr.f32.gmra.mrb[0].mxu0 %v4915
  %v5367 = vpop.f32.mrb[0].mxu0
  %v5368 = vadd.f32 %v5137, %v5367
  %v5369 = vpop.f32.mrb[0].mxu0
  %5370 = vmatprep.mubr.f32.mxu0 0.0
  %5371 = vmatmul.mubr.f32.gmra.mrb[0].mxu0 %v4918
  %v5372 = vpop.f32.mrb[0].mxu0
  %v5373 = vadd.f32 %v5142, %v5372
  %v5374 = vpop.f32.mrb[0].mxu0
  %5375 = vmatprep.mubr.f32.mxu0 0.0
  %5376 = vmatmul.mubr.f32.gmra.mrb[0].mxu0 %v4921
  %v5377 = vpop.f32.mrb[0].mxu0
  %v5378 = vadd.f32 %v5147, %v5377
  %v5379 = vpop.f32.mrb[0].mxu0
  %5380 = vmatprep.mubr.f32.mxu0 0.0
  %5381 = vmatmul.mubr.f32.gmra.mrb[0].mxu0 %v4924
  %v5382 = vpop.f32.mrb[0].mxu0
  %v5383 = vadd.f32 %v5152, %v5382
  %v5384 = vpop.f32.mrb[0].mxu0
  %5385 = vmatprep.mubr.f32.mxu0 0.0
  %5386 = vmatmul.mubr.f32.gmra.mrb[0].mxu0 %v4927
  %v5387 = vpop.f32.mrb[0].mxu0
  %v5388 = vadd.f32 %v5157, %v5387
  %v5389 = vpop.f32.mrb[0].mxu0
  %5390 = vdwg.mxu0
  %v5391 = vld [vmem:[%s3769 + $0x21] sm:$0xff]
  %v5392 = vld [vmem:[%s3769 + $0x29] sm:$0xff]
  %v5393 = vld [vmem:[%s3769 + $0x31] sm:$0xff]
  %v5394 = vld [vmem:[%s3769 + $0x39] sm:$0xff]
  %v5395 = vld [vmem:[%s3769 + $0x41] sm:$0xff]
  %v5396 = vld [vmem:[%s3769 + $0x49] sm:$0xff]
  %v5397 = vld [vmem:[%s3769 + $0x51] sm:$0xff]
  %v5398 = vld [vmem:[%s3769 + $0x59] sm:$0xff]
  %v5399 = vld [vmem:[%s3769 + $0x61] sm:$0xff]
  %v5400 = vld [vmem:[%s3769 + $0x69] sm:$0xff]
  %v5401 = vld [vmem:[%s3769 + $0x71] sm:$0xff]
  %v5402 = vld [vmem:[%s3769 + $0x79] sm:$0xff]
  %v5403 = vld [vmem:[%s3769 + $0x81] sm:$0xff]
  %v5404 = vld [vmem:[%s3769 + $0x89] sm:$0xff]
  %v5405 = vld [vmem:[%s3769 + $0x91] sm:$0xff]
  %v5406 = vld [vmem:[%s3769 + $0x99] sm:$0xff]
  %v5407 = vld [vmem:[%s3769 + $0xa1] sm:$0xff]
  %v5408 = vld [vmem:[%s3769 + $0xa9] sm:$0xff]
  %v5409 = vld [vmem:[%s3769 + $0xb1] sm:$0xff]
  %v5410 = vld [vmem:[%s3769 + $0xb9] sm:$0xff]
  %v5411 = vld [vmem:[%s3769 + $0xc1] sm:$0xff]
  %v5412 = vld [vmem:[%s3769 + $0xc9] sm:$0xff]
  %v5413 = vld [vmem:[%s3769 + $0xd1] sm:$0xff]
  %v5414 = vld [vmem:[%s3769 + $0xd9] sm:$0xff]
  %v5415 = vld [vmem:[%s3769 + $0xe1] sm:$0xff]
  %v5416 = vld [vmem:[%s3769 + $0xe9] sm:$0xff]
  %v5417 = vld [vmem:[%s3769 + $0xf1] sm:$0xff]
  %v5418 = vld [vmem:[%s3769 + $0xf9] sm:$0xff]
  %v5419 = vld [vmem:[%s3769 + $0x101] sm:$0xff]
  %v5420 = vld [vmem:[%s3769 + $0x109] sm:$0xff]
  %v5421 = vld [vmem:[%s3769 + $0x111] sm:$0xff]
  %v5422 = vld [vmem:[%s3769 + $0x119] sm:$0xff]
  %v5424 = vsel %vm687, %v5391, 0
  %v5427 = vsel %vm687, %v5392, 0
  %v5430 = vsel %vm687, %v5393, 0
  %v5433 = vsel %vm687, %v5394, 0
  %v5436 = vsel %vm687, %v5395, 0
  %v5439 = vsel %vm687, %v5396, 0
  %v5442 = vsel %vm687, %v5397, 0
  %v5445 = vsel %vm687, %v5398, 0
  %v5448 = vsel %vm687, %v5399, 0
  %v5451 = vsel %vm687, %v5400, 0
  %v5454 = vsel %vm687, %v5401, 0
  %v5457 = vsel %vm687, %v5402, 0
  %v5460 = vsel %vm687, %v5403, 0
  %v5463 = vsel %vm687, %v5404, 0
  %v5466 = vsel %vm687, %v5405, 0
  %v5469 = vsel %vm687, %v5406, 0
  %v5472 = vsel %vm687, %v5407, 0
  %v5475 = vsel %vm687, %v5408, 0
  %v5478 = vsel %vm687, %v5409, 0
  %v5481 = vsel %vm687, %v5410, 0
  %v5484 = vsel %vm687, %v5411, 0
  %v5487 = vsel %vm687, %v5412, 0
  %v5490 = vsel %vm687, %v5413, 0
  %v5493 = vsel %vm687, %v5414, 0
  %v5496 = vsel %vm687, %v5415, 0
  %v5499 = vsel %vm687, %v5416, 0
  %v5502 = vsel %vm687, %v5417, 0
  %v5505 = vsel %vm687, %v5418, 0
  %v5508 = vsel %vm687, %v5419, 0
  %v5511 = vsel %vm687, %v5420, 0
  %v5514 = vsel %vm687, %v5421, 0
  %v5517 = vsel %vm687, %v5422, 0
  %5519 = vmatprep.subr.mxu0 0.0
  %5520 = vmatpush1.msra.mxu0 %v2428
  %5521 = vmatprep.subr.mxu0 0.0
  %5522 = vmatpush1.msra.mxu0 0.0
  %5523 = vmatprep.subr.mxu0 0.0
  %5524 = vmatpush1.msra.mxu0 0.0
  %5525 = vmatprep.subr.mxu0 0.0
  %5526 = vmatpush1.msra.mxu0 0.0
  %5527 = vmatprep.subr.mxu0 0.0
  %5528 = vmatpush1.msra.mxu0 0.0
  %5529 = vmatprep.subr.mxu0 0.0
  %5530 = vmatpush1.msra.mxu0 0.0
  %5531 = vmatprep.subr.mxu0 0.0
  %5532 = vmatpush1.msra.mxu0 0.0
  %5533 = vmatprep.subr.mxu0 0.0
  %5534 = vmatpush1.msra.mxu0 0.0
  %5535 = vmatprep.subr.mxu0 0.0
  %5536 = vmatpush1.msra.mxu0 0.0
  %5537 = vmatprep.subr.mxu0 0.0
  %5538 = vmatpush1.msra.mxu0 0.0
  %5539 = vmatprep.subr.mxu0 0.0
  %5540 = vmatpush1.msra.mxu0 0.0
  %5541 = vmatprep.subr.mxu0 0.0
  %5542 = vmatpush1.msra.mxu0 0.0
  %5543 = vmatprep.subr.mxu0 0.0
  %5544 = vmatpush1.msra.mxu0 0.0
  %5545 = vmatprep.subr.mxu0 0.0
  %5546 = vmatpush1.msra.mxu0 0.0
  %5547 = vmatprep.subr.mxu0 0.0
  %5548 = vmatpush1.msra.mxu0 0.0
  %5549 = vmatprep.subr.mxu0 0.0
  %5550 = vmatpush1.msra.mxu0 0.0
  %5551 = vmatprep.subr.mxu0 0.0
  %5552 = vmatpush1.msra.mxu0 0.0
  %5553 = vmatprep.subr.mxu0 0.0
  %5554 = vmatpush1.msra.mxu0 0.0
  %5555 = vmatprep.subr.mxu0 0.0
  %5556 = vmatpush1.msra.mxu0 0.0
  %5557 = vmatprep.subr.mxu0 0.0
  %5558 = vmatpush1.msra.mxu0 0.0
  %5559 = vmatprep.subr.mxu0 0.0
  %5560 = vmatpush1.msra.mxu0 0.0
  %5561 = vmatprep.subr.mxu0 0.0
  %5562 = vmatpush1.msra.mxu0 0.0
  %5563 = vmatprep.subr.mxu0 0.0
  %5564 = vmatpush1.msra.mxu0 0.0
  %5565 = vmatprep.subr.mxu0 0.0
  %5566 = vmatpush1.msra.mxu0 0.0
  %5567 = vmatprep.subr.mxu0 0.0
  %5568 = vmatpush1.msra.mxu0 0.0
  %5569 = vmatprep.subr.mxu0 0.0
  %5570 = vmatpush1.msra.mxu0 0.0
  %5571 = vmatprep.subr.mxu0 0.0
  %5572 = vmatpush1.msra.mxu0 0.0
  %5573 = vmatprep.subr.mxu0 0.0
  %5574 = vmatpush1.msra.mxu0 0.0
  %5575 = vmatprep.subr.mxu0 0.0
  %5576 = vmatpush1.msra.mxu0 0.0
  %5577 = vmatprep.subr.mxu0 0.0
  %5578 = vmatpush1.msra.mxu0 0.0
  %5579 = vmatprep.subr.mxu0 0.0
  %5580 = vmatpush1.msra.mxu0 0.0
  %5581 = vmatprep.subr.mxu0 0.0
  %5582 = vmatpush1.msra.mxu0 0.0
  %5583 = vmatprep.mubr.f32.mxu0 0.0
  %5584 = vmatmul.mubr.f32.gmra.mrb[0].mxu0 %v5424
  %v5585 = vpop.f32.mrb[0].mxu0
  %v5586 = vadd.f32 0.0, %v5585
  %v5587 = vpop.f32.mrb[0].mxu0
  %5588 = vmatprep.mubr.f32.mxu0 0.0
  %5589 = vmatmul.mubr.f32.gmra.mrb[0].mxu0 %v5427
  %v5590 = vpop.f32.mrb[0].mxu0
  %v5591 = vadd.f32 0.0, %v5590
  %v5592 = vpop.f32.mrb[0].mxu0
  %5593 = vmatprep.mubr.f32.mxu0 0.0
  %5594 = vmatmul.mubr.f32.gmra.mrb[0].mxu0 %v5430
  %v5595 = vpop.f32.mrb[0].mxu0
  %v5596 = vadd.f32 0.0, %v5595
  %v5597 = vpop.f32.mrb[0].mxu0
  %5598 = vmatprep.mubr.f32.mxu0 0.0
  %5599 = vmatmul.mubr.f32.gmra.mrb[0].mxu0 %v5433
  %v5600 = vpop.f32.mrb[0].mxu0
  %v5601 = vadd.f32 0.0, %v5600
  %v5602 = vpop.f32.mrb[0].mxu0
  %5603 = vmatprep.mubr.f32.mxu0 0.0
  %5604 = vmatmul.mubr.f32.gmra.mrb[0].mxu0 %v5436
  %v5605 = vpop.f32.mrb[0].mxu0
  %v5606 = vadd.f32 0.0, %v5605
  %v5607 = vpop.f32.mrb[0].mxu0
  %5608 = vmatprep.mubr.f32.mxu0 0.0
  %5609 = vmatmul.mubr.f32.gmra.mrb[0].mxu0 %v5439
  %v5610 = vpop.f32.mrb[0].mxu0
  %v5611 = vadd.f32 0.0, %v5610
  %v5612 = vpop.f32.mrb[0].mxu0
  %5613 = vmatprep.mubr.f32.mxu0 0.0
  %5614 = vmatmul.mubr.f32.gmra.mrb[0].mxu0 %v5442
  %v5615 = vpop.f32.mrb[0].mxu0
  %v5616 = vadd.f32 0.0, %v5615
  %v5617 = vpop.f32.mrb[0].mxu0
  %5618 = vmatprep.mubr.f32.mxu0 0.0
  %5619 = vmatmul.mubr.f32.gmra.mrb[0].mxu0 %v5445
  %v5620 = vpop.f32.mrb[0].mxu0
  %v5621 = vadd.f32 0.0, %v5620
  %v5622 = vpop.f32.mrb[0].mxu0
  %5623 = vmatprep.mubr.f32.mxu0 0.0
  %5624 = vmatmul.mubr.f32.gmra.mrb[0].mxu0 %v5448
  %v5625 = vpop.f32.mrb[0].mxu0
  %v5626 = vadd.f32 0.0, %v5625
  %v5627 = vpop.f32.mrb[0].mxu0
  %5628 = vmatprep.mubr.f32.mxu0 0.0
  %5629 = vmatmul.mubr.f32.gmra.mrb[0].mxu0 %v5451
  %v5630 = vpop.f32.mrb[0].mxu0
  %v5631 = vadd.f32 0.0, %v5630
  %v5632 = vpop.f32.mrb[0].mxu0
  %5633 = vmatprep.mubr.f32.mxu0 0.0
  %5634 = vmatmul.mubr.f32.gmra.mrb[0].mxu0 %v5454
  %v5635 = vpop.f32.mrb[0].mxu0
  %v5636 = vadd.f32 0.0, %v5635
  %v5637 = vpop.f32.mrb[0].mxu0
  %5638 = vmatprep.mubr.f32.mxu0 0.0
  %5639 = vmatmul.mubr.f32.gmra.mrb[0].mxu0 %v5457
  %v5640 = vpop.f32.mrb[0].mxu0
  %v5641 = vadd.f32 0.0, %v5640
  %v5642 = vpop.f32.mrb[0].mxu0
  %5643 = vmatprep.mubr.f32.mxu0 0.0
  %5644 = vmatmul.mubr.f32.gmra.mrb[0].mxu0 %v5460
  %v5645 = vpop.f32.mrb[0].mxu0
  %v5646 = vadd.f32 0.0, %v5645
  %v5647 = vpop.f32.mrb[0].mxu0
  %5648 = vmatprep.mubr.f32.mxu0 0.0
  %5649 = vmatmul.mubr.f32.gmra.mrb[0].mxu0 %v5463
  %v5650 = vpop.f32.mrb[0].mxu0
  %v5651 = vadd.f32 0.0, %v5650
  %v5652 = vpop.f32.mrb[0].mxu0
  %5653 = vmatprep.mubr.f32.mxu0 0.0
  %5654 = vmatmul.mubr.f32.gmra.mrb[0].mxu0 %v5466
  %v5655 = vpop.f32.mrb[0].mxu0
  %v5656 = vadd.f32 0.0, %v5655
  %v5657 = vpop.f32.mrb[0].mxu0
  %5658 = vmatprep.mubr.f32.mxu0 0.0
  %5659 = vmatmul.mubr.f32.gmra.mrb[0].mxu0 %v5469
  %v5660 = vpop.f32.mrb[0].mxu0
  %v5661 = vadd.f32 0.0, %v5660
  %v5662 = vpop.f32.mrb[0].mxu0
  %5663 = vmatprep.mubr.f32.mxu0 0.0
  %5664 = vmatmul.mubr.f32.gmra.mrb[0].mxu0 %v5472
  %v5665 = vpop.f32.mrb[0].mxu0
  %v5666 = vadd.f32 0.0, %v5665
  %v5667 = vpop.f32.mrb[0].mxu0
  %5668 = vmatprep.mubr.f32.mxu0 0.0
  %5669 = vmatmul.mubr.f32.gmra.mrb[0].mxu0 %v5475
  %v5670 = vpop.f32.mrb[0].mxu0
  %v5671 = vadd.f32 0.0, %v5670
  %v5672 = vpop.f32.mrb[0].mxu0
  %5673 = vmatprep.mubr.f32.mxu0 0.0
  %5674 = vmatmul.mubr.f32.gmra.mrb[0].mxu0 %v5478
  %v5675 = vpop.f32.mrb[0].mxu0
  %v5676 = vadd.f32 0.0, %v5675
  %v5677 = vpop.f32.mrb[0].mxu0
  %5678 = vmatprep.mubr.f32.mxu0 0.0
  %5679 = vmatmul.mubr.f32.gmra.mrb[0].mxu0 %v5481
  %v5680 = vpop.f32.mrb[0].mxu0
  %v5681 = vadd.f32 0.0, %v5680
  %v5682 = vpop.f32.mrb[0].mxu0
  %5683 = vmatprep.mubr.f32.mxu0 0.0
  %5684 = vmatmul.mubr.f32.gmra.mrb[0].mxu0 %v5484
  %v5685 = vpop.f32.mrb[0].mxu0
  %v5686 = vadd.f32 0.0, %v5685
  %v5687 = vpop.f32.mrb[0].mxu0
  %5688 = vmatprep.mubr.f32.mxu0 0.0
  %5689 = vmatmul.mubr.f32.gmra.mrb[0].mxu0 %v5487
  %v5690 = vpop.f32.mrb[0].mxu0
  %v5691 = vadd.f32 0.0, %v5690
  %v5692 = vpop.f32.mrb[0].mxu0
  %5693 = vmatprep.mubr.f32.mxu0 0.0
  %5694 = vmatmul.mubr.f32.gmra.mrb[0].mxu0 %v5490
  %v5695 = vpop.f32.mrb[0].mxu0
  %v5696 = vadd.f32 0.0, %v5695
  %v5697 = vpop.f32.mrb[0].mxu0
  %5698 = vmatprep.mubr.f32.mxu0 0.0
  %5699 = vmatmul.mubr.f32.gmra.mrb[0].mxu0 %v5493
  %v5700 = vpop.f32.mrb[0].mxu0
  %v5701 = vadd.f32 0.0, %v5700
  %v5702 = vpop.f32.mrb[0].mxu0
  %5703 = vmatprep.mubr.f32.mxu0 0.0
  %5704 = vmatmul.mubr.f32.gmra.mrb[0].mxu0 %v5496
  %v5705 = vpop.f32.mrb[0].mxu0
  %v5706 = vadd.f32 0.0, %v5705
  %v5707 = vpop.f32.mrb[0].mxu0
  %5708 = vmatprep.mubr.f32.mxu0 0.0
  %5709 = vmatmul.mubr.f32.gmra.mrb[0].mxu0 %v5499
  %v5710 = vpop.f32.mrb[0].mxu0
  %v5711 = vadd.f32 0.0, %v5710
  %v5712 = vpop.f32.mrb[0].mxu0
  %5713 = vmatprep.mubr.f32.mxu0 0.0
  %5714 = vmatmul.mubr.f32.gmra.mrb[0].mxu0 %v5502
  %v5715 = vpop.f32.mrb[0].mxu0
  %v5716 = vadd.f32 0.0, %v5715
  %v5717 = vpop.f32.mrb[0].mxu0
  %5718 = vmatprep.mubr.f32.mxu0 0.0
  %5719 = vmatmul.mubr.f32.gmra.mrb[0].mxu0 %v5505
  %v5720 = vpop.f32.mrb[0].mxu0
  %v5721 = vadd.f32 0.0, %v5720
  %v5722 = vpop.f32.mrb[0].mxu0
  %5723 = vmatprep.mubr.f32.mxu0 0.0
  %5724 = vmatmul.mubr.f32.gmra.mrb[0].mxu0 %v5508
  %v5725 = vpop.f32.mrb[0].mxu0
  %v5726 = vadd.f32 0.0, %v5725
  %v5727 = vpop.f32.mrb[0].mxu0
  %5728 = vmatprep.mubr.f32.mxu0 0.0
  %5729 = vmatmul.mubr.f32.gmra.mrb[0].mxu0 %v5511
  %v5730 = vpop.f32.mrb[0].mxu0
  %v5731 = vadd.f32 0.0, %v5730
  %v5732 = vpop.f32.mrb[0].mxu0
  %5733 = vmatprep.mubr.f32.mxu0 0.0
  %5734 = vmatmul.mubr.f32.gmra.mrb[0].mxu0 %v5514
  %v5735 = vpop.f32.mrb[0].mxu0
  %v5736 = vadd.f32 0.0, %v5735
  %v5737 = vpop.f32.mrb[0].mxu0
  %5738 = vmatprep.mubr.f32.mxu0 0.0
  %5739 = vmatmul.mubr.f32.gmra.mrb[0].mxu0 %v5517
  %v5740 = vpop.f32.mrb[0].mxu0
  %v5741 = vadd.f32 0.0, %v5740
  %v5742 = vpop.f32.mrb[0].mxu0
  %5743 = vdwg.mxu0
  %v5744 = vadd.f32 %v5233, %v5586
  %v5745 = vadd.f32 %v5238, %v5591
  %v5746 = vadd.f32 %v5243, %v5596
  %v5747 = vadd.f32 %v5248, %v5601
  %v5748 = vadd.f32 %v5253, %v5606
  %v5749 = vadd.f32 %v5258, %v5611
  %v5750 = vadd.f32 %v5263, %v5616
  %v5751 = vadd.f32 %v5268, %v5621
  %v5752 = vadd.f32 %v5273, %v5626
  %v5753 = vadd.f32 %v5278, %v5631
  %v5754 = vadd.f32 %v5283, %v5636
  %v5755 = vadd.f32 %v5288, %v5641
  %v5756 = vadd.f32 %v5293, %v5646
  %v5757 = vadd.f32 %v5298, %v5651
  %v5758 = vadd.f32 %v5303, %v5656
  %v5759 = vadd.f32 %v5308, %v5661
  %v5760 = vadd.f32 %v5313, %v5666
  %v5761 = vadd.f32 %v5318, %v5671
  %v5762 = vadd.f32 %v5323, %v5676
  %v5763 = vadd.f32 %v5328, %v5681
  %v5764 = vadd.f32 %v5333, %v5686
  %v5765 = vadd.f32 %v5338, %v5691
  %v5766 = vadd.f32 %v5343, %v5696
  %v5767 = vadd.f32 %v5348, %v5701
  %v5768 = vadd.f32 %v5353, %v5706
  %v5769 = vadd.f32 %v5358, %v5711
  %v5770 = vadd.f32 %v5363, %v5716
  %v5771 = vadd.f32 %v5368, %v5721
  %v5772 = vadd.f32 %v5373, %v5726
  %v5773 = vadd.f32 %v5378, %v5731
  %v5774 = vadd.f32 %v5383, %v5736
  %v5775 = vadd.f32 %v5388, %v5741
  %v5776 = vadd.f32 %v4773, %v5744
  %v5777 = vadd.f32 %v4774, %v5745
  %v5778 = vadd.f32 %v4775, %v5746
  %v5779 = vadd.f32 %v4776, %v5747
  %v5780 = vadd.f32 %v4777, %v5748
  %v5781 = vadd.f32 %v4778, %v5749
  %v5782 = vadd.f32 %v4779, %v5750
  %v5783 = vadd.f32 %v4780, %v5751
  %v5784 = vadd.f32 %v4781, %v5752
  %v5785 = vadd.f32 %v4782, %v5753
  %v5786 = vadd.f32 %v4783, %v5754
  %v5787 = vadd.f32 %v4784, %v5755
  %v5788 = vadd.f32 %v4785, %v5756
  %v5789 = vadd.f32 %v4786, %v5757
  %v5790 = vadd.f32 %v4787, %v5758
  %v5791 = vadd.f32 %v4788, %v5759
  %v5792 = vadd.f32 %v4789, %v5760
  %v5793 = vadd.f32 %v4790, %v5761
  %v5794 = vadd.f32 %v4791, %v5762
  %v5795 = vadd.f32 %v4792, %v5763
  %v5796 = vadd.f32 %v4793, %v5764
  %v5797 = vadd.f32 %v4794, %v5765
  %v5798 = vadd.f32 %v4795, %v5766
  %v5799 = vadd.f32 %v4796, %v5767
  %v5800 = vadd.f32 %v4797, %v5768
  %v5801 = vadd.f32 %v4798, %v5769
  %v5802 = vadd.f32 %v4799, %v5770
  %v5803 = vadd.f32 %v4800, %v5771
  %v5804 = vadd.f32 %v4801, %v5772
  %v5805 = vadd.f32 %v4802, %v5773
  %v5806 = vadd.f32 %v4803, %v5774
  %v5807 = vadd.f32 %v4804, %v5775
  %v5808 = vld [vmem:[%s3769 + $0x2] sm:$0xff]
  %v5809 = vld [vmem:[%s3769 + $0xa] sm:$0xff]
  %v5810 = vld [vmem:[%s3769 + $0x12] sm:$0xff]
  %v5811 = vld [vmem:[%s3769 + $0x1a] sm:$0xff]
  %v5812 = vld [vmem:[%s3769 + $0x22] sm:$0xff]
  %v5813 = vld [vmem:[%s3769 + $0x2a] sm:$0xff]
  %v5814 = vld [vmem:[%s3769 + $0x32] sm:$0xff]
  %v5815 = vld [vmem:[%s3769 + $0x3a] sm:$0xff]
  %v5816 = vld [vmem:[%s3769 + $0x42] sm:$0xff]
  %v5817 = vld [vmem:[%s3769 + $0x4a] sm:$0xff]
  %v5818 = vld [vmem:[%s3769 + $0x52] sm:$0xff]
  %v5819 = vld [vmem:[%s3769 + $0x5a] sm:$0xff]
  %v5820 = vld [vmem:[%s3769 + $0x62] sm:$0xff]
  %v5821 = vld [vmem:[%s3769 + $0x6a] sm:$0xff]
  %v5822 = vld [vmem:[%s3769 + $0x72] sm:$0xff]
  %v5823 = vld [vmem:[%s3769 + $0x7a] sm:$0xff]
  %v5824 = vld [vmem:[%s3769 + $0x82] sm:$0xff]
  %v5825 = vld [vmem:[%s3769 + $0x8a] sm:$0xff]
  %v5826 = vld [vmem:[%s3769 + $0x92] sm:$0xff]
  %v5827 = vld [vmem:[%s3769 + $0x9a] sm:$0xff]
  %v5828 = vld [vmem:[%s3769 + $0xa2] sm:$0xff]
  %v5829 = vld [vmem:[%s3769 + $0xaa] sm:$0xff]
  %v5830 = vld [vmem:[%s3769 + $0xb2] sm:$0xff]
  %v5831 = vld [vmem:[%s3769 + $0xba] sm:$0xff]
  %v5832 = vld [vmem:[%s3769 + $0xc2] sm:$0xff]
  %v5833 = vld [vmem:[%s3769 + $0xca] sm:$0xff]
  %v5834 = vld [vmem:[%s3769 + $0xd2] sm:$0xff]
  %v5835 = vld [vmem:[%s3769 + $0xda] sm:$0xff]
  %v5836 = vld [vmem:[%s3769 + $0xe2] sm:$0xff]
  %v5837 = vld [vmem:[%s3769 + $0xea] sm:$0xff]
  %v5838 = vld [vmem:[%s3769 + $0xf2] sm:$0xff]
  %v5839 = vld [vmem:[%s3769 + $0xfa] sm:$0xff]
  %v5840 = vld [vmem:[%s3769 + $0x102] sm:$0xff]
  %v5841 = vld [vmem:[%s3769 + $0x10a] sm:$0xff]
  %v5843 = vsel %vm687, %v5810, 0
  %v5846 = vsel %vm687, %v5811, 0
  %v5849 = vsel %vm687, %v5812, 0
  %v5852 = vsel %vm687, %v5813, 0
  %v5855 = vsel %vm687, %v5814, 0
  %v5858 = vsel %vm687, %v5815, 0
  %v5861 = vsel %vm687, %v5816, 0
  %v5864 = vsel %vm687, %v5817, 0
  %v5867 = vsel %vm687, %v5818, 0
  %v5870 = vsel %vm687, %v5819, 0
  %v5873 = vsel %vm687, %v5820, 0
  %v5876 = vsel %vm687, %v5821, 0
  %v5879 = vsel %vm687, %v5822, 0
  %v5882 = vsel %vm687, %v5823, 0
  %v5885 = vsel %vm687, %v5824, 0
  %v5888 = vsel %vm687, %v5825, 0
  %v5891 = vsel %vm687, %v5826, 0
  %v5894 = vsel %vm687, %v5827, 0
  %v5897 = vsel %vm687, %v5828, 0
  %v5900 = vsel %vm687, %v5829, 0
  %v5903 = vsel %vm687, %v5830, 0
  %v5906 = vsel %vm687, %v5831, 0
  %v5909 = vsel %vm687, %v5832, 0
  %v5912 = vsel %vm687, %v5833, 0
  %v5915 = vsel %vm687, %v5834, 0
  %v5918 = vsel %vm687, %v5835, 0
  %v5921 = vsel %vm687, %v5836, 0
  %v5924 = vsel %vm687, %v5837, 0
  %v5927 = vsel %vm687, %v5838, 0
  %v5930 = vsel %vm687, %v5839, 0
  %v5933 = vsel %vm687, %v5840, 0
  %v5936 = vsel %vm687, %v5841, 0
  %5938 = vmatprep.subr.mxu0 0.0
  %5939 = vmatpush1.msra.mxu0 %v2854
  %5940 = vmatprep.subr.mxu0 0.0
  %5941 = vmatpush1.msra.mxu0 0.0
  %5942 = vmatprep.subr.mxu0 0.0
  %5943 = vmatpush1.msra.mxu0 0.0
  %5944 = vmatprep.subr.mxu0 0.0
  %5945 = vmatpush1.msra.mxu0 0.0
  %5946 = vmatprep.subr.mxu0 0.0
  %5947 = vmatpush1.msra.mxu0 0.0
  %5948 = vmatprep.subr.mxu0 0.0
  %5949 = vmatpush1.msra.mxu0 0.0
  %5950 = vmatprep.subr.mxu0 0.0
  %5951 = vmatpush1.msra.mxu0 0.0
  %5952 = vmatprep.subr.mxu0 0.0
  %5953 = vmatpush1.msra.mxu0 0.0
  %5954 = vmatprep.subr.mxu0 0.0
  %5955 = vmatpush1.msra.mxu0 0.0
  %5956 = vmatprep.subr.mxu0 0.0
  %5957 = vmatpush1.msra.mxu0 0.0
  %5958 = vmatprep.subr.mxu0 0.0
  %5959 = vmatpush1.msra.mxu0 0.0
  %5960 = vmatprep.subr.mxu0 0.0
  %5961 = vmatpush1.msra.mxu0 0.0
  %5962 = vmatprep.subr.mxu0 0.0
  %5963 = vmatpush1.msra.mxu0 0.0
  %5964 = vmatprep.subr.mxu0 0.0
  %5965 = vmatpush1.msra.mxu0 0.0
  %5966 = vmatprep.subr.mxu0 0.0
  %5967 = vmatpush1.msra.mxu0 0.0
  %5968 = vmatprep.subr.mxu0 0.0
  %5969 = vmatpush1.msra.mxu0 0.0
  %5970 = vmatprep.subr.mxu0 0.0
  %5971 = vmatpush1.msra.mxu0 0.0
  %5972 = vmatprep.subr.mxu0 0.0
  %5973 = vmatpush1.msra.mxu0 0.0
  %5974 = vmatprep.subr.mxu0 0.0
  %5975 = vmatpush1.msra.mxu0 0.0
  %5976 = vmatprep.subr.mxu0 0.0
  %5977 = vmatpush1.msra.mxu0 0.0
  %5978 = vmatprep.subr.mxu0 0.0
  %5979 = vmatpush1.msra.mxu0 0.0
  %5980 = vmatprep.subr.mxu0 0.0
  %5981 = vmatpush1.msra.mxu0 0.0
  %5982 = vmatprep.subr.mxu0 0.0
  %5983 = vmatpush1.msra.mxu0 0.0
  %5984 = vmatprep.subr.mxu0 0.0
  %5985 = vmatpush1.msra.mxu0 0.0
  %5986 = vmatprep.subr.mxu0 0.0
  %5987 = vmatpush1.msra.mxu0 0.0
  %5988 = vmatprep.subr.mxu0 0.0
  %5989 = vmatpush1.msra.mxu0 0.0
  %5990 = vmatprep.subr.mxu0 0.0
  %5991 = vmatpush1.msra.mxu0 0.0
  %5992 = vmatprep.subr.mxu0 0.0
  %5993 = vmatpush1.msra.mxu0 0.0
  %5994 = vmatprep.subr.mxu0 0.0
  %5995 = vmatpush1.msra.mxu0 0.0
  %5996 = vmatprep.subr.mxu0 0.0
  %5997 = vmatpush1.msra.mxu0 0.0
  %5998 = vmatprep.subr.mxu0 0.0
  %5999 = vmatpush1.msra.mxu0 0.0
  %6000 = vmatprep.subr.mxu0 0.0
  %6001 = vmatpush1.msra.mxu0 0.0
  %6002 = vmatprep.mubr.f32.mxu0 0.0
  %6003 = vmatmul.mubr.f32.gmra.mrb[0].mxu0 %v5843
  %v6004 = vpop.f32.mrb[0].mxu0
  %v6005 = vadd.f32 0.0, %v6004
  %v6006 = vpop.f32.mrb[0].mxu0
  %6007 = vmatprep.mubr.f32.mxu0 0.0
  %6008 = vmatmul.mubr.f32.gmra.mrb[0].mxu0 %v5846
  %v6009 = vpop.f32.mrb[0].mxu0
  %v6010 = vadd.f32 0.0, %v6009
  %v6011 = vpop.f32.mrb[0].mxu0
  %6012 = vmatprep.mubr.f32.mxu0 0.0
  %6013 = vmatmul.mubr.f32.gmra.mrb[0].mxu0 %v5849
  %v6014 = vpop.f32.mrb[0].mxu0
  %v6015 = vadd.f32 0.0, %v6014
  %v6016 = vpop.f32.mrb[0].mxu0
  %6017 = vmatprep.mubr.f32.mxu0 0.0
  %6018 = vmatmul.mubr.f32.gmra.mrb[0].mxu0 %v5852
  %v6019 = vpop.f32.mrb[0].mxu0
  %v6020 = vadd.f32 0.0, %v6019
  %v6021 = vpop.f32.mrb[0].mxu0
  %6022 = vmatprep.mubr.f32.mxu0 0.0
  %6023 = vmatmul.mubr.f32.gmra.mrb[0].mxu0 %v5855
  %v6024 = vpop.f32.mrb[0].mxu0
  %v6025 = vadd.f32 0.0, %v6024
  %v6026 = vpop.f32.mrb[0].mxu0
  %6027 = vmatprep.mubr.f32.mxu0 0.0
  %6028 = vmatmul.mubr.f32.gmra.mrb[0].mxu0 %v5858
  %v6029 = vpop.f32.mrb[0].mxu0
  %v6030 = vadd.f32 0.0, %v6029
  %v6031 = vpop.f32.mrb[0].mxu0
  %6032 = vmatprep.mubr.f32.mxu0 0.0
  %6033 = vmatmul.mubr.f32.gmra.mrb[0].mxu0 %v5861
  %v6034 = vpop.f32.mrb[0].mxu0
  %v6035 = vadd.f32 0.0, %v6034
  %v6036 = vpop.f32.mrb[0].mxu0
  %6037 = vmatprep.mubr.f32.mxu0 0.0
  %6038 = vmatmul.mubr.f32.gmra.mrb[0].mxu0 %v5864
  %v6039 = vpop.f32.mrb[0].mxu0
  %v6040 = vadd.f32 0.0, %v6039
  %v6041 = vpop.f32.mrb[0].mxu0
  %6042 = vmatprep.mubr.f32.mxu0 0.0
  %6043 = vmatmul.mubr.f32.gmra.mrb[0].mxu0 %v5867
  %v6044 = vpop.f32.mrb[0].mxu0
  %v6045 = vadd.f32 0.0, %v6044
  %v6046 = vpop.f32.mrb[0].mxu0
  %6047 = vmatprep.mubr.f32.mxu0 0.0
  %6048 = vmatmul.mubr.f32.gmra.mrb[0].mxu0 %v5870
  %v6049 = vpop.f32.mrb[0].mxu0
  %v6050 = vadd.f32 0.0, %v6049
  %v6051 = vpop.f32.mrb[0].mxu0
  %6052 = vmatprep.mubr.f32.mxu0 0.0
  %6053 = vmatmul.mubr.f32.gmra.mrb[0].mxu0 %v5873
  %v6054 = vpop.f32.mrb[0].mxu0
  %v6055 = vadd.f32 0.0, %v6054
  %v6056 = vpop.f32.mrb[0].mxu0
  %6057 = vmatprep.mubr.f32.mxu0 0.0
  %6058 = vmatmul.mubr.f32.gmra.mrb[0].mxu0 %v5876
  %v6059 = vpop.f32.mrb[0].mxu0
  %v6060 = vadd.f32 0.0, %v6059
  %v6061 = vpop.f32.mrb[0].mxu0
  %6062 = vmatprep.mubr.f32.mxu0 0.0
  %6063 = vmatmul.mubr.f32.gmra.mrb[0].mxu0 %v5879
  %v6064 = vpop.f32.mrb[0].mxu0
  %v6065 = vadd.f32 0.0, %v6064
  %v6066 = vpop.f32.mrb[0].mxu0
  %6067 = vmatprep.mubr.f32.mxu0 0.0
  %6068 = vmatmul.mubr.f32.gmra.mrb[0].mxu0 %v5882
  %v6069 = vpop.f32.mrb[0].mxu0
  %v6070 = vadd.f32 0.0, %v6069
  %v6071 = vpop.f32.mrb[0].mxu0
  %6072 = vmatprep.mubr.f32.mxu0 0.0
  %6073 = vmatmul.mubr.f32.gmra.mrb[0].mxu0 %v5885
  %v6074 = vpop.f32.mrb[0].mxu0
  %v6075 = vadd.f32 0.0, %v6074
  %v6076 = vpop.f32.mrb[0].mxu0
  %6077 = vmatprep.mubr.f32.mxu0 0.0
  %6078 = vmatmul.mubr.f32.gmra.mrb[0].mxu0 %v5888
  %v6079 = vpop.f32.mrb[0].mxu0
  %v6080 = vadd.f32 0.0, %v6079
  %v6081 = vpop.f32.mrb[0].mxu0
  %6082 = vmatprep.mubr.f32.mxu0 0.0
  %6083 = vmatmul.mubr.f32.gmra.mrb[0].mxu0 %v5891
  %v6084 = vpop.f32.mrb[0].mxu0
  %v6085 = vadd.f32 0.0, %v6084
  %v6086 = vpop.f32.mrb[0].mxu0
  %6087 = vmatprep.mubr.f32.mxu0 0.0
  %6088 = vmatmul.mubr.f32.gmra.mrb[0].mxu0 %v5894
  %v6089 = vpop.f32.mrb[0].mxu0
  %v6090 = vadd.f32 0.0, %v6089
  %v6091 = vpop.f32.mrb[0].mxu0
  %6092 = vmatprep.mubr.f32.mxu0 0.0
  %6093 = vmatmul.mubr.f32.gmra.mrb[0].mxu0 %v5897
  %v6094 = vpop.f32.mrb[0].mxu0
  %v6095 = vadd.f32 0.0, %v6094
  %v6096 = vpop.f32.mrb[0].mxu0
  %6097 = vmatprep.mubr.f32.mxu0 0.0
  %6098 = vmatmul.mubr.f32.gmra.mrb[0].mxu0 %v5900
  %v6099 = vpop.f32.mrb[0].mxu0
  %v6100 = vadd.f32 0.0, %v6099
  %v6101 = vpop.f32.mrb[0].mxu0
  %6102 = vmatprep.mubr.f32.mxu0 0.0
  %6103 = vmatmul.mubr.f32.gmra.mrb[0].mxu0 %v5903
  %v6104 = vpop.f32.mrb[0].mxu0
  %v6105 = vadd.f32 0.0, %v6104
  %v6106 = vpop.f32.mrb[0].mxu0
  %6107 = vmatprep.mubr.f32.mxu0 0.0
  %6108 = vmatmul.mubr.f32.gmra.mrb[0].mxu0 %v5906
  %v6109 = vpop.f32.mrb[0].mxu0
  %v6110 = vadd.f32 0.0, %v6109
  %v6111 = vpop.f32.mrb[0].mxu0
  %6112 = vmatprep.mubr.f32.mxu0 0.0
  %6113 = vmatmul.mubr.f32.gmra.mrb[0].mxu0 %v5909
  %v6114 = vpop.f32.mrb[0].mxu0
  %v6115 = vadd.f32 0.0, %v6114
  %v6116 = vpop.f32.mrb[0].mxu0
  %6117 = vmatprep.mubr.f32.mxu0 0.0
  %6118 = vmatmul.mubr.f32.gmra.mrb[0].mxu0 %v5912
  %v6119 = vpop.f32.mrb[0].mxu0
  %v6120 = vadd.f32 0.0, %v6119
  %v6121 = vpop.f32.mrb[0].mxu0
  %6122 = vmatprep.mubr.f32.mxu0 0.0
  %6123 = vmatmul.mubr.f32.gmra.mrb[0].mxu0 %v5915
  %v6124 = vpop.f32.mrb[0].mxu0
  %v6125 = vadd.f32 0.0, %v6124
  %v6126 = vpop.f32.mrb[0].mxu0
  %6127 = vmatprep.mubr.f32.mxu0 0.0
  %6128 = vmatmul.mubr.f32.gmra.mrb[0].mxu0 %v5918
  %v6129 = vpop.f32.mrb[0].mxu0
  %v6130 = vadd.f32 0.0, %v6129
  %v6131 = vpop.f32.mrb[0].mxu0
  %6132 = vmatprep.mubr.f32.mxu0 0.0
  %6133 = vmatmul.mubr.f32.gmra.mrb[0].mxu0 %v5921
  %v6134 = vpop.f32.mrb[0].mxu0
  %v6135 = vadd.f32 0.0, %v6134
  %v6136 = vpop.f32.mrb[0].mxu0
  %6137 = vmatprep.mubr.f32.mxu0 0.0
  %6138 = vmatmul.mubr.f32.gmra.mrb[0].mxu0 %v5924
  %v6139 = vpop.f32.mrb[0].mxu0
  %v6140 = vadd.f32 0.0, %v6139
  %v6141 = vpop.f32.mrb[0].mxu0
  %6142 = vmatprep.mubr.f32.mxu0 0.0
  %6143 = vmatmul.mubr.f32.gmra.mrb[0].mxu0 %v5927
  %v6144 = vpop.f32.mrb[0].mxu0
  %v6145 = vadd.f32 0.0, %v6144
  %v6146 = vpop.f32.mrb[0].mxu0
  %6147 = vmatprep.mubr.f32.mxu0 0.0
  %6148 = vmatmul.mubr.f32.gmra.mrb[0].mxu0 %v5930
  %v6149 = vpop.f32.mrb[0].mxu0
  %v6150 = vadd.f32 0.0, %v6149
  %v6151 = vpop.f32.mrb[0].mxu0
  %6152 = vmatprep.mubr.f32.mxu0 0.0
  %6153 = vmatmul.mubr.f32.gmra.mrb[0].mxu0 %v5933
  %v6154 = vpop.f32.mrb[0].mxu0
  %v6155 = vadd.f32 0.0, %v6154
  %v6156 = vpop.f32.mrb[0].mxu0
  %6157 = vmatprep.mubr.f32.mxu0 0.0
  %6158 = vmatmul.mubr.f32.gmra.mrb[0].mxu0 %v5936
  %v6159 = vpop.f32.mrb[0].mxu0
  %v6160 = vadd.f32 0.0, %v6159
  %v6161 = vpop.f32.mrb[0].mxu0
  %6162 = vdwg.mxu0
  %v6164 = vsel %vm687, %v5808, 0
  %v6167 = vsel %vm687, %v5809, 0
  %6169 = vmatprep.subr.mxu0 0.0
  %6170 = vmatpush1.msra.mxu0 %v3088
  %6171 = vmatprep.subr.mxu0 0.0
  %6172 = vmatpush1.msra.mxu0 0.0
  %6173 = vmatprep.subr.mxu0 0.0
  %6174 = vmatpush1.msra.mxu0 0.0
  %6175 = vmatprep.subr.mxu0 0.0
  %6176 = vmatpush1.msra.mxu0 0.0
  %6177 = vmatprep.subr.mxu0 0.0
  %6178 = vmatpush1.msra.mxu0 0.0
  %6179 = vmatprep.subr.mxu0 0.0
  %6180 = vmatpush1.msra.mxu0 0.0
  %6181 = vmatprep.subr.mxu0 0.0
  %6182 = vmatpush1.msra.mxu0 0.0
  %6183 = vmatprep.subr.mxu0 0.0
  %6184 = vmatpush1.msra.mxu0 0.0
  %6185 = vmatprep.subr.mxu0 0.0
  %6186 = vmatpush1.msra.mxu0 0.0
  %6187 = vmatprep.subr.mxu0 0.0
  %6188 = vmatpush1.msra.mxu0 0.0
  %6189 = vmatprep.subr.mxu0 0.0
  %6190 = vmatpush1.msra.mxu0 0.0
  %6191 = vmatprep.subr.mxu0 0.0
  %6192 = vmatpush1.msra.mxu0 0.0
  %6193 = vmatprep.subr.mxu0 0.0
  %6194 = vmatpush1.msra.mxu0 0.0
  %6195 = vmatprep.subr.mxu0 0.0
  %6196 = vmatpush1.msra.mxu0 0.0
  %6197 = vmatprep.subr.mxu0 0.0
  %6198 = vmatpush1.msra.mxu0 0.0
  %6199 = vmatprep.subr.mxu0 0.0
  %6200 = vmatpush1.msra.mxu0 0.0
  %6201 = vmatprep.subr.mxu0 0.0
  %6202 = vmatpush1.msra.mxu0 0.0
  %6203 = vmatprep.subr.mxu0 0.0
  %6204 = vmatpush1.msra.mxu0 0.0
  %6205 = vmatprep.subr.mxu0 0.0
  %6206 = vmatpush1.msra.mxu0 0.0
  %6207 = vmatprep.subr.mxu0 0.0
  %6208 = vmatpush1.msra.mxu0 0.0
  %6209 = vmatprep.subr.mxu0 0.0
  %6210 = vmatpush1.msra.mxu0 0.0
  %6211 = vmatprep.subr.mxu0 0.0
  %6212 = vmatpush1.msra.mxu0 0.0
  %6213 = vmatprep.subr.mxu0 0.0
  %6214 = vmatpush1.msra.mxu0 0.0
  %6215 = vmatprep.subr.mxu0 0.0
  %6216 = vmatpush1.msra.mxu0 0.0
  %6217 = vmatprep.subr.mxu0 0.0
  %6218 = vmatpush1.msra.mxu0 0.0
  %6219 = vmatprep.subr.mxu0 0.0
  %6220 = vmatpush1.msra.mxu0 0.0
  %6221 = vmatprep.subr.mxu0 0.0
  %6222 = vmatpush1.msra.mxu0 0.0
  %6223 = vmatprep.subr.mxu0 0.0
  %6224 = vmatpush1.msra.mxu0 0.0
  %6225 = vmatprep.subr.mxu0 0.0
  %6226 = vmatpush1.msra.mxu0 0.0
  %6227 = vmatprep.subr.mxu0 0.0
  %6228 = vmatpush1.msra.mxu0 0.0
  %6229 = vmatprep.subr.mxu0 0.0
  %6230 = vmatpush1.msra.mxu0 0.0
  %6231 = vmatprep.subr.mxu0 0.0
  %6232 = vmatpush1.msra.mxu0 0.0
  %6233 = vmatprep.mubr.f32.mxu0 0.0
  %6234 = vmatmul.mubr.f32.gmra.mrb[0].mxu0 %v6164
  %v6235 = vpop.f32.mrb[0].mxu0
  %v6236 = vadd.f32 %v6005, %v6235
  %v6237 = vpop.f32.mrb[0].mxu0
  %6238 = vmatprep.mubr.f32.mxu0 0.0
  %6239 = vmatmul.mubr.f32.gmra.mrb[0].mxu0 %v6167
  %v6240 = vpop.f32.mrb[0].mxu0
  %v6241 = vadd.f32 %v6010, %v6240
  %v6242 = vpop.f32.mrb[0].mxu0
  %6243 = vmatprep.mubr.f32.mxu0 0.0
  %6244 = vmatmul.mubr.f32.gmra.mrb[0].mxu0 %v5843
  %v6245 = vpop.f32.mrb[0].mxu0
  %v6246 = vadd.f32 %v6015, %v6245
  %v6247 = vpop.f32.mrb[0].mxu0
  %6248 = vmatprep.mubr.f32.mxu0 0.0
  %6249 = vmatmul.mubr.f32.gmra.mrb[0].mxu0 %v5846
  %v6250 = vpop.f32.mrb[0].mxu0
  %v6251 = vadd.f32 %v6020, %v6250
  %v6252 = vpop.f32.mrb[0].mxu0
  %6253 = vmatprep.mubr.f32.mxu0 0.0
  %6254 = vmatmul.mubr.f32.gmra.mrb[0].mxu0 %v5849
  %v6255 = vpop.f32.mrb[0].mxu0
  %v6256 = vadd.f32 %v6025, %v6255
  %v6257 = vpop.f32.mrb[0].mxu0
  %6258 = vmatprep.mubr.f32.mxu0 0.0
  %6259 = vmatmul.mubr.f32.gmra.mrb[0].mxu0 %v5852
  %v6260 = vpop.f32.mrb[0].mxu0
  %v6261 = vadd.f32 %v6030, %v6260
  %v6262 = vpop.f32.mrb[0].mxu0
  %6263 = vmatprep.mubr.f32.mxu0 0.0
  %6264 = vmatmul.mubr.f32.gmra.mrb[0].mxu0 %v5855
  %v6265 = vpop.f32.mrb[0].mxu0
  %v6266 = vadd.f32 %v6035, %v6265
  %v6267 = vpop.f32.mrb[0].mxu0
  %6268 = vmatprep.mubr.f32.mxu0 0.0
  %6269 = vmatmul.mubr.f32.gmra.mrb[0].mxu0 %v5858
  %v6270 = vpop.f32.mrb[0].mxu0
  %v6271 = vadd.f32 %v6040, %v6270
  %v6272 = vpop.f32.mrb[0].mxu0
  %6273 = vmatprep.mubr.f32.mxu0 0.0
  %6274 = vmatmul.mubr.f32.gmra.mrb[0].mxu0 %v5861
  %v6275 = vpop.f32.mrb[0].mxu0
  %v6276 = vadd.f32 %v6045, %v6275
  %v6277 = vpop.f32.mrb[0].mxu0
  %6278 = vmatprep.mubr.f32.mxu0 0.0
  %6279 = vmatmul.mubr.f32.gmra.mrb[0].mxu0 %v5864
  %v6280 = vpop.f32.mrb[0].mxu0
  %v6281 = vadd.f32 %v6050, %v6280
  %v6282 = vpop.f32.mrb[0].mxu0
  %6283 = vmatprep.mubr.f32.mxu0 0.0
  %6284 = vmatmul.mubr.f32.gmra.mrb[0].mxu0 %v5867
  %v6285 = vpop.f32.mrb[0].mxu0
  %v6286 = vadd.f32 %v6055, %v6285
  %v6287 = vpop.f32.mrb[0].mxu0
  %6288 = vmatprep.mubr.f32.mxu0 0.0
  %6289 = vmatmul.mubr.f32.gmra.mrb[0].mxu0 %v5870
  %v6290 = vpop.f32.mrb[0].mxu0
  %v6291 = vadd.f32 %v6060, %v6290
  %v6292 = vpop.f32.mrb[0].mxu0
  %6293 = vmatprep.mubr.f32.mxu0 0.0
  %6294 = vmatmul.mubr.f32.gmra.mrb[0].mxu0 %v5873
  %v6295 = vpop.f32.mrb[0].mxu0
  %v6296 = vadd.f32 %v6065, %v6295
  %v6297 = vpop.f32.mrb[0].mxu0
  %6298 = vmatprep.mubr.f32.mxu0 0.0
  %6299 = vmatmul.mubr.f32.gmra.mrb[0].mxu0 %v5876
  %v6300 = vpop.f32.mrb[0].mxu0
  %v6301 = vadd.f32 %v6070, %v6300
  %v6302 = vpop.f32.mrb[0].mxu0
  %6303 = vmatprep.mubr.f32.mxu0 0.0
  %6304 = vmatmul.mubr.f32.gmra.mrb[0].mxu0 %v5879
  %v6305 = vpop.f32.mrb[0].mxu0
  %v6306 = vadd.f32 %v6075, %v6305
  %v6307 = vpop.f32.mrb[0].mxu0
  %6308 = vmatprep.mubr.f32.mxu0 0.0
  %6309 = vmatmul.mubr.f32.gmra.mrb[0].mxu0 %v5882
  %v6310 = vpop.f32.mrb[0].mxu0
  %v6311 = vadd.f32 %v6080, %v6310
  %v6312 = vpop.f32.mrb[0].mxu0
  %6313 = vmatprep.mubr.f32.mxu0 0.0
  %6314 = vmatmul.mubr.f32.gmra.mrb[0].mxu0 %v5885
  %v6315 = vpop.f32.mrb[0].mxu0
  %v6316 = vadd.f32 %v6085, %v6315
  %v6317 = vpop.f32.mrb[0].mxu0
  %6318 = vmatprep.mubr.f32.mxu0 0.0
  %6319 = vmatmul.mubr.f32.gmra.mrb[0].mxu0 %v5888
  %v6320 = vpop.f32.mrb[0].mxu0
  %v6321 = vadd.f32 %v6090, %v6320
  %v6322 = vpop.f32.mrb[0].mxu0
  %6323 = vmatprep.mubr.f32.mxu0 0.0
  %6324 = vmatmul.mubr.f32.gmra.mrb[0].mxu0 %v5891
  %v6325 = vpop.f32.mrb[0].mxu0
  %v6326 = vadd.f32 %v6095, %v6325
  %v6327 = vpop.f32.mrb[0].mxu0
  %6328 = vmatprep.mubr.f32.mxu0 0.0
  %6329 = vmatmul.mubr.f32.gmra.mrb[0].mxu0 %v5894
  %v6330 = vpop.f32.mrb[0].mxu0
  %v6331 = vadd.f32 %v6100, %v6330
  %v6332 = vpop.f32.mrb[0].mxu0
  %6333 = vmatprep.mubr.f32.mxu0 0.0
  %6334 = vmatmul.mubr.f32.gmra.mrb[0].mxu0 %v5897
  %v6335 = vpop.f32.mrb[0].mxu0
  %v6336 = vadd.f32 %v6105, %v6335
  %v6337 = vpop.f32.mrb[0].mxu0
  %6338 = vmatprep.mubr.f32.mxu0 0.0
  %6339 = vmatmul.mubr.f32.gmra.mrb[0].mxu0 %v5900
  %v6340 = vpop.f32.mrb[0].mxu0
  %v6341 = vadd.f32 %v6110, %v6340
  %v6342 = vpop.f32.mrb[0].mxu0
  %6343 = vmatprep.mubr.f32.mxu0 0.0
  %6344 = vmatmul.mubr.f32.gmra.mrb[0].mxu0 %v5903
  %v6345 = vpop.f32.mrb[0].mxu0
  %v6346 = vadd.f32 %v6115, %v6345
  %v6347 = vpop.f32.mrb[0].mxu0
  %6348 = vmatprep.mubr.f32.mxu0 0.0
  %6349 = vmatmul.mubr.f32.gmra.mrb[0].mxu0 %v5906
  %v6350 = vpop.f32.mrb[0].mxu0
  %v6351 = vadd.f32 %v6120, %v6350
  %v6352 = vpop.f32.mrb[0].mxu0
  %6353 = vmatprep.mubr.f32.mxu0 0.0
  %6354 = vmatmul.mubr.f32.gmra.mrb[0].mxu0 %v5909
  %v6355 = vpop.f32.mrb[0].mxu0
  %v6356 = vadd.f32 %v6125, %v6355
  %v6357 = vpop.f32.mrb[0].mxu0
  %6358 = vmatprep.mubr.f32.mxu0 0.0
  %6359 = vmatmul.mubr.f32.gmra.mrb[0].mxu0 %v5912
  %v6360 = vpop.f32.mrb[0].mxu0
  %v6361 = vadd.f32 %v6130, %v6360
  %v6362 = vpop.f32.mrb[0].mxu0
  %6363 = vmatprep.mubr.f32.mxu0 0.0
  %6364 = vmatmul.mubr.f32.gmra.mrb[0].mxu0 %v5915
  %v6365 = vpop.f32.mrb[0].mxu0
  %v6366 = vadd.f32 %v6135, %v6365
  %v6367 = vpop.f32.mrb[0].mxu0
  %6368 = vmatprep.mubr.f32.mxu0 0.0
  %6369 = vmatmul.mubr.f32.gmra.mrb[0].mxu0 %v5918
  %v6370 = vpop.f32.mrb[0].mxu0
  %v6371 = vadd.f32 %v6140, %v6370
  %v6372 = vpop.f32.mrb[0].mxu0
  %6373 = vmatprep.mubr.f32.mxu0 0.0
  %6374 = vmatmul.mubr.f32.gmra.mrb[0].mxu0 %v5921
  %v6375 = vpop.f32.mrb[0].mxu0
  %v6376 = vadd.f32 %v6145, %v6375
  %v6377 = vpop.f32.mrb[0].mxu0
  %6378 = vmatprep.mubr.f32.mxu0 0.0
  %6379 = vmatmul.mubr.f32.gmra.mrb[0].mxu0 %v5924
  %v6380 = vpop.f32.mrb[0].mxu0
  %v6381 = vadd.f32 %v6150, %v6380
  %v6382 = vpop.f32.mrb[0].mxu0
  %6383 = vmatprep.mubr.f32.mxu0 0.0
  %6384 = vmatmul.mubr.f32.gmra.mrb[0].mxu0 %v5927
  %v6385 = vpop.f32.mrb[0].mxu0
  %v6386 = vadd.f32 %v6155, %v6385
  %v6387 = vpop.f32.mrb[0].mxu0
  %6388 = vmatprep.mubr.f32.mxu0 0.0
  %6389 = vmatmul.mubr.f32.gmra.mrb[0].mxu0 %v5930
  %v6390 = vpop.f32.mrb[0].mxu0
  %v6391 = vadd.f32 %v6160, %v6390
  %v6392 = vpop.f32.mrb[0].mxu0
  %6393 = vdwg.mxu0
  %v6394 = vld [vmem:[%s3769 + $0x22] sm:$0xff]
  %v6395 = vld [vmem:[%s3769 + $0x2a] sm:$0xff]
  %v6396 = vld [vmem:[%s3769 + $0x32] sm:$0xff]
  %v6397 = vld [vmem:[%s3769 + $0x3a] sm:$0xff]
  %v6398 = vld [vmem:[%s3769 + $0x42] sm:$0xff]
  %v6399 = vld [vmem:[%s3769 + $0x4a] sm:$0xff]
  %v6400 = vld [vmem:[%s3769 + $0x52] sm:$0xff]
  %v6401 = vld [vmem:[%s3769 + $0x5a] sm:$0xff]
  %v6402 = vld [vmem:[%s3769 + $0x62] sm:$0xff]
  %v6403 = vld [vmem:[%s3769 + $0x6a] sm:$0xff]
  %v6404 = vld [vmem:[%s3769 + $0x72] sm:$0xff]
  %v6405 = vld [vmem:[%s3769 + $0x7a] sm:$0xff]
  %v6406 = vld [vmem:[%s3769 + $0x82] sm:$0xff]
  %v6407 = vld [vmem:[%s3769 + $0x8a] sm:$0xff]
  %v6408 = vld [vmem:[%s3769 + $0x92] sm:$0xff]
  %v6409 = vld [vmem:[%s3769 + $0x9a] sm:$0xff]
  %v6410 = vld [vmem:[%s3769 + $0xa2] sm:$0xff]
  %v6411 = vld [vmem:[%s3769 + $0xaa] sm:$0xff]
  %v6412 = vld [vmem:[%s3769 + $0xb2] sm:$0xff]
  %v6413 = vld [vmem:[%s3769 + $0xba] sm:$0xff]
  %v6414 = vld [vmem:[%s3769 + $0xc2] sm:$0xff]
  %v6415 = vld [vmem:[%s3769 + $0xca] sm:$0xff]
  %v6416 = vld [vmem:[%s3769 + $0xd2] sm:$0xff]
  %v6417 = vld [vmem:[%s3769 + $0xda] sm:$0xff]
  %v6418 = vld [vmem:[%s3769 + $0xe2] sm:$0xff]
  %v6419 = vld [vmem:[%s3769 + $0xea] sm:$0xff]
  %v6420 = vld [vmem:[%s3769 + $0xf2] sm:$0xff]
  %v6421 = vld [vmem:[%s3769 + $0xfa] sm:$0xff]
  %v6422 = vld [vmem:[%s3769 + $0x102] sm:$0xff]
  %v6423 = vld [vmem:[%s3769 + $0x10a] sm:$0xff]
  %v6424 = vld [vmem:[%s3769 + $0x112] sm:$0xff]
  %v6425 = vld [vmem:[%s3769 + $0x11a] sm:$0xff]
  %v6427 = vsel %vm687, %v6394, 0
  %v6430 = vsel %vm687, %v6395, 0
  %v6433 = vsel %vm687, %v6396, 0
  %v6436 = vsel %vm687, %v6397, 0
  %v6439 = vsel %vm687, %v6398, 0
  %v6442 = vsel %vm687, %v6399, 0
  %v6445 = vsel %vm687, %v6400, 0
  %v6448 = vsel %vm687, %v6401, 0
  %v6451 = vsel %vm687, %v6402, 0
  %v6454 = vsel %vm687, %v6403, 0
  %v6457 = vsel %vm687, %v6404, 0
  %v6460 = vsel %vm687, %v6405, 0
  %v6463 = vsel %vm687, %v6406, 0
  %v6466 = vsel %vm687, %v6407, 0
  %v6469 = vsel %vm687, %v6408, 0
  %v6472 = vsel %vm687, %v6409, 0
  %v6475 = vsel %vm687, %v6410, 0
  %v6478 = vsel %vm687, %v6411, 0
  %v6481 = vsel %vm687, %v6412, 0
  %v6484 = vsel %vm687, %v6413, 0
  %v6487 = vsel %vm687, %v6414, 0
  %v6490 = vsel %vm687, %v6415, 0
  %v6493 = vsel %vm687, %v6416, 0
  %v6496 = vsel %vm687, %v6417, 0
  %v6499 = vsel %vm687, %v6418, 0
  %v6502 = vsel %vm687, %v6419, 0
  %v6505 = vsel %vm687, %v6420, 0
  %v6508 = vsel %vm687, %v6421, 0
  %v6511 = vsel %vm687, %v6422, 0
  %v6514 = vsel %vm687, %v6423, 0
  %v6517 = vsel %vm687, %v6424, 0
  %v6520 = vsel %vm687, %v6425, 0
  %6522 = vmatprep.subr.mxu0 0.0
  %6523 = vmatpush1.msra.mxu0 %v3446
  %6524 = vmatprep.subr.mxu0 0.0
  %6525 = vmatpush1.msra.mxu0 0.0
  %6526 = vmatprep.subr.mxu0 0.0
  %6527 = vmatpush1.msra.mxu0 0.0
  %6528 = vmatprep.subr.mxu0 0.0
  %6529 = vmatpush1.msra.mxu0 0.0
  %6530 = vmatprep.subr.mxu0 0.0
  %6531 = vmatpush1.msra.mxu0 0.0
  %6532 = vmatprep.subr.mxu0 0.0
  %6533 = vmatpush1.msra.mxu0 0.0
  %6534 = vmatprep.subr.mxu0 0.0
  %6535 = vmatpush1.msra.mxu0 0.0
  %6536 = vmatprep.subr.mxu0 0.0
  %6537 = vmatpush1.msra.mxu0 0.0
  %6538 = vmatprep.subr.mxu0 0.0
  %6539 = vmatpush1.msra.mxu0 0.0
  %6540 = vmatprep.subr.mxu0 0.0
  %6541 = vmatpush1.msra.mxu0 0.0
  %6542 = vmatprep.subr.mxu0 0.0
  %6543 = vmatpush1.msra.mxu0 0.0
  %6544 = vmatprep.subr.mxu0 0.0
  %6545 = vmatpush1.msra.mxu0 0.0
  %6546 = vmatprep.subr.mxu0 0.0
  %6547 = vmatpush1.msra.mxu0 0.0
  %6548 = vmatprep.subr.mxu0 0.0
  %6549 = vmatpush1.msra.mxu0 0.0
  %6550 = vmatprep.subr.mxu0 0.0
  %6551 = vmatpush1.msra.mxu0 0.0
  %6552 = vmatprep.subr.mxu0 0.0
  %6553 = vmatpush1.msra.mxu0 0.0
  %6554 = vmatprep.subr.mxu0 0.0
  %6555 = vmatpush1.msra.mxu0 0.0
  %6556 = vmatprep.subr.mxu0 0.0
  %6557 = vmatpush1.msra.mxu0 0.0
  %6558 = vmatprep.subr.mxu0 0.0
  %6559 = vmatpush1.msra.mxu0 0.0
  %6560 = vmatprep.subr.mxu0 0.0
  %6561 = vmatpush1.msra.mxu0 0.0
  %6562 = vmatprep.subr.mxu0 0.0
  %6563 = vmatpush1.msra.mxu0 0.0
  %6564 = vmatprep.subr.mxu0 0.0
  %6565 = vmatpush1.msra.mxu0 0.0
  %6566 = vmatprep.subr.mxu0 0.0
  %6567 = vmatpush1.msra.mxu0 0.0
  %6568 = vmatprep.subr.mxu0 0.0
  %6569 = vmatpush1.msra.mxu0 0.0
  %6570 = vmatprep.subr.mxu0 0.0
  %6571 = vmatpush1.msra.mxu0 0.0
  %6572 = vmatprep.subr.mxu0 0.0
  %6573 = vmatpush1.msra.mxu0 0.0
  %6574 = vmatprep.subr.mxu0 0.0
  %6575 = vmatpush1.msra.mxu0 0.0
  %6576 = vmatprep.subr.mxu0 0.0
  %6577 = vmatpush1.msra.mxu0 0.0
  %6578 = vmatprep.subr.mxu0 0.0
  %6579 = vmatpush1.msra.mxu0 0.0
  %6580 = vmatprep.subr.mxu0 0.0
  %6581 = vmatpush1.msra.mxu0 0.0
  %6582 = vmatprep.subr.mxu0 0.0
  %6583 = vmatpush1.msra.mxu0 0.0
  %6584 = vmatprep.subr.mxu0 0.0
  %6585 = vmatpush1.msra.mxu0 0.0
  %6586 = vmatprep.mubr.f32.mxu0 0.0
  %6587 = vmatmul.mubr.f32.gmra.mrb[0].mxu0 %v6427
  %v6588 = vpop.f32.mrb[0].mxu0
  %v6589 = vadd.f32 0.0, %v6588
  %v6590 = vpop.f32.mrb[0].mxu0
  %6591 = vmatprep.mubr.f32.mxu0 0.0
  %6592 = vmatmul.mubr.f32.gmra.mrb[0].mxu0 %v6430
  %v6593 = vpop.f32.mrb[0].mxu0
  %v6594 = vadd.f32 0.0, %v6593
  %v6595 = vpop.f32.mrb[0].mxu0
  %6596 = vmatprep.mubr.f32.mxu0 0.0
  %6597 = vmatmul.mubr.f32.gmra.mrb[0].mxu0 %v6433
  %v6598 = vpop.f32.mrb[0].mxu0
  %v6599 = vadd.f32 0.0, %v6598
  %v6600 = vpop.f32.mrb[0].mxu0
  %6601 = vmatprep.mubr.f32.mxu0 0.0
  %6602 = vmatmul.mubr.f32.gmra.mrb[0].mxu0 %v6436
  %v6603 = vpop.f32.mrb[0].mxu0
  %v6604 = vadd.f32 0.0, %v6603
  %v6605 = vpop.f32.mrb[0].mxu0
  %6606 = vmatprep.mubr.f32.mxu0 0.0
  %6607 = vmatmul.mubr.f32.gmra.mrb[0].mxu0 %v6439
  %v6608 = vpop.f32.mrb[0].mxu0
  %v6609 = vadd.f32 0.0, %v6608
  %v6610 = vpop.f32.mrb[0].mxu0
  %6611 = vmatprep.mubr.f32.mxu0 0.0
  %6612 = vmatmul.mubr.f32.gmra.mrb[0].mxu0 %v6442
  %v6613 = vpop.f32.mrb[0].mxu0
  %v6614 = vadd.f32 0.0, %v6613
  %v6615 = vpop.f32.mrb[0].mxu0
  %6616 = vmatprep.mubr.f32.mxu0 0.0
  %6617 = vmatmul.mubr.f32.gmra.mrb[0].mxu0 %v6445
  %v6618 = vpop.f32.mrb[0].mxu0
  %v6619 = vadd.f32 0.0, %v6618
  %v6620 = vpop.f32.mrb[0].mxu0
  %6621 = vmatprep.mubr.f32.mxu0 0.0
  %6622 = vmatmul.mubr.f32.gmra.mrb[0].mxu0 %v6448
  %v6623 = vpop.f32.mrb[0].mxu0
  %v6624 = vadd.f32 0.0, %v6623
  %v6625 = vpop.f32.mrb[0].mxu0
  %6626 = vmatprep.mubr.f32.mxu0 0.0
  %6627 = vmatmul.mubr.f32.gmra.mrb[0].mxu0 %v6451
  %v6628 = vpop.f32.mrb[0].mxu0
  %v6629 = vadd.f32 0.0, %v6628
  %v6630 = vpop.f32.mrb[0].mxu0
  %6631 = vmatprep.mubr.f32.mxu0 0.0
  %6632 = vmatmul.mubr.f32.gmra.mrb[0].mxu0 %v6454
  %v6633 = vpop.f32.mrb[0].mxu0
  %v6634 = vadd.f32 0.0, %v6633
  %v6635 = vpop.f32.mrb[0].mxu0
  %6636 = vmatprep.mubr.f32.mxu0 0.0
  %6637 = vmatmul.mubr.f32.gmra.mrb[0].mxu0 %v6457
  %v6638 = vpop.f32.mrb[0].mxu0
  %v6639 = vadd.f32 0.0, %v6638
  %v6640 = vpop.f32.mrb[0].mxu0
  %6641 = vmatprep.mubr.f32.mxu0 0.0
  %6642 = vmatmul.mubr.f32.gmra.mrb[0].mxu0 %v6460
  %v6643 = vpop.f32.mrb[0].mxu0
  %v6644 = vadd.f32 0.0, %v6643
  %v6645 = vpop.f32.mrb[0].mxu0
  %6646 = vmatprep.mubr.f32.mxu0 0.0
  %6647 = vmatmul.mubr.f32.gmra.mrb[0].mxu0 %v6463
  %v6648 = vpop.f32.mrb[0].mxu0
  %v6649 = vadd.f32 0.0, %v6648
  %v6650 = vpop.f32.mrb[0].mxu0
  %6651 = vmatprep.mubr.f32.mxu0 0.0
  %6652 = vmatmul.mubr.f32.gmra.mrb[0].mxu0 %v6466
  %v6653 = vpop.f32.mrb[0].mxu0
  %v6654 = vadd.f32 0.0, %v6653
  %v6655 = vpop.f32.mrb[0].mxu0
  %6656 = vmatprep.mubr.f32.mxu0 0.0
  %6657 = vmatmul.mubr.f32.gmra.mrb[0].mxu0 %v6469
  %v6658 = vpop.f32.mrb[0].mxu0
  %v6659 = vadd.f32 0.0, %v6658
  %v6660 = vpop.f32.mrb[0].mxu0
  %6661 = vmatprep.mubr.f32.mxu0 0.0
  %6662 = vmatmul.mubr.f32.gmra.mrb[0].mxu0 %v6472
  %v6663 = vpop.f32.mrb[0].mxu0
  %v6664 = vadd.f32 0.0, %v6663
  %v6665 = vpop.f32.mrb[0].mxu0
  %6666 = vmatprep.mubr.f32.mxu0 0.0
  %6667 = vmatmul.mubr.f32.gmra.mrb[0].mxu0 %v6475
  %v6668 = vpop.f32.mrb[0].mxu0
  %v6669 = vadd.f32 0.0, %v6668
  %v6670 = vpop.f32.mrb[0].mxu0
  %6671 = vmatprep.mubr.f32.mxu0 0.0
  %6672 = vmatmul.mubr.f32.gmra.mrb[0].mxu0 %v6478
  %v6673 = vpop.f32.mrb[0].mxu0
  %v6674 = vadd.f32 0.0, %v6673
  %v6675 = vpop.f32.mrb[0].mxu0
  %6676 = vmatprep.mubr.f32.mxu0 0.0
  %6677 = vmatmul.mubr.f32.gmra.mrb[0].mxu0 %v6481
  %v6678 = vpop.f32.mrb[0].mxu0
  %v6679 = vadd.f32 0.0, %v6678
  %v6680 = vpop.f32.mrb[0].mxu0
  %6681 = vmatprep.mubr.f32.mxu0 0.0
  %6682 = vmatmul.mubr.f32.gmra.mrb[0].mxu0 %v6484
  %v6683 = vpop.f32.mrb[0].mxu0
  %v6684 = vadd.f32 0.0, %v6683
  %v6685 = vpop.f32.mrb[0].mxu0
  %6686 = vmatprep.mubr.f32.mxu0 0.0
  %6687 = vmatmul.mubr.f32.gmra.mrb[0].mxu0 %v6487
  %v6688 = vpop.f32.mrb[0].mxu0
  %v6689 = vadd.f32 0.0, %v6688
  %v6690 = vpop.f32.mrb[0].mxu0
  %6691 = vmatprep.mubr.f32.mxu0 0.0
  %6692 = vmatmul.mubr.f32.gmra.mrb[0].mxu0 %v6490
  %v6693 = vpop.f32.mrb[0].mxu0
  %v6694 = vadd.f32 0.0, %v6693
  %v6695 = vpop.f32.mrb[0].mxu0
  %6696 = vmatprep.mubr.f32.mxu0 0.0
  %6697 = vmatmul.mubr.f32.gmra.mrb[0].mxu0 %v6493
  %v6698 = vpop.f32.mrb[0].mxu0
  %v6699 = vadd.f32 0.0, %v6698
  %v6700 = vpop.f32.mrb[0].mxu0
  %6701 = vmatprep.mubr.f32.mxu0 0.0
  %6702 = vmatmul.mubr.f32.gmra.mrb[0].mxu0 %v6496
  %v6703 = vpop.f32.mrb[0].mxu0
  %v6704 = vadd.f32 0.0, %v6703
  %v6705 = vpop.f32.mrb[0].mxu0
  %6706 = vmatprep.mubr.f32.mxu0 0.0
  %6707 = vmatmul.mubr.f32.gmra.mrb[0].mxu0 %v6499
  %v6708 = vpop.f32.mrb[0].mxu0
  %v6709 = vadd.f32 0.0, %v6708
  %v6710 = vpop.f32.mrb[0].mxu0
  %6711 = vmatprep.mubr.f32.mxu0 0.0
  %6712 = vmatmul.mubr.f32.gmra.mrb[0].mxu0 %v6502
  %v6713 = vpop.f32.mrb[0].mxu0
  %v6714 = vadd.f32 0.0, %v6713
  %v6715 = vpop.f32.mrb[0].mxu0
  %6716 = vmatprep.mubr.f32.mxu0 0.0
  %6717 = vmatmul.mubr.f32.gmra.mrb[0].mxu0 %v6505
  %v6718 = vpop.f32.mrb[0].mxu0
  %v6719 = vadd.f32 0.0, %v6718
  %v6720 = vpop.f32.mrb[0].mxu0
  %6721 = vmatprep.mubr.f32.mxu0 0.0
  %6722 = vmatmul.mubr.f32.gmra.mrb[0].mxu0 %v6508
  %v6723 = vpop.f32.mrb[0].mxu0
  %v6724 = vadd.f32 0.0, %v6723
  %v6725 = vpop.f32.mrb[0].mxu0
  %6726 = vmatprep.mubr.f32.mxu0 0.0
  %6727 = vmatmul.mubr.f32.gmra.mrb[0].mxu0 %v6511
  %v6728 = vpop.f32.mrb[0].mxu0
  %v6729 = vadd.f32 0.0, %v6728
  %v6730 = vpop.f32.mrb[0].mxu0
  %6731 = vmatprep.mubr.f32.mxu0 0.0
  %6732 = vmatmul.mubr.f32.gmra.mrb[0].mxu0 %v6514
  %v6733 = vpop.f32.mrb[0].mxu0
  %v6734 = vadd.f32 0.0, %v6733
  %v6735 = vpop.f32.mrb[0].mxu0
  %6736 = vmatprep.mubr.f32.mxu0 0.0
  %6737 = vmatmul.mubr.f32.gmra.mrb[0].mxu0 %v6517
  %v6738 = vpop.f32.mrb[0].mxu0
  %v6739 = vadd.f32 0.0, %v6738
  %v6740 = vpop.f32.mrb[0].mxu0
  %6741 = vmatprep.mubr.f32.mxu0 0.0
  %6742 = vmatmul.mubr.f32.gmra.mrb[0].mxu0 %v6520
  %v6743 = vpop.f32.mrb[0].mxu0
  %v6744 = vadd.f32 0.0, %v6743
  %v6745 = vpop.f32.mrb[0].mxu0
  %6746 = vdwg.mxu0
  %v6747 = vadd.f32 %v6236, %v6589
  %v6748 = vadd.f32 %v6241, %v6594
  %v6749 = vadd.f32 %v6246, %v6599
  %v6750 = vadd.f32 %v6251, %v6604
  %v6751 = vadd.f32 %v6256, %v6609
  %v6752 = vadd.f32 %v6261, %v6614
  %v6753 = vadd.f32 %v6266, %v6619
  %v6754 = vadd.f32 %v6271, %v6624
  %v6755 = vadd.f32 %v6276, %v6629
  %v6756 = vadd.f32 %v6281, %v6634
  %v6757 = vadd.f32 %v6286, %v6639
  %v6758 = vadd.f32 %v6291, %v6644
  %v6759 = vadd.f32 %v6296, %v6649
  %v6760 = vadd.f32 %v6301, %v6654
  %v6761 = vadd.f32 %v6306, %v6659
  %v6762 = vadd.f32 %v6311, %v6664
  %v6763 = vadd.f32 %v6316, %v6669
  %v6764 = vadd.f32 %v6321, %v6674
  %v6765 = vadd.f32 %v6326, %v6679
  %v6766 = vadd.f32 %v6331, %v6684
  %v6767 = vadd.f32 %v6336, %v6689
  %v6768 = vadd.f32 %v6341, %v6694
  %v6769 = vadd.f32 %v6346, %v6699
  %v6770 = vadd.f32 %v6351, %v6704
  %v6771 = vadd.f32 %v6356, %v6709
  %v6772 = vadd.f32 %v6361, %v6714
  %v6773 = vadd.f32 %v6366, %v6719
  %v6774 = vadd.f32 %v6371, %v6724
  %v6775 = vadd.f32 %v6376, %v6729
  %v6776 = vadd.f32 %v6381, %v6734
  %v6777 = vadd.f32 %v6386, %v6739
  %v6778 = vadd.f32 %v6391, %v6744
  %v6779 = vmul.f32 %v6747, %v618
  %v6780 = vmul.f32 %v6748, %v619
  %v6781 = vmul.f32 %v6749, %v620
  %v6782 = vmul.f32 %v6750, %v621
  %v6783 = vmul.f32 %v6751, %v622
  %v6784 = vmul.f32 %v6752, %v623
  %v6785 = vmul.f32 %v6753, %v624
  %v6786 = vmul.f32 %v6754, %v625
  %v6787 = vmul.f32 %v6755, %v626
  %v6788 = vmul.f32 %v6756, %v627
  %v6789 = vmul.f32 %v6757, %v628
  %v6790 = vmul.f32 %v6758, %v629
  %v6791 = vmul.f32 %v6759, %v630
  %v6792 = vmul.f32 %v6760, %v631
  %v6793 = vmul.f32 %v6761, %v632
  %v6794 = vmul.f32 %v6762, %v633
  %v6795 = vmul.f32 %v6763, %v634
  %v6796 = vmul.f32 %v6764, %v635
  %v6797 = vmul.f32 %v6765, %v636
  %v6798 = vmul.f32 %v6766, %v637
  %v6799 = vmul.f32 %v6767, %v638
  %v6800 = vmul.f32 %v6768, %v639
  %v6801 = vmul.f32 %v6769, %v640
  %v6802 = vmul.f32 %v6770, %v641
  %v6803 = vmul.f32 %v6771, %v642
  %v6804 = vmul.f32 %v6772, %v643
  %v6805 = vmul.f32 %v6773, %v644
  %v6806 = vmul.f32 %v6774, %v645
  %v6807 = vmul.f32 %v6775, %v646
  %v6808 = vmul.f32 %v6776, %v647
  %v6809 = vmul.f32 %v6777, %v648
  %v6810 = vmul.f32 %v6778, %v649
  %v6811 = vadd.f32 %v5776, %v6779
  %v6812 = vadd.f32 %v5777, %v6780
  %v6813 = vadd.f32 %v5778, %v6781
  %v6814 = vadd.f32 %v5779, %v6782
  %v6815 = vadd.f32 %v5780, %v6783
  %v6816 = vadd.f32 %v5781, %v6784
  %v6817 = vadd.f32 %v5782, %v6785
  %v6818 = vadd.f32 %v5783, %v6786
  %v6819 = vadd.f32 %v5784, %v6787
  %v6820 = vadd.f32 %v5785, %v6788
  %v6821 = vadd.f32 %v5786, %v6789
  %v6822 = vadd.f32 %v5787, %v6790
  %v6823 = vadd.f32 %v5788, %v6791
  %v6824 = vadd.f32 %v5789, %v6792
  %v6825 = vadd.f32 %v5790, %v6793
  %v6826 = vadd.f32 %v5791, %v6794
  %v6827 = vadd.f32 %v5792, %v6795
  %v6828 = vadd.f32 %v5793, %v6796
  %v6829 = vadd.f32 %v5794, %v6797
  %v6830 = vadd.f32 %v5795, %v6798
  %v6831 = vadd.f32 %v5796, %v6799
  %v6832 = vadd.f32 %v5797, %v6800
  %v6833 = vadd.f32 %v5798, %v6801
  %v6834 = vadd.f32 %v5799, %v6802
  %v6835 = vadd.f32 %v5800, %v6803
  %v6836 = vadd.f32 %v5801, %v6804
  %v6837 = vadd.f32 %v5802, %v6805
  %v6838 = vadd.f32 %v5803, %v6806
  %v6839 = vadd.f32 %v5804, %v6807
  %v6840 = vadd.f32 %v5805, %v6808
  %v6841 = vadd.f32 %v5806, %v6809
  %v6842 = vadd.f32 %v5807, %v6810
  %v6843 = vld [vmem:[%s5] sm:$0x3]
  %6844 = vmatprep.subr.mxu0 0.0
  %6845 = vmatpush1.msra.mxu0 %v3737
  %6846 = vmatprep.subr.mxu0 0.0
  %6847 = vmatpush1.msra.mxu0 %v3738
  %6848 = vmatprep.subr.mxu0 0.0
  %6849 = vmatpush1.msra.mxu0 %v3739
  %6850 = vmatprep.subr.mxu0 0.0
  %6851 = vmatpush1.msra.mxu0 %v3740
  %6852 = vmatprep.subr.mxu0 0.0
  %6853 = vmatpush1.msra.mxu0 %v3741
  %6854 = vmatprep.subr.mxu0 0.0
  %6855 = vmatpush1.msra.mxu0 %v3742
  %6856 = vmatprep.subr.mxu0 0.0
  %6857 = vmatpush1.msra.mxu0 %v3743
  %6858 = vmatprep.subr.mxu0 0.0
  %6859 = vmatpush1.msra.mxu0 %v3744
  %6860 = vmatprep.subr.mxu0 0.0
  %6861 = vmatpush1.msra.mxu0 %v3745
  %6862 = vmatprep.subr.mxu0 0.0
  %6863 = vmatpush1.msra.mxu0 %v3746
  %6864 = vmatprep.subr.mxu0 0.0
  %6865 = vmatpush1.msra.mxu0 %v3747
  %6866 = vmatprep.subr.mxu0 0.0
  %6867 = vmatpush1.msra.mxu0 %v3748
  %6868 = vmatprep.subr.mxu0 0.0
  %6869 = vmatpush1.msra.mxu0 %v3749
  %6870 = vmatprep.subr.mxu0 0.0
  %6871 = vmatpush1.msra.mxu0 %v3750
  %6872 = vmatprep.subr.mxu0 0.0
  %6873 = vmatpush1.msra.mxu0 %v3751
  %6874 = vmatprep.subr.mxu0 0.0
  %6875 = vmatpush1.msra.mxu0 %v3752
  %6876 = vmatprep.subr.mxu0 0.0
  %6877 = vmatpush1.msra.mxu0 %v3753
  %6878 = vmatprep.subr.mxu0 0.0
  %6879 = vmatpush1.msra.mxu0 %v3754
  %6880 = vmatprep.subr.mxu0 0.0
  %6881 = vmatpush1.msra.mxu0 %v3755
  %6882 = vmatprep.subr.mxu0 0.0
  %6883 = vmatpush1.msra.mxu0 %v3756
  %6884 = vmatprep.subr.mxu0 0.0
  %6885 = vmatpush1.msra.mxu0 %v3757
  %6886 = vmatprep.subr.mxu0 0.0
  %6887 = vmatpush1.msra.mxu0 %v3758
  %6888 = vmatprep.subr.mxu0 0.0
  %6889 = vmatpush1.msra.mxu0 %v3759
  %6890 = vmatprep.subr.mxu0 0.0
  %6891 = vmatpush1.msra.mxu0 %v3760
  %6892 = vmatprep.subr.mxu0 0.0
  %6893 = vmatpush1.msra.mxu0 %v3761
  %6894 = vmatprep.subr.mxu0 0.0
  %6895 = vmatpush1.msra.mxu0 %v3762
  %6896 = vmatprep.subr.mxu0 0.0
  %6897 = vmatpush1.msra.mxu0 %v3763
  %6898 = vmatprep.subr.mxu0 0.0
  %6899 = vmatpush1.msra.mxu0 %v3764
  %6900 = vmatprep.subr.mxu0 0.0
  %6901 = vmatpush1.msra.mxu0 %v3765
  %6902 = vmatprep.subr.mxu0 0.0
  %6903 = vmatpush1.msra.mxu0 %v3766
  %6904 = vmatprep.subr.mxu0 0.0
  %6905 = vmatpush1.msra.mxu0 %v3767
  %6906 = vmatprep.subr.mxu0 0.0
  %6907 = vmatpush1.msra.mxu0 %v3768
  %6908 = vmatprep.mubr.f32.mxu0 1.0
  %6909 = vmatmul.mubr.f32.gmra.mrb[0].mxu0 1.0
  %v6910 = vpop.f32.mrb[0].mxu0
  %v6911 = vadd.f32 0.0, %v6910
  %v6912 = vpop.f32.mrb[0].mxu0
  %6913 = vdwg.mxu0
  %6914 = vmatprep.subr.mxu0 0.0
  %6915 = vmatpush1.msra.mxu0 %v6811
  %6916 = vmatprep.subr.mxu0 0.0
  %6917 = vmatpush1.msra.mxu0 %v6812
  %6918 = vmatprep.subr.mxu0 0.0
  %6919 = vmatpush1.msra.mxu0 %v6813
  %6920 = vmatprep.subr.mxu0 0.0
  %6921 = vmatpush1.msra.mxu0 %v6814
  %6922 = vmatprep.subr.mxu0 0.0
  %6923 = vmatpush1.msra.mxu0 %v6815
  %6924 = vmatprep.subr.mxu0 0.0
  %6925 = vmatpush1.msra.mxu0 %v6816
  %6926 = vmatprep.subr.mxu0 0.0
  %6927 = vmatpush1.msra.mxu0 %v6817
  %6928 = vmatprep.subr.mxu0 0.0
  %6929 = vmatpush1.msra.mxu0 %v6818
  %6930 = vmatprep.subr.mxu0 0.0
  %6931 = vmatpush1.msra.mxu0 %v6819
  %6932 = vmatprep.subr.mxu0 0.0
  %6933 = vmatpush1.msra.mxu0 %v6820
  %6934 = vmatprep.subr.mxu0 0.0
  %6935 = vmatpush1.msra.mxu0 %v6821
  %6936 = vmatprep.subr.mxu0 0.0
  %6937 = vmatpush1.msra.mxu0 %v6822
  %6938 = vmatprep.subr.mxu0 0.0
  %6939 = vmatpush1.msra.mxu0 %v6823
  %6940 = vmatprep.subr.mxu0 0.0
  %6941 = vmatpush1.msra.mxu0 %v6824
  %6942 = vmatprep.subr.mxu0 0.0
  %6943 = vmatpush1.msra.mxu0 %v6825
  %6944 = vmatprep.subr.mxu0 0.0
  %6945 = vmatpush1.msra.mxu0 %v6826
  %6946 = vmatprep.subr.mxu0 0.0
  %6947 = vmatpush1.msra.mxu0 %v6827
  %6948 = vmatprep.subr.mxu0 0.0
  %6949 = vmatpush1.msra.mxu0 %v6828
  %6950 = vmatprep.subr.mxu0 0.0
  %6951 = vmatpush1.msra.mxu0 %v6829
  %6952 = vmatprep.subr.mxu0 0.0
  %6953 = vmatpush1.msra.mxu0 %v6830
  %6954 = vmatprep.subr.mxu0 0.0
  %6955 = vmatpush1.msra.mxu0 %v6831
  %6956 = vmatprep.subr.mxu0 0.0
  %6957 = vmatpush1.msra.mxu0 %v6832
  %6958 = vmatprep.subr.mxu0 0.0
  %6959 = vmatpush1.msra.mxu0 %v6833
  %6960 = vmatprep.subr.mxu0 0.0
  %6961 = vmatpush1.msra.mxu0 %v6834
  %6962 = vmatprep.subr.mxu0 0.0
  %6963 = vmatpush1.msra.mxu0 %v6835
  %6964 = vmatprep.subr.mxu0 0.0
  %6965 = vmatpush1.msra.mxu0 %v6836
  %6966 = vmatprep.subr.mxu0 0.0
  %6967 = vmatpush1.msra.mxu0 %v6837
  %6968 = vmatprep.subr.mxu0 0.0
  %6969 = vmatpush1.msra.mxu0 %v6838
  %6970 = vmatprep.subr.mxu0 0.0
  %6971 = vmatpush1.msra.mxu0 %v6839
  %6972 = vmatprep.subr.mxu0 0.0
  %6973 = vmatpush1.msra.mxu0 %v6840
  %6974 = vmatprep.subr.mxu0 0.0
  %6975 = vmatpush1.msra.mxu0 %v6841
  %6976 = vmatprep.subr.mxu0 0.0
  %6977 = vmatpush1.msra.mxu0 %v6842
  %6978 = vmatprep.mubr.f32.mxu0 1.0
  %6979 = vmatmul.mubr.f32.gmra.mrb[0].mxu0 1.0
  %v6980 = vpop.f32.mrb[0].mxu0
  %v6981 = vadd.f32 %v6911, %v6980
  %v6982 = vpop.f32.mrb[0].mxu0
  %6983 = vdwg.mxu0
  %v6984 = vmul.f32 %v6981, 0.001953125
  %v6985 = vlaneseq
  %v6986 = vshrl.u32 %v6985, 7
  %v6987 = vsub.s32 0, %v6986
  %v6988 = vrot.slane %v6984, %v6987
  %v6989 = vsub.f32 %v3737, %v6988
  %v6990 = vsub.f32 %v3738, %v6988
  %v6991 = vsub.f32 %v3739, %v6988
  %v6992 = vsub.f32 %v3740, %v6988
  %v6993 = vsub.f32 %v3741, %v6988
  %v6994 = vsub.f32 %v3742, %v6988
  %v6995 = vsub.f32 %v3743, %v6988
  %v6996 = vsub.f32 %v3744, %v6988
  %v6997 = vsub.f32 %v3745, %v6988
  %v6998 = vsub.f32 %v3746, %v6988
  %v6999 = vsub.f32 %v3747, %v6988
  %v7000 = vsub.f32 %v3748, %v6988
  %v7001 = vsub.f32 %v3749, %v6988
  %v7002 = vsub.f32 %v3750, %v6988
  %v7003 = vsub.f32 %v3751, %v6988
  %v7004 = vsub.f32 %v3752, %v6988
  %v7005 = vsub.f32 %v3753, %v6988
  %v7006 = vsub.f32 %v3754, %v6988
  %v7007 = vsub.f32 %v3755, %v6988
  %v7008 = vsub.f32 %v3756, %v6988
  %v7009 = vsub.f32 %v3757, %v6988
  %v7010 = vsub.f32 %v3758, %v6988
  %v7011 = vsub.f32 %v3759, %v6988
  %v7012 = vsub.f32 %v3760, %v6988
  %v7013 = vsub.f32 %v3761, %v6988
  %v7014 = vsub.f32 %v3762, %v6988
  %v7015 = vsub.f32 %v3763, %v6988
  %v7016 = vsub.f32 %v3764, %v6988
  %v7017 = vsub.f32 %v3765, %v6988
  %v7018 = vsub.f32 %v3766, %v6988
  %v7019 = vsub.f32 %v3767, %v6988
  %v7020 = vsub.f32 %v3768, %v6988
  %v7021 = vsub.f32 %v6811, %v6988
  %v7022 = vsub.f32 %v6812, %v6988
  %v7023 = vsub.f32 %v6813, %v6988
  %v7024 = vsub.f32 %v6814, %v6988
  %v7025 = vsub.f32 %v6815, %v6988
  %v7026 = vsub.f32 %v6816, %v6988
  %v7027 = vsub.f32 %v6817, %v6988
  %v7028 = vsub.f32 %v6818, %v6988
  %v7029 = vsub.f32 %v6819, %v6988
  %v7030 = vsub.f32 %v6820, %v6988
  %v7031 = vsub.f32 %v6821, %v6988
  %v7032 = vsub.f32 %v6822, %v6988
  %v7033 = vsub.f32 %v6823, %v6988
  %v7034 = vsub.f32 %v6824, %v6988
  %v7035 = vsub.f32 %v6825, %v6988
  %v7036 = vsub.f32 %v6826, %v6988
  %v7037 = vsub.f32 %v6827, %v6988
  %v7038 = vsub.f32 %v6828, %v6988
  %v7039 = vsub.f32 %v6829, %v6988
  %v7040 = vsub.f32 %v6830, %v6988
  %v7041 = vsub.f32 %v6831, %v6988
  %v7042 = vsub.f32 %v6832, %v6988
  %v7043 = vsub.f32 %v6833, %v6988
  %v7044 = vsub.f32 %v6834, %v6988
  %v7045 = vsub.f32 %v6835, %v6988
  %v7046 = vsub.f32 %v6836, %v6988
  %v7047 = vsub.f32 %v6837, %v6988
  %v7048 = vsub.f32 %v6838, %v6988
  %v7049 = vsub.f32 %v6839, %v6988
  %v7050 = vsub.f32 %v6840, %v6988
  %v7051 = vsub.f32 %v6841, %v6988
  %v7052 = vsub.f32 %v6842, %v6988
  %v7053 = vmul.f32 %v6989, %v6989
  %v7054 = vmul.f32 %v6990, %v6990
  %v7055 = vmul.f32 %v6991, %v6991
  %v7056 = vmul.f32 %v6992, %v6992
  %v7057 = vmul.f32 %v6993, %v6993
  %v7058 = vmul.f32 %v6994, %v6994
  %v7059 = vmul.f32 %v6995, %v6995
  %v7060 = vmul.f32 %v6996, %v6996
  %v7061 = vmul.f32 %v6997, %v6997
  %v7062 = vmul.f32 %v6998, %v6998
  %v7063 = vmul.f32 %v6999, %v6999
  %v7064 = vmul.f32 %v7000, %v7000
  %v7065 = vmul.f32 %v7001, %v7001
  %v7066 = vmul.f32 %v7002, %v7002
  %v7067 = vmul.f32 %v7003, %v7003
  %v7068 = vmul.f32 %v7004, %v7004
  %v7069 = vmul.f32 %v7005, %v7005
  %v7070 = vmul.f32 %v7006, %v7006
  %v7071 = vmul.f32 %v7007, %v7007
  %v7072 = vmul.f32 %v7008, %v7008
  %v7073 = vmul.f32 %v7009, %v7009
  %v7074 = vmul.f32 %v7010, %v7010
  %v7075 = vmul.f32 %v7011, %v7011
  %v7076 = vmul.f32 %v7012, %v7012
  %v7077 = vmul.f32 %v7013, %v7013
  %v7078 = vmul.f32 %v7014, %v7014
  %v7079 = vmul.f32 %v7015, %v7015
  %v7080 = vmul.f32 %v7016, %v7016
  %v7081 = vmul.f32 %v7017, %v7017
  %v7082 = vmul.f32 %v7018, %v7018
  %v7083 = vmul.f32 %v7019, %v7019
  %v7084 = vmul.f32 %v7020, %v7020
  %v7085 = vmul.f32 %v7021, %v7021
  %v7086 = vmul.f32 %v7022, %v7022
  %v7087 = vmul.f32 %v7023, %v7023
  %v7088 = vmul.f32 %v7024, %v7024
  %v7089 = vmul.f32 %v7025, %v7025
  %v7090 = vmul.f32 %v7026, %v7026
  %v7091 = vmul.f32 %v7027, %v7027
  %v7092 = vmul.f32 %v7028, %v7028
  %v7093 = vmul.f32 %v7029, %v7029
  %v7094 = vmul.f32 %v7030, %v7030
  %v7095 = vmul.f32 %v7031, %v7031
  %v7096 = vmul.f32 %v7032, %v7032
  %v7097 = vmul.f32 %v7033, %v7033
  %v7098 = vmul.f32 %v7034, %v7034
  %v7099 = vmul.f32 %v7035, %v7035
  %v7100 = vmul.f32 %v7036, %v7036
  %v7101 = vmul.f32 %v7037, %v7037
  %v7102 = vmul.f32 %v7038, %v7038
  %v7103 = vmul.f32 %v7039, %v7039
  %v7104 = vmul.f32 %v7040, %v7040
  %v7105 = vmul.f32 %v7041, %v7041
  %v7106 = vmul.f32 %v7042, %v7042
  %v7107 = vmul.f32 %v7043, %v7043
  %v7108 = vmul.f32 %v7044, %v7044
  %v7109 = vmul.f32 %v7045, %v7045
  %v7110 = vmul.f32 %v7046, %v7046
  %v7111 = vmul.f32 %v7047, %v7047
  %v7112 = vmul.f32 %v7048, %v7048
  %v7113 = vmul.f32 %v7049, %v7049
  %v7114 = vmul.f32 %v7050, %v7050
  %v7115 = vmul.f32 %v7051, %v7051
  %v7116 = vmul.f32 %v7052, %v7052
  %7117 = vmatprep.subr.mxu0 0.0
  %7118 = vmatpush1.msra.mxu0 %v7053
  %7119 = vmatprep.subr.mxu0 0.0
  %7120 = vmatpush1.msra.mxu0 %v7054
  %7121 = vmatprep.subr.mxu0 0.0
  %7122 = vmatpush1.msra.mxu0 %v7055
  %7123 = vmatprep.subr.mxu0 0.0
  %7124 = vmatpush1.msra.mxu0 %v7056
  %7125 = vmatprep.subr.mxu0 0.0
  %7126 = vmatpush1.msra.mxu0 %v7057
  %7127 = vmatprep.subr.mxu0 0.0
  %7128 = vmatpush1.msra.mxu0 %v7058
  %7129 = vmatprep.subr.mxu0 0.0
  %7130 = vmatpush1.msra.mxu0 %v7059
  %7131 = vmatprep.subr.mxu0 0.0
  %7132 = vmatpush1.msra.mxu0 %v7060
  %7133 = vmatprep.subr.mxu0 0.0
  %7134 = vmatpush1.msra.mxu0 %v7061
  %7135 = vmatprep.subr.mxu0 0.0
  %7136 = vmatpush1.msra.mxu0 %v7062
  %7137 = vmatprep.subr.mxu0 0.0
  %7138 = vmatpush1.msra.mxu0 %v7063
  %7139 = vmatprep.subr.mxu0 0.0
  %7140 = vmatpush1.msra.mxu0 %v7064
  %7141 = vmatprep.subr.mxu0 0.0
  %7142 = vmatpush1.msra.mxu0 %v7065
  %7143 = vmatprep.subr.mxu0 0.0
  %7144 = vmatpush1.msra.mxu0 %v7066
  %7145 = vmatprep.subr.mxu0 0.0
  %7146 = vmatpush1.msra.mxu0 %v7067
  %7147 = vmatprep.subr.mxu0 0.0
  %7148 = vmatpush1.msra.mxu0 %v7068
  %7149 = vmatprep.subr.mxu0 0.0
  %7150 = vmatpush1.msra.mxu0 %v7069
  %7151 = vmatprep.subr.mxu0 0.0
  %7152 = vmatpush1.msra.mxu0 %v7070
  %7153 = vmatprep.subr.mxu0 0.0
  %7154 = vmatpush1.msra.mxu0 %v7071
  %7155 = vmatprep.subr.mxu0 0.0
  %7156 = vmatpush1.msra.mxu0 %v7072
  %7157 = vmatprep.subr.mxu0 0.0
  %7158 = vmatpush1.msra.mxu0 %v7073
  %7159 = vmatprep.subr.mxu0 0.0
  %7160 = vmatpush1.msra.mxu0 %v7074
  %7161 = vmatprep.subr.mxu0 0.0
  %7162 = vmatpush1.msra.mxu0 %v7075
  %7163 = vmatprep.subr.mxu0 0.0
  %7164 = vmatpush1.msra.mxu0 %v7076
  %7165 = vmatprep.subr.mxu0 0.0
  %7166 = vmatpush1.msra.mxu0 %v7077
  %7167 = vmatprep.subr.mxu0 0.0
  %7168 = vmatpush1.msra.mxu0 %v7078
  %7169 = vmatprep.subr.mxu0 0.0
  %7170 = vmatpush1.msra.mxu0 %v7079
  %7171 = vmatprep.subr.mxu0 0.0
  %7172 = vmatpush1.msra.mxu0 %v7080
  %7173 = vmatprep.subr.mxu0 0.0
  %7174 = vmatpush1.msra.mxu0 %v7081
  %7175 = vmatprep.subr.mxu0 0.0
  %7176 = vmatpush1.msra.mxu0 %v7082
  %7177 = vmatprep.subr.mxu0 0.0
  %7178 = vmatpush1.msra.mxu0 %v7083
  %7179 = vmatprep.subr.mxu0 0.0
  %7180 = vmatpush1.msra.mxu0 %v7084
  %7181 = vmatprep.mubr.f32.mxu0 1.0
  %7182 = vmatmul.mubr.f32.gmra.mrb[0].mxu0 1.0
  %v7183 = vpop.f32.mrb[0].mxu0
  %v7184 = vadd.f32 0.0, %v7183
  %v7185 = vpop.f32.mrb[0].mxu0
  %7186 = vdwg.mxu0
  %7187 = vmatprep.subr.mxu0 0.0
  %7188 = vmatpush1.msra.mxu0 %v7085
  %7189 = vmatprep.subr.mxu0 0.0
  %7190 = vmatpush1.msra.mxu0 %v7086
  %7191 = vmatprep.subr.mxu0 0.0
  %7192 = vmatpush1.msra.mxu0 %v7087
  %7193 = vmatprep.subr.mxu0 0.0
  %7194 = vmatpush1.msra.mxu0 %v7088
  %7195 = vmatprep.subr.mxu0 0.0
  %7196 = vmatpush1.msra.mxu0 %v7089
  %7197 = vmatprep.subr.mxu0 0.0
  %7198 = vmatpush1.msra.mxu0 %v7090
  %7199 = vmatprep.subr.mxu0 0.0
  %7200 = vmatpush1.msra.mxu0 %v7091
  %7201 = vmatprep.subr.mxu0 0.0
  %7202 = vmatpush1.msra.mxu0 %v7092
  %7203 = vmatprep.subr.mxu0 0.0
  %7204 = vmatpush1.msra.mxu0 %v7093
  %7205 = vmatprep.subr.mxu0 0.0
  %7206 = vmatpush1.msra.mxu0 %v7094
  %7207 = vmatprep.subr.mxu0 0.0
  %7208 = vmatpush1.msra.mxu0 %v7095
  %7209 = vmatprep.subr.mxu0 0.0
  %7210 = vmatpush1.msra.mxu0 %v7096
  %7211 = vmatprep.subr.mxu0 0.0
  %7212 = vmatpush1.msra.mxu0 %v7097
  %7213 = vmatprep.subr.mxu0 0.0
  %7214 = vmatpush1.msra.mxu0 %v7098
  %7215 = vmatprep.subr.mxu0 0.0
  %7216 = vmatpush1.msra.mxu0 %v7099
  %7217 = vmatprep.subr.mxu0 0.0
  %7218 = vmatpush1.msra.mxu0 %v7100
  %7219 = vmatprep.subr.mxu0 0.0
  %7220 = vmatpush1.msra.mxu0 %v7101
  %7221 = vmatprep.subr.mxu0 0.0
  %7222 = vmatpush1.msra.mxu0 %v7102
  %7223 = vmatprep.subr.mxu0 0.0
  %7224 = vmatpush1.msra.mxu0 %v7103
  %7225 = vmatprep.subr.mxu0 0.0
  %7226 = vmatpush1.msra.mxu0 %v7104
  %7227 = vmatprep.subr.mxu0 0.0
  %7228 = vmatpush1.msra.mxu0 %v7105
  %7229 = vmatprep.subr.mxu0 0.0
  %7230 = vmatpush1.msra.mxu0 %v7106
  %7231 = vmatprep.subr.mxu0 0.0
  %7232 = vmatpush1.msra.mxu0 %v7107
  %7233 = vmatprep.subr.mxu0 0.0
  %7234 = vmatpush1.msra.mxu0 %v7108
  %7235 = vmatprep.subr.mxu0 0.0
  %7236 = vmatpush1.msra.mxu0 %v7109
  %7237 = vmatprep.subr.mxu0 0.0
  %7238 = vmatpush1.msra.mxu0 %v7110
  %7239 = vmatprep.subr.mxu0 0.0
  %7240 = vmatpush1.msra.mxu0 %v7111
  %7241 = vmatprep.subr.mxu0 0.0
  %7242 = vmatpush1.msra.mxu0 %v7112
  %7243 = vmatprep.subr.mxu0 0.0
  %7244 = vmatpush1.msra.mxu0 %v7113
  %7245 = vmatprep.subr.mxu0 0.0
  %7246 = vmatpush1.msra.mxu0 %v7114
  %7247 = vmatprep.subr.mxu0 0.0
  %7248 = vmatpush1.msra.mxu0 %v7115
  %7249 = vmatprep.subr.mxu0 0.0
  %7250 = vmatpush1.msra.mxu0 %v7116
  %7251 = vmatprep.mubr.f32.mxu0 1.0
  %7252 = vmatmul.mubr.f32.gmra.mrb[0].mxu0 1.0
  %v7253 = vpop.f32.mrb[0].mxu0
  %v7254 = vadd.f32 %v7184, %v7253
  %v7255 = vpop.f32.mrb[0].mxu0
  %7256 = vdwg.mxu0
  %v7257 = vmul.f32 %v7254, 0.001953125
  %v7258 = vadd.f32 %v7257, 1e-05
  %v7259 = vrsqrt.pop %v7258
  %v7260 = vmul.f32 %v6843, %v7259
  %v7261 = vlaneseq
  %v7262 = vshrl.u32 %v7261, 7
  %v7263 = vsub.s32 0, %v7262
  %v7264 = vrot.slane %v7260, %v7263
  %v7265 = vmul.f32 %v6989, %v7264
  %v7266 = vmul.f32 %v6990, %v7264
  %v7267 = vmul.f32 %v6991, %v7264
  %v7268 = vmul.f32 %v6992, %v7264
  %v7269 = vmul.f32 %v6993, %v7264
  %v7270 = vmul.f32 %v6994, %v7264
  %v7271 = vmul.f32 %v6995, %v7264
  %v7272 = vmul.f32 %v6996, %v7264
  %v7273 = vmul.f32 %v6997, %v7264
  %v7274 = vmul.f32 %v6998, %v7264
  %v7275 = vmul.f32 %v6999, %v7264
  %v7276 = vmul.f32 %v7000, %v7264
  %v7277 = vmul.f32 %v7001, %v7264
  %v7278 = vmul.f32 %v7002, %v7264
  %v7279 = vmul.f32 %v7003, %v7264
  %v7280 = vmul.f32 %v7004, %v7264
  %v7281 = vmul.f32 %v7005, %v7264
  %v7282 = vmul.f32 %v7006, %v7264
  %v7283 = vmul.f32 %v7007, %v7264
  %v7284 = vmul.f32 %v7008, %v7264
  %v7285 = vmul.f32 %v7009, %v7264
  %v7286 = vmul.f32 %v7010, %v7264
  %v7287 = vmul.f32 %v7011, %v7264
  %v7288 = vmul.f32 %v7012, %v7264
  %v7289 = vmul.f32 %v7013, %v7264
  %v7290 = vmul.f32 %v7014, %v7264
  %v7291 = vmul.f32 %v7015, %v7264
  %v7292 = vmul.f32 %v7016, %v7264
  %v7293 = vmul.f32 %v7017, %v7264
  %v7294 = vmul.f32 %v7018, %v7264
  %v7295 = vmul.f32 %v7019, %v7264
  %v7296 = vmul.f32 %v7020, %v7264
  %v7297 = vmul.f32 %v7021, %v7264
  %v7298 = vmul.f32 %v7022, %v7264
  %v7299 = vmul.f32 %v7023, %v7264
  %v7300 = vmul.f32 %v7024, %v7264
  %v7301 = vmul.f32 %v7025, %v7264
  %v7302 = vmul.f32 %v7026, %v7264
  %v7303 = vmul.f32 %v7027, %v7264
  %v7304 = vmul.f32 %v7028, %v7264
  %v7305 = vmul.f32 %v7029, %v7264
  %v7306 = vmul.f32 %v7030, %v7264
  %v7307 = vmul.f32 %v7031, %v7264
  %v7308 = vmul.f32 %v7032, %v7264
  %v7309 = vmul.f32 %v7033, %v7264
  %v7310 = vmul.f32 %v7034, %v7264
  %v7311 = vmul.f32 %v7035, %v7264
  %v7312 = vmul.f32 %v7036, %v7264
  %v7313 = vmul.f32 %v7037, %v7264
  %v7314 = vmul.f32 %v7038, %v7264
  %v7315 = vmul.f32 %v7039, %v7264
  %v7316 = vmul.f32 %v7040, %v7264
  %v7317 = vmul.f32 %v7041, %v7264
  %v7318 = vmul.f32 %v7042, %v7264
  %v7319 = vmul.f32 %v7043, %v7264
  %v7320 = vmul.f32 %v7044, %v7264
  %v7321 = vmul.f32 %v7045, %v7264
  %v7322 = vmul.f32 %v7046, %v7264
  %v7323 = vmul.f32 %v7047, %v7264
  %v7324 = vmul.f32 %v7048, %v7264
  %v7325 = vmul.f32 %v7049, %v7264
  %v7326 = vmul.f32 %v7050, %v7264
  %v7327 = vmul.f32 %v7051, %v7264
  %v7328 = vmul.f32 %v7052, %v7264
  %v7329 = vlaneseq
  %v7330 = vshrl.u32 %v7329, 7
  %v7331 = vsub.s32 1, %v7330
  %v7332 = vrot.slane %v6843, %v7331
  %v7333 = vadd.f32 %v7265, %v7332
  %v7334 = vadd.f32 %v7266, %v7332
  %v7335 = vadd.f32 %v7267, %v7332
  %v7336 = vadd.f32 %v7268, %v7332
  %v7337 = vadd.f32 %v7269, %v7332
  %v7338 = vadd.f32 %v7270, %v7332
  %v7339 = vadd.f32 %v7271, %v7332
  %v7340 = vadd.f32 %v7272, %v7332
  %v7341 = vadd.f32 %v7273, %v7332
  %v7342 = vadd.f32 %v7274, %v7332
  %v7343 = vadd.f32 %v7275, %v7332
  %v7344 = vadd.f32 %v7276, %v7332
  %v7345 = vadd.f32 %v7277, %v7332
  %v7346 = vadd.f32 %v7278, %v7332
  %v7347 = vadd.f32 %v7279, %v7332
  %v7348 = vadd.f32 %v7280, %v7332
  %v7349 = vadd.f32 %v7281, %v7332
  %v7350 = vadd.f32 %v7282, %v7332
  %v7351 = vadd.f32 %v7283, %v7332
  %v7352 = vadd.f32 %v7284, %v7332
  %v7353 = vadd.f32 %v7285, %v7332
  %v7354 = vadd.f32 %v7286, %v7332
  %v7355 = vadd.f32 %v7287, %v7332
  %v7356 = vadd.f32 %v7288, %v7332
  %v7357 = vadd.f32 %v7289, %v7332
  %v7358 = vadd.f32 %v7290, %v7332
  %v7359 = vadd.f32 %v7291, %v7332
  %v7360 = vadd.f32 %v7292, %v7332
  %v7361 = vadd.f32 %v7293, %v7332
  %v7362 = vadd.f32 %v7294, %v7332
  %v7363 = vadd.f32 %v7295, %v7332
  %v7364 = vadd.f32 %v7296, %v7332
  %v7365 = vadd.f32 %v7297, %v7332
  %v7366 = vadd.f32 %v7298, %v7332
  %v7367 = vadd.f32 %v7299, %v7332
  %v7368 = vadd.f32 %v7300, %v7332
  %v7369 = vadd.f32 %v7301, %v7332
  %v7370 = vadd.f32 %v7302, %v7332
  %v7371 = vadd.f32 %v7303, %v7332
  %v7372 = vadd.f32 %v7304, %v7332
  %v7373 = vadd.f32 %v7305, %v7332
  %v7374 = vadd.f32 %v7306, %v7332
  %v7375 = vadd.f32 %v7307, %v7332
  %v7376 = vadd.f32 %v7308, %v7332
  %v7377 = vadd.f32 %v7309, %v7332
  %v7378 = vadd.f32 %v7310, %v7332
  %v7379 = vadd.f32 %v7311, %v7332
  %v7380 = vadd.f32 %v7312, %v7332
  %v7381 = vadd.f32 %v7313, %v7332
  %v7382 = vadd.f32 %v7314, %v7332
  %v7383 = vadd.f32 %v7315, %v7332
  %v7384 = vadd.f32 %v7316, %v7332
  %v7385 = vadd.f32 %v7317, %v7332
  %v7386 = vadd.f32 %v7318, %v7332
  %v7387 = vadd.f32 %v7319, %v7332
  %v7388 = vadd.f32 %v7320, %v7332
  %v7389 = vadd.f32 %v7321, %v7332
  %v7390 = vadd.f32 %v7322, %v7332
  %v7391 = vadd.f32 %v7323, %v7332
  %v7392 = vadd.f32 %v7324, %v7332
  %v7393 = vadd.f32 %v7325, %v7332
  %v7394 = vadd.f32 %v7326, %v7332
  %v7395 = vadd.f32 %v7327, %v7332
  %v7396 = vadd.f32 %v7328, %v7332
  %v7397 = vmax.f32 %v7333, 0.0
  %v7398 = vmax.f32 %v7334, 0.0
  %v7399 = vmax.f32 %v7335, 0.0
  %v7400 = vmax.f32 %v7336, 0.0
  %v7401 = vmax.f32 %v7337, 0.0
  %v7402 = vmax.f32 %v7338, 0.0
  %v7403 = vmax.f32 %v7339, 0.0
  %v7404 = vmax.f32 %v7340, 0.0
  %v7405 = vmax.f32 %v7341, 0.0
  %v7406 = vmax.f32 %v7342, 0.0
  %v7407 = vmax.f32 %v7343, 0.0
  %v7408 = vmax.f32 %v7344, 0.0
  %v7409 = vmax.f32 %v7345, 0.0
  %v7410 = vmax.f32 %v7346, 0.0
  %v7411 = vmax.f32 %v7347, 0.0
  %v7412 = vmax.f32 %v7348, 0.0
  %v7413 = vmax.f32 %v7349, 0.0
  %v7414 = vmax.f32 %v7350, 0.0
  %v7415 = vmax.f32 %v7351, 0.0
  %v7416 = vmax.f32 %v7352, 0.0
  %v7417 = vmax.f32 %v7353, 0.0
  %v7418 = vmax.f32 %v7354, 0.0
  %v7419 = vmax.f32 %v7355, 0.0
  %v7420 = vmax.f32 %v7356, 0.0
  %v7421 = vmax.f32 %v7357, 0.0
  %v7422 = vmax.f32 %v7358, 0.0
  %v7423 = vmax.f32 %v7359, 0.0
  %v7424 = vmax.f32 %v7360, 0.0
  %v7425 = vmax.f32 %v7361, 0.0
  %v7426 = vmax.f32 %v7362, 0.0
  %v7427 = vmax.f32 %v7363, 0.0
  %v7428 = vmax.f32 %v7364, 0.0
  %v7429 = vmax.f32 %v7365, 0.0
  %v7430 = vmax.f32 %v7366, 0.0
  %v7431 = vmax.f32 %v7367, 0.0
  %v7432 = vmax.f32 %v7368, 0.0
  %v7433 = vmax.f32 %v7369, 0.0
  %v7434 = vmax.f32 %v7370, 0.0
  %v7435 = vmax.f32 %v7371, 0.0
  %v7436 = vmax.f32 %v7372, 0.0
  %v7437 = vmax.f32 %v7373, 0.0
  %v7438 = vmax.f32 %v7374, 0.0
  %v7439 = vmax.f32 %v7375, 0.0
  %v7440 = vmax.f32 %v7376, 0.0
  %v7441 = vmax.f32 %v7377, 0.0
  %v7442 = vmax.f32 %v7378, 0.0
  %v7443 = vmax.f32 %v7379, 0.0
  %v7444 = vmax.f32 %v7380, 0.0
  %v7445 = vmax.f32 %v7381, 0.0
  %v7446 = vmax.f32 %v7382, 0.0
  %v7447 = vmax.f32 %v7383, 0.0
  %v7448 = vmax.f32 %v7384, 0.0
  %v7449 = vmax.f32 %v7385, 0.0
  %v7450 = vmax.f32 %v7386, 0.0
  %v7451 = vmax.f32 %v7387, 0.0
  %v7452 = vmax.f32 %v7388, 0.0
  %v7453 = vmax.f32 %v7389, 0.0
  %v7454 = vmax.f32 %v7390, 0.0
  %v7455 = vmax.f32 %v7391, 0.0
  %v7456 = vmax.f32 %v7392, 0.0
  %v7457 = vmax.f32 %v7393, 0.0
  %v7458 = vmax.f32 %v7394, 0.0
  %v7459 = vmax.f32 %v7395, 0.0
  %v7460 = vmax.f32 %v7396, 0.0
  %vm7461 = vcmask 64512
  %7462 = vst.msk [vmem:[#allocation2] sm:$0xff] %vm7461, %v7397
  %7463 = vst.msk [vmem:[#allocation2 + $0x8] sm:$0xff] %vm7461, %v7398
  %7464 = vst.msk [vmem:[#allocation2 + $0x10] sm:$0xff] %vm7461, %v7399
  %7465 = vst.msk [vmem:[#allocation2 + $0x18] sm:$0xff] %vm7461, %v7400
  %7466 = vst.msk [vmem:[#allocation2 + $0x20] sm:$0xff] %vm7461, %v7401
  %7467 = vst.msk [vmem:[#allocation2 + $0x28] sm:$0xff] %vm7461, %v7402
  %7468 = vst.msk [vmem:[#allocation2 + $0x30] sm:$0xff] %vm7461, %v7403
  %7469 = vst.msk [vmem:[#allocation2 + $0x38] sm:$0xff] %vm7461, %v7404
  %7470 = vst.msk [vmem:[#allocation2 + $0x40] sm:$0xff] %vm7461, %v7405
  %7471 = vst.msk [vmem:[#allocation2 + $0x48] sm:$0xff] %vm7461, %v7406
  %7472 = vst.msk [vmem:[#allocation2 + $0x50] sm:$0xff] %vm7461, %v7407
  %7473 = vst.msk [vmem:[#allocation2 + $0x58] sm:$0xff] %vm7461, %v7408
  %7474 = vst.msk [vmem:[#allocation2 + $0x60] sm:$0xff] %vm7461, %v7409
  %7475 = vst.msk [vmem:[#allocation2 + $0x68] sm:$0xff] %vm7461, %v7410
  %7476 = vst.msk [vmem:[#allocation2 + $0x70] sm:$0xff] %vm7461, %v7411
  %7477 = vst.msk [vmem:[#allocation2 + $0x78] sm:$0xff] %vm7461, %v7412
  %7478 = vst.msk [vmem:[#allocation2 + $0x80] sm:$0xff] %vm7461, %v7413
  %7479 = vst.msk [vmem:[#allocation2 + $0x88] sm:$0xff] %vm7461, %v7414
  %7480 = vst.msk [vmem:[#allocation2 + $0x90] sm:$0xff] %vm7461, %v7415
  %7481 = vst.msk [vmem:[#allocation2 + $0x98] sm:$0xff] %vm7461, %v7416
  %7482 = vst.msk [vmem:[#allocation2 + $0xa0] sm:$0xff] %vm7461, %v7417
  %7483 = vst.msk [vmem:[#allocation2 + $0xa8] sm:$0xff] %vm7461, %v7418
  %7484 = vst.msk [vmem:[#allocation2 + $0xb0] sm:$0xff] %vm7461, %v7419
  %7485 = vst.msk [vmem:[#allocation2 + $0xb8] sm:$0xff] %vm7461, %v7420
  %7486 = vst.msk [vmem:[#allocation2 + $0xc0] sm:$0xff] %vm7461, %v7421
  %7487 = vst.msk [vmem:[#allocation2 + $0xc8] sm:$0xff] %vm7461, %v7422
  %7488 = vst.msk [vmem:[#allocation2 + $0xd0] sm:$0xff] %vm7461, %v7423
  %7489 = vst.msk [vmem:[#allocation2 + $0xd8] sm:$0xff] %vm7461, %v7424
  %7490 = vst.msk [vmem:[#allocation2 + $0xe0] sm:$0xff] %vm7461, %v7425
  %7491 = vst.msk [vmem:[#allocation2 + $0xe8] sm:$0xff] %vm7461, %v7426
  %7492 = vst.msk [vmem:[#allocation2 + $0xf0] sm:$0xff] %vm7461, %v7427
  %7493 = vst.msk [vmem:[#allocation2 + $0xf8] sm:$0xff] %vm7461, %v7428
  %7494 = vst.msk [vmem:[#allocation2 + $0x100] sm:$0xff] %vm7461, %v7429
  %7495 = vst.msk [vmem:[#allocation2 + $0x108] sm:$0xff] %vm7461, %v7430
  %7496 = vst.msk [vmem:[#allocation2 + $0x110] sm:$0xff] %vm7461, %v7431
  %7497 = vst.msk [vmem:[#allocation2 + $0x118] sm:$0xff] %vm7461, %v7432
  %7498 = vst.msk [vmem:[#allocation2 + $0x120] sm:$0xff] %vm7461, %v7433
  %7499 = vst.msk [vmem:[#allocation2 + $0x128] sm:$0xff] %vm7461, %v7434
  %7500 = vst.msk [vmem:[#allocation2 + $0x130] sm:$0xff] %vm7461, %v7435
  %7501 = vst.msk [vmem:[#allocation2 + $0x138] sm:$0xff] %vm7461, %v7436
  %7502 = vst.msk [vmem:[#allocation2 + $0x140] sm:$0xff] %vm7461, %v7437
  %7503 = vst.msk [vmem:[#allocation2 + $0x148] sm:$0xff] %vm7461, %v7438
  %7504 = vst.msk [vmem:[#allocation2 + $0x150] sm:$0xff] %vm7461, %v7439
  %7505 = vst.msk [vmem:[#allocation2 + $0x158] sm:$0xff] %vm7461, %v7440
  %7506 = vst.msk [vmem:[#allocation2 + $0x160] sm:$0xff] %vm7461, %v7441
  %7507 = vst.msk [vmem:[#allocation2 + $0x168] sm:$0xff] %vm7461, %v7442
  %7508 = vst.msk [vmem:[#allocation2 + $0x170] sm:$0xff] %vm7461, %v7443
  %7509 = vst.msk [vmem:[#allocation2 + $0x178] sm:$0xff] %vm7461, %v7444
  %7510 = vst.msk [vmem:[#allocation2 + $0x180] sm:$0xff] %vm7461, %v7445
  %7511 = vst.msk [vmem:[#allocation2 + $0x188] sm:$0xff] %vm7461, %v7446
  %7512 = vst.msk [vmem:[#allocation2 + $0x190] sm:$0xff] %vm7461, %v7447
  %7513 = vst.msk [vmem:[#allocation2 + $0x198] sm:$0xff] %vm7461, %v7448
  %7514 = vst.msk [vmem:[#allocation2 + $0x1a0] sm:$0xff] %vm7461, %v7449
  %7515 = vst.msk [vmem:[#allocation2 + $0x1a8] sm:$0xff] %vm7461, %v7450
  %7516 = vst.msk [vmem:[#allocation2 + $0x1b0] sm:$0xff] %vm7461, %v7451
  %7517 = vst.msk [vmem:[#allocation2 + $0x1b8] sm:$0xff] %vm7461, %v7452
  %7518 = vst.msk [vmem:[#allocation2 + $0x1c0] sm:$0xff] %vm7461, %v7453
  %7519 = vst.msk [vmem:[#allocation2 + $0x1c8] sm:$0xff] %vm7461, %v7454
  %7520 = vst.msk [vmem:[#allocation2 + $0x1d0] sm:$0xff] %vm7461, %v7455
  %7521 = vst.msk [vmem:[#allocation2 + $0x1d8] sm:$0xff] %vm7461, %v7456
  %7522 = vst.msk [vmem:[#allocation2 + $0x1e0] sm:$0xff] %vm7461, %v7457
  %7523 = vst.msk [vmem:[#allocation2 + $0x1e8] sm:$0xff] %vm7461, %v7458
  %7524 = vst.msk [vmem:[#allocation2 + $0x1f0] sm:$0xff] %vm7461, %v7459
  %7525 = vst.msk [vmem:[#allocation2 + $0x1f8] sm:$0xff] %vm7461, %v7460
  %v7527 = vsel %vm7461, %v42, 0
  %v7530 = vsel %vm7461, %v7397, 0
  %v7533 = vsel %vm7461, %v7398, 0
  %v7536 = vsel %vm7461, %v7399, 0
  %v7539 = vsel %vm7461, %v7400, 0
  %v7542 = vsel %vm7461, %v7401, 0
  %v7545 = vsel %vm7461, %v7402, 0
  %v7548 = vsel %vm7461, %v7403, 0
  %v7551 = vsel %vm7461, %v7404, 0
  %v7554 = vsel %vm7461, %v7405, 0
  %v7557 = vsel %vm7461, %v7406, 0
  %v7560 = vsel %vm7461, %v7407, 0
  %v7563 = vsel %vm7461, %v7408, 0
  %v7566 = vsel %vm7461, %v7409, 0
  %v7569 = vsel %vm7461, %v7410, 0
  %v7572 = vsel %vm7461, %v7411, 0
  %v7575 = vsel %vm7461, %v7412, 0
  %v7578 = vsel %vm7461, %v7413, 0
  %v7581 = vsel %vm7461, %v7414, 0
  %v7584 = vsel %vm7461, %v7415, 0
  %v7587 = vsel %vm7461, %v7416, 0
  %v7590 = vsel %vm7461, %v7417, 0
  %v7593 = vsel %vm7461, %v7418, 0
  %v7596 = vsel %vm7461, %v7419, 0
  %v7599 = vsel %vm7461, %v7420, 0
  %v7602 = vsel %vm7461, %v7421, 0
  %v7605 = vsel %vm7461, %v7422, 0
  %v7608 = vsel %vm7461, %v7423, 0
  %v7611 = vsel %vm7461, %v7424, 0
  %v7614 = vsel %vm7461, %v7425, 0
  %v7617 = vsel %vm7461, %v7426, 0
  %v7620 = vsel %vm7461, %v7427, 0
  %v7623 = vsel %vm7461, %v7428, 0
  %7625 = vmatprep.subr.mxu0 0.0
  %7626 = vmatpush1.xpose.msra.mxu0 %v7530
  %7627 = vmatprep.subr.mxu0 0.0
  %7628 = vmatpush1.xpose.msra.mxu0 %v7533
  %7629 = vmatprep.subr.mxu0 0.0
  %7630 = vmatpush1.xpose.msra.mxu0 %v7536
  %7631 = vmatprep.subr.mxu0 0.0
  %7632 = vmatpush1.xpose.msra.mxu0 %v7539
  %7633 = vmatprep.subr.mxu0 0.0
  %7634 = vmatpush1.xpose.msra.mxu0 %v7542
  %7635 = vmatprep.subr.mxu0 0.0
  %7636 = vmatpush1.xpose.msra.mxu0 %v7545
  %7637 = vmatprep.subr.mxu0 0.0
  %7638 = vmatpush1.xpose.msra.mxu0 %v7548
  %7639 = vmatprep.subr.mxu0 0.0
  %7640 = vmatpush1.xpose.msra.mxu0 %v7551
  %7641 = vmatprep.subr.mxu0 0.0
  %7642 = vmatpush1.xpose.msra.mxu0 %v7554
  %7643 = vmatprep.subr.mxu0 0.0
  %7644 = vmatpush1.xpose.msra.mxu0 %v7557
  %7645 = vmatprep.subr.mxu0 0.0
  %7646 = vmatpush1.xpose.msra.mxu0 %v7560
  %7647 = vmatprep.subr.mxu0 0.0
  %7648 = vmatpush1.xpose.msra.mxu0 %v7563
  %7649 = vmatprep.subr.mxu0 0.0
  %7650 = vmatpush1.xpose.msra.mxu0 %v7566
  %7651 = vmatprep.subr.mxu0 0.0
  %7652 = vmatpush1.xpose.msra.mxu0 %v7569
  %7653 = vmatprep.subr.mxu0 0.0
  %7654 = vmatpush1.xpose.msra.mxu0 %v7572
  %7655 = vmatprep.subr.mxu0 0.0
  %7656 = vmatpush1.xpose.msra.mxu0 %v7575
  %7657 = vmatprep.subr.mxu0 0.0
  %7658 = vmatpush1.xpose.msra.mxu0 %v7578
  %7659 = vmatprep.subr.mxu0 0.0
  %7660 = vmatpush1.xpose.msra.mxu0 %v7581
  %7661 = vmatprep.subr.mxu0 0.0
  %7662 = vmatpush1.xpose.msra.mxu0 %v7584
  %7663 = vmatprep.subr.mxu0 0.0
  %7664 = vmatpush1.xpose.msra.mxu0 %v7587
  %7665 = vmatprep.subr.mxu0 0.0
  %7666 = vmatpush1.xpose.msra.mxu0 %v7590
  %7667 = vmatprep.subr.mxu0 0.0
  %7668 = vmatpush1.xpose.msra.mxu0 %v7593
  %7669 = vmatprep.subr.mxu0 0.0
  %7670 = vmatpush1.xpose.msra.mxu0 %v7596
  %7671 = vmatprep.subr.mxu0 0.0
  %7672 = vmatpush1.xpose.msra.mxu0 %v7599
  %7673 = vmatprep.subr.mxu0 0.0
  %7674 = vmatpush1.xpose.msra.mxu0 %v7602
  %7675 = vmatprep.subr.mxu0 0.0
  %7676 = vmatpush1.xpose.msra.mxu0 %v7605
  %7677 = vmatprep.subr.mxu0 0.0
  %7678 = vmatpush1.xpose.msra.mxu0 %v7608
  %7679 = vmatprep.subr.mxu0 0.0
  %7680 = vmatpush1.xpose.msra.mxu0 %v7611
  %7681 = vmatprep.subr.mxu0 0.0
  %7682 = vmatpush1.xpose.msra.mxu0 %v7614
  %7683 = vmatprep.subr.mxu0 0.0
  %7684 = vmatpush1.xpose.msra.mxu0 %v7617
  %7685 = vmatprep.subr.mxu0 0.0
  %7686 = vmatpush1.xpose.msra.mxu0 %v7620
  %7687 = vmatprep.subr.mxu0 0.0
  %7688 = vmatpush1.xpose.msra.mxu0 %v7623
  %7689 = vmatprep.mubr.f32.mxu0 0.0
  %7690 = vmatmul.mubr.f32.gmra.mrb[0].mxu0 %v7527
  %v7691 = vpop.f32.mrb[0].mxu0
  %v7692 = vadd.f32 0.0, %v7691
  %v7693 = vpop.f32.mrb[0].mxu0
  %v7694 = vadd.f32 0.0, %v7693
  %7695 = vdwg.mxu0
  %7696 = vst [vmem:[%s9] sm:$0xff] %v7692
  %7697 = vst [vmem:[%s9 + $0x8] sm:$0xff] %v7694
  %v7699 = vsel %vm7461, %v7429, 0
  %v7702 = vsel %vm7461, %v7430, 0
  %v7705 = vsel %vm7461, %v7431, 0
  %v7708 = vsel %vm7461, %v7432, 0
  %v7711 = vsel %vm7461, %v7433, 0
  %v7714 = vsel %vm7461, %v7434, 0
  %v7717 = vsel %vm7461, %v7435, 0
  %v7720 = vsel %vm7461, %v7436, 0
  %v7723 = vsel %vm7461, %v7437, 0
  %v7726 = vsel %vm7461, %v7438, 0
  %v7729 = vsel %vm7461, %v7439, 0
  %v7732 = vsel %vm7461, %v7440, 0
  %v7735 = vsel %vm7461, %v7441, 0
  %v7738 = vsel %vm7461, %v7442, 0
  %v7741 = vsel %vm7461, %v7443, 0
  %v7744 = vsel %vm7461, %v7444, 0
  %v7747 = vsel %vm7461, %v7445, 0
  %v7750 = vsel %vm7461, %v7446, 0
  %v7753 = vsel %vm7461, %v7447, 0
  %v7756 = vsel %vm7461, %v7448, 0
  %v7759 = vsel %vm7461, %v7449, 0
  %v7762 = vsel %vm7461, %v7450, 0
  %v7765 = vsel %vm7461, %v7451, 0
  %v7768 = vsel %vm7461, %v7452, 0
  %v7771 = vsel %vm7461, %v7453, 0
  %v7774 = vsel %vm7461, %v7454, 0
  %v7777 = vsel %vm7461, %v7455, 0
  %v7780 = vsel %vm7461, %v7456, 0
  %v7783 = vsel %vm7461, %v7457, 0
  %v7786 = vsel %vm7461, %v7458, 0
  %v7789 = vsel %vm7461, %v7459, 0
  %v7792 = vsel %vm7461, %v7460, 0
  %7794 = vmatprep.subr.mxu0 0.0
  %7795 = vmatpush1.xpose.msra.mxu0 %v7699
  %7796 = vmatprep.subr.mxu0 0.0
  %7797 = vmatpush1.xpose.msra.mxu0 %v7702
  %7798 = vmatprep.subr.mxu0 0.0
  %7799 = vmatpush1.xpose.msra.mxu0 %v7705
  %7800 = vmatprep.subr.mxu0 0.0
  %7801 = vmatpush1.xpose.msra.mxu0 %v7708
  %7802 = vmatprep.subr.mxu0 0.0
  %7803 = vmatpush1.xpose.msra.mxu0 %v7711
  %7804 = vmatprep.subr.mxu0 0.0
  %7805 = vmatpush1.xpose.msra.mxu0 %v7714
  %7806 = vmatprep.subr.mxu0 0.0
  %7807 = vmatpush1.xpose.msra.mxu0 %v7717
  %7808 = vmatprep.subr.mxu0 0.0
  %7809 = vmatpush1.xpose.msra.mxu0 %v7720
  %7810 = vmatprep.subr.mxu0 0.0
  %7811 = vmatpush1.xpose.msra.mxu0 %v7723
  %7812 = vmatprep.subr.mxu0 0.0
  %7813 = vmatpush1.xpose.msra.mxu0 %v7726
  %7814 = vmatprep.subr.mxu0 0.0
  %7815 = vmatpush1.xpose.msra.mxu0 %v7729
  %7816 = vmatprep.subr.mxu0 0.0
  %7817 = vmatpush1.xpose.msra.mxu0 %v7732
  %7818 = vmatprep.subr.mxu0 0.0
  %7819 = vmatpush1.xpose.msra.mxu0 %v7735
  %7820 = vmatprep.subr.mxu0 0.0
  %7821 = vmatpush1.xpose.msra.mxu0 %v7738
  %7822 = vmatprep.subr.mxu0 0.0
  %7823 = vmatpush1.xpose.msra.mxu0 %v7741
  %7824 = vmatprep.subr.mxu0 0.0
  %7825 = vmatpush1.xpose.msra.mxu0 %v7744
  %7826 = vmatprep.subr.mxu0 0.0
  %7827 = vmatpush1.xpose.msra.mxu0 %v7747
  %7828 = vmatprep.subr.mxu0 0.0
  %7829 = vmatpush1.xpose.msra.mxu0 %v7750
  %7830 = vmatprep.subr.mxu0 0.0
  %7831 = vmatpush1.xpose.msra.mxu0 %v7753
  %7832 = vmatprep.subr.mxu0 0.0
  %7833 = vmatpush1.xpose.msra.mxu0 %v7756
  %7834 = vmatprep.subr.mxu0 0.0
  %7835 = vmatpush1.xpose.msra.mxu0 %v7759
  %7836 = vmatprep.subr.mxu0 0.0
  %7837 = vmatpush1.xpose.msra.mxu0 %v7762
  %7838 = vmatprep.subr.mxu0 0.0
  %7839 = vmatpush1.xpose.msra.mxu0 %v7765
  %7840 = vmatprep.subr.mxu0 0.0
  %7841 = vmatpush1.xpose.msra.mxu0 %v7768
  %7842 = vmatprep.subr.mxu0 0.0
  %7843 = vmatpush1.xpose.msra.mxu0 %v7771
  %7844 = vmatprep.subr.mxu0 0.0
  %7845 = vmatpush1.xpose.msra.mxu0 %v7774
  %7846 = vmatprep.subr.mxu0 0.0
  %7847 = vmatpush1.xpose.msra.mxu0 %v7777
  %7848 = vmatprep.subr.mxu0 0.0
  %7849 = vmatpush1.xpose.msra.mxu0 %v7780
  %7850 = vmatprep.subr.mxu0 0.0
  %7851 = vmatpush1.xpose.msra.mxu0 %v7783
  %7852 = vmatprep.subr.mxu0 0.0
  %7853 = vmatpush1.xpose.msra.mxu0 %v7786
  %7854 = vmatprep.subr.mxu0 0.0
  %7855 = vmatpush1.xpose.msra.mxu0 %v7789
  %7856 = vmatprep.subr.mxu0 0.0
  %7857 = vmatpush1.xpose.msra.mxu0 %v7792
  %7858 = vmatprep.mubr.f32.mxu0 0.0
  %7859 = vmatmul.mubr.f32.gmra.mrb[0].mxu0 %v7527
  %v7860 = vpop.f32.mrb[0].mxu0
  %v7861 = vadd.f32 0.0, %v7860
  %v7862 = vpop.f32.mrb[0].mxu0
  %v7863 = vadd.f32 0.0, %v7862
  %7864 = vdwg.mxu0
  %s7865 = scalar_lea.vmem %s9, 16
  %7866 = vst [vmem:[%s7865] sm:$0xff] %v7861
  %7867 = vst [vmem:[%s7865 + $0x8] sm:$0xff] %v7863
  %v7868 = vld [vmem:[#allocation2] ss:$2 sm:$0xff]
  %7869 = vst.msk [vmem:[#allocation4] sm:$0xff] %vm7461, %v7868
  %s7870 = scalar_lea.vmem [#allocation2], 32
  %v7871 = vld [vmem:[%s7870] ss:$2 sm:$0xff]
  %7872 = vst.msk [vmem:[#allocation4 + $0x8] sm:$0xff] %vm7461, %v7871
  %s7873 = scalar_lea.vmem [#allocation2], 64
  %v7874 = vld [vmem:[%s7873] ss:$2 sm:$0xff]
  %7875 = vst.msk [vmem:[#allocation4 + $0x10] sm:$0xff] %vm7461, %v7874
  %s7876 = scalar_lea.vmem [#allocation2], 96
  %v7877 = vld [vmem:[%s7876] ss:$2 sm:$0xff]
  %7878 = vst.msk [vmem:[#allocation4 + $0x18] sm:$0xff] %vm7461, %v7877
  %s7879 = scalar_lea.vmem [#allocation2], 128
  %v7880 = vld [vmem:[%s7879] ss:$2 sm:$0xff]
  %7881 = vst.msk [vmem:[#allocation4 + $0x20] sm:$0xff] %vm7461, %v7880
  %s7882 = scalar_lea.vmem [#allocation2], 160
  %v7883 = vld [vmem:[%s7882] ss:$2 sm:$0xff]
  %7884 = vst.msk [vmem:[#allocation4 + $0x28] sm:$0xff] %vm7461, %v7883
  %s7885 = scalar_lea.vmem [#allocation2], 192
  %v7886 = vld [vmem:[%s7885] ss:$2 sm:$0xff]
  %7887 = vst.msk [vmem:[#allocation4 + $0x30] sm:$0xff] %vm7461, %v7886
  %s7888 = scalar_lea.vmem [#allocation2], 224
  %v7889 = vld [vmem:[%s7888] ss:$2 sm:$0xff]
  %7890 = vst.msk [vmem:[#allocation4 + $0x38] sm:$0xff] %vm7461, %v7889
  %s7891 = scalar_lea.vmem [#allocation2], 256
  %v7892 = vld [vmem:[%s7891] ss:$2 sm:$0xff]
  %7893 = vst.msk [vmem:[#allocation4 + $0x40] sm:$0xff] %vm7461, %v7892
  %s7894 = scalar_lea.vmem [#allocation2], 288
  %v7895 = vld [vmem:[%s7894] ss:$2 sm:$0xff]
  %7896 = vst.msk [vmem:[#allocation4 + $0x48] sm:$0xff] %vm7461, %v7895
  %s7897 = scalar_lea.vmem [#allocation2], 320
  %v7898 = vld [vmem:[%s7897] ss:$2 sm:$0xff]
  %7899 = vst.msk [vmem:[#allocation4 + $0x50] sm:$0xff] %vm7461, %v7898
  %s7900 = scalar_lea.vmem [#allocation2], 352
  %v7901 = vld [vmem:[%s7900] ss:$2 sm:$0xff]
  %7902 = vst.msk [vmem:[#allocation4 + $0x58] sm:$0xff] %vm7461, %v7901
  %s7903 = scalar_lea.vmem [#allocation2], 384
  %v7904 = vld [vmem:[%s7903] ss:$2 sm:$0xff]
  %7905 = vst.msk [vmem:[#allocation4 + $0x60] sm:$0xff] %vm7461, %v7904
  %s7906 = scalar_lea.vmem [#allocation2], 416
  %v7907 = vld [vmem:[%s7906] ss:$2 sm:$0xff]
  %7908 = vst.msk [vmem:[#allocation4 + $0x68] sm:$0xff] %vm7461, %v7907
  %s7909 = scalar_lea.vmem [#allocation2], 448
  %v7910 = vld [vmem:[%s7909] ss:$2 sm:$0xff]
  %7911 = vst.msk [vmem:[#allocation4 + $0x70] sm:$0xff] %vm7461, %v7910
  %s7912 = scalar_lea.vmem [#allocation2], 480
  %v7913 = vld [vmem:[%s7912] ss:$2 sm:$0xff]
  %7914 = vst.msk [vmem:[#allocation4 + $0x78] sm:$0xff] %vm7461, %v7913
  %v7915 = vld [vmem:[#allocation4] sm:$0xff]
  %v7916 = vld [vmem:[#allocation4 + $0x8] sm:$0xff]
  %v7917 = vld [vmem:[#allocation4 + $0x10] sm:$0xff]
  %v7918 = vld [vmem:[#allocation4 + $0x18] sm:$0xff]
  %v7919 = vld [vmem:[#allocation4 + $0x20] sm:$0xff]
  %v7920 = vld [vmem:[#allocation4 + $0x28] sm:$0xff]
  %v7921 = vld [vmem:[#allocation4 + $0x30] sm:$0xff]
  %v7922 = vld [vmem:[#allocation4 + $0x38] sm:$0xff]
  %v7923 = vld [vmem:[#allocation4 + $0x40] sm:$0xff]
  %v7924 = vld [vmem:[#allocation4 + $0x48] sm:$0xff]
  %v7925 = vld [vmem:[#allocation4 + $0x50] sm:$0xff]
  %v7926 = vld [vmem:[#allocation4 + $0x58] sm:$0xff]
  %v7927 = vld [vmem:[#allocation4 + $0x60] sm:$0xff]
  %v7928 = vld [vmem:[#allocation4 + $0x68] sm:$0xff]
  %v7929 = vld [vmem:[#allocation4 + $0x70] sm:$0xff]
  %v7930 = vld [vmem:[#allocation4 + $0x78] sm:$0xff]
  %v7931 = vld [vmem:[%s2] sm:$0xff]
  %v7933 = vsel %vm7461, %v7915, 0
  %v7936 = vsel %vm7461, %v7916, 0
  %v7939 = vsel %vm7461, %v7917, 0
  %v7942 = vsel %vm7461, %v7918, 0
  %v7945 = vsel %vm7461, %v7919, 0
  %v7948 = vsel %vm7461, %v7920, 0
  %v7951 = vsel %vm7461, %v7921, 0
  %v7954 = vsel %vm7461, %v7922, 0
  %v7957 = vsel %vm7461, %v7923, 0
  %v7960 = vsel %vm7461, %v7924, 0
  %v7963 = vsel %vm7461, %v7925, 0
  %v7966 = vsel %vm7461, %v7926, 0
  %v7969 = vsel %vm7461, %v7927, 0
  %v7972 = vsel %vm7461, %v7928, 0
  %v7975 = vsel %vm7461, %v7929, 0
  %v7978 = vsel %vm7461, %v7930, 0
  %7980 = vmatprep.subr.mxu0 0.0
  %7981 = vmatpush1.msra.mxu0 %v7931
  %7982 = vmatprep.subr.mxu0 0.0
  %7983 = vmatpush1.msra.mxu0 0.0
  %7984 = vmatprep.subr.mxu0 0.0
  %7985 = vmatpush1.msra.mxu0 0.0
  %7986 = vmatprep.subr.mxu0 0.0
  %7987 = vmatpush1.msra.mxu0 0.0
  %7988 = vmatprep.subr.mxu0 0.0
  %7989 = vmatpush1.msra.mxu0 0.0
  %7990 = vmatprep.subr.mxu0 0.0
  %7991 = vmatpush1.msra.mxu0 0.0
  %7992 = vmatprep.subr.mxu0 0.0
  %7993 = vmatpush1.msra.mxu0 0.0
  %7994 = vmatprep.subr.mxu0 0.0
  %7995 = vmatpush1.msra.mxu0 0.0
  %7996 = vmatprep.subr.mxu0 0.0
  %7997 = vmatpush1.msra.mxu0 0.0
  %7998 = vmatprep.subr.mxu0 0.0
  %7999 = vmatpush1.msra.mxu0 0.0
  %8000 = vmatprep.subr.mxu0 0.0
  %8001 = vmatpush1.msra.mxu0 0.0
  %8002 = vmatprep.subr.mxu0 0.0
  %8003 = vmatpush1.msra.mxu0 0.0
  %8004 = vmatprep.subr.mxu0 0.0
  %8005 = vmatpush1.msra.mxu0 0.0
  %8006 = vmatprep.subr.mxu0 0.0
  %8007 = vmatpush1.msra.mxu0 0.0
  %8008 = vmatprep.subr.mxu0 0.0
  %8009 = vmatpush1.msra.mxu0 0.0
  %8010 = vmatprep.subr.mxu0 0.0
  %8011 = vmatpush1.msra.mxu0 0.0
  %8012 = vmatprep.subr.mxu0 0.0
  %8013 = vmatpush1.msra.mxu0 0.0
  %8014 = vmatprep.subr.mxu0 0.0
  %8015 = vmatpush1.msra.mxu0 0.0
  %8016 = vmatprep.subr.mxu0 0.0
  %8017 = vmatpush1.msra.mxu0 0.0
  %8018 = vmatprep.subr.mxu0 0.0
  %8019 = vmatpush1.msra.mxu0 0.0
  %8020 = vmatprep.subr.mxu0 0.0
  %8021 = vmatpush1.msra.mxu0 0.0
  %8022 = vmatprep.subr.mxu0 0.0
  %8023 = vmatpush1.msra.mxu0 0.0
  %8024 = vmatprep.subr.mxu0 0.0
  %8025 = vmatpush1.msra.mxu0 0.0
  %8026 = vmatprep.subr.mxu0 0.0
  %8027 = vmatpush1.msra.mxu0 0.0
  %8028 = vmatprep.subr.mxu0 0.0
  %8029 = vmatpush1.msra.mxu0 0.0
  %8030 = vmatprep.subr.mxu0 0.0
  %8031 = vmatpush1.msra.mxu0 0.0
  %8032 = vmatprep.subr.mxu0 0.0
  %8033 = vmatpush1.msra.mxu0 0.0
  %8034 = vmatprep.subr.mxu0 0.0
  %8035 = vmatpush1.msra.mxu0 0.0
  %8036 = vmatprep.subr.mxu0 0.0
  %8037 = vmatpush1.msra.mxu0 0.0
  %8038 = vmatprep.subr.mxu0 0.0
  %8039 = vmatpush1.msra.mxu0 0.0
  %8040 = vmatprep.subr.mxu0 0.0
  %8041 = vmatpush1.msra.mxu0 0.0
  %8042 = vmatprep.subr.mxu0 0.0
  %8043 = vmatpush1.msra.mxu0 0.0
  %8044 = vmatprep.mubr.f32.mxu0 0.0
  %8045 = vmatmul.mubr.f32.gmra.mrb[0].mxu0 %v7933
  %v8046 = vpop.f32.mrb[0].mxu0
  %v8047 = vadd.f32 0.0, %v8046
  %v8048 = vpop.f32.mrb[0].mxu0
  %8049 = vmatprep.mubr.f32.mxu0 0.0
  %8050 = vmatmul.mubr.f32.gmra.mrb[0].mxu0 %v7936
  %v8051 = vpop.f32.mrb[0].mxu0
  %v8052 = vadd.f32 0.0, %v8051
  %v8053 = vpop.f32.mrb[0].mxu0
  %8054 = vmatprep.mubr.f32.mxu0 0.0
  %8055 = vmatmul.mubr.f32.gmra.mrb[0].mxu0 %v7939
  %v8056 = vpop.f32.mrb[0].mxu0
  %v8057 = vadd.f32 0.0, %v8056
  %v8058 = vpop.f32.mrb[0].mxu0
  %8059 = vmatprep.mubr.f32.mxu0 0.0
  %8060 = vmatmul.mubr.f32.gmra.mrb[0].mxu0 %v7942
  %v8061 = vpop.f32.mrb[0].mxu0
  %v8062 = vadd.f32 0.0, %v8061
  %v8063 = vpop.f32.mrb[0].mxu0
  %8064 = vmatprep.mubr.f32.mxu0 0.0
  %8065 = vmatmul.mubr.f32.gmra.mrb[0].mxu0 %v7945
  %v8066 = vpop.f32.mrb[0].mxu0
  %v8067 = vadd.f32 0.0, %v8066
  %v8068 = vpop.f32.mrb[0].mxu0
  %8069 = vmatprep.mubr.f32.mxu0 0.0
  %8070 = vmatmul.mubr.f32.gmra.mrb[0].mxu0 %v7948
  %v8071 = vpop.f32.mrb[0].mxu0
  %v8072 = vadd.f32 0.0, %v8071
  %v8073 = vpop.f32.mrb[0].mxu0
  %8074 = vmatprep.mubr.f32.mxu0 0.0
  %8075 = vmatmul.mubr.f32.gmra.mrb[0].mxu0 %v7951
  %v8076 = vpop.f32.mrb[0].mxu0
  %v8077 = vadd.f32 0.0, %v8076
  %v8078 = vpop.f32.mrb[0].mxu0
  %8079 = vmatprep.mubr.f32.mxu0 0.0
  %8080 = vmatmul.mubr.f32.gmra.mrb[0].mxu0 %v7954
  %v8081 = vpop.f32.mrb[0].mxu0
  %v8082 = vadd.f32 0.0, %v8081
  %v8083 = vpop.f32.mrb[0].mxu0
  %8084 = vmatprep.mubr.f32.mxu0 0.0
  %8085 = vmatmul.mubr.f32.gmra.mrb[0].mxu0 %v7957
  %v8086 = vpop.f32.mrb[0].mxu0
  %v8087 = vadd.f32 0.0, %v8086
  %v8088 = vpop.f32.mrb[0].mxu0
  %8089 = vmatprep.mubr.f32.mxu0 0.0
  %8090 = vmatmul.mubr.f32.gmra.mrb[0].mxu0 %v7960
  %v8091 = vpop.f32.mrb[0].mxu0
  %v8092 = vadd.f32 0.0, %v8091
  %v8093 = vpop.f32.mrb[0].mxu0
  %8094 = vmatprep.mubr.f32.mxu0 0.0
  %8095 = vmatmul.mubr.f32.gmra.mrb[0].mxu0 %v7963
  %v8096 = vpop.f32.mrb[0].mxu0
  %v8097 = vadd.f32 0.0, %v8096
  %v8098 = vpop.f32.mrb[0].mxu0
  %8099 = vmatprep.mubr.f32.mxu0 0.0
  %8100 = vmatmul.mubr.f32.gmra.mrb[0].mxu0 %v7966
  %v8101 = vpop.f32.mrb[0].mxu0
  %v8102 = vadd.f32 0.0, %v8101
  %v8103 = vpop.f32.mrb[0].mxu0
  %8104 = vmatprep.mubr.f32.mxu0 0.0
  %8105 = vmatmul.mubr.f32.gmra.mrb[0].mxu0 %v7969
  %v8106 = vpop.f32.mrb[0].mxu0
  %v8107 = vadd.f32 0.0, %v8106
  %v8108 = vpop.f32.mrb[0].mxu0
  %8109 = vmatprep.mubr.f32.mxu0 0.0
  %8110 = vmatmul.mubr.f32.gmra.mrb[0].mxu0 %v7972
  %v8111 = vpop.f32.mrb[0].mxu0
  %v8112 = vadd.f32 0.0, %v8111
  %v8113 = vpop.f32.mrb[0].mxu0
  %8114 = vmatprep.mubr.f32.mxu0 0.0
  %8115 = vmatmul.mubr.f32.gmra.mrb[0].mxu0 %v7975
  %v8116 = vpop.f32.mrb[0].mxu0
  %v8117 = vadd.f32 0.0, %v8116
  %v8118 = vpop.f32.mrb[0].mxu0
  %8119 = vmatprep.mubr.f32.mxu0 0.0
  %8120 = vmatmul.mubr.f32.gmra.mrb[0].mxu0 %v7978
  %v8121 = vpop.f32.mrb[0].mxu0
  %v8122 = vadd.f32 0.0, %v8121
  %v8123 = vpop.f32.mrb[0].mxu0
  %8124 = vdwg.mxu0
  %v8125 = vld [vmem:[%s6] sm:$0x3]
  %8126 = vmatprep.subr.mxu0 0.0
  %8127 = vmatpush1.msra.mxu0 %v8047
  %8128 = vmatprep.subr.mxu0 0.0
  %8129 = vmatpush1.msra.mxu0 %v8052
  %8130 = vmatprep.subr.mxu0 0.0
  %8131 = vmatpush1.msra.mxu0 %v8057
  %8132 = vmatprep.subr.mxu0 0.0
  %8133 = vmatpush1.msra.mxu0 %v8062
  %8134 = vmatprep.subr.mxu0 0.0
  %8135 = vmatpush1.msra.mxu0 %v8067
  %8136 = vmatprep.subr.mxu0 0.0
  %8137 = vmatpush1.msra.mxu0 %v8072
  %8138 = vmatprep.subr.mxu0 0.0
  %8139 = vmatpush1.msra.mxu0 %v8077
  %8140 = vmatprep.subr.mxu0 0.0
  %8141 = vmatpush1.msra.mxu0 %v8082
  %8142 = vmatprep.subr.mxu0 0.0
  %8143 = vmatpush1.msra.mxu0 %v8087
  %8144 = vmatprep.subr.mxu0 0.0
  %8145 = vmatpush1.msra.mxu0 %v8092
  %8146 = vmatprep.subr.mxu0 0.0
  %8147 = vmatpush1.msra.mxu0 %v8097
  %8148 = vmatprep.subr.mxu0 0.0
  %8149 = vmatpush1.msra.mxu0 %v8102
  %8150 = vmatprep.subr.mxu0 0.0
  %8151 = vmatpush1.msra.mxu0 %v8107
  %8152 = vmatprep.subr.mxu0 0.0
  %8153 = vmatpush1.msra.mxu0 %v8112
  %8154 = vmatprep.subr.mxu0 0.0
  %8155 = vmatpush1.msra.mxu0 %v8117
  %8156 = vmatprep.subr.mxu0 0.0
  %8157 = vmatpush1.msra.mxu0 %v8122
  %8158 = vmatprep.subr.mxu0 0.0
  %8159 = vmatpush1.msra.mxu0 0.0
  %8160 = vmatprep.subr.mxu0 0.0
  %8161 = vmatpush1.msra.mxu0 0.0
  %8162 = vmatprep.subr.mxu0 0.0
  %8163 = vmatpush1.msra.mxu0 0.0
  %8164 = vmatprep.subr.mxu0 0.0
  %8165 = vmatpush1.msra.mxu0 0.0
  %8166 = vmatprep.subr.mxu0 0.0
  %8167 = vmatpush1.msra.mxu0 0.0
  %8168 = vmatprep.subr.mxu0 0.0
  %8169 = vmatpush1.msra.mxu0 0.0
  %8170 = vmatprep.subr.mxu0 0.0
  %8171 = vmatpush1.msra.mxu0 0.0
  %8172 = vmatprep.subr.mxu0 0.0
  %8173 = vmatpush1.msra.mxu0 0.0
  %8174 = vmatprep.subr.mxu0 0.0
  %8175 = vmatpush1.msra.mxu0 0.0
  %8176 = vmatprep.subr.mxu0 0.0
  %8177 = vmatpush1.msra.mxu0 0.0
  %8178 = vmatprep.subr.mxu0 0.0
  %8179 = vmatpush1.msra.mxu0 0.0
  %8180 = vmatprep.subr.mxu0 0.0
  %8181 = vmatpush1.msra.mxu0 0.0
  %8182 = vmatprep.subr.mxu0 0.0
  %8183 = vmatpush1.msra.mxu0 0.0
  %8184 = vmatprep.subr.mxu0 0.0
  %8185 = vmatpush1.msra.mxu0 0.0
  %8186 = vmatprep.subr.mxu0 0.0
  %8187 = vmatpush1.msra.mxu0 0.0
  %8188 = vmatprep.subr.mxu0 0.0
  %8189 = vmatpush1.msra.mxu0 0.0
  %8190 = vmatprep.mubr.f32.mxu0 0.0
  %8191 = vmatmul.mubr.f32.gmra.mrb[0].mxu0 1.0
  %v8192 = vpop.f32.mrb[0].mxu0
  %v8193 = vadd.f32 0.0, %v8192
  %v8194 = vpop.f32.mrb[0].mxu0
  %8195 = vdwg.mxu0
  %v8196 = vmul.f32 %v8193, 0.0078125
  %v8197 = vlaneseq
  %v8198 = vshrl.u32 %v8197, 7
  %v8199 = vsub.s32 0, %v8198
  %v8200 = vrot.slane %v8196, %v8199
  %v8201 = vsub.f32 %v8047, %v8200
  %v8202 = vsub.f32 %v8052, %v8200
  %v8203 = vsub.f32 %v8057, %v8200
  %v8204 = vsub.f32 %v8062, %v8200
  %v8205 = vsub.f32 %v8067, %v8200
  %v8206 = vsub.f32 %v8072, %v8200
  %v8207 = vsub.f32 %v8077, %v8200
  %v8208 = vsub.f32 %v8082, %v8200
  %v8209 = vsub.f32 %v8087, %v8200
  %v8210 = vsub.f32 %v8092, %v8200
  %v8211 = vsub.f32 %v8097, %v8200
  %v8212 = vsub.f32 %v8102, %v8200
  %v8213 = vsub.f32 %v8107, %v8200
  %v8214 = vsub.f32 %v8112, %v8200
  %v8215 = vsub.f32 %v8117, %v8200
  %v8216 = vsub.f32 %v8122, %v8200
  %v8217 = vmul.f32 %v8201, %v8201
  %v8218 = vmul.f32 %v8202, %v8202
  %v8219 = vmul.f32 %v8203, %v8203
  %v8220 = vmul.f32 %v8204, %v8204
  %v8221 = vmul.f32 %v8205, %v8205
  %v8222 = vmul.f32 %v8206, %v8206
  %v8223 = vmul.f32 %v8207, %v8207
  %v8224 = vmul.f32 %v8208, %v8208
  %v8225 = vmul.f32 %v8209, %v8209
  %v8226 = vmul.f32 %v8210, %v8210
  %v8227 = vmul.f32 %v8211, %v8211
  %v8228 = vmul.f32 %v8212, %v8212
  %v8229 = vmul.f32 %v8213, %v8213
  %v8230 = vmul.f32 %v8214, %v8214
  %v8231 = vmul.f32 %v8215, %v8215
  %v8232 = vmul.f32 %v8216, %v8216
  %8233 = vmatprep.subr.mxu0 0.0
  %8234 = vmatpush1.msra.mxu0 %v8217
  %8235 = vmatprep.subr.mxu0 0.0
  %8236 = vmatpush1.msra.mxu0 %v8218
  %8237 = vmatprep.subr.mxu0 0.0
  %8238 = vmatpush1.msra.mxu0 %v8219
  %8239 = vmatprep.subr.mxu0 0.0
  %8240 = vmatpush1.msra.mxu0 %v8220
  %8241 = vmatprep.subr.mxu0 0.0
  %8242 = vmatpush1.msra.mxu0 %v8221
  %8243 = vmatprep.subr.mxu0 0.0
  %8244 = vmatpush1.msra.mxu0 %v8222
  %8245 = vmatprep.subr.mxu0 0.0
  %8246 = vmatpush1.msra.mxu0 %v8223
  %8247 = vmatprep.subr.mxu0 0.0
  %8248 = vmatpush1.msra.mxu0 %v8224
  %8249 = vmatprep.subr.mxu0 0.0
  %8250 = vmatpush1.msra.mxu0 %v8225
  %8251 = vmatprep.subr.mxu0 0.0
  %8252 = vmatpush1.msra.mxu0 %v8226
  %8253 = vmatprep.subr.mxu0 0.0
  %8254 = vmatpush1.msra.mxu0 %v8227
  %8255 = vmatprep.subr.mxu0 0.0
  %8256 = vmatpush1.msra.mxu0 %v8228
  %8257 = vmatprep.subr.mxu0 0.0
  %8258 = vmatpush1.msra.mxu0 %v8229
  %8259 = vmatprep.subr.mxu0 0.0
  %8260 = vmatpush1.msra.mxu0 %v8230
  %8261 = vmatprep.subr.mxu0 0.0
  %8262 = vmatpush1.msra.mxu0 %v8231
  %8263 = vmatprep.subr.mxu0 0.0
  %8264 = vmatpush1.msra.mxu0 %v8232
  %8265 = vmatprep.subr.mxu0 0.0
  %8266 = vmatpush1.msra.mxu0 0.0
  %8267 = vmatprep.subr.mxu0 0.0
  %8268 = vmatpush1.msra.mxu0 0.0
  %8269 = vmatprep.subr.mxu0 0.0
  %8270 = vmatpush1.msra.mxu0 0.0
  %8271 = vmatprep.subr.mxu0 0.0
  %8272 = vmatpush1.msra.mxu0 0.0
  %8273 = vmatprep.subr.mxu0 0.0
  %8274 = vmatpush1.msra.mxu0 0.0
  %8275 = vmatprep.subr.mxu0 0.0
  %8276 = vmatpush1.msra.mxu0 0.0
  %8277 = vmatprep.subr.mxu0 0.0
  %8278 = vmatpush1.msra.mxu0 0.0
  %8279 = vmatprep.subr.mxu0 0.0
  %8280 = vmatpush1.msra.mxu0 0.0
  %8281 = vmatprep.subr.mxu0 0.0
  %8282 = vmatpush1.msra.mxu0 0.0
  %8283 = vmatprep.subr.mxu0 0.0
  %8284 = vmatpush1.msra.mxu0 0.0
  %8285 = vmatprep.subr.mxu0 0.0
  %8286 = vmatpush1.msra.mxu0 0.0
  %8287 = vmatprep.subr.mxu0 0.0
  %8288 = vmatpush1.msra.mxu0 0.0
  %8289 = vmatprep.subr.mxu0 0.0
  %8290 = vmatpush1.msra.mxu0 0.0
  %8291 = vmatprep.subr.mxu0 0.0
  %8292 = vmatpush1.msra.mxu0 0.0
  %8293 = vmatprep.subr.mxu0 0.0
  %8294 = vmatpush1.msra.mxu0 0.0
  %8295 = vmatprep.subr.mxu0 0.0
  %8296 = vmatpush1.msra.mxu0 0.0
  %8297 = vmatprep.mubr.f32.mxu0 0.0
  %8298 = vmatmul.mubr.f32.gmra.mrb[0].mxu0 1.0
  %v8299 = vpop.f32.mrb[0].mxu0
  %v8300 = vadd.f32 0.0, %v8299
  %v8301 = vpop.f32.mrb[0].mxu0
  %8302 = vdwg.mxu0
  %v8303 = vmul.f32 %v8300, 0.0078125
  %v8304 = vadd.f32 %v8303, 1e-05
  %v8305 = vrsqrt.pop %v8304
  %v8306 = vmul.f32 %v8125, %v8305
  %v8307 = vlaneseq
  %v8308 = vshrl.u32 %v8307, 7
  %v8309 = vsub.s32 0, %v8308
  %v8310 = vrot.slane %v8306, %v8309
  %v8311 = vmul.f32 %v8201, %v8310
  %v8312 = vmul.f32 %v8202, %v8310
  %v8313 = vmul.f32 %v8203, %v8310
  %v8314 = vmul.f32 %v8204, %v8310
  %v8315 = vmul.f32 %v8205, %v8310
  %v8316 = vmul.f32 %v8206, %v8310
  %v8317 = vmul.f32 %v8207, %v8310
  %v8318 = vmul.f32 %v8208, %v8310
  %v8319 = vmul.f32 %v8209, %v8310
  %v8320 = vmul.f32 %v8210, %v8310
  %v8321 = vmul.f32 %v8211, %v8310
  %v8322 = vmul.f32 %v8212, %v8310
  %v8323 = vmul.f32 %v8213, %v8310
  %v8324 = vmul.f32 %v8214, %v8310
  %v8325 = vmul.f32 %v8215, %v8310
  %v8326 = vmul.f32 %v8216, %v8310
  %v8327 = vlaneseq
  %v8328 = vshrl.u32 %v8327, 7
  %v8329 = vsub.s32 1, %v8328
  %v8330 = vrot.slane %v8125, %v8329
  %v8331 = vadd.f32 %v8311, %v8330
  %v8332 = vadd.f32 %v8312, %v8330
  %v8333 = vadd.f32 %v8313, %v8330
  %v8334 = vadd.f32 %v8314, %v8330
  %v8335 = vadd.f32 %v8315, %v8330
  %v8336 = vadd.f32 %v8316, %v8330
  %v8337 = vadd.f32 %v8317, %v8330
  %v8338 = vadd.f32 %v8318, %v8330
  %v8339 = vadd.f32 %v8319, %v8330
  %v8340 = vadd.f32 %v8320, %v8330
  %v8341 = vadd.f32 %v8321, %v8330
  %v8342 = vadd.f32 %v8322, %v8330
  %v8343 = vadd.f32 %v8323, %v8330
  %v8344 = vadd.f32 %v8324, %v8330
  %v8345 = vadd.f32 %v8325, %v8330
  %v8346 = vadd.f32 %v8326, %v8330
  %v8347 = vmax.f32 %v8331, 0.0
  %v8348 = vmax.f32 %v8332, 0.0
  %v8349 = vmax.f32 %v8333, 0.0
  %v8350 = vmax.f32 %v8334, 0.0
  %v8351 = vmax.f32 %v8335, 0.0
  %v8352 = vmax.f32 %v8336, 0.0
  %v8353 = vmax.f32 %v8337, 0.0
  %v8354 = vmax.f32 %v8338, 0.0
  %v8355 = vmax.f32 %v8339, 0.0
  %v8356 = vmax.f32 %v8340, 0.0
  %v8357 = vmax.f32 %v8341, 0.0
  %v8358 = vmax.f32 %v8342, 0.0
  %v8359 = vmax.f32 %v8343, 0.0
  %v8360 = vmax.f32 %v8344, 0.0
  %v8361 = vmax.f32 %v8345, 0.0
  %v8362 = vmax.f32 %v8346, 0.0
  %8363 = vst.msk [vmem:[#allocation3] sm:$0xff] %vm7461, %v8347
  %8364 = vst.msk [vmem:[#allocation3 + $0x8] sm:$0xff] %vm7461, %v8348
  %8365 = vst.msk [vmem:[#allocation3 + $0x10] sm:$0xff] %vm7461, %v8349
  %8366 = vst.msk [vmem:[#allocation3 + $0x18] sm:$0xff] %vm7461, %v8350
  %8367 = vst.msk [vmem:[#allocation3 + $0x20] sm:$0xff] %vm7461, %v8351
  %8368 = vst.msk [vmem:[#allocation3 + $0x28] sm:$0xff] %vm7461, %v8352
  %8369 = vst.msk [vmem:[#allocation3 + $0x30] sm:$0xff] %vm7461, %v8353
  %8370 = vst.msk [vmem:[#allocation3 + $0x38] sm:$0xff] %vm7461, %v8354
  %8371 = vst.msk [vmem:[#allocation3 + $0x40] sm:$0xff] %vm7461, %v8355
  %8372 = vst.msk [vmem:[#allocation3 + $0x48] sm:$0xff] %vm7461, %v8356
  %8373 = vst.msk [vmem:[#allocation3 + $0x50] sm:$0xff] %vm7461, %v8357
  %8374 = vst.msk [vmem:[#allocation3 + $0x58] sm:$0xff] %vm7461, %v8358
  %8375 = vst.msk [vmem:[#allocation3 + $0x60] sm:$0xff] %vm7461, %v8359
  %8376 = vst.msk [vmem:[#allocation3 + $0x68] sm:$0xff] %vm7461, %v8360
  %8377 = vst.msk [vmem:[#allocation3 + $0x70] sm:$0xff] %vm7461, %v8361
  %8378 = vst.msk [vmem:[#allocation3 + $0x78] sm:$0xff] %vm7461, %v8362
  %v8380 = vsel %vm7461, %v8347, 0
  %v8383 = vsel %vm7461, %v8348, 0
  %v8386 = vsel %vm7461, %v8349, 0
  %v8389 = vsel %vm7461, %v8350, 0
  %v8392 = vsel %vm7461, %v8351, 0
  %v8395 = vsel %vm7461, %v8352, 0
  %v8398 = vsel %vm7461, %v8353, 0
  %v8401 = vsel %vm7461, %v8354, 0
  %8403 = vmatprep.subr.mxu0 0.0
  %8404 = vmatpush1.xpose.msra.mxu0 %v8380
  %8405 = vmatprep.subr.mxu0 0.0
  %8406 = vmatpush1.xpose.msra.mxu0 %v8383
  %8407 = vmatprep.subr.mxu0 0.0
  %8408 = vmatpush1.xpose.msra.mxu0 %v8386
  %8409 = vmatprep.subr.mxu0 0.0
  %8410 = vmatpush1.xpose.msra.mxu0 %v8389
  %8411 = vmatprep.subr.mxu0 0.0
  %8412 = vmatpush1.xpose.msra.mxu0 %v8392
  %8413 = vmatprep.subr.mxu0 0.0
  %8414 = vmatpush1.xpose.msra.mxu0 %v8395
  %8415 = vmatprep.subr.mxu0 0.0
  %8416 = vmatpush1.xpose.msra.mxu0 %v8398
  %8417 = vmatprep.subr.mxu0 0.0
  %8418 = vmatpush1.xpose.msra.mxu0 %v8401
  %8419 = vmatprep.subr.mxu0 0.0
  %8420 = vmatpush1.xpose.msra.mxu0 0.0
  %8421 = vmatprep.subr.mxu0 0.0
  %8422 = vmatpush1.xpose.msra.mxu0 0.0
  %8423 = vmatprep.subr.mxu0 0.0
  %8424 = vmatpush1.xpose.msra.mxu0 0.0
  %8425 = vmatprep.subr.mxu0 0.0
  %8426 = vmatpush1.xpose.msra.mxu0 0.0
  %8427 = vmatprep.subr.mxu0 0.0
  %8428 = vmatpush1.xpose.msra.mxu0 0.0
  %8429 = vmatprep.subr.mxu0 0.0
  %8430 = vmatpush1.xpose.msra.mxu0 0.0
  %8431 = vmatprep.subr.mxu0 0.0
  %8432 = vmatpush1.xpose.msra.mxu0 0.0
  %8433 = vmatprep.subr.mxu0 0.0
  %8434 = vmatpush1.xpose.msra.mxu0 0.0
  %8435 = vmatprep.subr.mxu0 0.0
  %8436 = vmatpush1.xpose.msra.mxu0 0.0
  %8437 = vmatprep.subr.mxu0 0.0
  %8438 = vmatpush1.xpose.msra.mxu0 0.0
  %8439 = vmatprep.subr.mxu0 0.0
  %8440 = vmatpush1.xpose.msra.mxu0 0.0
  %8441 = vmatprep.subr.mxu0 0.0
  %8442 = vmatpush1.xpose.msra.mxu0 0.0
  %8443 = vmatprep.subr.mxu0 0.0
  %8444 = vmatpush1.xpose.msra.mxu0 0.0
  %8445 = vmatprep.subr.mxu0 0.0
  %8446 = vmatpush1.xpose.msra.mxu0 0.0
  %8447 = vmatprep.subr.mxu0 0.0
  %8448 = vmatpush1.xpose.msra.mxu0 0.0
  %8449 = vmatprep.subr.mxu0 0.0
  %8450 = vmatpush1.xpose.msra.mxu0 0.0
  %8451 = vmatprep.subr.mxu0 0.0
  %8452 = vmatpush1.xpose.msra.mxu0 0.0
  %8453 = vmatprep.subr.mxu0 0.0
  %8454 = vmatpush1.xpose.msra.mxu0 0.0
  %8455 = vmatprep.subr.mxu0 0.0
  %8456 = vmatpush1.xpose.msra.mxu0 0.0
  %8457 = vmatprep.subr.mxu0 0.0
  %8458 = vmatpush1.xpose.msra.mxu0 0.0
  %8459 = vmatprep.subr.mxu0 0.0
  %8460 = vmatpush1.xpose.msra.mxu0 0.0
  %8461 = vmatprep.subr.mxu0 0.0
  %8462 = vmatpush1.xpose.msra.mxu0 0.0
  %8463 = vmatprep.subr.mxu0 0.0
  %8464 = vmatpush1.xpose.msra.mxu0 0.0
  %8465 = vmatprep.subr.mxu0 0.0
  %8466 = vmatpush1.xpose.msra.mxu0 0.0
  %8467 = vmatprep.mubr.f32.mxu0 0.0
  %8468 = vmatmul.mubr.f32.gmra.mrb[0].mxu0 %v7527
  %v8469 = vpop.f32.mrb[0].mxu0
  %v8470 = vadd.f32 0.0, %v8469
  %v8471 = vpop.f32.mrb[0].mxu0
  %8472 = vdwg.mxu0
  %vm8473 = vcmask 523264
  %8474 = vst.msk [vmem:[%s10] sm:$0xff] %vm8473, %v8470
  %v8476 = vsel %vm7461, %v8355, 0
  %v8479 = vsel %vm7461, %v8356, 0
  %v8482 = vsel %vm7461, %v8357, 0
  %v8485 = vsel %vm7461, %v8358, 0
  %v8488 = vsel %vm7461, %v8359, 0
  %v8491 = vsel %vm7461, %v8360, 0
  %v8494 = vsel %vm7461, %v8361, 0
  %v8497 = vsel %vm7461, %v8362, 0
  %8499 = vmatprep.subr.mxu0 0.0
  %8500 = vmatpush1.xpose.msra.mxu0 %v8476
  %8501 = vmatprep.subr.mxu0 0.0
  %8502 = vmatpush1.xpose.msra.mxu0 %v8479
  %8503 = vmatprep.subr.mxu0 0.0
  %8504 = vmatpush1.xpose.msra.mxu0 %v8482
  %8505 = vmatprep.subr.mxu0 0.0
  %8506 = vmatpush1.xpose.msra.mxu0 %v8485
  %8507 = vmatprep.subr.mxu0 0.0
  %8508 = vmatpush1.xpose.msra.mxu0 %v8488
  %8509 = vmatprep.subr.mxu0 0.0
  %8510 = vmatpush1.xpose.msra.mxu0 %v8491
  %8511 = vmatprep.subr.mxu0 0.0
  %8512 = vmatpush1.xpose.msra.mxu0 %v8494
  %8513 = vmatprep.subr.mxu0 0.0
  %8514 = vmatpush1.xpose.msra.mxu0 %v8497
  %8515 = vmatprep.subr.mxu0 0.0
  %8516 = vmatpush1.xpose.msra.mxu0 0.0
  %8517 = vmatprep.subr.mxu0 0.0
  %8518 = vmatpush1.xpose.msra.mxu0 0.0
  %8519 = vmatprep.subr.mxu0 0.0
  %8520 = vmatpush1.xpose.msra.mxu0 0.0
  %8521 = vmatprep.subr.mxu0 0.0
  %8522 = vmatpush1.xpose.msra.mxu0 0.0
  %8523 = vmatprep.subr.mxu0 0.0
  %8524 = vmatpush1.xpose.msra.mxu0 0.0
  %8525 = vmatprep.subr.mxu0 0.0
  %8526 = vmatpush1.xpose.msra.mxu0 0.0
  %8527 = vmatprep.subr.mxu0 0.0
  %8528 = vmatpush1.xpose.msra.mxu0 0.0
  %8529 = vmatprep.subr.mxu0 0.0
  %8530 = vmatpush1.xpose.msra.mxu0 0.0
  %8531 = vmatprep.subr.mxu0 0.0
  %8532 = vmatpush1.xpose.msra.mxu0 0.0
  %8533 = vmatprep.subr.mxu0 0.0
  %8534 = vmatpush1.xpose.msra.mxu0 0.0
  %8535 = vmatprep.subr.mxu0 0.0
  %8536 = vmatpush1.xpose.msra.mxu0 0.0
  %8537 = vmatprep.subr.mxu0 0.0
  %8538 = vmatpush1.xpose.msra.mxu0 0.0
  %8539 = vmatprep.subr.mxu0 0.0
  %8540 = vmatpush1.xpose.msra.mxu0 0.0
  %8541 = vmatprep.subr.mxu0 0.0
  %8542 = vmatpush1.xpose.msra.mxu0 0.0
  %8543 = vmatprep.subr.mxu0 0.0
  %8544 = vmatpush1.xpose.msra.mxu0 0.0
  %8545 = vmatprep.subr.mxu0 0.0
  %8546 = vmatpush1.xpose.msra.mxu0 0.0
  %8547 = vmatprep.subr.mxu0 0.0
  %8548 = vmatpush1.xpose.msra.mxu0 0.0
  %8549 = vmatprep.subr.mxu0 0.0
  %8550 = vmatpush1.xpose.msra.mxu0 0.0
  %8551 = vmatprep.subr.mxu0 0.0
  %8552 = vmatpush1.xpose.msra.mxu0 0.0
  %8553 = vmatprep.subr.mxu0 0.0
  %8554 = vmatpush1.xpose.msra.mxu0 0.0
  %8555 = vmatprep.subr.mxu0 0.0
  %8556 = vmatpush1.xpose.msra.mxu0 0.0
  %8557 = vmatprep.subr.mxu0 0.0
  %8558 = vmatpush1.xpose.msra.mxu0 0.0
  %8559 = vmatprep.subr.mxu0 0.0
  %8560 = vmatpush1.xpose.msra.mxu0 0.0
  %8561 = vmatprep.subr.mxu0 0.0
  %8562 = vmatpush1.xpose.msra.mxu0 0.0
  %8563 = vmatprep.mubr.f32.mxu0 0.0
  %8564 = vmatmul.mubr.f32.gmra.mrb[0].mxu0 %v7527
  %v8565 = vpop.f32.mrb[0].mxu0
  %v8566 = vadd.f32 0.0, %v8565
  %v8567 = vpop.f32.mrb[0].mxu0
  %8568 = vdwg.mxu0
  %s8569 = scalar_lea.vmem %s10, 8
  %8570 = vst.msk [vmem:[%s8569] sm:$0xff] %vm8473, %v8566
  %v8571 = vld [vmem:[#allocation3] ss:$2 sm:$0xf]
  %vm8572 = vcmask 60416
  %8573 = vst.msk [vmem:[#allocation4] sm:$0xf] %vm8572, %v8571
  %s8574 = scalar_lea.vmem [#allocation3], 16
  %v8575 = vld [vmem:[%s8574] ss:$2 sm:$0xf]
  %8576 = vst.msk [vmem:[#allocation4 + $0x4] sm:$0xf] %vm8572, %v8575
  %s8577 = scalar_lea.vmem [#allocation3], 32
  %v8578 = vld [vmem:[%s8577] ss:$2 sm:$0xf]
  %8579 = vst.msk [vmem:[#allocation4 + $0x8] sm:$0xf] %vm8572, %v8578
  %s8580 = scalar_lea.vmem [#allocation3], 48
  %v8581 = vld [vmem:[%s8580] ss:$2 sm:$0xf]
  %8582 = vst.msk [vmem:[#allocation4 + $0xc] sm:$0xf] %vm8572, %v8581
  %s8583 = scalar_lea.vmem [#allocation3], 64
  %v8584 = vld [vmem:[%s8583] ss:$2 sm:$0xf]
  %8585 = vst.msk [vmem:[#allocation4 + $0x10] sm:$0xf] %vm8572, %v8584
  %s8586 = scalar_lea.vmem [#allocation3], 80
  %v8587 = vld [vmem:[%s8586] ss:$2 sm:$0xf]
  %8588 = vst.msk [vmem:[#allocation4 + $0x14] sm:$0xf] %vm8572, %v8587
  %s8589 = scalar_lea.vmem [#allocation3], 96
  %v8590 = vld [vmem:[%s8589] ss:$2 sm:$0xf]
  %8591 = vst.msk [vmem:[#allocation4 + $0x18] sm:$0xf] %vm8572, %v8590
  %s8592 = scalar_lea.vmem [#allocation3], 112
  %v8593 = vld [vmem:[%s8592] ss:$2 sm:$0xf]
  %8594 = vst.msk [vmem:[#allocation4 + $0x1c] sm:$0xf] %vm8572, %v8593
  %v8595 = vld [vmem:[#allocation4] sm:$0xff]
  %v8596 = vld [vmem:[#allocation4 + $0x8] sm:$0xff]
  %v8597 = vld [vmem:[#allocation4 + $0x10] sm:$0xff]
  %v8598 = vld [vmem:[#allocation4 + $0x18] sm:$0xff]
  %v8599 = vld [vmem:[%s3] sm:$0xff]
  %v8601 = vsel %vm7461, %v8595, 0
  %v8604 = vsel %vm7461, %v8596, 0
  %v8607 = vsel %vm7461, %v8597, 0
  %v8610 = vsel %vm7461, %v8598, 0
  %8612 = vmatprep.subr.mxu0 0.0
  %8613 = vmatpush1.msra.mxu0 %v8599
  %8614 = vmatprep.subr.mxu0 0.0
  %8615 = vmatpush1.msra.mxu0 0.0
  %8616 = vmatprep.subr.mxu0 0.0
  %8617 = vmatpush1.msra.mxu0 0.0
  %8618 = vmatprep.subr.mxu0 0.0
  %8619 = vmatpush1.msra.mxu0 0.0
  %8620 = vmatprep.subr.mxu0 0.0
  %8621 = vmatpush1.msra.mxu0 0.0
  %8622 = vmatprep.subr.mxu0 0.0
  %8623 = vmatpush1.msra.mxu0 0.0
  %8624 = vmatprep.subr.mxu0 0.0
  %8625 = vmatpush1.msra.mxu0 0.0
  %8626 = vmatprep.subr.mxu0 0.0
  %8627 = vmatpush1.msra.mxu0 0.0
  %8628 = vmatprep.subr.mxu0 0.0
  %8629 = vmatpush1.msra.mxu0 0.0
  %8630 = vmatprep.subr.mxu0 0.0
  %8631 = vmatpush1.msra.mxu0 0.0
  %8632 = vmatprep.subr.mxu0 0.0
  %8633 = vmatpush1.msra.mxu0 0.0
  %8634 = vmatprep.subr.mxu0 0.0
  %8635 = vmatpush1.msra.mxu0 0.0
  %8636 = vmatprep.subr.mxu0 0.0
  %8637 = vmatpush1.msra.mxu0 0.0
  %8638 = vmatprep.subr.mxu0 0.0
  %8639 = vmatpush1.msra.mxu0 0.0
  %8640 = vmatprep.subr.mxu0 0.0
  %8641 = vmatpush1.msra.mxu0 0.0
  %8642 = vmatprep.subr.mxu0 0.0
  %8643 = vmatpush1.msra.mxu0 0.0
  %8644 = vmatprep.subr.mxu0 0.0
  %8645 = vmatpush1.msra.mxu0 0.0
  %8646 = vmatprep.subr.mxu0 0.0
  %8647 = vmatpush1.msra.mxu0 0.0
  %8648 = vmatprep.subr.mxu0 0.0
  %8649 = vmatpush1.msra.mxu0 0.0
  %8650 = vmatprep.subr.mxu0 0.0
  %8651 = vmatpush1.msra.mxu0 0.0
  %8652 = vmatprep.subr.mxu0 0.0
  %8653 = vmatpush1.msra.mxu0 0.0
  %8654 = vmatprep.subr.mxu0 0.0
  %8655 = vmatpush1.msra.mxu0 0.0
  %8656 = vmatprep.subr.mxu0 0.0
  %8657 = vmatpush1.msra.mxu0 0.0
  %8658 = vmatprep.subr.mxu0 0.0
  %8659 = vmatpush1.msra.mxu0 0.0
  %8660 = vmatprep.subr.mxu0 0.0
  %8661 = vmatpush1.msra.mxu0 0.0
  %8662 = vmatprep.subr.mxu0 0.0
  %8663 = vmatpush1.msra.mxu0 0.0
  %8664 = vmatprep.subr.mxu0 0.0
  %8665 = vmatpush1.msra.mxu0 0.0
  %8666 = vmatprep.subr.mxu0 0.0
  %8667 = vmatpush1.msra.mxu0 0.0
  %8668 = vmatprep.subr.mxu0 0.0
  %8669 = vmatpush1.msra.mxu0 0.0
  %8670 = vmatprep.subr.mxu0 0.0
  %8671 = vmatpush1.msra.mxu0 0.0
  %8672 = vmatprep.subr.mxu0 0.0
  %8673 = vmatpush1.msra.mxu0 0.0
  %8674 = vmatprep.subr.mxu0 0.0
  %8675 = vmatpush1.msra.mxu0 0.0
  %8676 = vmatprep.mubr.f32.mxu0 0.0
  %8677 = vmatmul.mubr.f32.gmra.mrb[0].mxu0 %v8601
  %v8678 = vpop.f32.mrb[0].mxu0
  %v8679 = vadd.f32 0.0, %v8678
  %v8680 = vpop.f32.mrb[0].mxu0
  %8681 = vmatprep.mubr.f32.mxu0 0.0
  %8682 = vmatmul.mubr.f32.gmra.mrb[0].mxu0 %v8604
  %v8683 = vpop.f32.mrb[0].mxu0
  %v8684 = vadd.f32 0.0, %v8683
  %v8685 = vpop.f32.mrb[0].mxu0
  %8686 = vmatprep.mubr.f32.mxu0 0.0
  %8687 = vmatmul.mubr.f32.gmra.mrb[0].mxu0 %v8607
  %v8688 = vpop.f32.mrb[0].mxu0
  %v8689 = vadd.f32 0.0, %v8688
  %v8690 = vpop.f32.mrb[0].mxu0
  %8691 = vmatprep.mubr.f32.mxu0 0.0
  %8692 = vmatmul.mubr.f32.gmra.mrb[0].mxu0 %v8610
  %v8693 = vpop.f32.mrb[0].mxu0
  %v8694 = vadd.f32 0.0, %v8693
  %v8695 = vpop.f32.mrb[0].mxu0
  %8696 = vdwg.mxu0
  %v8697 = vld [vmem:[%s7] sm:$0x3]
  %vm8698 = vcmask 261120
  %v8700 = vsel %vm8698, 1.0, 0
  %8702 = vmatprep.subr.mxu0 0.0
  %8703 = vmatpush1.msra.mxu0 %v8679
  %8704 = vmatprep.subr.mxu0 0.0
  %8705 = vmatpush1.msra.mxu0 %v8684
  %8706 = vmatprep.subr.mxu0 0.0
  %8707 = vmatpush1.msra.mxu0 %v8689
  %8708 = vmatprep.subr.mxu0 0.0
  %8709 = vmatpush1.msra.mxu0 %v8694
  %8710 = vmatprep.subr.mxu0 0.0
  %8711 = vmatpush1.msra.mxu0 0.0
  %8712 = vmatprep.subr.mxu0 0.0
  %8713 = vmatpush1.msra.mxu0 0.0
  %8714 = vmatprep.subr.mxu0 0.0
  %8715 = vmatpush1.msra.mxu0 0.0
  %8716 = vmatprep.subr.mxu0 0.0
  %8717 = vmatpush1.msra.mxu0 0.0
  %8718 = vmatprep.subr.mxu0 0.0
  %8719 = vmatpush1.msra.mxu0 0.0
  %8720 = vmatprep.subr.mxu0 0.0
  %8721 = vmatpush1.msra.mxu0 0.0
  %8722 = vmatprep.subr.mxu0 0.0
  %8723 = vmatpush1.msra.mxu0 0.0
  %8724 = vmatprep.subr.mxu0 0.0
  %8725 = vmatpush1.msra.mxu0 0.0
  %8726 = vmatprep.subr.mxu0 0.0
  %8727 = vmatpush1.msra.mxu0 0.0
  %8728 = vmatprep.subr.mxu0 0.0
  %8729 = vmatpush1.msra.mxu0 0.0
  %8730 = vmatprep.subr.mxu0 0.0
  %8731 = vmatpush1.msra.mxu0 0.0
  %8732 = vmatprep.subr.mxu0 0.0
  %8733 = vmatpush1.msra.mxu0 0.0
  %8734 = vmatprep.subr.mxu0 0.0
  %8735 = vmatpush1.msra.mxu0 0.0
  %8736 = vmatprep.subr.mxu0 0.0
  %8737 = vmatpush1.msra.mxu0 0.0
  %8738 = vmatprep.subr.mxu0 0.0
  %8739 = vmatpush1.msra.mxu0 0.0
  %8740 = vmatprep.subr.mxu0 0.0
  %8741 = vmatpush1.msra.mxu0 0.0
  %8742 = vmatprep.subr.mxu0 0.0
  %8743 = vmatpush1.msra.mxu0 0.0
  %8744 = vmatprep.subr.mxu0 0.0
  %8745 = vmatpush1.msra.mxu0 0.0
  %8746 = vmatprep.subr.mxu0 0.0
  %8747 = vmatpush1.msra.mxu0 0.0
  %8748 = vmatprep.subr.mxu0 0.0
  %8749 = vmatpush1.msra.mxu0 0.0
  %8750 = vmatprep.subr.mxu0 0.0
  %8751 = vmatpush1.msra.mxu0 0.0
  %8752 = vmatprep.subr.mxu0 0.0
  %8753 = vmatpush1.msra.mxu0 0.0
  %8754 = vmatprep.subr.mxu0 0.0
  %8755 = vmatpush1.msra.mxu0 0.0
  %8756 = vmatprep.subr.mxu0 0.0
  %8757 = vmatpush1.msra.mxu0 0.0
  %8758 = vmatprep.subr.mxu0 0.0
  %8759 = vmatpush1.msra.mxu0 0.0
  %8760 = vmatprep.subr.mxu0 0.0
  %8761 = vmatpush1.msra.mxu0 0.0
  %8762 = vmatprep.subr.mxu0 0.0
  %8763 = vmatpush1.msra.mxu0 0.0
  %8764 = vmatprep.subr.mxu0 0.0
  %8765 = vmatpush1.msra.mxu0 0.0
  %8766 = vmatprep.mubr.f32.mxu0 0.0
  %8767 = vmatmul.mubr.f32.gmra.mrb[0].mxu0 %v8700
  %v8768 = vpop.f32.mrb[0].mxu0
  %v8769 = vadd.f32 0.0, %v8768
  %v8770 = vpop.f32.mrb[0].mxu0
  %8771 = vdwg.mxu0
  %v8772 = vmul.f32 %v8769, 0.03125
  %v8773 = vlaneseq
  %v8774 = vshrl.u32 %v8773, 7
  %v8775 = vsub.s32 0, %v8774
  %v8776 = vrot.slane %v8772, %v8775
  %v8777 = vsub.f32 %v8679, %v8776
  %v8778 = vsub.f32 %v8684, %v8776
  %v8779 = vsub.f32 %v8689, %v8776
  %v8780 = vsub.f32 %v8694, %v8776
  %v8781 = vmul.f32 %v8777, %v8777
  %v8782 = vmul.f32 %v8778, %v8778
  %v8783 = vmul.f32 %v8779, %v8779
  %v8784 = vmul.f32 %v8780, %v8780
  %8785 = vmatprep.subr.mxu0 0.0
  %8786 = vmatpush1.msra.mxu0 %v8781
  %8787 = vmatprep.subr.mxu0 0.0
  %8788 = vmatpush1.msra.mxu0 %v8782
  %8789 = vmatprep.subr.mxu0 0.0
  %8790 = vmatpush1.msra.mxu0 %v8783
  %8791 = vmatprep.subr.mxu0 0.0
  %8792 = vmatpush1.msra.mxu0 %v8784
  %8793 = vmatprep.subr.mxu0 0.0
  %8794 = vmatpush1.msra.mxu0 0.0
  %8795 = vmatprep.subr.mxu0 0.0
  %8796 = vmatpush1.msra.mxu0 0.0
  %8797 = vmatprep.subr.mxu0 0.0
  %8798 = vmatpush1.msra.mxu0 0.0
  %8799 = vmatprep.subr.mxu0 0.0
  %8800 = vmatpush1.msra.mxu0 0.0
  %8801 = vmatprep.subr.mxu0 0.0
  %8802 = vmatpush1.msra.mxu0 0.0
  %8803 = vmatprep.subr.mxu0 0.0
  %8804 = vmatpush1.msra.mxu0 0.0
  %8805 = vmatprep.subr.mxu0 0.0
  %8806 = vmatpush1.msra.mxu0 0.0
  %8807 = vmatprep.subr.mxu0 0.0
  %8808 = vmatpush1.msra.mxu0 0.0
  %8809 = vmatprep.subr.mxu0 0.0
  %8810 = vmatpush1.msra.mxu0 0.0
  %8811 = vmatprep.subr.mxu0 0.0
  %8812 = vmatpush1.msra.mxu0 0.0
  %8813 = vmatprep.subr.mxu0 0.0
  %8814 = vmatpush1.msra.mxu0 0.0
  %8815 = vmatprep.subr.mxu0 0.0
  %8816 = vmatpush1.msra.mxu0 0.0
  %8817 = vmatprep.subr.mxu0 0.0
  %8818 = vmatpush1.msra.mxu0 0.0
  %8819 = vmatprep.subr.mxu0 0.0
  %8820 = vmatpush1.msra.mxu0 0.0
  %8821 = vmatprep.subr.mxu0 0.0
  %8822 = vmatpush1.msra.mxu0 0.0
  %8823 = vmatprep.subr.mxu0 0.0
  %8824 = vmatpush1.msra.mxu0 0.0
  %8825 = vmatprep.subr.mxu0 0.0
  %8826 = vmatpush1.msra.mxu0 0.0
  %8827 = vmatprep.subr.mxu0 0.0
  %8828 = vmatpush1.msra.mxu0 0.0
  %8829 = vmatprep.subr.mxu0 0.0
  %8830 = vmatpush1.msra.mxu0 0.0
  %8831 = vmatprep.subr.mxu0 0.0
  %8832 = vmatpush1.msra.mxu0 0.0
  %8833 = vmatprep.subr.mxu0 0.0
  %8834 = vmatpush1.msra.mxu0 0.0
  %8835 = vmatprep.subr.mxu0 0.0
  %8836 = vmatpush1.msra.mxu0 0.0
  %8837 = vmatprep.subr.mxu0 0.0
  %8838 = vmatpush1.msra.mxu0 0.0
  %8839 = vmatprep.subr.mxu0 0.0
  %8840 = vmatpush1.msra.mxu0 0.0
  %8841 = vmatprep.subr.mxu0 0.0
  %8842 = vmatpush1.msra.mxu0 0.0
  %8843 = vmatprep.subr.mxu0 0.0
  %8844 = vmatpush1.msra.mxu0 0.0
  %8845 = vmatprep.subr.mxu0 0.0
  %8846 = vmatpush1.msra.mxu0 0.0
  %8847 = vmatprep.subr.mxu0 0.0
  %8848 = vmatpush1.msra.mxu0 0.0
  %8849 = vmatprep.mubr.f32.mxu0 0.0
  %8850 = vmatmul.mubr.f32.gmra.mrb[0].mxu0 %v8700
  %v8851 = vpop.f32.mrb[0].mxu0
  %v8852 = vadd.f32 0.0, %v8851
  %v8853 = vpop.f32.mrb[0].mxu0
  %8854 = vdwg.mxu0
  %v8855 = vmul.f32 %v8852, 0.03125
  %v8856 = vadd.f32 %v8855, 1e-05
  %v8857 = vrsqrt.pop %v8856
  %v8858 = vmul.f32 %v8697, %v8857
  %v8859 = vlaneseq
  %v8860 = vshrl.u32 %v8859, 7
  %v8861 = vsub.s32 0, %v8860
  %v8862 = vrot.slane %v8858, %v8861
  %v8863 = vmul.f32 %v8777, %v8862
  %v8864 = vmul.f32 %v8778, %v8862
  %v8865 = vmul.f32 %v8779, %v8862
  %v8866 = vmul.f32 %v8780, %v8862
  %v8867 = vlaneseq
  %v8868 = vshrl.u32 %v8867, 7
  %v8869 = vsub.s32 1, %v8868
  %v8870 = vrot.slane %v8697, %v8869
  %v8871 = vadd.f32 %v8863, %v8870
  %v8872 = vadd.f32 %v8864, %v8870
  %v8873 = vadd.f32 %v8865, %v8870
  %v8874 = vadd.f32 %v8866, %v8870
  %v8875 = vmax.f32 %v8871, 0.0
  %v8876 = vmax.f32 %v8872, 0.0
  %v8877 = vmax.f32 %v8873, 0.0
  %v8878 = vmax.f32 %v8874, 0.0
  %v8880 = vsel %vm7461, %v8875, 0
  %v8883 = vsel %vm7461, %v8876, 0
  %8885 = vmatprep.subr.mxu0 0.0
  %8886 = vmatpush1.xpose.msra.mxu0 %v8880
  %8887 = vmatprep.subr.mxu0 0.0
  %8888 = vmatpush1.xpose.msra.mxu0 %v8883
  %8889 = vmatprep.subr.mxu0 0.0
  %8890 = vmatpush1.xpose.msra.mxu0 0.0
  %8891 = vmatprep.subr.mxu0 0.0
  %8892 = vmatpush1.xpose.msra.mxu0 0.0
  %8893 = vmatprep.subr.mxu0 0.0
  %8894 = vmatpush1.xpose.msra.mxu0 0.0
  %8895 = vmatprep.subr.mxu0 0.0
  %8896 = vmatpush1.xpose.msra.mxu0 0.0
  %8897 = vmatprep.subr.mxu0 0.0
  %8898 = vmatpush1.xpose.msra.mxu0 0.0
  %8899 = vmatprep.subr.mxu0 0.0
  %8900 = vmatpush1.xpose.msra.mxu0 0.0
  %8901 = vmatprep.subr.mxu0 0.0
  %8902 = vmatpush1.xpose.msra.mxu0 0.0
  %8903 = vmatprep.subr.mxu0 0.0
  %8904 = vmatpush1.xpose.msra.mxu0 0.0
  %8905 = vmatprep.subr.mxu0 0.0
  %8906 = vmatpush1.xpose.msra.mxu0 0.0
  %8907 = vmatprep.subr.mxu0 0.0
  %8908 = vmatpush1.xpose.msra.mxu0 0.0
  %8909 = vmatprep.subr.mxu0 0.0
  %8910 = vmatpush1.xpose.msra.mxu0 0.0
  %8911 = vmatprep.subr.mxu0 0.0
  %8912 = vmatpush1.xpose.msra.mxu0 0.0
  %8913 = vmatprep.subr.mxu0 0.0
  %8914 = vmatpush1.xpose.msra.mxu0 0.0
  %8915 = vmatprep.subr.mxu0 0.0
  %8916 = vmatpush1.xpose.msra.mxu0 0.0
  %8917 = vmatprep.subr.mxu0 0.0
  %8918 = vmatpush1.xpose.msra.mxu0 0.0
  %8919 = vmatprep.subr.mxu0 0.0
  %8920 = vmatpush1.xpose.msra.mxu0 0.0
  %8921 = vmatprep.subr.mxu0 0.0
  %8922 = vmatpush1.xpose.msra.mxu0 0.0
  %8923 = vmatprep.subr.mxu0 0.0
  %8924 = vmatpush1.xpose.msra.mxu0 0.0
  %8925 = vmatprep.subr.mxu0 0.0
  %8926 = vmatpush1.xpose.msra.mxu0 0.0
  %8927 = vmatprep.subr.mxu0 0.0
  %8928 = vmatpush1.xpose.msra.mxu0 0.0
  %8929 = vmatprep.subr.mxu0 0.0
  %8930 = vmatpush1.xpose.msra.mxu0 0.0
  %8931 = vmatprep.subr.mxu0 0.0
  %8932 = vmatpush1.xpose.msra.mxu0 0.0
  %8933 = vmatprep.subr.mxu0 0.0
  %8934 = vmatpush1.xpose.msra.mxu0 0.0
  %8935 = vmatprep.subr.mxu0 0.0
  %8936 = vmatpush1.xpose.msra.mxu0 0.0
  %8937 = vmatprep.subr.mxu0 0.0
  %8938 = vmatpush1.xpose.msra.mxu0 0.0
  %8939 = vmatprep.subr.mxu0 0.0
  %8940 = vmatpush1.xpose.msra.mxu0 0.0
  %8941 = vmatprep.subr.mxu0 0.0
  %8942 = vmatpush1.xpose.msra.mxu0 0.0
  %8943 = vmatprep.subr.mxu0 0.0
  %8944 = vmatpush1.xpose.msra.mxu0 0.0
  %8945 = vmatprep.subr.mxu0 0.0
  %8946 = vmatpush1.xpose.msra.mxu0 0.0
  %8947 = vmatprep.subr.mxu0 0.0
  %8948 = vmatpush1.xpose.msra.mxu0 0.0
  %8949 = vmatprep.mubr.f32.mxu0 0.0
  %8950 = vmatmul.mubr.f32.gmra.mrb[0].mxu0 %v7527
  %v8951 = vpop.f32.mrb[0].mxu0
  %v8952 = vadd.f32 0.0, %v8951
  %v8953 = vpop.f32.mrb[0].mxu0
  %8954 = vdwg.mxu0
  %vm8955 = vcmask 130048
  %8956 = vst.msk [vmem:[%s11] sm:$0xff] %vm8955, %v8952
  %v8958 = vsel %vm7461, %v8877, 0
  %v8961 = vsel %vm7461, %v8878, 0
  %8963 = vmatprep.subr.mxu0 0.0
  %8964 = vmatpush1.xpose.msra.mxu0 %v8958
  %8965 = vmatprep.subr.mxu0 0.0
  %8966 = vmatpush1.xpose.msra.mxu0 %v8961
  %8967 = vmatprep.subr.mxu0 0.0
  %8968 = vmatpush1.xpose.msra.mxu0 0.0
  %8969 = vmatprep.subr.mxu0 0.0
  %8970 = vmatpush1.xpose.msra.mxu0 0.0
  %8971 = vmatprep.subr.mxu0 0.0
  %8972 = vmatpush1.xpose.msra.mxu0 0.0
  %8973 = vmatprep.subr.mxu0 0.0
  %8974 = vmatpush1.xpose.msra.mxu0 0.0
  %8975 = vmatprep.subr.mxu0 0.0
  %8976 = vmatpush1.xpose.msra.mxu0 0.0
  %8977 = vmatprep.subr.mxu0 0.0
  %8978 = vmatpush1.xpose.msra.mxu0 0.0
  %8979 = vmatprep.subr.mxu0 0.0
  %8980 = vmatpush1.xpose.msra.mxu0 0.0
  %8981 = vmatprep.subr.mxu0 0.0
  %8982 = vmatpush1.xpose.msra.mxu0 0.0
  %8983 = vmatprep.subr.mxu0 0.0
  %8984 = vmatpush1.xpose.msra.mxu0 0.0
  %8985 = vmatprep.subr.mxu0 0.0
  %8986 = vmatpush1.xpose.msra.mxu0 0.0
  %8987 = vmatprep.subr.mxu0 0.0
  %8988 = vmatpush1.xpose.msra.mxu0 0.0
  %8989 = vmatprep.subr.mxu0 0.0
  %8990 = vmatpush1.xpose.msra.mxu0 0.0
  %8991 = vmatprep.subr.mxu0 0.0
  %8992 = vmatpush1.xpose.msra.mxu0 0.0
  %8993 = vmatprep.subr.mxu0 0.0
  %8994 = vmatpush1.xpose.msra.mxu0 0.0
  %8995 = vmatprep.subr.mxu0 0.0
  %8996 = vmatpush1.xpose.msra.mxu0 0.0
  %8997 = vmatprep.subr.mxu0 0.0
  %8998 = vmatpush1.xpose.msra.mxu0 0.0
  %8999 = vmatprep.subr.mxu0 0.0
  %9000 = vmatpush1.xpose.msra.mxu0 0.0
  %9001 = vmatprep.subr.mxu0 0.0
  %9002 = vmatpush1.xpose.msra.mxu0 0.0
  %9003 = vmatprep.subr.mxu0 0.0
  %9004 = vmatpush1.xpose.msra.mxu0 0.0
  %9005 = vmatprep.subr.mxu0 0.0
  %9006 = vmatpush1.xpose.msra.mxu0 0.0
  %9007 = vmatprep.subr.mxu0 0.0
  %9008 = vmatpush1.xpose.msra.mxu0 0.0
  %9009 = vmatprep.subr.mxu0 0.0
  %9010 = vmatpush1.xpose.msra.mxu0 0.0
  %9011 = vmatprep.subr.mxu0 0.0
  %9012 = vmatpush1.xpose.msra.mxu0 0.0
  %9013 = vmatprep.subr.mxu0 0.0
  %9014 = vmatpush1.xpose.msra.mxu0 0.0
  %9015 = vmatprep.subr.mxu0 0.0
  %9016 = vmatpush1.xpose.msra.mxu0 0.0
  %9017 = vmatprep.subr.mxu0 0.0
  %9018 = vmatpush1.xpose.msra.mxu0 0.0
  %9019 = vmatprep.subr.mxu0 0.0
  %9020 = vmatpush1.xpose.msra.mxu0 0.0
  %9021 = vmatprep.subr.mxu0 0.0
  %9022 = vmatpush1.xpose.msra.mxu0 0.0
  %9023 = vmatprep.subr.mxu0 0.0
  %9024 = vmatpush1.xpose.msra.mxu0 0.0
  %9025 = vmatprep.subr.mxu0 0.0
  %9026 = vmatpush1.xpose.msra.mxu0 0.0
  %9027 = vmatprep.mubr.f32.mxu0 0.0
  %9028 = vmatmul.mubr.f32.gmra.mrb[0].mxu0 %v7527
  %v9029 = vpop.f32.mrb[0].mxu0
  %v9030 = vadd.f32 0.0, %v9029
  %v9031 = vpop.f32.mrb[0].mxu0
  %9032 = vdwg.mxu0
  %s9033 = scalar_lea.vmem %s11, 8
  %9034 = vst.msk [vmem:[%s9033] sm:$0xff] %vm8955, %v9030
  %9035 = vst.msk [vmem:[#allocation5] sm:$0xff] %vm7461, 0.0
  %9036 = vst.msk [vmem:[#allocation5 + $0x8] sm:$0xff] %vm7461, 0.0
  %9037 = vst.msk [vmem:[#allocation5 + $0x10] sm:$0xff] %vm7461, 0.0
  %vm9038 = vcmask 58368
  %9039 = vst.msk [vmem:[#allocation5 + $0x18] sm:$0x3] %vm9038, 0.0
  %9040 = vst.msk [vmem:[#allocation5 + $0x20] sm:$0xff] %vm7461, 0.0
  %9041 = vst.msk [vmem:[#allocation5 + $0x28] sm:$0xff] %vm7461, 0.0
  %9042 = vst.msk [vmem:[#allocation5 + $0x30] sm:$0xff] %vm7461, 0.0
  %9043 = vst.msk [vmem:[#allocation5 + $0x38] sm:$0x3] %vm9038, 0.0
  %9044 = vst.msk [vmem:[#allocation5 + $0x5] sm:$0xff] %vm7461, %v8875
  %9045 = vst.msk [vmem:[#allocation5 + $0xd] sm:$0xff] %vm7461, %v8876
  %s9046 = scalar_lea.vmem [#allocation5], 32
  %9047 = vst.msk [vmem:[%s9046 + $0x5] sm:$0xff] %vm7461, %v8877
  %9048 = vst.msk [vmem:[%s9046 + $0xd] sm:$0xff] %vm7461, %v8878
  %vm9049 = vcmp.lt.s32.totalorder %v37, 0
  %v9050 = vsub.s32 0, %v37
  %v9051 = vsel %vm9049, %v9050, %v37
  %v9052 = vshrl.u32 %v9051, 2
  %v9053 = vand.u32 %v9051, 3
  %v9054 = vsub.s32 0, %v9053
  %v9055 = vsel %vm9049, %v9054, %v9053
  %vm9056 = vcmp.lt.s32.totalorder %v43, 0
  %v9057 = vsub.s32 0, %v43
  %v9058 = vsel %vm9056, %v9057, %v43
  %v9059 = vshrl.u32 %v9058, 2
  %v9060 = vand.u32 %v9058, 3
  %v9061 = vsub.s32 0, %v9060
  %v9062 = vsel %vm9056, %v9061, %v9060
  %vm9063 = vcmp.ne.s32.totalorder %v9055, 0
  %vm9064 = vcmp.ne.s32.totalorder %v9062, 0
  %vm9065 = vcmp.lt.s32.totalorder %v9055, 0
  %vm9066 = vcmp.lt.s32.totalorder %v9062, 0
  %vm9067 = vmand %vm9065, %vm9063
  %vm9068 = vmand %vm9066, %vm9064
  %v9069 = vadd.s32 %v9055, 4
  %v9070 = vadd.s32 %v9062, 4
  %v9071 = vsel %vm9067, %v9069, %v9055
  %v9072 = vsel %vm9068, %v9070, %v9062
  %vm9073 = vcmp.ne.s32.totalorder %v9071, 0
  %vm9074 = vcmp.ne.s32.totalorder %v9072, 0
  %v9075 = vsel %vm9073, 1, 0
  %v9076 = vsel %vm9074, 1, 0
  %v9077 = vcvt.s32.f32 %v9075
  %v9078 = vcvt.s32.f32 %v9076
  %vm9079 = vcmp.ne.s32.totalorder %v9071, 3
  %vm9080 = vcmp.ne.s32.totalorder %v9072, 3
  %v9081 = vsel %vm9079, 1, 0
  %v9082 = vsel %vm9080, 1, 0
  %v9083 = vcvt.s32.f32 %v9081
  %v9084 = vcvt.s32.f32 %v9082
  %v9085 = vld [vmem:[#allocation5] sm:$0xff]
  %v9086 = vld [vmem:[#allocation5 + $0x8] sm:$0xff]
  %v9087 = vld [vmem:[%s4] sm:$0xff]
  %v9088 = vld [vmem:[#allocation5 + $0x4] sm:$0xff]
  %v9089 = vld [vmem:[#allocation5 + $0xc] sm:$0xff]
  %s9090 = scalar_lea.vmem %s4, 24
  %v9091 = vld [vmem:[%s9090] sm:$0xff]
  %v9093 = vsel %vm7461, %v9088, 0
  %v9096 = vsel %vm7461, %v9089, 0
  %9098 = vmatprep.subr.mxu0 0.0
  %9099 = vmatpush1.msra.mxu0 %v9091
  %9100 = vmatprep.subr.mxu0 0.0
  %9101 = vmatpush1.msra.mxu0 0.0
  %9102 = vmatprep.subr.mxu0 0.0
  %9103 = vmatpush1.msra.mxu0 0.0
  %9104 = vmatprep.subr.mxu0 0.0
  %9105 = vmatpush1.msra.mxu0 0.0
  %9106 = vmatprep.subr.mxu0 0.0
  %9107 = vmatpush1.msra.mxu0 0.0
  %9108 = vmatprep.subr.mxu0 0.0
  %9109 = vmatpush1.msra.mxu0 0.0
  %9110 = vmatprep.subr.mxu0 0.0
  %9111 = vmatpush1.msra.mxu0 0.0
  %9112 = vmatprep.subr.mxu0 0.0
  %9113 = vmatpush1.msra.mxu0 0.0
  %9114 = vmatprep.subr.mxu0 0.0
  %9115 = vmatpush1.msra.mxu0 0.0
  %9116 = vmatprep.subr.mxu0 0.0
  %9117 = vmatpush1.msra.mxu0 0.0
  %9118 = vmatprep.subr.mxu0 0.0
  %9119 = vmatpush1.msra.mxu0 0.0
  %9120 = vmatprep.subr.mxu0 0.0
  %9121 = vmatpush1.msra.mxu0 0.0
  %9122 = vmatprep.subr.mxu0 0.0
  %9123 = vmatpush1.msra.mxu0 0.0
  %9124 = vmatprep.subr.mxu0 0.0
  %9125 = vmatpush1.msra.mxu0 0.0
  %9126 = vmatprep.subr.mxu0 0.0
  %9127 = vmatpush1.msra.mxu0 0.0
  %9128 = vmatprep.subr.mxu0 0.0
  %9129 = vmatpush1.msra.mxu0 0.0
  %9130 = vmatprep.subr.mxu0 0.0
  %9131 = vmatpush1.msra.mxu0 0.0
  %9132 = vmatprep.subr.mxu0 0.0
  %9133 = vmatpush1.msra.mxu0 0.0
  %9134 = vmatprep.subr.mxu0 0.0
  %9135 = vmatpush1.msra.mxu0 0.0
  %9136 = vmatprep.subr.mxu0 0.0
  %9137 = vmatpush1.msra.mxu0 0.0
  %9138 = vmatprep.subr.mxu0 0.0
  %9139 = vmatpush1.msra.mxu0 0.0
  %9140 = vmatprep.subr.mxu0 0.0
  %9141 = vmatpush1.msra.mxu0 0.0
  %9142 = vmatprep.subr.mxu0 0.0
  %9143 = vmatpush1.msra.mxu0 0.0
  %9144 = vmatprep.subr.mxu0 0.0
  %9145 = vmatpush1.msra.mxu0 0.0
  %9146 = vmatprep.subr.mxu0 0.0
  %9147 = vmatpush1.msra.mxu0 0.0
  %9148 = vmatprep.subr.mxu0 0.0
  %9149 = vmatpush1.msra.mxu0 0.0
  %9150 = vmatprep.subr.mxu0 0.0
  %9151 = vmatpush1.msra.mxu0 0.0
  %9152 = vmatprep.subr.mxu0 0.0
  %9153 = vmatpush1.msra.mxu0 0.0
  %9154 = vmatprep.subr.mxu0 0.0
  %9155 = vmatpush1.msra.mxu0 0.0
  %9156 = vmatprep.subr.mxu0 0.0
  %9157 = vmatpush1.msra.mxu0 0.0
  %9158 = vmatprep.subr.mxu0 0.0
  %9159 = vmatpush1.msra.mxu0 0.0
  %9160 = vmatprep.subr.mxu0 0.0
  %9161 = vmatpush1.msra.mxu0 0.0
  %9162 = vmatprep.mubr.f32.mxu0 0.0
  %9163 = vmatmul.mubr.f32.gmra.mrb[0].mxu0 %v9093
  %v9164 = vpop.f32.mrb[0].mxu0
  %v9165 = vadd.f32 0.0, %v9164
  %v9166 = vpop.f32.mrb[0].mxu0
  %9167 = vmatprep.mubr.f32.mxu0 0.0
  %9168 = vmatmul.mubr.f32.gmra.mrb[0].mxu0 %v9096
  %v9169 = vpop.f32.mrb[0].mxu0
  %v9170 = vadd.f32 0.0, %v9169
  %v9171 = vpop.f32.mrb[0].mxu0
  %9172 = vdwg.mxu0
  %v9174 = vsel %vm7461, %v9085, 0
  %v9177 = vsel %vm7461, %v9086, 0
  %9179 = vmatprep.subr.mxu0 0.0
  %9180 = vmatpush1.msra.mxu0 %v9087
  %9181 = vmatprep.subr.mxu0 0.0
  %9182 = vmatpush1.msra.mxu0 0.0
  %9183 = vmatprep.subr.mxu0 0.0
  %9184 = vmatpush1.msra.mxu0 0.0
  %9185 = vmatprep.subr.mxu0 0.0
  %9186 = vmatpush1.msra.mxu0 0.0
  %9187 = vmatprep.subr.mxu0 0.0
  %9188 = vmatpush1.msra.mxu0 0.0
  %9189 = vmatprep.subr.mxu0 0.0
  %9190 = vmatpush1.msra.mxu0 0.0
  %9191 = vmatprep.subr.mxu0 0.0
  %9192 = vmatpush1.msra.mxu0 0.0
  %9193 = vmatprep.subr.mxu0 0.0
  %9194 = vmatpush1.msra.mxu0 0.0
  %9195 = vmatprep.subr.mxu0 0.0
  %9196 = vmatpush1.msra.mxu0 0.0
  %9197 = vmatprep.subr.mxu0 0.0
  %9198 = vmatpush1.msra.mxu0 0.0
  %9199 = vmatprep.subr.mxu0 0.0
  %9200 = vmatpush1.msra.mxu0 0.0
  %9201 = vmatprep.subr.mxu0 0.0
  %9202 = vmatpush1.msra.mxu0 0.0
  %9203 = vmatprep.subr.mxu0 0.0
  %9204 = vmatpush1.msra.mxu0 0.0
  %9205 = vmatprep.subr.mxu0 0.0
  %9206 = vmatpush1.msra.mxu0 0.0
  %9207 = vmatprep.subr.mxu0 0.0
  %9208 = vmatpush1.msra.mxu0 0.0
  %9209 = vmatprep.subr.mxu0 0.0
  %9210 = vmatpush1.msra.mxu0 0.0
  %9211 = vmatprep.subr.mxu0 0.0
  %9212 = vmatpush1.msra.mxu0 0.0
  %9213 = vmatprep.subr.mxu0 0.0
  %9214 = vmatpush1.msra.mxu0 0.0
  %9215 = vmatprep.subr.mxu0 0.0
  %9216 = vmatpush1.msra.mxu0 0.0
  %9217 = vmatprep.subr.mxu0 0.0
  %9218 = vmatpush1.msra.mxu0 0.0
  %9219 = vmatprep.subr.mxu0 0.0
  %9220 = vmatpush1.msra.mxu0 0.0
  %9221 = vmatprep.subr.mxu0 0.0
  %9222 = vmatpush1.msra.mxu0 0.0
  %9223 = vmatprep.subr.mxu0 0.0
  %9224 = vmatpush1.msra.mxu0 0.0
  %9225 = vmatprep.subr.mxu0 0.0
  %9226 = vmatpush1.msra.mxu0 0.0
  %9227 = vmatprep.subr.mxu0 0.0
  %9228 = vmatpush1.msra.mxu0 0.0
  %9229 = vmatprep.subr.mxu0 0.0
  %9230 = vmatpush1.msra.mxu0 0.0
  %9231 = vmatprep.subr.mxu0 0.0
  %9232 = vmatpush1.msra.mxu0 0.0
  %9233 = vmatprep.subr.mxu0 0.0
  %9234 = vmatpush1.msra.mxu0 0.0
  %9235 = vmatprep.subr.mxu0 0.0
  %9236 = vmatpush1.msra.mxu0 0.0
  %9237 = vmatprep.subr.mxu0 0.0
  %9238 = vmatpush1.msra.mxu0 0.0
  %9239 = vmatprep.subr.mxu0 0.0
  %9240 = vmatpush1.msra.mxu0 0.0
  %9241 = vmatprep.subr.mxu0 0.0
  %9242 = vmatpush1.msra.mxu0 0.0
  %9243 = vmatprep.mubr.f32.mxu0 0.0
  %9244 = vmatmul.mubr.f32.gmra.mrb[0].mxu0 %v9174
  %v9245 = vpop.f32.mrb[0].mxu0
  %v9246 = vadd.f32 %v9165, %v9245
  %v9247 = vpop.f32.mrb[0].mxu0
  %9248 = vmatprep.mubr.f32.mxu0 0.0
  %9249 = vmatmul.mubr.f32.gmra.mrb[0].mxu0 %v9177
  %v9250 = vpop.f32.mrb[0].mxu0
  %v9251 = vadd.f32 %v9170, %v9250
  %v9252 = vpop.f32.mrb[0].mxu0
  %9253 = vdwg.mxu0
  %v9254 = vld [vmem:[#allocation5 + $0x8] sm:$0xff]
  %v9255 = vld [vmem:[#allocation5 + $0x10] sm:$0xff]
  %s9256 = scalar_lea.vmem %s4, 48
  %v9257 = vld [vmem:[%s9256] sm:$0xff]
  %v9259 = vsel %vm7461, %v9254, 0
  %v9262 = vsel %vm7461, %v9255, 0
  %9264 = vmatprep.subr.mxu0 0.0
  %9265 = vmatpush1.msra.mxu0 %v9257
  %9266 = vmatprep.subr.mxu0 0.0
  %9267 = vmatpush1.msra.mxu0 0.0
  %9268 = vmatprep.subr.mxu0 0.0
  %9269 = vmatpush1.msra.mxu0 0.0
  %9270 = vmatprep.subr.mxu0 0.0
  %9271 = vmatpush1.msra.mxu0 0.0
  %9272 = vmatprep.subr.mxu0 0.0
  %9273 = vmatpush1.msra.mxu0 0.0
  %9274 = vmatprep.subr.mxu0 0.0
  %9275 = vmatpush1.msra.mxu0 0.0
  %9276 = vmatprep.subr.mxu0 0.0
  %9277 = vmatpush1.msra.mxu0 0.0
  %9278 = vmatprep.subr.mxu0 0.0
  %9279 = vmatpush1.msra.mxu0 0.0
  %9280 = vmatprep.subr.mxu0 0.0
  %9281 = vmatpush1.msra.mxu0 0.0
  %9282 = vmatprep.subr.mxu0 0.0
  %9283 = vmatpush1.msra.mxu0 0.0
  %9284 = vmatprep.subr.mxu0 0.0
  %9285 = vmatpush1.msra.mxu0 0.0
  %9286 = vmatprep.subr.mxu0 0.0
  %9287 = vmatpush1.msra.mxu0 0.0
  %9288 = vmatprep.subr.mxu0 0.0
  %9289 = vmatpush1.msra.mxu0 0.0
  %9290 = vmatprep.subr.mxu0 0.0
  %9291 = vmatpush1.msra.mxu0 0.0
  %9292 = vmatprep.subr.mxu0 0.0
  %9293 = vmatpush1.msra.mxu0 0.0
  %9294 = vmatprep.subr.mxu0 0.0
  %9295 = vmatpush1.msra.mxu0 0.0
  %9296 = vmatprep.subr.mxu0 0.0
  %9297 = vmatpush1.msra.mxu0 0.0
  %9298 = vmatprep.subr.mxu0 0.0
  %9299 = vmatpush1.msra.mxu0 0.0
  %9300 = vmatprep.subr.mxu0 0.0
  %9301 = vmatpush1.msra.mxu0 0.0
  %9302 = vmatprep.subr.mxu0 0.0
  %9303 = vmatpush1.msra.mxu0 0.0
  %9304 = vmatprep.subr.mxu0 0.0
  %9305 = vmatpush1.msra.mxu0 0.0
  %9306 = vmatprep.subr.mxu0 0.0
  %9307 = vmatpush1.msra.mxu0 0.0
  %9308 = vmatprep.subr.mxu0 0.0
  %9309 = vmatpush1.msra.mxu0 0.0
  %9310 = vmatprep.subr.mxu0 0.0
  %9311 = vmatpush1.msra.mxu0 0.0
  %9312 = vmatprep.subr.mxu0 0.0
  %9313 = vmatpush1.msra.mxu0 0.0
  %9314 = vmatprep.subr.mxu0 0.0
  %9315 = vmatpush1.msra.mxu0 0.0
  %9316 = vmatprep.subr.mxu0 0.0
  %9317 = vmatpush1.msra.mxu0 0.0
  %9318 = vmatprep.subr.mxu0 0.0
  %9319 = vmatpush1.msra.mxu0 0.0
  %9320 = vmatprep.subr.mxu0 0.0
  %9321 = vmatpush1.msra.mxu0 0.0
  %9322 = vmatprep.subr.mxu0 0.0
  %9323 = vmatpush1.msra.mxu0 0.0
  %9324 = vmatprep.subr.mxu0 0.0
  %9325 = vmatpush1.msra.mxu0 0.0
  %9326 = vmatprep.subr.mxu0 0.0
  %9327 = vmatpush1.msra.mxu0 0.0
  %9328 = vmatprep.mubr.f32.mxu0 0.0
  %9329 = vmatmul.mubr.f32.gmra.mrb[0].mxu0 %v9259
  %v9330 = vpop.f32.mrb[0].mxu0
  %v9331 = vadd.f32 0.0, %v9330
  %v9332 = vpop.f32.mrb[0].mxu0
  %9333 = vmatprep.mubr.f32.mxu0 0.0
  %9334 = vmatmul.mubr.f32.gmra.mrb[0].mxu0 %v9262
  %v9335 = vpop.f32.mrb[0].mxu0
  %v9336 = vadd.f32 0.0, %v9335
  %v9337 = vpop.f32.mrb[0].mxu0
  %9338 = vdwg.mxu0
  %v9339 = vadd.f32 %v9246, %v9331
  %v9340 = vadd.f32 %v9251, %v9336
  %v9341 = vmul.f32 %v9339, %v9077
  %v9342 = vmul.f32 %v9340, %v9078
  %v9343 = vadd.f32 %v9341, 0.0
  %v9344 = vadd.f32 %v9342, 0.0
  %v9345 = vld [vmem:[#allocation5 + $0x1] sm:$0xff]
  %v9346 = vld [vmem:[#allocation5 + $0x9] sm:$0xff]
  %s9347 = scalar_lea.vmem %s4, 8
  %v9348 = vld [vmem:[%s9347] sm:$0xff]
  %v9349 = vld [vmem:[#allocation5 + $0x5] sm:$0xff]
  %v9350 = vld [vmem:[#allocation5 + $0xd] sm:$0xff]
  %s9351 = scalar_lea.vmem %s4, 32
  %v9352 = vld [vmem:[%s9351] sm:$0xff]
  %v9354 = vsel %vm7461, %v9349, 0
  %v9357 = vsel %vm7461, %v9350, 0
  %9359 = vmatprep.subr.mxu0 0.0
  %9360 = vmatpush1.msra.mxu0 %v9352
  %9361 = vmatprep.subr.mxu0 0.0
  %9362 = vmatpush1.msra.mxu0 0.0
  %9363 = vmatprep.subr.mxu0 0.0
  %9364 = vmatpush1.msra.mxu0 0.0
  %9365 = vmatprep.subr.mxu0 0.0
  %9366 = vmatpush1.msra.mxu0 0.0
  %9367 = vmatprep.subr.mxu0 0.0
  %9368 = vmatpush1.msra.mxu0 0.0
  %9369 = vmatprep.subr.mxu0 0.0
  %9370 = vmatpush1.msra.mxu0 0.0
  %9371 = vmatprep.subr.mxu0 0.0
  %9372 = vmatpush1.msra.mxu0 0.0
  %9373 = vmatprep.subr.mxu0 0.0
  %9374 = vmatpush1.msra.mxu0 0.0
  %9375 = vmatprep.subr.mxu0 0.0
  %9376 = vmatpush1.msra.mxu0 0.0
  %9377 = vmatprep.subr.mxu0 0.0
  %9378 = vmatpush1.msra.mxu0 0.0
  %9379 = vmatprep.subr.mxu0 0.0
  %9380 = vmatpush1.msra.mxu0 0.0
  %9381 = vmatprep.subr.mxu0 0.0
  %9382 = vmatpush1.msra.mxu0 0.0
  %9383 = vmatprep.subr.mxu0 0.0
  %9384 = vmatpush1.msra.mxu0 0.0
  %9385 = vmatprep.subr.mxu0 0.0
  %9386 = vmatpush1.msra.mxu0 0.0
  %9387 = vmatprep.subr.mxu0 0.0
  %9388 = vmatpush1.msra.mxu0 0.0
  %9389 = vmatprep.subr.mxu0 0.0
  %9390 = vmatpush1.msra.mxu0 0.0
  %9391 = vmatprep.subr.mxu0 0.0
  %9392 = vmatpush1.msra.mxu0 0.0
  %9393 = vmatprep.subr.mxu0 0.0
  %9394 = vmatpush1.msra.mxu0 0.0
  %9395 = vmatprep.subr.mxu0 0.0
  %9396 = vmatpush1.msra.mxu0 0.0
  %9397 = vmatprep.subr.mxu0 0.0
  %9398 = vmatpush1.msra.mxu0 0.0
  %9399 = vmatprep.subr.mxu0 0.0
  %9400 = vmatpush1.msra.mxu0 0.0
  %9401 = vmatprep.subr.mxu0 0.0
  %9402 = vmatpush1.msra.mxu0 0.0
  %9403 = vmatprep.subr.mxu0 0.0
  %9404 = vmatpush1.msra.mxu0 0.0
  %9405 = vmatprep.subr.mxu0 0.0
  %9406 = vmatpush1.msra.mxu0 0.0
  %9407 = vmatprep.subr.mxu0 0.0
  %9408 = vmatpush1.msra.mxu0 0.0
  %9409 = vmatprep.subr.mxu0 0.0
  %9410 = vmatpush1.msra.mxu0 0.0
  %9411 = vmatprep.subr.mxu0 0.0
  %9412 = vmatpush1.msra.mxu0 0.0
  %9413 = vmatprep.subr.mxu0 0.0
  %9414 = vmatpush1.msra.mxu0 0.0
  %9415 = vmatprep.subr.mxu0 0.0
  %9416 = vmatpush1.msra.mxu0 0.0
  %9417 = vmatprep.subr.mxu0 0.0
  %9418 = vmatpush1.msra.mxu0 0.0
  %9419 = vmatprep.subr.mxu0 0.0
  %9420 = vmatpush1.msra.mxu0 0.0
  %9421 = vmatprep.subr.mxu0 0.0
  %9422 = vmatpush1.msra.mxu0 0.0
  %9423 = vmatprep.mubr.f32.mxu0 0.0
  %9424 = vmatmul.mubr.f32.gmra.mrb[0].mxu0 %v9354
  %v9425 = vpop.f32.mrb[0].mxu0
  %v9426 = vadd.f32 0.0, %v9425
  %v9427 = vpop.f32.mrb[0].mxu0
  %9428 = vmatprep.mubr.f32.mxu0 0.0
  %9429 = vmatmul.mubr.f32.gmra.mrb[0].mxu0 %v9357
  %v9430 = vpop.f32.mrb[0].mxu0
  %v9431 = vadd.f32 0.0, %v9430
  %v9432 = vpop.f32.mrb[0].mxu0
  %9433 = vdwg.mxu0
  %v9435 = vsel %vm7461, %v9345, 0
  %v9438 = vsel %vm7461, %v9346, 0
  %9440 = vmatprep.subr.mxu0 0.0
  %9441 = vmatpush1.msra.mxu0 %v9348
  %9442 = vmatprep.subr.mxu0 0.0
  %9443 = vmatpush1.msra.mxu0 0.0
  %9444 = vmatprep.subr.mxu0 0.0
  %9445 = vmatpush1.msra.mxu0 0.0
  %9446 = vmatprep.subr.mxu0 0.0
  %9447 = vmatpush1.msra.mxu0 0.0
  %9448 = vmatprep.subr.mxu0 0.0
  %9449 = vmatpush1.msra.mxu0 0.0
  %9450 = vmatprep.subr.mxu0 0.0
  %9451 = vmatpush1.msra.mxu0 0.0
  %9452 = vmatprep.subr.mxu0 0.0
  %9453 = vmatpush1.msra.mxu0 0.0
  %9454 = vmatprep.subr.mxu0 0.0
  %9455 = vmatpush1.msra.mxu0 0.0
  %9456 = vmatprep.subr.mxu0 0.0
  %9457 = vmatpush1.msra.mxu0 0.0
  %9458 = vmatprep.subr.mxu0 0.0
  %9459 = vmatpush1.msra.mxu0 0.0
  %9460 = vmatprep.subr.mxu0 0.0
  %9461 = vmatpush1.msra.mxu0 0.0
  %9462 = vmatprep.subr.mxu0 0.0
  %9463 = vmatpush1.msra.mxu0 0.0
  %9464 = vmatprep.subr.mxu0 0.0
  %9465 = vmatpush1.msra.mxu0 0.0
  %9466 = vmatprep.subr.mxu0 0.0
  %9467 = vmatpush1.msra.mxu0 0.0
  %9468 = vmatprep.subr.mxu0 0.0
  %9469 = vmatpush1.msra.mxu0 0.0
  %9470 = vmatprep.subr.mxu0 0.0
  %9471 = vmatpush1.msra.mxu0 0.0
  %9472 = vmatprep.subr.mxu0 0.0
  %9473 = vmatpush1.msra.mxu0 0.0
  %9474 = vmatprep.subr.mxu0 0.0
  %9475 = vmatpush1.msra.mxu0 0.0
  %9476 = vmatprep.subr.mxu0 0.0
  %9477 = vmatpush1.msra.mxu0 0.0
  %9478 = vmatprep.subr.mxu0 0.0
  %9479 = vmatpush1.msra.mxu0 0.0
  %9480 = vmatprep.subr.mxu0 0.0
  %9481 = vmatpush1.msra.mxu0 0.0
  %9482 = vmatprep.subr.mxu0 0.0
  %9483 = vmatpush1.msra.mxu0 0.0
  %9484 = vmatprep.subr.mxu0 0.0
  %9485 = vmatpush1.msra.mxu0 0.0
  %9486 = vmatprep.subr.mxu0 0.0
  %9487 = vmatpush1.msra.mxu0 0.0
  %9488 = vmatprep.subr.mxu0 0.0
  %9489 = vmatpush1.msra.mxu0 0.0
  %9490 = vmatprep.subr.mxu0 0.0
  %9491 = vmatpush1.msra.mxu0 0.0
  %9492 = vmatprep.subr.mxu0 0.0
  %9493 = vmatpush1.msra.mxu0 0.0
  %9494 = vmatprep.subr.mxu0 0.0
  %9495 = vmatpush1.msra.mxu0 0.0
  %9496 = vmatprep.subr.mxu0 0.0
  %9497 = vmatpush1.msra.mxu0 0.0
  %9498 = vmatprep.subr.mxu0 0.0
  %9499 = vmatpush1.msra.mxu0 0.0
  %9500 = vmatprep.subr.mxu0 0.0
  %9501 = vmatpush1.msra.mxu0 0.0
  %9502 = vmatprep.subr.mxu0 0.0
  %9503 = vmatpush1.msra.mxu0 0.0
  %9504 = vmatprep.mubr.f32.mxu0 0.0
  %9505 = vmatmul.mubr.f32.gmra.mrb[0].mxu0 %v9435
  %v9506 = vpop.f32.mrb[0].mxu0
  %v9507 = vadd.f32 %v9426, %v9506
  %v9508 = vpop.f32.mrb[0].mxu0
  %9509 = vmatprep.mubr.f32.mxu0 0.0
  %9510 = vmatmul.mubr.f32.gmra.mrb[0].mxu0 %v9438
  %v9511 = vpop.f32.mrb[0].mxu0
  %v9512 = vadd.f32 %v9431, %v9511
  %v9513 = vpop.f32.mrb[0].mxu0
  %9514 = vdwg.mxu0
  %v9515 = vld [vmem:[#allocation5 + $0x9] sm:$0xff]
  %v9516 = vld [vmem:[#allocation5 + $0x11] sm:$0xff]
  %s9517 = scalar_lea.vmem %s4, 56
  %v9518 = vld [vmem:[%s9517] sm:$0xff]
  %v9520 = vsel %vm7461, %v9515, 0
  %v9523 = vsel %vm7461, %v9516, 0
  %9525 = vmatprep.subr.mxu0 0.0
  %9526 = vmatpush1.msra.mxu0 %v9518
  %9527 = vmatprep.subr.mxu0 0.0
  %9528 = vmatpush1.msra.mxu0 0.0
  %9529 = vmatprep.subr.mxu0 0.0
  %9530 = vmatpush1.msra.mxu0 0.0
  %9531 = vmatprep.subr.mxu0 0.0
  %9532 = vmatpush1.msra.mxu0 0.0
  %9533 = vmatprep.subr.mxu0 0.0
  %9534 = vmatpush1.msra.mxu0 0.0
  %9535 = vmatprep.subr.mxu0 0.0
  %9536 = vmatpush1.msra.mxu0 0.0
  %9537 = vmatprep.subr.mxu0 0.0
  %9538 = vmatpush1.msra.mxu0 0.0
  %9539 = vmatprep.subr.mxu0 0.0
  %9540 = vmatpush1.msra.mxu0 0.0
  %9541 = vmatprep.subr.mxu0 0.0
  %9542 = vmatpush1.msra.mxu0 0.0
  %9543 = vmatprep.subr.mxu0 0.0
  %9544 = vmatpush1.msra.mxu0 0.0
  %9545 = vmatprep.subr.mxu0 0.0
  %9546 = vmatpush1.msra.mxu0 0.0
  %9547 = vmatprep.subr.mxu0 0.0
  %9548 = vmatpush1.msra.mxu0 0.0
  %9549 = vmatprep.subr.mxu0 0.0
  %9550 = vmatpush1.msra.mxu0 0.0
  %9551 = vmatprep.subr.mxu0 0.0
  %9552 = vmatpush1.msra.mxu0 0.0
  %9553 = vmatprep.subr.mxu0 0.0
  %9554 = vmatpush1.msra.mxu0 0.0
  %9555 = vmatprep.subr.mxu0 0.0
  %9556 = vmatpush1.msra.mxu0 0.0
  %9557 = vmatprep.subr.mxu0 0.0
  %9558 = vmatpush1.msra.mxu0 0.0
  %9559 = vmatprep.subr.mxu0 0.0
  %9560 = vmatpush1.msra.mxu0 0.0
  %9561 = vmatprep.subr.mxu0 0.0
  %9562 = vmatpush1.msra.mxu0 0.0
  %9563 = vmatprep.subr.mxu0 0.0
  %9564 = vmatpush1.msra.mxu0 0.0
  %9565 = vmatprep.subr.mxu0 0.0
  %9566 = vmatpush1.msra.mxu0 0.0
  %9567 = vmatprep.subr.mxu0 0.0
  %9568 = vmatpush1.msra.mxu0 0.0
  %9569 = vmatprep.subr.mxu0 0.0
  %9570 = vmatpush1.msra.mxu0 0.0
  %9571 = vmatprep.subr.mxu0 0.0
  %9572 = vmatpush1.msra.mxu0 0.0
  %9573 = vmatprep.subr.mxu0 0.0
  %9574 = vmatpush1.msra.mxu0 0.0
  %9575 = vmatprep.subr.mxu0 0.0
  %9576 = vmatpush1.msra.mxu0 0.0
  %9577 = vmatprep.subr.mxu0 0.0
  %9578 = vmatpush1.msra.mxu0 0.0
  %9579 = vmatprep.subr.mxu0 0.0
  %9580 = vmatpush1.msra.mxu0 0.0
  %9581 = vmatprep.subr.mxu0 0.0
  %9582 = vmatpush1.msra.mxu0 0.0
  %9583 = vmatprep.subr.mxu0 0.0
  %9584 = vmatpush1.msra.mxu0 0.0
  %9585 = vmatprep.subr.mxu0 0.0
  %9586 = vmatpush1.msra.mxu0 0.0
  %9587 = vmatprep.subr.mxu0 0.0
  %9588 = vmatpush1.msra.mxu0 0.0
  %9589 = vmatprep.mubr.f32.mxu0 0.0
  %9590 = vmatmul.mubr.f32.gmra.mrb[0].mxu0 %v9520
  %v9591 = vpop.f32.mrb[0].mxu0
  %v9592 = vadd.f32 0.0, %v9591
  %v9593 = vpop.f32.mrb[0].mxu0
  %9594 = vmatprep.mubr.f32.mxu0 0.0
  %9595 = vmatmul.mubr.f32.gmra.mrb[0].mxu0 %v9523
  %v9596 = vpop.f32.mrb[0].mxu0
  %v9597 = vadd.f32 0.0, %v9596
  %v9598 = vpop.f32.mrb[0].mxu0
  %9599 = vdwg.mxu0
  %v9600 = vadd.f32 %v9507, %v9592
  %v9601 = vadd.f32 %v9512, %v9597
  %v9602 = vadd.f32 %v9343, %v9600
  %v9603 = vadd.f32 %v9344, %v9601
  %v9604 = vld [vmem:[#allocation5 + $0x2] sm:$0xff]
  %v9605 = vld [vmem:[#allocation5 + $0xa] sm:$0xff]
  %s9606 = scalar_lea.vmem %s4, 16
  %v9607 = vld [vmem:[%s9606] sm:$0xff]
  %v9608 = vld [vmem:[#allocation5 + $0x6] sm:$0xff]
  %v9609 = vld [vmem:[#allocation5 + $0xe] sm:$0xff]
  %s9610 = scalar_lea.vmem %s4, 40
  %v9611 = vld [vmem:[%s9610] sm:$0xff]
  %v9613 = vsel %vm7461, %v9608, 0
  %v9616 = vsel %vm7461, %v9609, 0
  %9618 = vmatprep.subr.mxu0 0.0
  %9619 = vmatpush1.msra.mxu0 %v9611
  %9620 = vmatprep.subr.mxu0 0.0
  %9621 = vmatpush1.msra.mxu0 0.0
  %9622 = vmatprep.subr.mxu0 0.0
  %9623 = vmatpush1.msra.mxu0 0.0
  %9624 = vmatprep.subr.mxu0 0.0
  %9625 = vmatpush1.msra.mxu0 0.0
  %9626 = vmatprep.subr.mxu0 0.0
  %9627 = vmatpush1.msra.mxu0 0.0
  %9628 = vmatprep.subr.mxu0 0.0
  %9629 = vmatpush1.msra.mxu0 0.0
  %9630 = vmatprep.subr.mxu0 0.0
  %9631 = vmatpush1.msra.mxu0 0.0
  %9632 = vmatprep.subr.mxu0 0.0
  %9633 = vmatpush1.msra.mxu0 0.0
  %9634 = vmatprep.subr.mxu0 0.0
  %9635 = vmatpush1.msra.mxu0 0.0
  %9636 = vmatprep.subr.mxu0 0.0
  %9637 = vmatpush1.msra.mxu0 0.0
  %9638 = vmatprep.subr.mxu0 0.0
  %9639 = vmatpush1.msra.mxu0 0.0
  %9640 = vmatprep.subr.mxu0 0.0
  %9641 = vmatpush1.msra.mxu0 0.0
  %9642 = vmatprep.subr.mxu0 0.0
  %9643 = vmatpush1.msra.mxu0 0.0
  %9644 = vmatprep.subr.mxu0 0.0
  %9645 = vmatpush1.msra.mxu0 0.0
  %9646 = vmatprep.subr.mxu0 0.0
  %9647 = vmatpush1.msra.mxu0 0.0
  %9648 = vmatprep.subr.mxu0 0.0
  %9649 = vmatpush1.msra.mxu0 0.0
  %9650 = vmatprep.subr.mxu0 0.0
  %9651 = vmatpush1.msra.mxu0 0.0
  %9652 = vmatprep.subr.mxu0 0.0
  %9653 = vmatpush1.msra.mxu0 0.0
  %9654 = vmatprep.subr.mxu0 0.0
  %9655 = vmatpush1.msra.mxu0 0.0
  %9656 = vmatprep.subr.mxu0 0.0
  %9657 = vmatpush1.msra.mxu0 0.0
  %9658 = vmatprep.subr.mxu0 0.0
  %9659 = vmatpush1.msra.mxu0 0.0
  %9660 = vmatprep.subr.mxu0 0.0
  %9661 = vmatpush1.msra.mxu0 0.0
  %9662 = vmatprep.subr.mxu0 0.0
  %9663 = vmatpush1.msra.mxu0 0.0
  %9664 = vmatprep.subr.mxu0 0.0
  %9665 = vmatpush1.msra.mxu0 0.0
  %9666 = vmatprep.subr.mxu0 0.0
  %9667 = vmatpush1.msra.mxu0 0.0
  %9668 = vmatprep.subr.mxu0 0.0
  %9669 = vmatpush1.msra.mxu0 0.0
  %9670 = vmatprep.subr.mxu0 0.0
  %9671 = vmatpush1.msra.mxu0 0.0
  %9672 = vmatprep.subr.mxu0 0.0
  %9673 = vmatpush1.msra.mxu0 0.0
  %9674 = vmatprep.subr.mxu0 0.0
  %9675 = vmatpush1.msra.mxu0 0.0
  %9676 = vmatprep.subr.mxu0 0.0
  %9677 = vmatpush1.msra.mxu0 0.0
  %9678 = vmatprep.subr.mxu0 0.0
  %9679 = vmatpush1.msra.mxu0 0.0
  %9680 = vmatprep.subr.mxu0 0.0
  %9681 = vmatpush1.msra.mxu0 0.0
  %9682 = vmatprep.mubr.f32.mxu0 0.0
  %9683 = vmatmul.mubr.f32.gmra.mrb[0].mxu0 %v9613
  %v9684 = vpop.f32.mrb[0].mxu0
  %v9685 = vadd.f32 0.0, %v9684
  %v9686 = vpop.f32.mrb[0].mxu0
  %9687 = vmatprep.mubr.f32.mxu0 0.0
  %9688 = vmatmul.mubr.f32.gmra.mrb[0].mxu0 %v9616
  %v9689 = vpop.f32.mrb[0].mxu0
  %v9690 = vadd.f32 0.0, %v9689
  %v9691 = vpop.f32.mrb[0].mxu0
  %9692 = vdwg.mxu0
  %v9694 = vsel %vm7461, %v9604, 0
  %v9697 = vsel %vm7461, %v9605, 0
  %9699 = vmatprep.subr.mxu0 0.0
  %9700 = vmatpush1.msra.mxu0 %v9607
  %9701 = vmatprep.subr.mxu0 0.0
  %9702 = vmatpush1.msra.mxu0 0.0
  %9703 = vmatprep.subr.mxu0 0.0
  %9704 = vmatpush1.msra.mxu0 0.0
  %9705 = vmatprep.subr.mxu0 0.0
  %9706 = vmatpush1.msra.mxu0 0.0
  %9707 = vmatprep.subr.mxu0 0.0
  %9708 = vmatpush1.msra.mxu0 0.0
  %9709 = vmatprep.subr.mxu0 0.0
  %9710 = vmatpush1.msra.mxu0 0.0
  %9711 = vmatprep.subr.mxu0 0.0
  %9712 = vmatpush1.msra.mxu0 0.0
  %9713 = vmatprep.subr.mxu0 0.0
  %9714 = vmatpush1.msra.mxu0 0.0
  %9715 = vmatprep.subr.mxu0 0.0
  %9716 = vmatpush1.msra.mxu0 0.0
  %9717 = vmatprep.subr.mxu0 0.0
  %9718 = vmatpush1.msra.mxu0 0.0
  %9719 = vmatprep.subr.mxu0 0.0
  %9720 = vmatpush1.msra.mxu0 0.0
  %9721 = vmatprep.subr.mxu0 0.0
  %9722 = vmatpush1.msra.mxu0 0.0
  %9723 = vmatprep.subr.mxu0 0.0
  %9724 = vmatpush1.msra.mxu0 0.0
  %9725 = vmatprep.subr.mxu0 0.0
  %9726 = vmatpush1.msra.mxu0 0.0
  %9727 = vmatprep.subr.mxu0 0.0
  %9728 = vmatpush1.msra.mxu0 0.0
  %9729 = vmatprep.subr.mxu0 0.0
  %9730 = vmatpush1.msra.mxu0 0.0
  %9731 = vmatprep.subr.mxu0 0.0
  %9732 = vmatpush1.msra.mxu0 0.0
  %9733 = vmatprep.subr.mxu0 0.0
  %9734 = vmatpush1.msra.mxu0 0.0
  %9735 = vmatprep.subr.mxu0 0.0
  %9736 = vmatpush1.msra.mxu0 0.0
  %9737 = vmatprep.subr.mxu0 0.0
  %9738 = vmatpush1.msra.mxu0 0.0
  %9739 = vmatprep.subr.mxu0 0.0
  %9740 = vmatpush1.msra.mxu0 0.0
  %9741 = vmatprep.subr.mxu0 0.0
  %9742 = vmatpush1.msra.mxu0 0.0
  %9743 = vmatprep.subr.mxu0 0.0
  %9744 = vmatpush1.msra.mxu0 0.0
  %9745 = vmatprep.subr.mxu0 0.0
  %9746 = vmatpush1.msra.mxu0 0.0
  %9747 = vmatprep.subr.mxu0 0.0
  %9748 = vmatpush1.msra.mxu0 0.0
  %9749 = vmatprep.subr.mxu0 0.0
  %9750 = vmatpush1.msra.mxu0 0.0
  %9751 = vmatprep.subr.mxu0 0.0
  %9752 = vmatpush1.msra.mxu0 0.0
  %9753 = vmatprep.subr.mxu0 0.0
  %9754 = vmatpush1.msra.mxu0 0.0
  %9755 = vmatprep.subr.mxu0 0.0
  %9756 = vmatpush1.msra.mxu0 0.0
  %9757 = vmatprep.subr.mxu0 0.0
  %9758 = vmatpush1.msra.mxu0 0.0
  %9759 = vmatprep.subr.mxu0 0.0
  %9760 = vmatpush1.msra.mxu0 0.0
  %9761 = vmatprep.subr.mxu0 0.0
  %9762 = vmatpush1.msra.mxu0 0.0
  %9763 = vmatprep.mubr.f32.mxu0 0.0
  %9764 = vmatmul.mubr.f32.gmra.mrb[0].mxu0 %v9694
  %v9765 = vpop.f32.mrb[0].mxu0
  %v9766 = vadd.f32 %v9685, %v9765
  %v9767 = vpop.f32.mrb[0].mxu0
  %9768 = vmatprep.mubr.f32.mxu0 0.0
  %9769 = vmatmul.mubr.f32.gmra.mrb[0].mxu0 %v9697
  %v9770 = vpop.f32.mrb[0].mxu0
  %v9771 = vadd.f32 %v9690, %v9770
  %v9772 = vpop.f32.mrb[0].mxu0
  %9773 = vdwg.mxu0
  %v9774 = vld [vmem:[#allocation5 + $0xa] sm:$0xff]
  %v9775 = vld [vmem:[#allocation5 + $0x12] sm:$0xff]
  %s9776 = scalar_lea.vmem %s4, 64
  %v9777 = vld [vmem:[%s9776] sm:$0xff]
  %v9779 = vsel %vm7461, %v9774, 0
  %v9782 = vsel %vm7461, %v9775, 0
  %9784 = vmatprep.subr.mxu0 0.0
  %9785 = vmatpush1.msra.mxu0 %v9777
  %9786 = vmatprep.subr.mxu0 0.0
  %9787 = vmatpush1.msra.mxu0 0.0
  %9788 = vmatprep.subr.mxu0 0.0
  %9789 = vmatpush1.msra.mxu0 0.0
  %9790 = vmatprep.subr.mxu0 0.0
  %9791 = vmatpush1.msra.mxu0 0.0
  %9792 = vmatprep.subr.mxu0 0.0
  %9793 = vmatpush1.msra.mxu0 0.0
  %9794 = vmatprep.subr.mxu0 0.0
  %9795 = vmatpush1.msra.mxu0 0.0
  %9796 = vmatprep.subr.mxu0 0.0
  %9797 = vmatpush1.msra.mxu0 0.0
  %9798 = vmatprep.subr.mxu0 0.0
  %9799 = vmatpush1.msra.mxu0 0.0
  %9800 = vmatprep.subr.mxu0 0.0
  %9801 = vmatpush1.msra.mxu0 0.0
  %9802 = vmatprep.subr.mxu0 0.0
  %9803 = vmatpush1.msra.mxu0 0.0
  %9804 = vmatprep.subr.mxu0 0.0
  %9805 = vmatpush1.msra.mxu0 0.0
  %9806 = vmatprep.subr.mxu0 0.0
  %9807 = vmatpush1.msra.mxu0 0.0
  %9808 = vmatprep.subr.mxu0 0.0
  %9809 = vmatpush1.msra.mxu0 0.0
  %9810 = vmatprep.subr.mxu0 0.0
  %9811 = vmatpush1.msra.mxu0 0.0
  %9812 = vmatprep.subr.mxu0 0.0
  %9813 = vmatpush1.msra.mxu0 0.0
  %9814 = vmatprep.subr.mxu0 0.0
  %9815 = vmatpush1.msra.mxu0 0.0
  %9816 = vmatprep.subr.mxu0 0.0
  %9817 = vmatpush1.msra.mxu0 0.0
  %9818 = vmatprep.subr.mxu0 0.0
  %9819 = vmatpush1.msra.mxu0 0.0
  %9820 = vmatprep.subr.mxu0 0.0
  %9821 = vmatpush1.msra.mxu0 0.0
  %9822 = vmatprep.subr.mxu0 0.0
  %9823 = vmatpush1.msra.mxu0 0.0
  %9824 = vmatprep.subr.mxu0 0.0
  %9825 = vmatpush1.msra.mxu0 0.0
  %9826 = vmatprep.subr.mxu0 0.0
  %9827 = vmatpush1.msra.mxu0 0.0
  %9828 = vmatprep.subr.mxu0 0.0
  %9829 = vmatpush1.msra.mxu0 0.0
  %9830 = vmatprep.subr.mxu0 0.0
  %9831 = vmatpush1.msra.mxu0 0.0
  %9832 = vmatprep.subr.mxu0 0.0
  %9833 = vmatpush1.msra.mxu0 0.0
  %9834 = vmatprep.subr.mxu0 0.0
  %9835 = vmatpush1.msra.mxu0 0.0
  %9836 = vmatprep.subr.mxu0 0.0
  %9837 = vmatpush1.msra.mxu0 0.0
  %9838 = vmatprep.subr.mxu0 0.0
  %9839 = vmatpush1.msra.mxu0 0.0
  %9840 = vmatprep.subr.mxu0 0.0
  %9841 = vmatpush1.msra.mxu0 0.0
  %9842 = vmatprep.subr.mxu0 0.0
  %9843 = vmatpush1.msra.mxu0 0.0
  %9844 = vmatprep.subr.mxu0 0.0
  %9845 = vmatpush1.msra.mxu0 0.0
  %9846 = vmatprep.subr.mxu0 0.0
  %9847 = vmatpush1.msra.mxu0 0.0
  %9848 = vmatprep.mubr.f32.mxu0 0.0
  %9849 = vmatmul.mubr.f32.gmra.mrb[0].mxu0 %v9779
  %v9850 = vpop.f32.mrb[0].mxu0
  %v9851 = vadd.f32 0.0, %v9850
  %v9852 = vpop.f32.mrb[0].mxu0
  %9853 = vmatprep.mubr.f32.mxu0 0.0
  %9854 = vmatmul.mubr.f32.gmra.mrb[0].mxu0 %v9782
  %v9855 = vpop.f32.mrb[0].mxu0
  %v9856 = vadd.f32 0.0, %v9855
  %v9857 = vpop.f32.mrb[0].mxu0
  %9858 = vdwg.mxu0
  %v9859 = vadd.f32 %v9766, %v9851
  %v9860 = vadd.f32 %v9771, %v9856
  %v9861 = vmul.f32 %v9859, %v9083
  %v9862 = vmul.f32 %v9860, %v9084
  %v9863 = vadd.f32 %v9602, %v9861
  %v9864 = vadd.f32 %v9603, %v9862
  %v9865 = vld [vmem:[%s9046] sm:$0xff]
  %v9866 = vld [vmem:[%s9046 + $0x8] sm:$0xff]
  %v9867 = vld [vmem:[%s9046 + $0x4] sm:$0xff]
  %v9868 = vld [vmem:[%s9046 + $0xc] sm:$0xff]
  %v9870 = vsel %vm7461, %v9867, 0
  %v9873 = vsel %vm7461, %v9868, 0
  %9875 = vmatprep.subr.mxu0 0.0
  %9876 = vmatpush1.msra.mxu0 %v9091
  %9877 = vmatprep.subr.mxu0 0.0
  %9878 = vmatpush1.msra.mxu0 0.0
  %9879 = vmatprep.subr.mxu0 0.0
  %9880 = vmatpush1.msra.mxu0 0.0
  %9881 = vmatprep.subr.mxu0 0.0
  %9882 = vmatpush1.msra.mxu0 0.0
  %9883 = vmatprep.subr.mxu0 0.0
  %9884 = vmatpush1.msra.mxu0 0.0
  %9885 = vmatprep.subr.mxu0 0.0
  %9886 = vmatpush1.msra.mxu0 0.0
  %9887 = vmatprep.subr.mxu0 0.0
  %9888 = vmatpush1.msra.mxu0 0.0
  %9889 = vmatprep.subr.mxu0 0.0
  %9890 = vmatpush1.msra.mxu0 0.0
  %9891 = vmatprep.subr.mxu0 0.0
  %9892 = vmatpush1.msra.mxu0 0.0
  %9893 = vmatprep.subr.mxu0 0.0
  %9894 = vmatpush1.msra.mxu0 0.0
  %9895 = vmatprep.subr.mxu0 0.0
  %9896 = vmatpush1.msra.mxu0 0.0
  %9897 = vmatprep.subr.mxu0 0.0
  %9898 = vmatpush1.msra.mxu0 0.0
  %9899 = vmatprep.subr.mxu0 0.0
  %9900 = vmatpush1.msra.mxu0 0.0
  %9901 = vmatprep.subr.mxu0 0.0
  %9902 = vmatpush1.msra.mxu0 0.0
  %9903 = vmatprep.subr.mxu0 0.0
  %9904 = vmatpush1.msra.mxu0 0.0
  %9905 = vmatprep.subr.mxu0 0.0
  %9906 = vmatpush1.msra.mxu0 0.0
  %9907 = vmatprep.subr.mxu0 0.0
  %9908 = vmatpush1.msra.mxu0 0.0
  %9909 = vmatprep.subr.mxu0 0.0
  %9910 = vmatpush1.msra.mxu0 0.0
  %9911 = vmatprep.subr.mxu0 0.0
  %9912 = vmatpush1.msra.mxu0 0.0
  %9913 = vmatprep.subr.mxu0 0.0
  %9914 = vmatpush1.msra.mxu0 0.0
  %9915 = vmatprep.subr.mxu0 0.0
  %9916 = vmatpush1.msra.mxu0 0.0
  %9917 = vmatprep.subr.mxu0 0.0
  %9918 = vmatpush1.msra.mxu0 0.0
  %9919 = vmatprep.subr.mxu0 0.0
  %9920 = vmatpush1.msra.mxu0 0.0
  %9921 = vmatprep.subr.mxu0 0.0
  %9922 = vmatpush1.msra.mxu0 0.0
  %9923 = vmatprep.subr.mxu0 0.0
  %9924 = vmatpush1.msra.mxu0 0.0
  %9925 = vmatprep.subr.mxu0 0.0
  %9926 = vmatpush1.msra.mxu0 0.0
  %9927 = vmatprep.subr.mxu0 0.0
  %9928 = vmatpush1.msra.mxu0 0.0
  %9929 = vmatprep.subr.mxu0 0.0
  %9930 = vmatpush1.msra.mxu0 0.0
  %9931 = vmatprep.subr.mxu0 0.0
  %9932 = vmatpush1.msra.mxu0 0.0
  %9933 = vmatprep.subr.mxu0 0.0
  %9934 = vmatpush1.msra.mxu0 0.0
  %9935 = vmatprep.subr.mxu0 0.0
  %9936 = vmatpush1.msra.mxu0 0.0
  %9937 = vmatprep.subr.mxu0 0.0
  %9938 = vmatpush1.msra.mxu0 0.0
  %9939 = vmatprep.mubr.f32.mxu0 0.0
  %9940 = vmatmul.mubr.f32.gmra.mrb[0].mxu0 %v9870
  %v9941 = vpop.f32.mrb[0].mxu0
  %v9942 = vadd.f32 0.0, %v9941
  %v9943 = vpop.f32.mrb[0].mxu0
  %9944 = vmatprep.mubr.f32.mxu0 0.0
  %9945 = vmatmul.mubr.f32.gmra.mrb[0].mxu0 %v9873
  %v9946 = vpop.f32.mrb[0].mxu0
  %v9947 = vadd.f32 0.0, %v9946
  %v9948 = vpop.f32.mrb[0].mxu0
  %9949 = vdwg.mxu0
  %v9951 = vsel %vm7461, %v9865, 0
  %v9954 = vsel %vm7461, %v9866, 0
  %9956 = vmatprep.subr.mxu0 0.0
  %9957 = vmatpush1.msra.mxu0 %v9087
  %9958 = vmatprep.subr.mxu0 0.0
  %9959 = vmatpush1.msra.mxu0 0.0
  %9960 = vmatprep.subr.mxu0 0.0
  %9961 = vmatpush1.msra.mxu0 0.0
  %9962 = vmatprep.subr.mxu0 0.0
  %9963 = vmatpush1.msra.mxu0 0.0
  %9964 = vmatprep.subr.mxu0 0.0
  %9965 = vmatpush1.msra.mxu0 0.0
  %9966 = vmatprep.subr.mxu0 0.0
  %9967 = vmatpush1.msra.mxu0 0.0
  %9968 = vmatprep.subr.mxu0 0.0
  %9969 = vmatpush1.msra.mxu0 0.0
  %9970 = vmatprep.subr.mxu0 0.0
  %9971 = vmatpush1.msra.mxu0 0.0
  %9972 = vmatprep.subr.mxu0 0.0
  %9973 = vmatpush1.msra.mxu0 0.0
  %9974 = vmatprep.subr.mxu0 0.0
  %9975 = vmatpush1.msra.mxu0 0.0
  %9976 = vmatprep.subr.mxu0 0.0
  %9977 = vmatpush1.msra.mxu0 0.0
  %9978 = vmatprep.subr.mxu0 0.0
  %9979 = vmatpush1.msra.mxu0 0.0
  %9980 = vmatprep.subr.mxu0 0.0
  %9981 = vmatpush1.msra.mxu0 0.0
  %9982 = vmatprep.subr.mxu0 0.0
  %9983 = vmatpush1.msra.mxu0 0.0
  %9984 = vmatprep.subr.mxu0 0.0
  %9985 = vmatpush1.msra.mxu0 0.0
  %9986 = vmatprep.subr.mxu0 0.0
  %9987 = vmatpush1.msra.mxu0 0.0
  %9988 = vmatprep.subr.mxu0 0.0
  %9989 = vmatpush1.msra.mxu0 0.0
  %9990 = vmatprep.subr.mxu0 0.0
  %9991 = vmatpush1.msra.mxu0 0.0
  %9992 = vmatprep.subr.mxu0 0.0
  %9993 = vmatpush1.msra.mxu0 0.0
  %9994 = vmatprep.subr.mxu0 0.0
  %9995 = vmatpush1.msra.mxu0 0.0
  %9996 = vmatprep.subr.mxu0 0.0
  %9997 = vmatpush1.msra.mxu0 0.0
  %9998 = vmatprep.subr.mxu0 0.0
  %9999 = vmatpush1.msra.mxu0 0.0
  %10000 = vmatprep.subr.mxu0 0.0
  %10001 = vmatpush1.msra.mxu0 0.0
  %10002 = vmatprep.subr.mxu0 0.0
  %10003 = vmatpush1.msra.mxu0 0.0
  %10004 = vmatprep.subr.mxu0 0.0
  %10005 = vmatpush1.msra.mxu0 0.0
  %10006 = vmatprep.subr.mxu0 0.0
  %10007 = vmatpush1.msra.mxu0 0.0
  %10008 = vmatprep.subr.mxu0 0.0
  %10009 = vmatpush1.msra.mxu0 0.0
  %10010 = vmatprep.subr.mxu0 0.0
  %10011 = vmatpush1.msra.mxu0 0.0
  %10012 = vmatprep.subr.mxu0 0.0
  %10013 = vmatpush1.msra.mxu0 0.0
  %10014 = vmatprep.subr.mxu0 0.0
  %10015 = vmatpush1.msra.mxu0 0.0
  %10016 = vmatprep.subr.mxu0 0.0
  %10017 = vmatpush1.msra.mxu0 0.0
  %10018 = vmatprep.subr.mxu0 0.0
  %10019 = vmatpush1.msra.mxu0 0.0
  %10020 = vmatprep.mubr.f32.mxu0 0.0
  %10021 = vmatmul.mubr.f32.gmra.mrb[0].mxu0 %v9951
  %v10022 = vpop.f32.mrb[0].mxu0
  %v10023 = vadd.f32 %v9942, %v10022
  %v10024 = vpop.f32.mrb[0].mxu0
  %10025 = vmatprep.mubr.f32.mxu0 0.0
  %10026 = vmatmul.mubr.f32.gmra.mrb[0].mxu0 %v9954
  %v10027 = vpop.f32.mrb[0].mxu0
  %v10028 = vadd.f32 %v9947, %v10027
  %v10029 = vpop.f32.mrb[0].mxu0
  %10030 = vdwg.mxu0
  %v10031 = vld [vmem:[%s9046 + $0x8] sm:$0xff]
  %v10032 = vld [vmem:[%s9046 + $0x10] sm:$0xff]
  %v10034 = vsel %vm7461, %v10031, 0
  %v10037 = vsel %vm7461, %v10032, 0
  %10039 = vmatprep.subr.mxu0 0.0
  %10040 = vmatpush1.msra.mxu0 %v9257
  %10041 = vmatprep.subr.mxu0 0.0
  %10042 = vmatpush1.msra.mxu0 0.0
  %10043 = vmatprep.subr.mxu0 0.0
  %10044 = vmatpush1.msra.mxu0 0.0
  %10045 = vmatprep.subr.mxu0 0.0
  %10046 = vmatpush1.msra.mxu0 0.0
  %10047 = vmatprep.subr.mxu0 0.0
  %10048 = vmatpush1.msra.mxu0 0.0
  %10049 = vmatprep.subr.mxu0 0.0
  %10050 = vmatpush1.msra.mxu0 0.0
  %10051 = vmatprep.subr.mxu0 0.0
  %10052 = vmatpush1.msra.mxu0 0.0
  %10053 = vmatprep.subr.mxu0 0.0
  %10054 = vmatpush1.msra.mxu0 0.0
  %10055 = vmatprep.subr.mxu0 0.0
  %10056 = vmatpush1.msra.mxu0 0.0
  %10057 = vmatprep.subr.mxu0 0.0
  %10058 = vmatpush1.msra.mxu0 0.0
  %10059 = vmatprep.subr.mxu0 0.0
  %10060 = vmatpush1.msra.mxu0 0.0
  %10061 = vmatprep.subr.mxu0 0.0
  %10062 = vmatpush1.msra.mxu0 0.0
  %10063 = vmatprep.subr.mxu0 0.0
  %10064 = vmatpush1.msra.mxu0 0.0
  %10065 = vmatprep.subr.mxu0 0.0
  %10066 = vmatpush1.msra.mxu0 0.0
  %10067 = vmatprep.subr.mxu0 0.0
  %10068 = vmatpush1.msra.mxu0 0.0
  %10069 = vmatprep.subr.mxu0 0.0
  %10070 = vmatpush1.msra.mxu0 0.0
  %10071 = vmatprep.subr.mxu0 0.0
  %10072 = vmatpush1.msra.mxu0 0.0
  %10073 = vmatprep.subr.mxu0 0.0
  %10074 = vmatpush1.msra.mxu0 0.0
  %10075 = vmatprep.subr.mxu0 0.0
  %10076 = vmatpush1.msra.mxu0 0.0
  %10077 = vmatprep.subr.mxu0 0.0
  %10078 = vmatpush1.msra.mxu0 0.0
  %10079 = vmatprep.subr.mxu0 0.0
  %10080 = vmatpush1.msra.mxu0 0.0
  %10081 = vmatprep.subr.mxu0 0.0
  %10082 = vmatpush1.msra.mxu0 0.0
  %10083 = vmatprep.subr.mxu0 0.0
  %10084 = vmatpush1.msra.mxu0 0.0
  %10085 = vmatprep.subr.mxu0 0.0
  %10086 = vmatpush1.msra.mxu0 0.0
  %10087 = vmatprep.subr.mxu0 0.0
  %10088 = vmatpush1.msra.mxu0 0.0
  %10089 = vmatprep.subr.mxu0 0.0
  %10090 = vmatpush1.msra.mxu0 0.0
  %10091 = vmatprep.subr.mxu0 0.0
  %10092 = vmatpush1.msra.mxu0 0.0
  %10093 = vmatprep.subr.mxu0 0.0
  %10094 = vmatpush1.msra.mxu0 0.0
  %10095 = vmatprep.subr.mxu0 0.0
  %10096 = vmatpush1.msra.mxu0 0.0
  %10097 = vmatprep.subr.mxu0 0.0
  %10098 = vmatpush1.msra.mxu0 0.0
  %10099 = vmatprep.subr.mxu0 0.0
  %10100 = vmatpush1.msra.mxu0 0.0
  %10101 = vmatprep.subr.mxu0 0.0
  %10102 = vmatpush1.msra.mxu0 0.0
  %10103 = vmatprep.mubr.f32.mxu0 0.0
  %10104 = vmatmul.mubr.f32.gmra.mrb[0].mxu0 %v10034
  %v10105 = vpop.f32.mrb[0].mxu0
  %v10106 = vadd.f32 0.0, %v10105
  %v10107 = vpop.f32.mrb[0].mxu0
  %10108 = vmatprep.mubr.f32.mxu0 0.0
  %10109 = vmatmul.mubr.f32.gmra.mrb[0].mxu0 %v10037
  %v10110 = vpop.f32.mrb[0].mxu0
  %v10111 = vadd.f32 0.0, %v10110
  %v10112 = vpop.f32.mrb[0].mxu0
  %10113 = vdwg.mxu0
  %v10114 = vadd.f32 %v10023, %v10106
  %v10115 = vadd.f32 %v10028, %v10111
  %v10116 = vmul.f32 %v10114, %v9077
  %v10117 = vmul.f32 %v10115, %v9078
  %v10118 = vadd.f32 %v10116, 0.0
  %v10119 = vadd.f32 %v10117, 0.0
  %v10120 = vld [vmem:[%s9046 + $0x1] sm:$0xff]
  %v10121 = vld [vmem:[%s9046 + $0x9] sm:$0xff]
  %v10122 = vld [vmem:[%s9046 + $0x5] sm:$0xff]
  %v10123 = vld [vmem:[%s9046 + $0xd] sm:$0xff]
  %v10125 = vsel %vm7461, %v10122, 0
  %v10128 = vsel %vm7461, %v10123, 0
  %10130 = vmatprep.subr.mxu0 0.0
  %10131 = vmatpush1.msra.mxu0 %v9352
  %10132 = vmatprep.subr.mxu0 0.0
  %10133 = vmatpush1.msra.mxu0 0.0
  %10134 = vmatprep.subr.mxu0 0.0
  %10135 = vmatpush1.msra.mxu0 0.0
  %10136 = vmatprep.subr.mxu0 0.0
  %10137 = vmatpush1.msra.mxu0 0.0
  %10138 = vmatprep.subr.mxu0 0.0
  %10139 = vmatpush1.msra.mxu0 0.0
  %10140 = vmatprep.subr.mxu0 0.0
  %10141 = vmatpush1.msra.mxu0 0.0
  %10142 = vmatprep.subr.mxu0 0.0
  %10143 = vmatpush1.msra.mxu0 0.0
  %10144 = vmatprep.subr.mxu0 0.0
  %10145 = vmatpush1.msra.mxu0 0.0
  %10146 = vmatprep.subr.mxu0 0.0
  %10147 = vmatpush1.msra.mxu0 0.0
  %10148 = vmatprep.subr.mxu0 0.0
  %10149 = vmatpush1.msra.mxu0 0.0
  %10150 = vmatprep.subr.mxu0 0.0
  %10151 = vmatpush1.msra.mxu0 0.0
  %10152 = vmatprep.subr.mxu0 0.0
  %10153 = vmatpush1.msra.mxu0 0.0
  %10154 = vmatprep.subr.mxu0 0.0
  %10155 = vmatpush1.msra.mxu0 0.0
  %10156 = vmatprep.subr.mxu0 0.0
  %10157 = vmatpush1.msra.mxu0 0.0
  %10158 = vmatprep.subr.mxu0 0.0
  %10159 = vmatpush1.msra.mxu0 0.0
  %10160 = vmatprep.subr.mxu0 0.0
  %10161 = vmatpush1.msra.mxu0 0.0
  %10162 = vmatprep.subr.mxu0 0.0
  %10163 = vmatpush1.msra.mxu0 0.0
  %10164 = vmatprep.subr.mxu0 0.0
  %10165 = vmatpush1.msra.mxu0 0.0
  %10166 = vmatprep.subr.mxu0 0.0
  %10167 = vmatpush1.msra.mxu0 0.0
  %10168 = vmatprep.subr.mxu0 0.0
  %10169 = vmatpush1.msra.mxu0 0.0
  %10170 = vmatprep.subr.mxu0 0.0
  %10171 = vmatpush1.msra.mxu0 0.0
  %10172 = vmatprep.subr.mxu0 0.0
  %10173 = vmatpush1.msra.mxu0 0.0
  %10174 = vmatprep.subr.mxu0 0.0
  %10175 = vmatpush1.msra.mxu0 0.0
  %10176 = vmatprep.subr.mxu0 0.0
  %10177 = vmatpush1.msra.mxu0 0.0
  %10178 = vmatprep.subr.mxu0 0.0
  %10179 = vmatpush1.msra.mxu0 0.0
  %10180 = vmatprep.subr.mxu0 0.0
  %10181 = vmatpush1.msra.mxu0 0.0
  %10182 = vmatprep.subr.mxu0 0.0
  %10183 = vmatpush1.msra.mxu0 0.0
  %10184 = vmatprep.subr.mxu0 0.0
  %10185 = vmatpush1.msra.mxu0 0.0
  %10186 = vmatprep.subr.mxu0 0.0
  %10187 = vmatpush1.msra.mxu0 0.0
  %10188 = vmatprep.subr.mxu0 0.0
  %10189 = vmatpush1.msra.mxu0 0.0
  %10190 = vmatprep.subr.mxu0 0.0
  %10191 = vmatpush1.msra.mxu0 0.0
  %10192 = vmatprep.subr.mxu0 0.0
  %10193 = vmatpush1.msra.mxu0 0.0
  %10194 = vmatprep.mubr.f32.mxu0 0.0
  %10195 = vmatmul.mubr.f32.gmra.mrb[0].mxu0 %v10125
  %v10196 = vpop.f32.mrb[0].mxu0
  %v10197 = vadd.f32 0.0, %v10196
  %v10198 = vpop.f32.mrb[0].mxu0
  %10199 = vmatprep.mubr.f32.mxu0 0.0
  %10200 = vmatmul.mubr.f32.gmra.mrb[0].mxu0 %v10128
  %v10201 = vpop.f32.mrb[0].mxu0
  %v10202 = vadd.f32 0.0, %v10201
  %v10203 = vpop.f32.mrb[0].mxu0
  %10204 = vdwg.mxu0
  %v10206 = vsel %vm7461, %v10120, 0
  %v10209 = vsel %vm7461, %v10121, 0
  %10211 = vmatprep.subr.mxu0 0.0
  %10212 = vmatpush1.msra.mxu0 %v9348
  %10213 = vmatprep.subr.mxu0 0.0
  %10214 = vmatpush1.msra.mxu0 0.0
  %10215 = vmatprep.subr.mxu0 0.0
  %10216 = vmatpush1.msra.mxu0 0.0
  %10217 = vmatprep.subr.mxu0 0.0
  %10218 = vmatpush1.msra.mxu0 0.0
  %10219 = vmatprep.subr.mxu0 0.0
  %10220 = vmatpush1.msra.mxu0 0.0
  %10221 = vmatprep.subr.mxu0 0.0
  %10222 = vmatpush1.msra.mxu0 0.0
  %10223 = vmatprep.subr.mxu0 0.0
  %10224 = vmatpush1.msra.mxu0 0.0
  %10225 = vmatprep.subr.mxu0 0.0
  %10226 = vmatpush1.msra.mxu0 0.0
  %10227 = vmatprep.subr.mxu0 0.0
  %10228 = vmatpush1.msra.mxu0 0.0
  %10229 = vmatprep.subr.mxu0 0.0
  %10230 = vmatpush1.msra.mxu0 0.0
  %10231 = vmatprep.subr.mxu0 0.0
  %10232 = vmatpush1.msra.mxu0 0.0
  %10233 = vmatprep.subr.mxu0 0.0
  %10234 = vmatpush1.msra.mxu0 0.0
  %10235 = vmatprep.subr.mxu0 0.0
  %10236 = vmatpush1.msra.mxu0 0.0
  %10237 = vmatprep.subr.mxu0 0.0
  %10238 = vmatpush1.msra.mxu0 0.0
  %10239 = vmatprep.subr.mxu0 0.0
  %10240 = vmatpush1.msra.mxu0 0.0
  %10241 = vmatprep.subr.mxu0 0.0
  %10242 = vmatpush1.msra.mxu0 0.0
  %10243 = vmatprep.subr.mxu0 0.0
  %10244 = vmatpush1.msra.mxu0 0.0
  %10245 = vmatprep.subr.mxu0 0.0
  %10246 = vmatpush1.msra.mxu0 0.0
  %10247 = vmatprep.subr.mxu0 0.0
  %10248 = vmatpush1.msra.mxu0 0.0
  %10249 = vmatprep.subr.mxu0 0.0
  %10250 = vmatpush1.msra.mxu0 0.0
  %10251 = vmatprep.subr.mxu0 0.0
  %10252 = vmatpush1.msra.mxu0 0.0
  %10253 = vmatprep.subr.mxu0 0.0
  %10254 = vmatpush1.msra.mxu0 0.0
  %10255 = vmatprep.subr.mxu0 0.0
  %10256 = vmatpush1.msra.mxu0 0.0
  %10257 = vmatprep.subr.mxu0 0.0
  %10258 = vmatpush1.msra.mxu0 0.0
  %10259 = vmatprep.subr.mxu0 0.0
  %10260 = vmatpush1.msra.mxu0 0.0
  %10261 = vmatprep.subr.mxu0 0.0
  %10262 = vmatpush1.msra.mxu0 0.0
  %10263 = vmatprep.subr.mxu0 0.0
  %10264 = vmatpush1.msra.mxu0 0.0
  %10265 = vmatprep.subr.mxu0 0.0
  %10266 = vmatpush1.msra.mxu0 0.0
  %10267 = vmatprep.subr.mxu0 0.0
  %10268 = vmatpush1.msra.mxu0 0.0
  %10269 = vmatprep.subr.mxu0 0.0
  %10270 = vmatpush1.msra.mxu0 0.0
  %10271 = vmatprep.subr.mxu0 0.0
  %10272 = vmatpush1.msra.mxu0 0.0
  %10273 = vmatprep.subr.mxu0 0.0
  %10274 = vmatpush1.msra.mxu0 0.0
  %10275 = vmatprep.mubr.f32.mxu0 0.0
  %10276 = vmatmul.mubr.f32.gmra.mrb[0].mxu0 %v10206
  %v10277 = vpop.f32.mrb[0].mxu0
  %v10278 = vadd.f32 %v10197, %v10277
  %v10279 = vpop.f32.mrb[0].mxu0
  %10280 = vmatprep.mubr.f32.mxu0 0.0
  %10281 = vmatmul.mubr.f32.gmra.mrb[0].mxu0 %v10209
  %v10282 = vpop.f32.mrb[0].mxu0
  %v10283 = vadd.f32 %v10202, %v10282
  %v10284 = vpop.f32.mrb[0].mxu0
  %10285 = vdwg.mxu0
  %v10286 = vld [vmem:[%s9046 + $0x9] sm:$0xff]
  %v10287 = vld [vmem:[%s9046 + $0x11] sm:$0xff]
  %v10289 = vsel %vm7461, %v10286, 0
  %v10292 = vsel %vm7461, %v10287, 0
  %10294 = vmatprep.subr.mxu0 0.0
  %10295 = vmatpush1.msra.mxu0 %v9518
  %10296 = vmatprep.subr.mxu0 0.0
  %10297 = vmatpush1.msra.mxu0 0.0
  %10298 = vmatprep.subr.mxu0 0.0
  %10299 = vmatpush1.msra.mxu0 0.0
  %10300 = vmatprep.subr.mxu0 0.0
  %10301 = vmatpush1.msra.mxu0 0.0
  %10302 = vmatprep.subr.mxu0 0.0
  %10303 = vmatpush1.msra.mxu0 0.0
  %10304 = vmatprep.subr.mxu0 0.0
  %10305 = vmatpush1.msra.mxu0 0.0
  %10306 = vmatprep.subr.mxu0 0.0
  %10307 = vmatpush1.msra.mxu0 0.0
  %10308 = vmatprep.subr.mxu0 0.0
  %10309 = vmatpush1.msra.mxu0 0.0
  %10310 = vmatprep.subr.mxu0 0.0
  %10311 = vmatpush1.msra.mxu0 0.0
  %10312 = vmatprep.subr.mxu0 0.0
  %10313 = vmatpush1.msra.mxu0 0.0
  %10314 = vmatprep.subr.mxu0 0.0
  %10315 = vmatpush1.msra.mxu0 0.0
  %10316 = vmatprep.subr.mxu0 0.0
  %10317 = vmatpush1.msra.mxu0 0.0
  %10318 = vmatprep.subr.mxu0 0.0
  %10319 = vmatpush1.msra.mxu0 0.0
  %10320 = vmatprep.subr.mxu0 0.0
  %10321 = vmatpush1.msra.mxu0 0.0
  %10322 = vmatprep.subr.mxu0 0.0
  %10323 = vmatpush1.msra.mxu0 0.0
  %10324 = vmatprep.subr.mxu0 0.0
  %10325 = vmatpush1.msra.mxu0 0.0
  %10326 = vmatprep.subr.mxu0 0.0
  %10327 = vmatpush1.msra.mxu0 0.0
  %10328 = vmatprep.subr.mxu0 0.0
  %10329 = vmatpush1.msra.mxu0 0.0
  %10330 = vmatprep.subr.mxu0 0.0
  %10331 = vmatpush1.msra.mxu0 0.0
  %10332 = vmatprep.subr.mxu0 0.0
  %10333 = vmatpush1.msra.mxu0 0.0
  %10334 = vmatprep.subr.mxu0 0.0
  %10335 = vmatpush1.msra.mxu0 0.0
  %10336 = vmatprep.subr.mxu0 0.0
  %10337 = vmatpush1.msra.mxu0 0.0
  %10338 = vmatprep.subr.mxu0 0.0
  %10339 = vmatpush1.msra.mxu0 0.0
  %10340 = vmatprep.subr.mxu0 0.0
  %10341 = vmatpush1.msra.mxu0 0.0
  %10342 = vmatprep.subr.mxu0 0.0
  %10343 = vmatpush1.msra.mxu0 0.0
  %10344 = vmatprep.subr.mxu0 0.0
  %10345 = vmatpush1.msra.mxu0 0.0
  %10346 = vmatprep.subr.mxu0 0.0
  %10347 = vmatpush1.msra.mxu0 0.0
  %10348 = vmatprep.subr.mxu0 0.0
  %10349 = vmatpush1.msra.mxu0 0.0
  %10350 = vmatprep.subr.mxu0 0.0
  %10351 = vmatpush1.msra.mxu0 0.0
  %10352 = vmatprep.subr.mxu0 0.0
  %10353 = vmatpush1.msra.mxu0 0.0
  %10354 = vmatprep.subr.mxu0 0.0
  %10355 = vmatpush1.msra.mxu0 0.0
  %10356 = vmatprep.subr.mxu0 0.0
  %10357 = vmatpush1.msra.mxu0 0.0
  %10358 = vmatprep.mubr.f32.mxu0 0.0
  %10359 = vmatmul.mubr.f32.gmra.mrb[0].mxu0 %v10289
  %v10360 = vpop.f32.mrb[0].mxu0
  %v10361 = vadd.f32 0.0, %v10360
  %v10362 = vpop.f32.mrb[0].mxu0
  %10363 = vmatprep.mubr.f32.mxu0 0.0
  %10364 = vmatmul.mubr.f32.gmra.mrb[0].mxu0 %v10292
  %v10365 = vpop.f32.mrb[0].mxu0
  %v10366 = vadd.f32 0.0, %v10365
  %v10367 = vpop.f32.mrb[0].mxu0
  %10368 = vdwg.mxu0
  %v10369 = vadd.f32 %v10278, %v10361
  %v10370 = vadd.f32 %v10283, %v10366
  %v10371 = vadd.f32 %v10118, %v10369
  %v10372 = vadd.f32 %v10119, %v10370
  %v10373 = vld [vmem:[%s9046 + $0x2] sm:$0xff]
  %v10374 = vld [vmem:[%s9046 + $0xa] sm:$0xff]
  %v10375 = vld [vmem:[%s9046 + $0x6] sm:$0xff]
  %v10376 = vld [vmem:[%s9046 + $0xe] sm:$0xff]
  %v10378 = vsel %vm7461, %v10375, 0
  %v10381 = vsel %vm7461, %v10376, 0
  %10383 = vmatprep.subr.mxu0 0.0
  %10384 = vmatpush1.msra.mxu0 %v9611
  %10385 = vmatprep.subr.mxu0 0.0
  %10386 = vmatpush1.msra.mxu0 0.0
  %10387 = vmatprep.subr.mxu0 0.0
  %10388 = vmatpush1.msra.mxu0 0.0
  %10389 = vmatprep.subr.mxu0 0.0
  %10390 = vmatpush1.msra.mxu0 0.0
  %10391 = vmatprep.subr.mxu0 0.0
  %10392 = vmatpush1.msra.mxu0 0.0
  %10393 = vmatprep.subr.mxu0 0.0
  %10394 = vmatpush1.msra.mxu0 0.0
  %10395 = vmatprep.subr.mxu0 0.0
  %10396 = vmatpush1.msra.mxu0 0.0
  %10397 = vmatprep.subr.mxu0 0.0
  %10398 = vmatpush1.msra.mxu0 0.0
  %10399 = vmatprep.subr.mxu0 0.0
  %10400 = vmatpush1.msra.mxu0 0.0
  %10401 = vmatprep.subr.mxu0 0.0
  %10402 = vmatpush1.msra.mxu0 0.0
  %10403 = vmatprep.subr.mxu0 0.0
  %10404 = vmatpush1.msra.mxu0 0.0
  %10405 = vmatprep.subr.mxu0 0.0
  %10406 = vmatpush1.msra.mxu0 0.0
  %10407 = vmatprep.subr.mxu0 0.0
  %10408 = vmatpush1.msra.mxu0 0.0
  %10409 = vmatprep.subr.mxu0 0.0
  %10410 = vmatpush1.msra.mxu0 0.0
  %10411 = vmatprep.subr.mxu0 0.0
  %10412 = vmatpush1.msra.mxu0 0.0
  %10413 = vmatprep.subr.mxu0 0.0
  %10414 = vmatpush1.msra.mxu0 0.0
  %10415 = vmatprep.subr.mxu0 0.0
  %10416 = vmatpush1.msra.mxu0 0.0
  %10417 = vmatprep.subr.mxu0 0.0
  %10418 = vmatpush1.msra.mxu0 0.0
  %10419 = vmatprep.subr.mxu0 0.0
  %10420 = vmatpush1.msra.mxu0 0.0
  %10421 = vmatprep.subr.mxu0 0.0
  %10422 = vmatpush1.msra.mxu0 0.0
  %10423 = vmatprep.subr.mxu0 0.0
  %10424 = vmatpush1.msra.mxu0 0.0
  %10425 = vmatprep.subr.mxu0 0.0
  %10426 = vmatpush1.msra.mxu0 0.0
  %10427 = vmatprep.subr.mxu0 0.0
  %10428 = vmatpush1.msra.mxu0 0.0
  %10429 = vmatprep.subr.mxu0 0.0
  %10430 = vmatpush1.msra.mxu0 0.0
  %10431 = vmatprep.subr.mxu0 0.0
  %10432 = vmatpush1.msra.mxu0 0.0
  %10433 = vmatprep.subr.mxu0 0.0
  %10434 = vmatpush1.msra.mxu0 0.0
  %10435 = vmatprep.subr.mxu0 0.0
  %10436 = vmatpush1.msra.mxu0 0.0
  %10437 = vmatprep.subr.mxu0 0.0
  %10438 = vmatpush1.msra.mxu0 0.0
  %10439 = vmatprep.subr.mxu0 0.0
  %10440 = vmatpush1.msra.mxu0 0.0
  %10441 = vmatprep.subr.mxu0 0.0
  %10442 = vmatpush1.msra.mxu0 0.0
  %10443 = vmatprep.subr.mxu0 0.0
  %10444 = vmatpush1.msra.mxu0 0.0
  %10445 = vmatprep.subr.mxu0 0.0
  %10446 = vmatpush1.msra.mxu0 0.0
  %10447 = vmatprep.mubr.f32.mxu0 0.0
  %10448 = vmatmul.mubr.f32.gmra.mrb[0].mxu0 %v10378
  %v10449 = vpop.f32.mrb[0].mxu0
  %v10450 = vadd.f32 0.0, %v10449
  %v10451 = vpop.f32.mrb[0].mxu0
  %10452 = vmatprep.mubr.f32.mxu0 0.0
  %10453 = vmatmul.mubr.f32.gmra.mrb[0].mxu0 %v10381
  %v10454 = vpop.f32.mrb[0].mxu0
  %v10455 = vadd.f32 0.0, %v10454
  %v10456 = vpop.f32.mrb[0].mxu0
  %10457 = vdwg.mxu0
  %v10459 = vsel %vm7461, %v10373, 0
  %v10462 = vsel %vm7461, %v10374, 0
  %10464 = vmatprep.subr.mxu0 0.0
  %10465 = vmatpush1.msra.mxu0 %v9607
  %10466 = vmatprep.subr.mxu0 0.0
  %10467 = vmatpush1.msra.mxu0 0.0
  %10468 = vmatprep.subr.mxu0 0.0
  %10469 = vmatpush1.msra.mxu0 0.0
  %10470 = vmatprep.subr.mxu0 0.0
  %10471 = vmatpush1.msra.mxu0 0.0
  %10472 = vmatprep.subr.mxu0 0.0
  %10473 = vmatpush1.msra.mxu0 0.0
  %10474 = vmatprep.subr.mxu0 0.0
  %10475 = vmatpush1.msra.mxu0 0.0
  %10476 = vmatprep.subr.mxu0 0.0
  %10477 = vmatpush1.msra.mxu0 0.0
  %10478 = vmatprep.subr.mxu0 0.0
  %10479 = vmatpush1.msra.mxu0 0.0
  %10480 = vmatprep.subr.mxu0 0.0
  %10481 = vmatpush1.msra.mxu0 0.0
  %10482 = vmatprep.subr.mxu0 0.0
  %10483 = vmatpush1.msra.mxu0 0.0
  %10484 = vmatprep.subr.mxu0 0.0
  %10485 = vmatpush1.msra.mxu0 0.0
  %10486 = vmatprep.subr.mxu0 0.0
  %10487 = vmatpush1.msra.mxu0 0.0
  %10488 = vmatprep.subr.mxu0 0.0
  %10489 = vmatpush1.msra.mxu0 0.0
  %10490 = vmatprep.subr.mxu0 0.0
  %10491 = vmatpush1.msra.mxu0 0.0
  %10492 = vmatprep.subr.mxu0 0.0
  %10493 = vmatpush1.msra.mxu0 0.0
  %10494 = vmatprep.subr.mxu0 0.0
  %10495 = vmatpush1.msra.mxu0 0.0
  %10496 = vmatprep.subr.mxu0 0.0
  %10497 = vmatpush1.msra.mxu0 0.0
  %10498 = vmatprep.subr.mxu0 0.0
  %10499 = vmatpush1.msra.mxu0 0.0
  %10500 = vmatprep.subr.mxu0 0.0
  %10501 = vmatpush1.msra.mxu0 0.0
  %10502 = vmatprep.subr.mxu0 0.0
  %10503 = vmatpush1.msra.mxu0 0.0
  %10504 = vmatprep.subr.mxu0 0.0
  %10505 = vmatpush1.msra.mxu0 0.0
  %10506 = vmatprep.subr.mxu0 0.0
  %10507 = vmatpush1.msra.mxu0 0.0
  %10508 = vmatprep.subr.mxu0 0.0
  %10509 = vmatpush1.msra.mxu0 0.0
  %10510 = vmatprep.subr.mxu0 0.0
  %10511 = vmatpush1.msra.mxu0 0.0
  %10512 = vmatprep.subr.mxu0 0.0
  %10513 = vmatpush1.msra.mxu0 0.0
  %10514 = vmatprep.subr.mxu0 0.0
  %10515 = vmatpush1.msra.mxu0 0.0
  %10516 = vmatprep.subr.mxu0 0.0
  %10517 = vmatpush1.msra.mxu0 0.0
  %10518 = vmatprep.subr.mxu0 0.0
  %10519 = vmatpush1.msra.mxu0 0.0
  %10520 = vmatprep.subr.mxu0 0.0
  %10521 = vmatpush1.msra.mxu0 0.0
  %10522 = vmatprep.subr.mxu0 0.0
  %10523 = vmatpush1.msra.mxu0 0.0
  %10524 = vmatprep.subr.mxu0 0.0
  %10525 = vmatpush1.msra.mxu0 0.0
  %10526 = vmatprep.subr.mxu0 0.0
  %10527 = vmatpush1.msra.mxu0 0.0
  %10528 = vmatprep.mubr.f32.mxu0 0.0
  %10529 = vmatmul.mubr.f32.gmra.mrb[0].mxu0 %v10459
  %v10530 = vpop.f32.mrb[0].mxu0
  %v10531 = vadd.f32 %v10450, %v10530
  %v10532 = vpop.f32.mrb[0].mxu0
  %10533 = vmatprep.mubr.f32.mxu0 0.0
  %10534 = vmatmul.mubr.f32.gmra.mrb[0].mxu0 %v10462
  %v10535 = vpop.f32.mrb[0].mxu0
  %v10536 = vadd.f32 %v10455, %v10535
  %v10537 = vpop.f32.mrb[0].mxu0
  %10538 = vdwg.mxu0
  %v10539 = vld [vmem:[%s9046 + $0xa] sm:$0xff]
  %v10540 = vld [vmem:[%s9046 + $0x12] sm:$0xff]
  %v10542 = vsel %vm7461, %v10539, 0
  %v10545 = vsel %vm7461, %v10540, 0
  %10547 = vmatprep.subr.mxu0 0.0
  %10548 = vmatpush1.msra.mxu0 %v9777
  %10549 = vmatprep.subr.mxu0 0.0
  %10550 = vmatpush1.msra.mxu0 0.0
  %10551 = vmatprep.subr.mxu0 0.0
  %10552 = vmatpush1.msra.mxu0 0.0
  %10553 = vmatprep.subr.mxu0 0.0
  %10554 = vmatpush1.msra.mxu0 0.0
  %10555 = vmatprep.subr.mxu0 0.0
  %10556 = vmatpush1.msra.mxu0 0.0
  %10557 = vmatprep.subr.mxu0 0.0
  %10558 = vmatpush1.msra.mxu0 0.0
  %10559 = vmatprep.subr.mxu0 0.0
  %10560 = vmatpush1.msra.mxu0 0.0
  %10561 = vmatprep.subr.mxu0 0.0
  %10562 = vmatpush1.msra.mxu0 0.0
  %10563 = vmatprep.subr.mxu0 0.0
  %10564 = vmatpush1.msra.mxu0 0.0
  %10565 = vmatprep.subr.mxu0 0.0
  %10566 = vmatpush1.msra.mxu0 0.0
  %10567 = vmatprep.subr.mxu0 0.0
  %10568 = vmatpush1.msra.mxu0 0.0
  %10569 = vmatprep.subr.mxu0 0.0
  %10570 = vmatpush1.msra.mxu0 0.0
  %10571 = vmatprep.subr.mxu0 0.0
  %10572 = vmatpush1.msra.mxu0 0.0
  %10573 = vmatprep.subr.mxu0 0.0
  %10574 = vmatpush1.msra.mxu0 0.0
  %10575 = vmatprep.subr.mxu0 0.0
  %10576 = vmatpush1.msra.mxu0 0.0
  %10577 = vmatprep.subr.mxu0 0.0
  %10578 = vmatpush1.msra.mxu0 0.0
  %10579 = vmatprep.subr.mxu0 0.0
  %10580 = vmatpush1.msra.mxu0 0.0
  %10581 = vmatprep.subr.mxu0 0.0
  %10582 = vmatpush1.msra.mxu0 0.0
  %10583 = vmatprep.subr.mxu0 0.0
  %10584 = vmatpush1.msra.mxu0 0.0
  %10585 = vmatprep.subr.mxu0 0.0
  %10586 = vmatpush1.msra.mxu0 0.0
  %10587 = vmatprep.subr.mxu0 0.0
  %10588 = vmatpush1.msra.mxu0 0.0
  %10589 = vmatprep.subr.mxu0 0.0
  %10590 = vmatpush1.msra.mxu0 0.0
  %10591 = vmatprep.subr.mxu0 0.0
  %10592 = vmatpush1.msra.mxu0 0.0
  %10593 = vmatprep.subr.mxu0 0.0
  %10594 = vmatpush1.msra.mxu0 0.0
  %10595 = vmatprep.subr.mxu0 0.0
  %10596 = vmatpush1.msra.mxu0 0.0
  %10597 = vmatprep.subr.mxu0 0.0
  %10598 = vmatpush1.msra.mxu0 0.0
  %10599 = vmatprep.subr.mxu0 0.0
  %10600 = vmatpush1.msra.mxu0 0.0
  %10601 = vmatprep.subr.mxu0 0.0
  %10602 = vmatpush1.msra.mxu0 0.0
  %10603 = vmatprep.subr.mxu0 0.0
  %10604 = vmatpush1.msra.mxu0 0.0
  %10605 = vmatprep.subr.mxu0 0.0
  %10606 = vmatpush1.msra.mxu0 0.0
  %10607 = vmatprep.subr.mxu0 0.0
  %10608 = vmatpush1.msra.mxu0 0.0
  %10609 = vmatprep.subr.mxu0 0.0
  %10610 = vmatpush1.msra.mxu0 0.0
  %10611 = vmatprep.mubr.f32.mxu0 0.0
  %10612 = vmatmul.mubr.f32.gmra.mrb[0].mxu0 %v10542
  %v10613 = vpop.f32.mrb[0].mxu0
  %v10614 = vadd.f32 0.0, %v10613
  %v10615 = vpop.f32.mrb[0].mxu0
  %10616 = vmatprep.mubr.f32.mxu0 0.0
  %10617 = vmatmul.mubr.f32.gmra.mrb[0].mxu0 %v10545
  %v10618 = vpop.f32.mrb[0].mxu0
  %v10619 = vadd.f32 0.0, %v10618
  %v10620 = vpop.f32.mrb[0].mxu0
  %10621 = vdwg.mxu0
  %v10622 = vadd.f32 %v10531, %v10614
  %v10623 = vadd.f32 %v10536, %v10619
  %v10624 = vmul.f32 %v10622, %v9083
  %v10625 = vmul.f32 %v10623, %v9084
  %v10626 = vadd.f32 %v10371, %v10624
  %v10627 = vadd.f32 %v10372, %v10625
  %v10628 = vld [vmem:[%s8] sm:$0x3]
  %10629 = vmatprep.subr.mxu0 0.0
  %10630 = vmatpush1.msra.mxu0 %v9863
  %10631 = vmatprep.subr.mxu0 0.0
  %10632 = vmatpush1.msra.mxu0 %v9864
  %10633 = vmatprep.subr.mxu0 0.0
  %10634 = vmatpush1.msra.mxu0 %v10626
  %10635 = vmatprep.subr.mxu0 0.0
  %10636 = vmatpush1.msra.mxu0 %v10627
  %10637 = vmatprep.subr.mxu0 0.0
  %10638 = vmatpush1.msra.mxu0 0.0
  %10639 = vmatprep.subr.mxu0 0.0
  %10640 = vmatpush1.msra.mxu0 0.0
  %10641 = vmatprep.subr.mxu0 0.0
  %10642 = vmatpush1.msra.mxu0 0.0
  %10643 = vmatprep.subr.mxu0 0.0
  %10644 = vmatpush1.msra.mxu0 0.0
  %10645 = vmatprep.subr.mxu0 0.0
  %10646 = vmatpush1.msra.mxu0 0.0
  %10647 = vmatprep.subr.mxu0 0.0
  %10648 = vmatpush1.msra.mxu0 0.0
  %10649 = vmatprep.subr.mxu0 0.0
  %10650 = vmatpush1.msra.mxu0 0.0
  %10651 = vmatprep.subr.mxu0 0.0
  %10652 = vmatpush1.msra.mxu0 0.0
  %10653 = vmatprep.subr.mxu0 0.0
  %10654 = vmatpush1.msra.mxu0 0.0
  %10655 = vmatprep.subr.mxu0 0.0
  %10656 = vmatpush1.msra.mxu0 0.0
  %10657 = vmatprep.subr.mxu0 0.0
  %10658 = vmatpush1.msra.mxu0 0.0
  %10659 = vmatprep.subr.mxu0 0.0
  %10660 = vmatpush1.msra.mxu0 0.0
  %10661 = vmatprep.subr.mxu0 0.0
  %10662 = vmatpush1.msra.mxu0 0.0
  %10663 = vmatprep.subr.mxu0 0.0
  %10664 = vmatpush1.msra.mxu0 0.0
  %10665 = vmatprep.subr.mxu0 0.0
  %10666 = vmatpush1.msra.mxu0 0.0
  %10667 = vmatprep.subr.mxu0 0.0
  %10668 = vmatpush1.msra.mxu0 0.0
  %10669 = vmatprep.subr.mxu0 0.0
  %10670 = vmatpush1.msra.mxu0 0.0
  %10671 = vmatprep.subr.mxu0 0.0
  %10672 = vmatpush1.msra.mxu0 0.0
  %10673 = vmatprep.subr.mxu0 0.0
  %10674 = vmatpush1.msra.mxu0 0.0
  %10675 = vmatprep.subr.mxu0 0.0
  %10676 = vmatpush1.msra.mxu0 0.0
  %10677 = vmatprep.subr.mxu0 0.0
  %10678 = vmatpush1.msra.mxu0 0.0
  %10679 = vmatprep.subr.mxu0 0.0
  %10680 = vmatpush1.msra.mxu0 0.0
  %10681 = vmatprep.subr.mxu0 0.0
  %10682 = vmatpush1.msra.mxu0 0.0
  %10683 = vmatprep.subr.mxu0 0.0
  %10684 = vmatpush1.msra.mxu0 0.0
  %10685 = vmatprep.subr.mxu0 0.0
  %10686 = vmatpush1.msra.mxu0 0.0
  %10687 = vmatprep.subr.mxu0 0.0
  %10688 = vmatpush1.msra.mxu0 0.0
  %10689 = vmatprep.subr.mxu0 0.0
  %10690 = vmatpush1.msra.mxu0 0.0
  %10691 = vmatprep.subr.mxu0 0.0
  %10692 = vmatpush1.msra.mxu0 0.0
  %10693 = vmatprep.mubr.f32.mxu0 0.0
  %10694 = vmatmul.mubr.f32.gmra.mrb[0].mxu0 %v8700
  %v10695 = vpop.f32.mrb[0].mxu0
  %v10696 = vadd.f32 0.0, %v10695
  %v10697 = vpop.f32.mrb[0].mxu0
  %10698 = vdwg.mxu0
  %v10699 = vmul.f32 %v10696, 0.03125
  %v10700 = vlaneseq
  %v10701 = vshrl.u32 %v10700, 7
  %v10702 = vsub.s32 0, %v10701
  %v10703 = vrot.slane %v10699, %v10702
  %v10704 = vsub.f32 %v9863, %v10703
  %v10705 = vsub.f32 %v9864, %v10703
  %v10706 = vsub.f32 %v10626, %v10703
  %v10707 = vsub.f32 %v10627, %v10703
  %v10708 = vmul.f32 %v10704, %v10704
  %v10709 = vmul.f32 %v10705, %v10705
  %v10710 = vmul.f32 %v10706, %v10706
  %v10711 = vmul.f32 %v10707, %v10707
  %10712 = vmatprep.subr.mxu0 0.0
  %10713 = vmatpush1.msra.mxu0 %v10708
  %10714 = vmatprep.subr.mxu0 0.0
  %10715 = vmatpush1.msra.mxu0 %v10709
  %10716 = vmatprep.subr.mxu0 0.0
  %10717 = vmatpush1.msra.mxu0 %v10710
  %10718 = vmatprep.subr.mxu0 0.0
  %10719 = vmatpush1.msra.mxu0 %v10711
  %10720 = vmatprep.subr.mxu0 0.0
  %10721 = vmatpush1.msra.mxu0 0.0
  %10722 = vmatprep.subr.mxu0 0.0
  %10723 = vmatpush1.msra.mxu0 0.0
  %10724 = vmatprep.subr.mxu0 0.0
  %10725 = vmatpush1.msra.mxu0 0.0
  %10726 = vmatprep.subr.mxu0 0.0
  %10727 = vmatpush1.msra.mxu0 0.0
  %10728 = vmatprep.subr.mxu0 0.0
  %10729 = vmatpush1.msra.mxu0 0.0
  %10730 = vmatprep.subr.mxu0 0.0
  %10731 = vmatpush1.msra.mxu0 0.0
  %10732 = vmatprep.subr.mxu0 0.0
  %10733 = vmatpush1.msra.mxu0 0.0
  %10734 = vmatprep.subr.mxu0 0.0
  %10735 = vmatpush1.msra.mxu0 0.0
  %10736 = vmatprep.subr.mxu0 0.0
  %10737 = vmatpush1.msra.mxu0 0.0
  %10738 = vmatprep.subr.mxu0 0.0
  %10739 = vmatpush1.msra.mxu0 0.0
  %10740 = vmatprep.subr.mxu0 0.0
  %10741 = vmatpush1.msra.mxu0 0.0
  %10742 = vmatprep.subr.mxu0 0.0
  %10743 = vmatpush1.msra.mxu0 0.0
  %10744 = vmatprep.subr.mxu0 0.0
  %10745 = vmatpush1.msra.mxu0 0.0
  %10746 = vmatprep.subr.mxu0 0.0
  %10747 = vmatpush1.msra.mxu0 0.0
  %10748 = vmatprep.subr.mxu0 0.0
  %10749 = vmatpush1.msra.mxu0 0.0
  %10750 = vmatprep.subr.mxu0 0.0
  %10751 = vmatpush1.msra.mxu0 0.0
  %10752 = vmatprep.subr.mxu0 0.0
  %10753 = vmatpush1.msra.mxu0 0.0
  %10754 = vmatprep.subr.mxu0 0.0
  %10755 = vmatpush1.msra.mxu0 0.0
  %10756 = vmatprep.subr.mxu0 0.0
  %10757 = vmatpush1.msra.mxu0 0.0
  %10758 = vmatprep.subr.mxu0 0.0
  %10759 = vmatpush1.msra.mxu0 0.0
  %10760 = vmatprep.subr.mxu0 0.0
  %10761 = vmatpush1.msra.mxu0 0.0
  %10762 = vmatprep.subr.mxu0 0.0
  %10763 = vmatpush1.msra.mxu0 0.0
  %10764 = vmatprep.subr.mxu0 0.0
  %10765 = vmatpush1.msra.mxu0 0.0
  %10766 = vmatprep.subr.mxu0 0.0
  %10767 = vmatpush1.msra.mxu0 0.0
  %10768 = vmatprep.subr.mxu0 0.0
  %10769 = vmatpush1.msra.mxu0 0.0
  %10770 = vmatprep.subr.mxu0 0.0
  %10771 = vmatpush1.msra.mxu0 0.0
  %10772 = vmatprep.subr.mxu0 0.0
  %10773 = vmatpush1.msra.mxu0 0.0
  %10774 = vmatprep.subr.mxu0 0.0
  %10775 = vmatpush1.msra.mxu0 0.0
  %10776 = vmatprep.mubr.f32.mxu0 0.0
  %10777 = vmatmul.mubr.f32.gmra.mrb[0].mxu0 %v8700
  %v10778 = vpop.f32.mrb[0].mxu0
  %v10779 = vadd.f32 0.0, %v10778
  %v10780 = vpop.f32.mrb[0].mxu0
  %10781 = vdwg.mxu0
  %v10782 = vmul.f32 %v10779, 0.03125
  %v10783 = vadd.f32 %v10782, 1e-05
  %v10784 = vrsqrt.pop %v10783
  %v10785 = vmul.f32 %v10628, %v10784
  %v10786 = vlaneseq
  %v10787 = vshrl.u32 %v10786, 7
  %v10788 = vsub.s32 0, %v10787
  %v10789 = vrot.slane %v10785, %v10788
  %v10790 = vmul.f32 %v10704, %v10789
  %v10791 = vmul.f32 %v10705, %v10789
  %v10792 = vmul.f32 %v10706, %v10789
  %v10793 = vmul.f32 %v10707, %v10789
  %v10794 = vlaneseq
  %v10795 = vshrl.u32 %v10794, 7
  %v10796 = vsub.s32 1, %v10795
  %v10797 = vrot.slane %v10628, %v10796
  %v10798 = vadd.f32 %v10790, %v10797
  %v10799 = vadd.f32 %v10791, %v10797
  %v10800 = vadd.f32 %v10792, %v10797
  %v10801 = vadd.f32 %v10793, %v10797
  %v10802 = vmax.f32 %v10798, 0.0
  %v10803 = vmax.f32 %v10799, 0.0
  %v10804 = vmax.f32 %v10800, 0.0
  %v10805 = vmax.f32 %v10801, 0.0
  %v10807 = vsel %vm7461, %v10802, 0
  %v10810 = vsel %vm7461, %v10803, 0
  %10812 = vmatprep.subr.mxu0 0.0
  %10813 = vmatpush1.xpose.msra.mxu0 %v10807
  %10814 = vmatprep.subr.mxu0 0.0
  %10815 = vmatpush1.xpose.msra.mxu0 %v10810
  %10816 = vmatprep.subr.mxu0 0.0
  %10817 = vmatpush1.xpose.msra.mxu0 0.0
  %10818 = vmatprep.subr.mxu0 0.0
  %10819 = vmatpush1.xpose.msra.mxu0 0.0
  %10820 = vmatprep.subr.mxu0 0.0
  %10821 = vmatpush1.xpose.msra.mxu0 0.0
  %10822 = vmatprep.subr.mxu0 0.0
  %10823 = vmatpush1.xpose.msra.mxu0 0.0
  %10824 = vmatprep.subr.mxu0 0.0
  %10825 = vmatpush1.xpose.msra.mxu0 0.0
  %10826 = vmatprep.subr.mxu0 0.0
  %10827 = vmatpush1.xpose.msra.mxu0 0.0
  %10828 = vmatprep.subr.mxu0 0.0
  %10829 = vmatpush1.xpose.msra.mxu0 0.0
  %10830 = vmatprep.subr.mxu0 0.0
  %10831 = vmatpush1.xpose.msra.mxu0 0.0
  %10832 = vmatprep.subr.mxu0 0.0
  %10833 = vmatpush1.xpose.msra.mxu0 0.0
  %10834 = vmatprep.subr.mxu0 0.0
  %10835 = vmatpush1.xpose.msra.mxu0 0.0
  %10836 = vmatprep.subr.mxu0 0.0
  %10837 = vmatpush1.xpose.msra.mxu0 0.0
  %10838 = vmatprep.subr.mxu0 0.0
  %10839 = vmatpush1.xpose.msra.mxu0 0.0
  %10840 = vmatprep.subr.mxu0 0.0
  %10841 = vmatpush1.xpose.msra.mxu0 0.0
  %10842 = vmatprep.subr.mxu0 0.0
  %10843 = vmatpush1.xpose.msra.mxu0 0.0
  %10844 = vmatprep.subr.mxu0 0.0
  %10845 = vmatpush1.xpose.msra.mxu0 0.0
  %10846 = vmatprep.subr.mxu0 0.0
  %10847 = vmatpush1.xpose.msra.mxu0 0.0
  %10848 = vmatprep.subr.mxu0 0.0
  %10849 = vmatpush1.xpose.msra.mxu0 0.0
  %10850 = vmatprep.subr.mxu0 0.0
  %10851 = vmatpush1.xpose.msra.mxu0 0.0
  %10852 = vmatprep.subr.mxu0 0.0
  %10853 = vmatpush1.xpose.msra.mxu0 0.0
  %10854 = vmatprep.subr.mxu0 0.0
  %10855 = vmatpush1.xpose.msra.mxu0 0.0
  %10856 = vmatprep.subr.mxu0 0.0
  %10857 = vmatpush1.xpose.msra.mxu0 0.0
  %10858 = vmatprep.subr.mxu0 0.0
  %10859 = vmatpush1.xpose.msra.mxu0 0.0
  %10860 = vmatprep.subr.mxu0 0.0
  %10861 = vmatpush1.xpose.msra.mxu0 0.0
  %10862 = vmatprep.subr.mxu0 0.0
  %10863 = vmatpush1.xpose.msra.mxu0 0.0
  %10864 = vmatprep.subr.mxu0 0.0
  %10865 = vmatpush1.xpose.msra.mxu0 0.0
  %10866 = vmatprep.subr.mxu0 0.0
  %10867 = vmatpush1.xpose.msra.mxu0 0.0
  %10868 = vmatprep.subr.mxu0 0.0
  %10869 = vmatpush1.xpose.msra.mxu0 0.0
  %10870 = vmatprep.subr.mxu0 0.0
  %10871 = vmatpush1.xpose.msra.mxu0 0.0
  %10872 = vmatprep.subr.mxu0 0.0
  %10873 = vmatpush1.xpose.msra.mxu0 0.0
  %10874 = vmatprep.subr.mxu0 0.0
  %10875 = vmatpush1.xpose.msra.mxu0 0.0
  %10876 = vmatprep.mubr.f32.mxu0 0.0
  %10877 = vmatmul.mubr.f32.gmra.mrb[0].mxu0 %v7527
  %v10878 = vpop.f32.mrb[0].mxu0
  %v10879 = vadd.f32 0.0, %v10878
  %v10880 = vpop.f32.mrb[0].mxu0
  %10881 = vdwg.mxu0
  %10882 = vst.msk [vmem:[%s12] sm:$0xff] %vm8955, %v10879
  %v10884 = vsel %vm7461, %v10804, 0
  %v10887 = vsel %vm7461, %v10805, 0
  %10889 = vmatprep.subr.mxu0 0.0
  %10890 = vmatpush1.xpose.msra.mxu0 %v10884
  %10891 = vmatprep.subr.mxu0 0.0
  %10892 = vmatpush1.xpose.msra.mxu0 %v10887
  %10893 = vmatprep.subr.mxu0 0.0
  %10894 = vmatpush1.xpose.msra.mxu0 0.0
  %10895 = vmatprep.subr.mxu0 0.0
  %10896 = vmatpush1.xpose.msra.mxu0 0.0
  %10897 = vmatprep.subr.mxu0 0.0
  %10898 = vmatpush1.xpose.msra.mxu0 0.0
  %10899 = vmatprep.subr.mxu0 0.0
  %10900 = vmatpush1.xpose.msra.mxu0 0.0
  %10901 = vmatprep.subr.mxu0 0.0
  %10902 = vmatpush1.xpose.msra.mxu0 0.0
  %10903 = vmatprep.subr.mxu0 0.0
  %10904 = vmatpush1.xpose.msra.mxu0 0.0
  %10905 = vmatprep.subr.mxu0 0.0
  %10906 = vmatpush1.xpose.msra.mxu0 0.0
  %10907 = vmatprep.subr.mxu0 0.0
  %10908 = vmatpush1.xpose.msra.mxu0 0.0
  %10909 = vmatprep.subr.mxu0 0.0
  %10910 = vmatpush1.xpose.msra.mxu0 0.0
  %10911 = vmatprep.subr.mxu0 0.0
  %10912 = vmatpush1.xpose.msra.mxu0 0.0
  %10913 = vmatprep.subr.mxu0 0.0
  %10914 = vmatpush1.xpose.msra.mxu0 0.0
  %10915 = vmatprep.subr.mxu0 0.0
  %10916 = vmatpush1.xpose.msra.mxu0 0.0
  %10917 = vmatprep.subr.mxu0 0.0
  %10918 = vmatpush1.xpose.msra.mxu0 0.0
  %10919 = vmatprep.subr.mxu0 0.0
  %10920 = vmatpush1.xpose.msra.mxu0 0.0
  %10921 = vmatprep.subr.mxu0 0.0
  %10922 = vmatpush1.xpose.msra.mxu0 0.0
  %10923 = vmatprep.subr.mxu0 0.0
  %10924 = vmatpush1.xpose.msra.mxu0 0.0
  %10925 = vmatprep.subr.mxu0 0.0
  %10926 = vmatpush1.xpose.msra.mxu0 0.0
  %10927 = vmatprep.subr.mxu0 0.0
  %10928 = vmatpush1.xpose.msra.mxu0 0.0
  %10929 = vmatprep.subr.mxu0 0.0
  %10930 = vmatpush1.xpose.msra.mxu0 0.0
  %10931 = vmatprep.subr.mxu0 0.0
  %10932 = vmatpush1.xpose.msra.mxu0 0.0
  %10933 = vmatprep.subr.mxu0 0.0
  %10934 = vmatpush1.xpose.msra.mxu0 0.0
  %10935 = vmatprep.subr.mxu0 0.0
  %10936 = vmatpush1.xpose.msra.mxu0 0.0
  %10937 = vmatprep.subr.mxu0 0.0
  %10938 = vmatpush1.xpose.msra.mxu0 0.0
  %10939 = vmatprep.subr.mxu0 0.0
  %10940 = vmatpush1.xpose.msra.mxu0 0.0
  %10941 = vmatprep.subr.mxu0 0.0
  %10942 = vmatpush1.xpose.msra.mxu0 0.0
  %10943 = vmatprep.subr.mxu0 0.0
  %10944 = vmatpush1.xpose.msra.mxu0 0.0
  %10945 = vmatprep.subr.mxu0 0.0
  %10946 = vmatpush1.xpose.msra.mxu0 0.0
  %10947 = vmatprep.subr.mxu0 0.0
  %10948 = vmatpush1.xpose.msra.mxu0 0.0
  %10949 = vmatprep.subr.mxu0 0.0
  %10950 = vmatpush1.xpose.msra.mxu0 0.0
  %10951 = vmatprep.subr.mxu0 0.0
  %10952 = vmatpush1.xpose.msra.mxu0 0.0
  %10953 = vmatprep.mubr.f32.mxu0 0.0
  %10954 = vmatmul.mubr.f32.gmra.mrb[0].mxu0 %v7527
  %v10955 = vpop.f32.mrb[0].mxu0
  %v10956 = vadd.f32 0.0, %v10955
  %v10957 = vpop.f32.mrb[0].mxu0
  %10958 = vdwg.mxu0
  %s10959 = scalar_lea.vmem %s12, 8
  %10960 = vst.msk [vmem:[%s10959] sm:$0xff] %vm8955, %v10956
  // Predicated region
  $region38: #{_lambda_.1} parent=0 // pred_check
    _
  $region39: #{_lambda_.1} parent=0 // pred_check_branch
    %10962 = sbr.rel (0) target = $region41
  $region40: #{_lambda_.1} parent=0 // pred_region
    _
  $region41: #{_lambda_.1} parent=0 // pred_fallthru
    _
  // Predicated region
  $region42: #{_lambda_.1} parent=0 // pred_check
    _
  $region43: #{_lambda_.1} parent=0 // pred_check_branch
    %10964 = sbr.rel (0) target = $region45
  $region44: #{_lambda_.1} parent=0 // pred_region
    _
  $region45: #{_lambda_.1} parent=0 // pred_fallthru
    _
  // Predicated region
  $region46: #{_lambda_.1} parent=0 // pred_check
    _
  $region47: #{_lambda_.1} parent=0 // pred_check_branch
    %10966 = sbr.rel (0) target = $region49
  $region48: #{_lambda_.1} parent=0 // pred_region
    _
  $region49: #{_lambda_.1} parent=0 // pred_fallthru
    _
  // Predicated region
  $region50: #{_lambda_.1} parent=0 // pred_check
    _
  $region51: #{_lambda_.1} parent=0 // pred_check_branch
    %10968 = sbr.rel (0) target = $region53
  $region52: #{_lambda_.1} parent=0 // pred_region
    _
  $region53: #{_lambda_.1} parent=0 // pred_fallthru
    _
  // Predicated region
  $region54: #{_lambda_.1} parent=0 // pred_check
    _
  $region55: #{_lambda_.1} parent=0 // pred_check_branch
    %10970 = sbr.rel (0) target = $region57
  $region56: #{_lambda_.1} parent=0 // pred_region
    _
  $region57: #{_lambda_.1} parent=0 // pred_fallthru
    _
  // Predicated region
  $region58: #{_lambda_.1} parent=0 // pred_check
    _
  $region59: #{_lambda_.1} parent=0 // pred_check_branch
    %10972 = sbr.rel (0) target = $region61
  $region60: #{_lambda_.1} parent=0 // pred_region
    _
  $region61: #{_lambda_.1} parent=0 // pred_fallthru
    _
  // Predicated region
  $region62: #{_lambda_.1} parent=0 // pred_check
    _
  $region63: #{_lambda_.1} parent=0 // pred_check_branch
    %10974 = sbr.rel (0) target = $region65
  $region64: #{_lambda_.1} parent=0 // pred_region
    _
  $region65: #{_lambda_.1} parent=0 // pred_fallthru
    _
  // Predicated region
  $region66: #{_lambda_.1} parent=0 // pred_check
    _
  $region67: #{_lambda_.1} parent=0 // pred_check_branch
    %10976 = sbr.rel (0) target = $region69
  $region68: #{_lambda_.1} parent=0 // pred_region
    _
  $region69: #{_lambda_.1} parent=0 // pred_fallthru
    _

</llo_original>
